<compile_context>
chip_gen: v7x
topology: tpu7x:2x2x1
jax: 0.10.0
libtpu: 0.0.40
codegen_flags: <defaults>
</compile_context>

<pallas_src>
import functools

import jax
import jax.numpy as jnp
from jax.experimental import pallas as pl
from jax.experimental.pallas import tpu as pltpu


def _spatial_attention_kernel(x_ref, ste_ref, wx_ref, ws_ref, b_ref,
                              wo_ref, bo_ref, out_ref, qkv_ref, oh_ref, *,
                              num_heads, head_size):
    TB, N, D = x_ref.shape
    rows = TB * N

    # ---- fused Q/K/V projection (1x1 conv == dense matmul over features).
    # One [rows, D] @ [D, 3D] GEMM per input half (X / STE): bf16 operands,
    # f32 accumulation, single bias+ReLU pass over the fused [rows, 3D] result.
    xf = x_ref[...].reshape(rows, D).astype(jnp.bfloat16)
    sf = ste_ref[...].reshape(rows, D).astype(jnp.bfloat16)
    y = jnp.dot(xf, wx_ref[...], preferred_element_type=jnp.float32)
    y = y + jnp.dot(sf, ws_ref[...], preferred_element_type=jnp.float32)
    y = jnp.maximum(y + b_ref[...], 0.0)                  # bias + ReLU (BN folded)
    # Park q|k|v in VMEM scratch (bf16) so they are not held live in vregs
    # across the head loop (rows x 3D in f32 alone would blow the 64-vreg file).
    qkv_ref[...] = y.reshape(TB, N, 3 * D).astype(jnp.bfloat16)

    # ---- per-head attention, batched over the TB rows of this block.
    # Static 8-iteration loop with every bulky tensor routed through VMEM
    # scratch, so per-iteration intermediates die at the scratch store.
    # (A fori_loop would need dynamic lane-dim slices of width head_size=4,
    # which Mosaic handles poorly; these slices are static.)
    for h in range(num_heads):
        s = h * head_size
        qh = qkv_ref[:, :, s:s + head_size]                       # [TB, N, K] bf16
        kh = qkv_ref[:, :, D + s:D + s + head_size]
        vh = qkv_ref[:, :, 2 * D + s:2 * D + s + head_size]
        # 1/sqrt(d) scale is already folded into wq/bq in the wrapper.
        logits = jnp.einsum('bnk,bmk->bnm', qh, kh,
                            preferred_element_type=jnp.float32)   # [TB, N, N] f32
        logits = logits - jnp.max(logits, axis=-1, keepdims=True)
        p = jnp.exp(logits)
        attn = p * pl.reciprocal(jnp.sum(p, axis=-1, keepdims=True), approx=True)
        oh = jnp.einsum('bnm,bmk->bnk', attn.astype(jnp.bfloat16), vh,
                        preferred_element_type=jnp.float32)       # [TB, N, K]
        # Head h lands in lane slice [h*K, (h+1)*K): the reference's lane-axis
        # concat of heads falls out for free.
        oh_ref[:, :, s:s + head_size] = oh.astype(jnp.bfloat16)

    # ---- final FC (1x1 conv) + ReLU: ONE [rows, D] @ [D, D] GEMM instead of
    # num_heads contraction-K accumulation dots.
    o_all = oh_ref[...].reshape(rows, D)                          # bf16
    out = jnp.dot(o_all, wo_ref[...], preferred_element_type=jnp.float32)
    out = jnp.maximum(out + bo_ref[...], 0.0)
    out_ref[...] = out.reshape(TB, N, D).astype(out_ref.dtype)


def _chip_config():
    """Best-effort TPU generation detection; conservative fallback if unknown.

    Returns (vmem_limit_bytes, vmem_tile_budget_bytes, single_core, mxu_m).
    """
    kind = ""
    try:
        kind = jax.devices()[0].device_kind.lower()
    except Exception:
        pass
    vmem_phys = None
    try:
        vmem_phys = int(getattr(pltpu.get_tpu_info(), "vmem_capacity_bytes", 0)) or None
    except Exception:
        pass

    # Single-TensorCore chips (v5e / v6e): no need to keep grid >= 2.
    single_core = any(t in kind for t in ("v5 lite", "v5e", "v6 lite", "v6e"))
    # MXU M granularity: 128 rows on v4/v5, 256 on v6e/v7x.
    mxu_m = 128 if ("v4" in kind or "v5" in kind) else 256

    if vmem_phys is None:
        # Unknown: assume the smallest VMEM (v7x-like, 64 MiB/TC) to stay safe.
        vmem_phys = 128 * 1024 * 1024 if single_core else 64 * 1024 * 1024

    if vmem_phys >= 100 * 1024 * 1024:       # v5e / v6e (128 MiB physical VMEM)
        vmem_limit = 96 * 1024 * 1024
        budget = 64 * 1024 * 1024
    else:                                    # v7x (64 MiB per TensorCore)
        vmem_limit = 32 * 1024 * 1024
        budget = 20 * 1024 * 1024
    return vmem_limit, budget, single_core, mxu_m


def _pick_block_rows(bt, n, d_model, *, budget, single_core, mxu_m):
    """Rows of the fused B*T axis processed per grid step.

    Sized against a conservative per-row VMEM estimate (f32 I/O blocks
    lane-padded to 128 and double-buffered, bf16 scratch, attention
    transients), capped so both TensorCores get work on dual-core chips, and
    snapped (when possible) so TB*N is a multiple of the MXU M granularity.
    """
    lane = 128
    pad = lambda x: ((x + lane - 1) // lane) * lane
    row_bytes = (
        3 * 2 * n * pad(d_model) * 4          # x / ste / out blocks, 2x buffered, f32
        + n * pad(3 * d_model) * 2            # q|k|v VMEM scratch (bf16)
        + n * pad(d_model) * 2                # head-output VMEM scratch (bf16)
        + 3 * n * pad(n) * 4                  # per-head [N, N] attention transients
        + 2 * n * pad(3 * d_model) * 4        # projection / epilogue f32 live values
    )
    cap = max(1, budget // row_bytes)
    if not single_core and bt >= 2:
        cap = min(cap, bt // 2)               # grid >= 2 so both TCs get a block
    cap = max(1, min(cap, bt))
    # Largest TB <= cap whose TB*N fills whole MXU M passes; else just the cap.
    for t in range(cap, 0, -1):
        if (t * n) % mxu_m == 0:
            return t
    return cap


def spatial_attention(X, STE, params, *, K, d):
    """X, STE: [B, T, N, D] with D = K * d (matches the PyTorch module's split)."""
    B, T, N, D = X.shape
    assert D == K * d and STE.shape == X.shape
    wq, bq, wk, bk, wv, bv, wo, bo = params

    # Fold the 1/sqrt(d) attention scale into the Q projection
    # (ReLU(a*z) == a*ReLU(z) for a > 0, exact up to rounding).
    scale = float(d) ** -0.5

    # Output-axis-fused Q/K/V weights, split into X-half / STE-half (removes
    # the lane-axis concat and collapses 6 MXU dots into 2); bf16 for the MXU.
    w_cat = jnp.concatenate([wq * scale, wk, wv], axis=-1)        # [2D, 3D] f32
    w_x = w_cat[:D].astype(jnp.bfloat16)                          # [D, 3D]
    w_s = w_cat[D:].astype(jnp.bfloat16)                          # [D, 3D]
    b3 = jnp.concatenate([bq * scale, bk, bv], axis=-1)           # [1, 3D] f32
    wo_b = wo.astype(jnp.bfloat16)                                # [D, D]

    bt = B * T
    x2 = X.reshape(bt, N, D)
    ste2 = STE.reshape(bt, N, D)

    vmem_limit, budget, single_core, mxu_m = _chip_config()
    TB = _pick_block_rows(bt, N, D, budget=budget,
                          single_core=single_core, mxu_m=mxu_m)

    # Pad the fused B*T axis to a multiple of TB (so a prime/awkward B*T does
    # not collapse TB to 1); padded rows are computed and then sliced away.
    bt_pad = ((bt + TB - 1) // TB) * TB
    if bt_pad != bt:
        pad_rows = bt_pad - bt
        x2 = jnp.concatenate([x2, jnp.zeros((pad_rows, N, D), x2.dtype)], axis=0)
        ste2 = jnp.concatenate([ste2, jnp.zeros((pad_rows, N, D), ste2.dtype)], axis=0)

    grid = (bt_pad // TB,)
    kernel = functools.partial(_spatial_attention_kernel,
                               num_heads=d, head_size=K)

    io_spec = pl.BlockSpec((TB, N, D), lambda i: (i, 0, 0))

    def full(a):
        zeros = (0,) * a.ndim
        return pl.BlockSpec(a.shape, lambda i: zeros)

    out = pl.pallas_call(
        kernel,
        out_shape=jax.ShapeDtypeStruct((bt_pad, N, D), X.dtype),
        grid=grid,
        in_specs=[io_spec, io_spec,
                  full(w_x), full(w_s), full(b3), full(wo_b), full(bo)],
        out_specs=io_spec,
        scratch_shapes=[pltpu.VMEM((TB, N, 3 * D), jnp.bfloat16),   # q | k | v
                        pltpu.VMEM((TB, N, D), jnp.bfloat16)],      # head outputs
        compiler_params=pltpu.CompilerParams(
            dimension_semantics=("parallel",),
            vmem_limit_bytes=vmem_limit),
    )(x2, ste2, w_x, w_s, b3, wo_b, bo)

    return out[:bt].reshape(B, T, N, D)


def spatial_attention_ref(X, STE, params, *, K, d):
    """Pure-JAX (f32) reference mirroring the PyTorch forward exactly."""
    wq, bq, wk, bk, wv, bv, wo, bo = params
    relu = lambda z: jnp.maximum(z, 0.0)
    x = jnp.concatenate([X, STE], axis=-1)
    q = relu(x @ wq + bq)
    k_ = relu(x @ wk + bk)
    v = relu(x @ wv + bv)
    # torch.split(., K, dim=-1) -> d chunks of size K; cat along batch dim.
    qs = jnp.concatenate(jnp.split(q, d, axis=-1), axis=0)
    ks = jnp.concatenate(jnp.split(k_, d, axis=-1), axis=0)
    vs = jnp.concatenate(jnp.split(v, d, axis=-1), axis=0)
    attn = jnp.einsum('btnk,btmk->btnm', qs, ks) / (d ** 0.5)
    attn = jax.nn.softmax(attn, axis=-1)
    o = jnp.einsum('btnm,btmk->btnk', attn, vs)
    o = jnp.concatenate(jnp.split(o, d, axis=0), axis=-1)
    return relu(o @ wo + bo)


if __name__ == "__main__":
    # Small shapes: batch=2, num_step=8, num_vertex=16, K=4 (head split size), d=8 -> D=32
    B, T, N, Kh, dh = 2, 8, 16, 4, 8
    D = Kh * dh

    key = jax.random.PRNGKey(0)
    keys = jax.random.split(key, 10)
    X = jax.random.normal(keys[0], (B, T, N, D), dtype=jnp.float32)
    STE = jax.random.normal(keys[1], (B, T, N, D), dtype=jnp.float32)

    # Deterministic parameters (FC_q, FC_k, FC_v: 2D->D; FC: D->D), biases as (1, D).
    def init_w(k, fan_in, fan_out):
        return jax.random.normal(k, (fan_in, fan_out), dtype=jnp.float32) * 0.1

    wq = init_w(keys[2], 2 * D, D); bq = jax.random.normal(keys[3], (1, D), jnp.float32) * 0.1
    wk = init_w(keys[4], 2 * D, D); bk = jax.random.normal(keys[5], (1, D), jnp.float32) * 0.1
    wv = init_w(keys[6], 2 * D, D); bv = jax.random.normal(keys[7], (1, D), jnp.float32) * 0.1
    wo = init_w(keys[8], D, D);     bo = jax.random.normal(keys[9], (1, D), jnp.float32) * 0.1
    params = (wq, bq, wk, bk, wv, bv, wo, bo)

    out = spatial_attention(X, STE, params, K=Kh, d=dh)
    out = jax.block_until_ready(out)

    ref = spatial_attention_ref(X, STE, params, K=Kh, d=dh)
    assert out.shape == (B, T, N, D)
    # Relaxed tolerance: matmul operands are bf16 (f32 accumulation) and the
    # softmax denominator uses the EUP approximate reciprocal.
    assert jnp.allclose(out, ref, rtol=5e-2, atol=5e-2), \
        f"max abs diff {jnp.max(jnp.abs(out - ref))}"

    print("KERNEL_OK")
</pallas_src>

<mosaic_0001>
module attributes {stable_mosaic.version = 11 : i64} {
  func.func @_spatial_attention_kernel(%arg0: i32, %arg1: memref<8x16x32xf32, #tpu.memory_space<vmem>>, %arg2: memref<8x16x32xf32, #tpu.memory_space<vmem>>, %arg3: memref<32x96xbf16, #tpu.memory_space<vmem>>, %arg4: memref<32x96xbf16, #tpu.memory_space<vmem>>, %arg5: memref<1x96xf32, #tpu.memory_space<vmem>>, %arg6: memref<32x32xbf16, #tpu.memory_space<vmem>>, %arg7: memref<1x32xf32, #tpu.memory_space<vmem>>, %arg8: memref<8x16x32xf32, #tpu.memory_space<vmem>>, %arg9: memref<8x16x96xbf16, #tpu.memory_space<vmem>>, %arg10: memref<8x16x32xbf16, #tpu.memory_space<vmem>>) attributes {dimension_semantics = [#tpu.dimension_semantics<parallel>], iteration_bounds = array<i64: 2>, scalar_prefetch = 0 : i64, scratch_operands = 2 : i64, tpu.core_type = #tpu.core_type<tc>, window_params = [{transform_indices = @transform_0, window_bounds = array<i64: 8, 16, 32>}, {transform_indices = @transform_1, window_bounds = array<i64: 8, 16, 32>}, {pipeline_mode = #tpu.pipeline_mode<synchronous>, transform_indices = @transform_2, window_bounds = array<i64: 32, 96>}, {pipeline_mode = #tpu.pipeline_mode<synchronous>, transform_indices = @transform_3, window_bounds = array<i64: 32, 96>}, {pipeline_mode = #tpu.pipeline_mode<synchronous>, transform_indices = @transform_4, window_bounds = array<i64: 1, 96>}, {pipeline_mode = #tpu.pipeline_mode<synchronous>, transform_indices = @transform_5, window_bounds = array<i64: 32, 32>}, {pipeline_mode = #tpu.pipeline_mode<synchronous>, transform_indices = @transform_6, window_bounds = array<i64: 1, 32>}, {transform_indices = @transform_7, window_bounds = array<i64: 8, 16, 32>}]} {
    %c0 = arith.constant 0 : index
    %c0_0 = arith.constant 0 : index
    %c0_1 = arith.constant 0 : index
    %0 = vector.load %arg1[%c0, %c0_0, %c0_1] : memref<8x16x32xf32, #tpu.memory_space<vmem>>, vector<8x16x32xf32>
    %1 = vector.shape_cast %0 : vector<8x16x32xf32> to vector<128x32xf32>
    %2 = arith.truncf %1 : vector<128x32xf32> to vector<128x32xbf16>
    %c0_2 = arith.constant 0 : index
    %c0_3 = arith.constant 0 : index
    %c0_4 = arith.constant 0 : index
    %3 = vector.load %arg2[%c0_2, %c0_3, %c0_4] : memref<8x16x32xf32, #tpu.memory_space<vmem>>, vector<8x16x32xf32>
    %4 = vector.shape_cast %3 : vector<8x16x32xf32> to vector<128x32xf32>
    %5 = arith.truncf %4 : vector<128x32xf32> to vector<128x32xbf16>
    %c0_5 = arith.constant 0 : index
    %c0_6 = arith.constant 0 : index
    %6 = vector.load %arg3[%c0_5, %c0_6] : memref<32x96xbf16, #tpu.memory_space<vmem>>, vector<32x96xbf16>
    %cst = arith.constant dense<0.000000e+00> : vector<128x96xf32>
    %7 = tpu.matmul %2, %6, %cst {dimension_numbers = #tpu.dot_dimension_numbers<[1], [0], [0], [1], [0, 0, 1, 1], [], []>} : vector<128x32xbf16>, vector<32x96xbf16>, vector<128x96xf32> -> vector<128x96xf32>
    %c0_7 = arith.constant 0 : index
    %c0_8 = arith.constant 0 : index
    %8 = vector.load %arg4[%c0_7, %c0_8] : memref<32x96xbf16, #tpu.memory_space<vmem>>, vector<32x96xbf16>
    %cst_9 = arith.constant dense<0.000000e+00> : vector<128x96xf32>
    %9 = tpu.matmul %5, %8, %cst_9 {dimension_numbers = #tpu.dot_dimension_numbers<[1], [0], [0], [1], [0, 0, 1, 1], [], []>} : vector<128x32xbf16>, vector<32x96xbf16>, vector<128x96xf32> -> vector<128x96xf32>
    %10 = arith.addf %7, %9 : vector<128x96xf32>
    %c0_10 = arith.constant 0 : index
    %c0_11 = arith.constant 0 : index
    %11 = vector.load %arg5[%c0_10, %c0_11] : memref<1x96xf32, #tpu.memory_space<vmem>>, vector<1x96xf32>
    %12 = vector.broadcast %11 : vector<1x96xf32> to vector<128x96xf32>
    %13 = arith.addf %10, %12 : vector<128x96xf32>
    %cst_12 = arith.constant 0.000000e+00 : f32
    %14 = vector.broadcast %cst_12 : f32 to vector<128x96xf32>
    %15 = arith.maximumf %13, %14 : vector<128x96xf32>
    %16 = vector.shape_cast %15 : vector<128x96xf32> to vector<8x16x96xf32>
    %17 = arith.truncf %16 : vector<8x16x96xf32> to vector<8x16x96xbf16>
    %c0_13 = arith.constant 0 : index
    %c0_14 = arith.constant 0 : index
    %c0_15 = arith.constant 0 : index
    %18 = vector.load %arg9[%c0_13, %c0_14, %c0_15] : memref<8x16x96xbf16, #tpu.memory_space<vmem>>, vector<8x16x96xbf16>
    tpu.vector_store %arg9[%c0_13, %c0_14, %c0_15], %17 {strides = array<i32>} : memref<8x16x96xbf16, #tpu.memory_space<vmem>>, vector<8x16x96xbf16>,
    %c0_16 = arith.constant 0 : index
    %c0_17 = arith.constant 0 : index
    %c0_18 = arith.constant 0 : index
    %19 = vector.load %arg9[%c0_16, %c0_17, %c0_18] : memref<8x16x96xbf16, #tpu.memory_space<vmem>>, vector<8x16x4xbf16>
    %c0_19 = arith.constant 0 : index
    %c0_20 = arith.constant 0 : index
    %c32 = arith.constant 32 : index
    %20 = vector.load %arg9[%c0_19, %c0_20, %c32] : memref<8x16x96xbf16, #tpu.memory_space<vmem>>, vector<8x16x4xbf16>
    %c0_21 = arith.constant 0 : index
    %c0_22 = arith.constant 0 : index
    %c64 = arith.constant 64 : index
    %21 = vector.load %arg9[%c0_21, %c0_22, %c64] : memref<8x16x96xbf16, #tpu.memory_space<vmem>>, vector<8x16x4xbf16>
    "tpu.trace_start"() <{level = 10 : i32, message = "bnk,bmk->bnm"}> : () -> ()
    %cst_23 = arith.constant dense<0.000000e+00> : vector<8x16x16xf32>
    %22 = tpu.matmul %19, %20, %cst_23 {dimension_numbers = #tpu.dot_dimension_numbers<[2], [2], [1], [1], [0, 0, 0, 1, 1, 1], [0], [0]>} : vector<8x16x4xbf16>, vector<8x16x4xbf16>, vector<8x16x16xf32> -> vector<8x16x16xf32>
    "tpu.trace_stop"() : () -> ()
    %cst_24 = arith.constant dense<0xFF800000> : vector<8x16xf32>
    %23 = vector.multi_reduction <maximumf>, %22, %cst_24 [2] : vector<8x16x16xf32> to vector<8x16xf32>
    %24 = vector.shape_cast %23 : vector<8x16xf32> to vector<8x16x1xf32>
    %25 = vector.broadcast %24 : vector<8x16x1xf32> to vector<8x16x16xf32>
    %26 = arith.subf %22, %25 : vector<8x16x16xf32>
    %27 = math.exp %26 : vector<8x16x16xf32>
    %cst_25 = arith.constant dense<0.000000e+00> : vector<8x16xf32>
    %28 = vector.multi_reduction <add>, %27, %cst_25 [2] : vector<8x16x16xf32> to vector<8x16xf32>
    %29 = vector.shape_cast %28 : vector<8x16xf32> to vector<8x16x1xf32>
    %30 = tpu.reciprocal %29 {approx = true} : vector<8x16x1xf32> -> vector<8x16x1xf32>
    %31 = vector.broadcast %30 : vector<8x16x1xf32> to vector<8x16x16xf32>
    %32 = arith.mulf %27, %31 : vector<8x16x16xf32>
    %33 = arith.truncf %32 : vector<8x16x16xf32> to vector<8x16x16xbf16>
    "tpu.trace_start"() <{level = 10 : i32, message = "bnm,bmk->bnk"}> : () -> ()
    %cst_26 = arith.constant dense<0.000000e+00> : vector<8x16x4xf32>
    %34 = tpu.matmul %33, %21, %cst_26 {dimension_numbers = #tpu.dot_dimension_numbers<[2], [1], [1], [2], [0, 0, 0, 1, 1, 2], [0], [0]>} : vector<8x16x16xbf16>, vector<8x16x4xbf16>, vector<8x16x4xf32> -> vector<8x16x4xf32>
    "tpu.trace_stop"() : () -> ()
    %35 = arith.truncf %34 : vector<8x16x4xf32> to vector<8x16x4xbf16>
    %c0_27 = arith.constant 0 : index
    %c0_28 = arith.constant 0 : index
    %c0_29 = arith.constant 0 : index
    %36 = vector.load %arg10[%c0_27, %c0_28, %c0_29] : memref<8x16x32xbf16, #tpu.memory_space<vmem>>, vector<8x16x4xbf16>
    tpu.vector_store %arg10[%c0_27, %c0_28, %c0_29], %35 {strides = array<i32>} : memref<8x16x32xbf16, #tpu.memory_space<vmem>>, vector<8x16x4xbf16>,
    %c0_30 = arith.constant 0 : index
    %c0_31 = arith.constant 0 : index
    %c4 = arith.constant 4 : index
    %37 = vector.load %arg9[%c0_30, %c0_31, %c4] : memref<8x16x96xbf16, #tpu.memory_space<vmem>>, vector<8x16x4xbf16>
    %c0_32 = arith.constant 0 : index
    %c0_33 = arith.constant 0 : index
    %c36 = arith.constant 36 : index
    %38 = vector.load %arg9[%c0_32, %c0_33, %c36] : memref<8x16x96xbf16, #tpu.memory_space<vmem>>, vector<8x16x4xbf16>
    %c0_34 = arith.constant 0 : index
    %c0_35 = arith.constant 0 : index
    %c68 = arith.constant 68 : index
    %39 = vector.load %arg9[%c0_34, %c0_35, %c68] : memref<8x16x96xbf16, #tpu.memory_space<vmem>>, vector<8x16x4xbf16>
    "tpu.trace_start"() <{level = 10 : i32, message = "bnk,bmk->bnm"}> : () -> ()
    %cst_36 = arith.constant dense<0.000000e+00> : vector<8x16x16xf32>
    %40 = tpu.matmul %37, %38, %cst_36 {dimension_numbers = #tpu.dot_dimension_numbers<[2], [2], [1], [1], [0, 0, 0, 1, 1, 1], [0], [0]>} : vector<8x16x4xbf16>, vector<8x16x4xbf16>, vector<8x16x16xf32> -> vector<8x16x16xf32>
    "tpu.trace_stop"() : () -> ()
    %cst_37 = arith.constant dense<0xFF800000> : vector<8x16xf32>
    %41 = vector.multi_reduction <maximumf>, %40, %cst_37 [2] : vector<8x16x16xf32> to vector<8x16xf32>
    %42 = vector.shape_cast %41 : vector<8x16xf32> to vector<8x16x1xf32>
    %43 = vector.broadcast %42 : vector<8x16x1xf32> to vector<8x16x16xf32>
    %44 = arith.subf %40, %43 : vector<8x16x16xf32>
    %45 = math.exp %44 : vector<8x16x16xf32>
    %cst_38 = arith.constant dense<0.000000e+00> : vector<8x16xf32>
    %46 = vector.multi_reduction <add>, %45, %cst_38 [2] : vector<8x16x16xf32> to vector<8x16xf32>
    %47 = vector.shape_cast %46 : vector<8x16xf32> to vector<8x16x1xf32>
    %48 = tpu.reciprocal %47 {approx = true} : vector<8x16x1xf32> -> vector<8x16x1xf32>
    %49 = vector.broadcast %48 : vector<8x16x1xf32> to vector<8x16x16xf32>
    %50 = arith.mulf %45, %49 : vector<8x16x16xf32>
    %51 = arith.truncf %50 : vector<8x16x16xf32> to vector<8x16x16xbf16>
    "tpu.trace_start"() <{level = 10 : i32, message = "bnm,bmk->bnk"}> : () -> ()
    %cst_39 = arith.constant dense<0.000000e+00> : vector<8x16x4xf32>
    %52 = tpu.matmul %51, %39, %cst_39 {dimension_numbers = #tpu.dot_dimension_numbers<[2], [1], [1], [2], [0, 0, 0, 1, 1, 2], [0], [0]>} : vector<8x16x16xbf16>, vector<8x16x4xbf16>, vector<8x16x4xf32> -> vector<8x16x4xf32>
    "tpu.trace_stop"() : () -> ()
    %53 = arith.truncf %52 : vector<8x16x4xf32> to vector<8x16x4xbf16>
    %c0_40 = arith.constant 0 : index
    %c0_41 = arith.constant 0 : index
    %c4_42 = arith.constant 4 : index
    %54 = vector.load %arg10[%c0_40, %c0_41, %c4_42] : memref<8x16x32xbf16, #tpu.memory_space<vmem>>, vector<8x16x4xbf16>
    tpu.vector_store %arg10[%c0_40, %c0_41, %c4_42], %53 {strides = array<i32>} : memref<8x16x32xbf16, #tpu.memory_space<vmem>>, vector<8x16x4xbf16>,
    %c0_43 = arith.constant 0 : index
    %c0_44 = arith.constant 0 : index
    %c8 = arith.constant 8 : index
    %55 = vector.load %arg9[%c0_43, %c0_44, %c8] : memref<8x16x96xbf16, #tpu.memory_space<vmem>>, vector<8x16x4xbf16>
    %c0_45 = arith.constant 0 : index
    %c0_46 = arith.constant 0 : index
    %c40 = arith.constant 40 : index
    %56 = vector.load %arg9[%c0_45, %c0_46, %c40] : memref<8x16x96xbf16, #tpu.memory_space<vmem>>, vector<8x16x4xbf16>
    %c0_47 = arith.constant 0 : index
    %c0_48 = arith.constant 0 : index
    %c72 = arith.constant 72 : index
    %57 = vector.load %arg9[%c0_47, %c0_48, %c72] : memref<8x16x96xbf16, #tpu.memory_space<vmem>>, vector<8x16x4xbf16>
    "tpu.trace_start"() <{level = 10 : i32, message = "bnk,bmk->bnm"}> : () -> ()
    %cst_49 = arith.constant dense<0.000000e+00> : vector<8x16x16xf32>
    %58 = tpu.matmul %55, %56, %cst_49 {dimension_numbers = #tpu.dot_dimension_numbers<[2], [2], [1], [1], [0, 0, 0, 1, 1, 1], [0], [0]>} : vector<8x16x4xbf16>, vector<8x16x4xbf16>, vector<8x16x16xf32> -> vector<8x16x16xf32>
    "tpu.trace_stop"() : () -> ()
    %cst_50 = arith.constant dense<0xFF800000> : vector<8x16xf32>
    %59 = vector.multi_reduction <maximumf>, %58, %cst_50 [2] : vector<8x16x16xf32> to vector<8x16xf32>
    %60 = vector.shape_cast %59 : vector<8x16xf32> to vector<8x16x1xf32>
    %61 = vector.broadcast %60 : vector<8x16x1xf32> to vector<8x16x16xf32>
    %62 = arith.subf %58, %61 : vector<8x16x16xf32>
    %63 = math.exp %62 : vector<8x16x16xf32>
    %cst_51 = arith.constant dense<0.000000e+00> : vector<8x16xf32>
    %64 = vector.multi_reduction <add>, %63, %cst_51 [2] : vector<8x16x16xf32> to vector<8x16xf32>
    %65 = vector.shape_cast %64 : vector<8x16xf32> to vector<8x16x1xf32>
    %66 = tpu.reciprocal %65 {approx = true} : vector<8x16x1xf32> -> vector<8x16x1xf32>
    %67 = vector.broadcast %66 : vector<8x16x1xf32> to vector<8x16x16xf32>
    %68 = arith.mulf %63, %67 : vector<8x16x16xf32>
    %69 = arith.truncf %68 : vector<8x16x16xf32> to vector<8x16x16xbf16>
    "tpu.trace_start"() <{level = 10 : i32, message = "bnm,bmk->bnk"}> : () -> ()
    %cst_52 = arith.constant dense<0.000000e+00> : vector<8x16x4xf32>
    %70 = tpu.matmul %69, %57, %cst_52 {dimension_numbers = #tpu.dot_dimension_numbers<[2], [1], [1], [2], [0, 0, 0, 1, 1, 2], [0], [0]>} : vector<8x16x16xbf16>, vector<8x16x4xbf16>, vector<8x16x4xf32> -> vector<8x16x4xf32>
    "tpu.trace_stop"() : () -> ()
    %71 = arith.truncf %70 : vector<8x16x4xf32> to vector<8x16x4xbf16>
    %c0_53 = arith.constant 0 : index
    %c0_54 = arith.constant 0 : index
    %c8_55 = arith.constant 8 : index
    %72 = vector.load %arg10[%c0_53, %c0_54, %c8_55] : memref<8x16x32xbf16, #tpu.memory_space<vmem>>, vector<8x16x4xbf16>
    tpu.vector_store %arg10[%c0_53, %c0_54, %c8_55], %71 {strides = array<i32>} : memref<8x16x32xbf16, #tpu.memory_space<vmem>>, vector<8x16x4xbf16>,
    %c0_56 = arith.constant 0 : index
    %c0_57 = arith.constant 0 : index
    %c12 = arith.constant 12 : index
    %73 = vector.load %arg9[%c0_56, %c0_57, %c12] : memref<8x16x96xbf16, #tpu.memory_space<vmem>>, vector<8x16x4xbf16>
    %c0_58 = arith.constant 0 : index
    %c0_59 = arith.constant 0 : index
    %c44 = arith.constant 44 : index
    %74 = vector.load %arg9[%c0_58, %c0_59, %c44] : memref<8x16x96xbf16, #tpu.memory_space<vmem>>, vector<8x16x4xbf16>
    %c0_60 = arith.constant 0 : index
    %c0_61 = arith.constant 0 : index
    %c76 = arith.constant 76 : index
    %75 = vector.load %arg9[%c0_60, %c0_61, %c76] : memref<8x16x96xbf16, #tpu.memory_space<vmem>>, vector<8x16x4xbf16>
    "tpu.trace_start"() <{level = 10 : i32, message = "bnk,bmk->bnm"}> : () -> ()
    %cst_62 = arith.constant dense<0.000000e+00> : vector<8x16x16xf32>
    %76 = tpu.matmul %73, %74, %cst_62 {dimension_numbers = #tpu.dot_dimension_numbers<[2], [2], [1], [1], [0, 0, 0, 1, 1, 1], [0], [0]>} : vector<8x16x4xbf16>, vector<8x16x4xbf16>, vector<8x16x16xf32> -> vector<8x16x16xf32>
    "tpu.trace_stop"() : () -> ()
    %cst_63 = arith.constant dense<0xFF800000> : vector<8x16xf32>
    %77 = vector.multi_reduction <maximumf>, %76, %cst_63 [2] : vector<8x16x16xf32> to vector<8x16xf32>
    %78 = vector.shape_cast %77 : vector<8x16xf32> to vector<8x16x1xf32>
    %79 = vector.broadcast %78 : vector<8x16x1xf32> to vector<8x16x16xf32>
    %80 = arith.subf %76, %79 : vector<8x16x16xf32>
    %81 = math.exp %80 : vector<8x16x16xf32>
    %cst_64 = arith.constant dense<0.000000e+00> : vector<8x16xf32>
    %82 = vector.multi_reduction <add>, %81, %cst_64 [2] : vector<8x16x16xf32> to vector<8x16xf32>
    %83 = vector.shape_cast %82 : vector<8x16xf32> to vector<8x16x1xf32>
    %84 = tpu.reciprocal %83 {approx = true} : vector<8x16x1xf32> -> vector<8x16x1xf32>
    %85 = vector.broadcast %84 : vector<8x16x1xf32> to vector<8x16x16xf32>
    %86 = arith.mulf %81, %85 : vector<8x16x16xf32>
    %87 = arith.truncf %86 : vector<8x16x16xf32> to vector<8x16x16xbf16>
    "tpu.trace_start"() <{level = 10 : i32, message = "bnm,bmk->bnk"}> : () -> ()
    %cst_65 = arith.constant dense<0.000000e+00> : vector<8x16x4xf32>
    %88 = tpu.matmul %87, %75, %cst_65 {dimension_numbers = #tpu.dot_dimension_numbers<[2], [1], [1], [2], [0, 0, 0, 1, 1, 2], [0], [0]>} : vector<8x16x16xbf16>, vector<8x16x4xbf16>, vector<8x16x4xf32> -> vector<8x16x4xf32>
    "tpu.trace_stop"() : () -> ()
    %89 = arith.truncf %88 : vector<8x16x4xf32> to vector<8x16x4xbf16>
    %c0_66 = arith.constant 0 : index
    %c0_67 = arith.constant 0 : index
    %c12_68 = arith.constant 12 : index
    %90 = vector.load %arg10[%c0_66, %c0_67, %c12_68] : memref<8x16x32xbf16, #tpu.memory_space<vmem>>, vector<8x16x4xbf16>
    tpu.vector_store %arg10[%c0_66, %c0_67, %c12_68], %89 {strides = array<i32>} : memref<8x16x32xbf16, #tpu.memory_space<vmem>>, vector<8x16x4xbf16>,
    %c0_69 = arith.constant 0 : index
    %c0_70 = arith.constant 0 : index
    %c16 = arith.constant 16 : index
    %91 = vector.load %arg9[%c0_69, %c0_70, %c16] : memref<8x16x96xbf16, #tpu.memory_space<vmem>>, vector<8x16x4xbf16>
    %c0_71 = arith.constant 0 : index
    %c0_72 = arith.constant 0 : index
    %c48 = arith.constant 48 : index
    %92 = vector.load %arg9[%c0_71, %c0_72, %c48] : memref<8x16x96xbf16, #tpu.memory_space<vmem>>, vector<8x16x4xbf16>
    %c0_73 = arith.constant 0 : index
    %c0_74 = arith.constant 0 : index
    %c80 = arith.constant 80 : index
    %93 = vector.load %arg9[%c0_73, %c0_74, %c80] : memref<8x16x96xbf16, #tpu.memory_space<vmem>>, vector<8x16x4xbf16>
    "tpu.trace_start"() <{level = 10 : i32, message = "bnk,bmk->bnm"}> : () -> ()
    %cst_75 = arith.constant dense<0.000000e+00> : vector<8x16x16xf32>
    %94 = tpu.matmul %91, %92, %cst_75 {dimension_numbers = #tpu.dot_dimension_numbers<[2], [2], [1], [1], [0, 0, 0, 1, 1, 1], [0], [0]>} : vector<8x16x4xbf16>, vector<8x16x4xbf16>, vector<8x16x16xf32> -> vector<8x16x16xf32>
    "tpu.trace_stop"() : () -> ()
    %cst_76 = arith.constant dense<0xFF800000> : vector<8x16xf32>
    %95 = vector.multi_reduction <maximumf>, %94, %cst_76 [2] : vector<8x16x16xf32> to vector<8x16xf32>
    %96 = vector.shape_cast %95 : vector<8x16xf32> to vector<8x16x1xf32>
    %97 = vector.broadcast %96 : vector<8x16x1xf32> to vector<8x16x16xf32>
    %98 = arith.subf %94, %97 : vector<8x16x16xf32>
    %99 = math.exp %98 : vector<8x16x16xf32>
    %cst_77 = arith.constant dense<0.000000e+00> : vector<8x16xf32>
    %100 = vector.multi_reduction <add>, %99, %cst_77 [2] : vector<8x16x16xf32> to vector<8x16xf32>
    %101 = vector.shape_cast %100 : vector<8x16xf32> to vector<8x16x1xf32>
    %102 = tpu.reciprocal %101 {approx = true} : vector<8x16x1xf32> -> vector<8x16x1xf32>
    %103 = vector.broadcast %102 : vector<8x16x1xf32> to vector<8x16x16xf32>
    %104 = arith.mulf %99, %103 : vector<8x16x16xf32>
    %105 = arith.truncf %104 : vector<8x16x16xf32> to vector<8x16x16xbf16>
    "tpu.trace_start"() <{level = 10 : i32, message = "bnm,bmk->bnk"}> : () -> ()
    %cst_78 = arith.constant dense<0.000000e+00> : vector<8x16x4xf32>
    %106 = tpu.matmul %105, %93, %cst_78 {dimension_numbers = #tpu.dot_dimension_numbers<[2], [1], [1], [2], [0, 0, 0, 1, 1, 2], [0], [0]>} : vector<8x16x16xbf16>, vector<8x16x4xbf16>, vector<8x16x4xf32> -> vector<8x16x4xf32>
    "tpu.trace_stop"() : () -> ()
    %107 = arith.truncf %106 : vector<8x16x4xf32> to vector<8x16x4xbf16>
    %c0_79 = arith.constant 0 : index
    %c0_80 = arith.constant 0 : index
    %c16_81 = arith.constant 16 : index
    %108 = vector.load %arg10[%c0_79, %c0_80, %c16_81] : memref<8x16x32xbf16, #tpu.memory_space<vmem>>, vector<8x16x4xbf16>
    tpu.vector_store %arg10[%c0_79, %c0_80, %c16_81], %107 {strides = array<i32>} : memref<8x16x32xbf16, #tpu.memory_space<vmem>>, vector<8x16x4xbf16>,
    %c0_82 = arith.constant 0 : index
    %c0_83 = arith.constant 0 : index
    %c20 = arith.constant 20 : index
    %109 = vector.load %arg9[%c0_82, %c0_83, %c20] : memref<8x16x96xbf16, #tpu.memory_space<vmem>>, vector<8x16x4xbf16>
    %c0_84 = arith.constant 0 : index
    %c0_85 = arith.constant 0 : index
    %c52 = arith.constant 52 : index
    %110 = vector.load %arg9[%c0_84, %c0_85, %c52] : memref<8x16x96xbf16, #tpu.memory_space<vmem>>, vector<8x16x4xbf16>
    %c0_86 = arith.constant 0 : index
    %c0_87 = arith.constant 0 : index
    %c84 = arith.constant 84 : index
    %111 = vector.load %arg9[%c0_86, %c0_87, %c84] : memref<8x16x96xbf16, #tpu.memory_space<vmem>>, vector<8x16x4xbf16>
    "tpu.trace_start"() <{level = 10 : i32, message = "bnk,bmk->bnm"}> : () -> ()
    %cst_88 = arith.constant dense<0.000000e+00> : vector<8x16x16xf32>
    %112 = tpu.matmul %109, %110, %cst_88 {dimension_numbers = #tpu.dot_dimension_numbers<[2], [2], [1], [1], [0, 0, 0, 1, 1, 1], [0], [0]>} : vector<8x16x4xbf16>, vector<8x16x4xbf16>, vector<8x16x16xf32> -> vector<8x16x16xf32>
    "tpu.trace_stop"() : () -> ()
    %cst_89 = arith.constant dense<0xFF800000> : vector<8x16xf32>
    %113 = vector.multi_reduction <maximumf>, %112, %cst_89 [2] : vector<8x16x16xf32> to vector<8x16xf32>
    %114 = vector.shape_cast %113 : vector<8x16xf32> to vector<8x16x1xf32>
    %115 = vector.broadcast %114 : vector<8x16x1xf32> to vector<8x16x16xf32>
    %116 = arith.subf %112, %115 : vector<8x16x16xf32>
    %117 = math.exp %116 : vector<8x16x16xf32>
    %cst_90 = arith.constant dense<0.000000e+00> : vector<8x16xf32>
    %118 = vector.multi_reduction <add>, %117, %cst_90 [2] : vector<8x16x16xf32> to vector<8x16xf32>
    %119 = vector.shape_cast %118 : vector<8x16xf32> to vector<8x16x1xf32>
    %120 = tpu.reciprocal %119 {approx = true} : vector<8x16x1xf32> -> vector<8x16x1xf32>
    %121 = vector.broadcast %120 : vector<8x16x1xf32> to vector<8x16x16xf32>
    %122 = arith.mulf %117, %121 : vector<8x16x16xf32>
    %123 = arith.truncf %122 : vector<8x16x16xf32> to vector<8x16x16xbf16>
    "tpu.trace_start"() <{level = 10 : i32, message = "bnm,bmk->bnk"}> : () -> ()
    %cst_91 = arith.constant dense<0.000000e+00> : vector<8x16x4xf32>
    %124 = tpu.matmul %123, %111, %cst_91 {dimension_numbers = #tpu.dot_dimension_numbers<[2], [1], [1], [2], [0, 0, 0, 1, 1, 2], [0], [0]>} : vector<8x16x16xbf16>, vector<8x16x4xbf16>, vector<8x16x4xf32> -> vector<8x16x4xf32>
    "tpu.trace_stop"() : () -> ()
    %125 = arith.truncf %124 : vector<8x16x4xf32> to vector<8x16x4xbf16>
    %c0_92 = arith.constant 0 : index
    %c0_93 = arith.constant 0 : index
    %c20_94 = arith.constant 20 : index
    %126 = vector.load %arg10[%c0_92, %c0_93, %c20_94] : memref<8x16x32xbf16, #tpu.memory_space<vmem>>, vector<8x16x4xbf16>
    tpu.vector_store %arg10[%c0_92, %c0_93, %c20_94], %125 {strides = array<i32>} : memref<8x16x32xbf16, #tpu.memory_space<vmem>>, vector<8x16x4xbf16>,
    %c0_95 = arith.constant 0 : index
    %c0_96 = arith.constant 0 : index
    %c24 = arith.constant 24 : index
    %127 = vector.load %arg9[%c0_95, %c0_96, %c24] : memref<8x16x96xbf16, #tpu.memory_space<vmem>>, vector<8x16x4xbf16>
    %c0_97 = arith.constant 0 : index
    %c0_98 = arith.constant 0 : index
    %c56 = arith.constant 56 : index
    %128 = vector.load %arg9[%c0_97, %c0_98, %c56] : memref<8x16x96xbf16, #tpu.memory_space<vmem>>, vector<8x16x4xbf16>
    %c0_99 = arith.constant 0 : index
    %c0_100 = arith.constant 0 : index
    %c88 = arith.constant 88 : index
    %129 = vector.load %arg9[%c0_99, %c0_100, %c88] : memref<8x16x96xbf16, #tpu.memory_space<vmem>>, vector<8x16x4xbf16>
    "tpu.trace_start"() <{level = 10 : i32, message = "bnk,bmk->bnm"}> : () -> ()
    %cst_101 = arith.constant dense<0.000000e+00> : vector<8x16x16xf32>
    %130 = tpu.matmul %127, %128, %cst_101 {dimension_numbers = #tpu.dot_dimension_numbers<[2], [2], [1], [1], [0, 0, 0, 1, 1, 1], [0], [0]>} : vector<8x16x4xbf16>, vector<8x16x4xbf16>, vector<8x16x16xf32> -> vector<8x16x16xf32>
    "tpu.trace_stop"() : () -> ()
    %cst_102 = arith.constant dense<0xFF800000> : vector<8x16xf32>
    %131 = vector.multi_reduction <maximumf>, %130, %cst_102 [2] : vector<8x16x16xf32> to vector<8x16xf32>
    %132 = vector.shape_cast %131 : vector<8x16xf32> to vector<8x16x1xf32>
    %133 = vector.broadcast %132 : vector<8x16x1xf32> to vector<8x16x16xf32>
    %134 = arith.subf %130, %133 : vector<8x16x16xf32>
    %135 = math.exp %134 : vector<8x16x16xf32>
    %cst_103 = arith.constant dense<0.000000e+00> : vector<8x16xf32>
    %136 = vector.multi_reduction <add>, %135, %cst_103 [2] : vector<8x16x16xf32> to vector<8x16xf32>
    %137 = vector.shape_cast %136 : vector<8x16xf32> to vector<8x16x1xf32>
    %138 = tpu.reciprocal %137 {approx = true} : vector<8x16x1xf32> -> vector<8x16x1xf32>
    %139 = vector.broadcast %138 : vector<8x16x1xf32> to vector<8x16x16xf32>
    %140 = arith.mulf %135, %139 : vector<8x16x16xf32>
    %141 = arith.truncf %140 : vector<8x16x16xf32> to vector<8x16x16xbf16>
    "tpu.trace_start"() <{level = 10 : i32, message = "bnm,bmk->bnk"}> : () -> ()
    %cst_104 = arith.constant dense<0.000000e+00> : vector<8x16x4xf32>
    %142 = tpu.matmul %141, %129, %cst_104 {dimension_numbers = #tpu.dot_dimension_numbers<[2], [1], [1], [2], [0, 0, 0, 1, 1, 2], [0], [0]>} : vector<8x16x16xbf16>, vector<8x16x4xbf16>, vector<8x16x4xf32> -> vector<8x16x4xf32>
    "tpu.trace_stop"() : () -> ()
    %143 = arith.truncf %142 : vector<8x16x4xf32> to vector<8x16x4xbf16>
    %c0_105 = arith.constant 0 : index
    %c0_106 = arith.constant 0 : index
    %c24_107 = arith.constant 24 : index
    %144 = vector.load %arg10[%c0_105, %c0_106, %c24_107] : memref<8x16x32xbf16, #tpu.memory_space<vmem>>, vector<8x16x4xbf16>
    tpu.vector_store %arg10[%c0_105, %c0_106, %c24_107], %143 {strides = array<i32>} : memref<8x16x32xbf16, #tpu.memory_space<vmem>>, vector<8x16x4xbf16>,
    %c0_108 = arith.constant 0 : index
    %c0_109 = arith.constant 0 : index
    %c28 = arith.constant 28 : index
    %145 = vector.load %arg9[%c0_108, %c0_109, %c28] : memref<8x16x96xbf16, #tpu.memory_space<vmem>>, vector<8x16x4xbf16>
    %c0_110 = arith.constant 0 : index
    %c0_111 = arith.constant 0 : index
    %c60 = arith.constant 60 : index
    %146 = vector.load %arg9[%c0_110, %c0_111, %c60] : memref<8x16x96xbf16, #tpu.memory_space<vmem>>, vector<8x16x4xbf16>
    %c0_112 = arith.constant 0 : index
    %c0_113 = arith.constant 0 : index
    %c92 = arith.constant 92 : index
    %147 = vector.load %arg9[%c0_112, %c0_113, %c92] : memref<8x16x96xbf16, #tpu.memory_space<vmem>>, vector<8x16x4xbf16>
    "tpu.trace_start"() <{level = 10 : i32, message = "bnk,bmk->bnm"}> : () -> ()
    %cst_114 = arith.constant dense<0.000000e+00> : vector<8x16x16xf32>
    %148 = tpu.matmul %145, %146, %cst_114 {dimension_numbers = #tpu.dot_dimension_numbers<[2], [2], [1], [1], [0, 0, 0, 1, 1, 1], [0], [0]>} : vector<8x16x4xbf16>, vector<8x16x4xbf16>, vector<8x16x16xf32> -> vector<8x16x16xf32>
    "tpu.trace_stop"() : () -> ()
    %cst_115 = arith.constant dense<0xFF800000> : vector<8x16xf32>
    %149 = vector.multi_reduction <maximumf>, %148, %cst_115 [2] : vector<8x16x16xf32> to vector<8x16xf32>
    %150 = vector.shape_cast %149 : vector<8x16xf32> to vector<8x16x1xf32>
    %151 = vector.broadcast %150 : vector<8x16x1xf32> to vector<8x16x16xf32>
    %152 = arith.subf %148, %151 : vector<8x16x16xf32>
    %153 = math.exp %152 : vector<8x16x16xf32>
    %cst_116 = arith.constant dense<0.000000e+00> : vector<8x16xf32>
    %154 = vector.multi_reduction <add>, %153, %cst_116 [2] : vector<8x16x16xf32> to vector<8x16xf32>
    %155 = vector.shape_cast %154 : vector<8x16xf32> to vector<8x16x1xf32>
    %156 = tpu.reciprocal %155 {approx = true} : vector<8x16x1xf32> -> vector<8x16x1xf32>
    %157 = vector.broadcast %156 : vector<8x16x1xf32> to vector<8x16x16xf32>
    %158 = arith.mulf %153, %157 : vector<8x16x16xf32>
    %159 = arith.truncf %158 : vector<8x16x16xf32> to vector<8x16x16xbf16>
    "tpu.trace_start"() <{level = 10 : i32, message = "bnm,bmk->bnk"}> : () -> ()
    %cst_117 = arith.constant dense<0.000000e+00> : vector<8x16x4xf32>
    %160 = tpu.matmul %159, %147, %cst_117 {dimension_numbers = #tpu.dot_dimension_numbers<[2], [1], [1], [2], [0, 0, 0, 1, 1, 2], [0], [0]>} : vector<8x16x16xbf16>, vector<8x16x4xbf16>, vector<8x16x4xf32> -> vector<8x16x4xf32>
    "tpu.trace_stop"() : () -> ()
    %161 = arith.truncf %160 : vector<8x16x4xf32> to vector<8x16x4xbf16>
    %c0_118 = arith.constant 0 : index
    %c0_119 = arith.constant 0 : index
    %c28_120 = arith.constant 28 : index
    %162 = vector.load %arg10[%c0_118, %c0_119, %c28_120] : memref<8x16x32xbf16, #tpu.memory_space<vmem>>, vector<8x16x4xbf16>
    tpu.vector_store %arg10[%c0_118, %c0_119, %c28_120], %161 {strides = array<i32>} : memref<8x16x32xbf16, #tpu.memory_space<vmem>>, vector<8x16x4xbf16>,
    %c0_121 = arith.constant 0 : index
    %c0_122 = arith.constant 0 : index
    %c0_123 = arith.constant 0 : index
    %163 = vector.load %arg10[%c0_121, %c0_122, %c0_123] : memref<8x16x32xbf16, #tpu.memory_space<vmem>>, vector<8x16x32xbf16>
    %164 = vector.shape_cast %163 : vector<8x16x32xbf16> to vector<128x32xbf16>
    %c0_124 = arith.constant 0 : index
    %c0_125 = arith.constant 0 : index
    %165 = vector.load %arg6[%c0_124, %c0_125] : memref<32x32xbf16, #tpu.memory_space<vmem>>, vector<32x32xbf16>
    %cst_126 = arith.constant dense<0.000000e+00> : vector<128x32xf32>
    %166 = tpu.matmul %164, %165, %cst_126 {dimension_numbers = #tpu.dot_dimension_numbers<[1], [0], [0], [1], [0, 0, 1, 1], [], []>} : vector<128x32xbf16>, vector<32x32xbf16>, vector<128x32xf32> -> vector<128x32xf32>
    %c0_127 = arith.constant 0 : index
    %c0_128 = arith.constant 0 : index
    %167 = vector.load %arg7[%c0_127, %c0_128] : memref<1x32xf32, #tpu.memory_space<vmem>>, vector<1x32xf32>
    %168 = vector.broadcast %167 : vector<1x32xf32> to vector<128x32xf32>
    %169 = arith.addf %166, %168 : vector<128x32xf32>
    %cst_129 = arith.constant 0.000000e+00 : f32
    %170 = vector.broadcast %cst_129 : f32 to vector<128x32xf32>
    %171 = arith.maximumf %169, %170 : vector<128x32xf32>
    %172 = vector.shape_cast %171 : vector<128x32xf32> to vector<8x16x32xf32>
    %c0_130 = arith.constant 0 : index
    %c0_131 = arith.constant 0 : index
    %c0_132 = arith.constant 0 : index
    %173 = vector.load %arg8[%c0_130, %c0_131, %c0_132] : memref<8x16x32xf32, #tpu.memory_space<vmem>>, vector<8x16x32xf32>
    tpu.vector_store %arg8[%c0_130, %c0_131, %c0_132], %172 {strides = array<i32>} : memref<8x16x32xf32, #tpu.memory_space<vmem>>, vector<8x16x32xf32>,
    return
  }
  func.func @transform_0(%arg0: i32) -> (i32, i32, i32) {
    %c0_i32 = arith.constant 0 : i32
    %c0_i32_0 = arith.constant 0 : i32
    %c0_i32_1 = arith.constant 0 : i32
    return %arg0, %c0_i32, %c0_i32_0 : i32, i32, i32
  }
  func.func @transform_1(%arg0: i32) -> (i32, i32, i32) {
    %c0_i32 = arith.constant 0 : i32
    %c0_i32_0 = arith.constant 0 : i32
    %c0_i32_1 = arith.constant 0 : i32
    return %arg0, %c0_i32, %c0_i32_0 : i32, i32, i32
  }
  func.func @transform_2(%arg0: i32) -> (i32, i32) {
    %c0_i32 = arith.constant 0 : i32
    %c0_i32_0 = arith.constant 0 : i32
    %c0_i32_1 = arith.constant 0 : i32
    return %c0_i32, %c0_i32_0 : i32, i32
  }
  func.func @transform_3(%arg0: i32) -> (i32, i32) {
    %c0_i32 = arith.constant 0 : i32
    %c0_i32_0 = arith.constant 0 : i32
    %c0_i32_1 = arith.constant 0 : i32
    return %c0_i32, %c0_i32_0 : i32, i32
  }
  func.func @transform_4(%arg0: i32) -> (i32, i32) {
    %c0_i32 = arith.constant 0 : i32
    %c0_i32_0 = arith.constant 0 : i32
    %c0_i32_1 = arith.constant 0 : i32
    return %c0_i32, %c0_i32_0 : i32, i32
  }
  func.func @transform_5(%arg0: i32) -> (i32, i32) {
    %c0_i32 = arith.constant 0 : i32
    %c0_i32_0 = arith.constant 0 : i32
    %c0_i32_1 = arith.constant 0 : i32
    return %c0_i32, %c0_i32_0 : i32, i32
  }
  func.func @transform_6(%arg0: i32) -> (i32, i32) {
    %c0_i32 = arith.constant 0 : i32
    %c0_i32_0 = arith.constant 0 : i32
    %c0_i32_1 = arith.constant 0 : i32
    return %c0_i32, %c0_i32_0 : i32, i32
  }
  func.func @transform_7(%arg0: i32) -> (i32, i32, i32) {
    %c0_i32 = arith.constant 0 : i32
    %c0_i32_0 = arith.constant 0 : i32
    %c0_i32_1 = arith.constant 0 : i32
    return %arg0, %c0_i32, %c0_i32_0 : i32, i32, i32
  }
}

</mosaic_0001>

<llo_original>
// kernel: tpu_custom_call.1
$region0: #{tpu_custom_call.1}
  #allocation0 [shape = 'u32[]', space=smem, size = 0x4, offset = 0x4, fixed_abs, tag = 'smem constant byte address 0x4 - core index']
  #allocation1 [shape = 'u32[144,128]{1,0:T(1,128)}', space=vmem, size = 0x12000, scoped, tag = 'internal scratch']
  #allocation2 [shape = 'bf16[8,16,96]{2,1,0:T(16,128)(2,1)}', space=vmem, size = 0x8000, scoped, tag = 'scratch operand']
  #allocation3 [shape = 'bf16[8,16,32]{2,1,0:T(16,128)(2,1)}', space=vmem, size = 0x8000, scoped, tag = 'scratch operand']
  %s0 = inlined_call_operand.hbm [shape: f32[16,16,32], index: 0, kind: input, shape index: {}]
  %s1 = inlined_call_operand.hbm [shape: f32[16,16,32], index: 1, kind: input, shape index: {}]
  %s2 = inlined_call_operand.hbm [shape: bf16[32,96], index: 2, kind: input, shape index: {}]
  %s3 = inlined_call_operand.hbm [shape: bf16[32,96], index: 3, kind: input, shape index: {}]
  %s4 = inlined_call_operand.vmem [shape: f32[1,96], index: 4, kind: input, shape index: {}]
  %s5 = inlined_call_operand.vmem [shape: bf16[32,32], index: 5, kind: input, shape index: {}]
  %s6 = inlined_call_operand.vmem [shape: f32[1,32], index: 6, kind: input, shape index: {}]
  %s7 = inlined_call_operand.hbm [shape: f32[16,16,32], index: 7, kind: output, shape index: {}]
  %s8 = sld [smem:[#allocation0]]
  $region77: #{tpu_custom_call.1} parent=0
    _
  %s10 = ssub.s32 1, %s8
  %s11 = scalar_select 0, %s10, %s8
  $region1: #{tpu_custom_call.1} parent=0
    #allocation4 [shape = 'u8[131072]{0}', space=vmem, size = 0x20000, scoped, tag = 'input window, operand 0']
    #allocation5 [shape = 's32[2]{0}', space=sflag, size = 0x8, scoped, tag = 'scoped memory for tpu_custom_call.1']
    #allocation6 [shape = 's32[2]{0}', space=sflag, size = 0x8, scoped, tag = 'scoped memory for tpu_custom_call.1']
    #allocation7 [shape = 'u8[131072]{0}', space=vmem, size = 0x20000, scoped, tag = 'input window, operand 1']
    #allocation8 [shape = 's32[2]{0}', space=sflag, size = 0x8, scoped, tag = 'scoped memory for tpu_custom_call.1']
    #allocation9 [shape = 'u8[8192]{0}', space=vmem, size = 0x2000, scoped, tag = 'input window, operand 2, single buffered']
    #allocation10 [shape = 'u8[8192]{0}', space=vmem, size = 0x2000, scoped, tag = 'input window, operand 3, single buffered']
    #allocation11 [shape = 's32[1]{0}', space=sflag, size = 0x4, scoped, tag = 'scoped memory for tpu_custom_call.1']
    #allocation12 [shape = 'u8[131072]{0}', space=vmem, size = 0x20000, scoped, tag = 'output window, operand 0']
    %12 = vsyncpa [#allocation5], 0
    %s13 = scalar_lea.sflag [#allocation5], 1
    %14 = vsyncpa %s13, 0
    %15 = vsyncpa [#allocation8], 0
    %s16 = scalar_lea.sflag [#allocation8], 1
    %17 = vsyncpa %s16, 0
    %18 = vsyncpa [#allocation11], 0
    %19 = vsyncpa [#allocation6], 0
    %s20 = scalar_lea.sflag [#allocation6], 1
    %21 = vsyncpa %s20, 0
    loop: start=0, step=1, limit=4
    $region2: #{tpu_custom_call.1} parent=1 // loop_pre_header
      _
    $region3: #{tpu_custom_call.1} parent=1 // loop_header
      %s23 = sphi 0, %s27
      %p24 = scmp.ge.s32.totalorder %s23, 4
      %s33 = sphi 0, %s35
      %s36 = sphi 0, %s33
      %s37 = sphi 0, %s36
      %s53 = sphi 0, %s37
      %s59 = sphi 0, %s61
      %s62 = sphi 0, %s59
      %s63 = sphi 0, %s62
      %s79 = sphi 0, %s63
      %s83 = sphi 0, %s83
      %s85 = sphi 0, %s83
      %s86 = sphi 0, %s85
      %s100 = sphi 0, %s86
      %s104 = sphi 0, %s104
      %s106 = sphi 0, %s104
      %s107 = sphi 0, %s106
      %s121 = sphi 0, %s107
      %s125 = sphi 0, %s125
      %s127 = sphi 0, %s125
      %s128 = sphi 0, %s127
      %s142 = sphi 0, %s128
      %s146 = sphi 0, %s146
      %s148 = sphi 0, %s146
      %s149 = sphi 0, %s148
      %s163 = sphi 0, %s149
      %s167 = sphi 0, %s167
      %s169 = sphi 0, %s167
      %s170 = sphi 0, %s169
      %s184 = sphi 0, %s170
      %s190 = sphi 0, %s192
      %s193 = sphi 0, %s190
      %s194 = sphi 0, %s193
      %s210 = sphi 0, %s194
    $region4: #{tpu_custom_call.1} parent=1 // loop_header_branch
      %26 = sbr.rel (%p24) target = $region8
    $region5: #{tpu_custom_call.1} parent=1 // loop_body
      %s28 = ssub.s32 %s23, 1
      %s29 = ssub.s32 %s23, 2
      %s30 = sadd.s32 %s23, 1
      %s31 = ssub.s32 %s23, %s30
      %p32 = scmp.eq.s32.totalorder %s31, 0
      %s34 = sadd.s32 %s33, 1
      %s35 = scalar_select %p32, %s33, %s34
      %p38 = pneg %p32
      %p39 = scmp.eq.s32.totalorder %s23, 1
      %p40 = por %p38, %p39
      %p41 = scmp.ne.s32.totalorder %s33, %s36
      %p42 = scmp.eq.s32.totalorder %s23, 0
      %p43 = por %p41, %p42
      %p44 = scmp.ne.s32.totalorder %s33, %s36
      %p45 = scmp.eq.s32.totalorder %s28, 1
      %p46 = por %p44, %p45
      %p47 = scmp.ne.s32.totalorder %s36, %s37
      %p48 = scmp.eq.s32.totalorder %s28, 0
      %p49 = por %p47, %p48
      %p50 = scmp.ne.s32.totalorder %s36, %s37
      %p51 = scmp.eq.s32.totalorder %s29, 1
      %p52 = por %p50, %p51
      %p54 = scmp.ne.s32.totalorder %s37, %s53
      %p55 = scmp.eq.s32.totalorder %s29, 0
      %p56 = por %p54, %p55
      %s57 = ssub.s32 %s23, %s30
      %p58 = scmp.eq.s32.totalorder %s57, 0
      %s60 = sadd.s32 %s59, 1
      %s61 = scalar_select %p58, %s59, %s60
      %p64 = pneg %p58
      %p65 = scmp.eq.s32.totalorder %s23, 1
      %p66 = por %p64, %p65
      %p67 = scmp.ne.s32.totalorder %s59, %s62
      %p68 = scmp.eq.s32.totalorder %s23, 0
      %p69 = por %p67, %p68
      %p70 = scmp.ne.s32.totalorder %s59, %s62
      %p71 = scmp.eq.s32.totalorder %s28, 1
      %p72 = por %p70, %p71
      %p73 = scmp.ne.s32.totalorder %s62, %s63
      %p74 = scmp.eq.s32.totalorder %s28, 0
      %p75 = por %p73, %p74
      %p76 = scmp.ne.s32.totalorder %s62, %s63
      %p77 = scmp.eq.s32.totalorder %s29, 1
      %p78 = por %p76, %p77
      %p80 = scmp.ne.s32.totalorder %s63, %s79
      %p81 = scmp.eq.s32.totalorder %s29, 0
      %p82 = por %p80, %p81
      %s84 = sadd.s32 %s83, 1
      %p87 = scmp.eq.s32.totalorder %s23, 1
      %p88 = scmp.ne.s32.totalorder %s83, %s85
      %p89 = scmp.eq.s32.totalorder %s23, 0
      %p90 = por %p88, %p89
      %p91 = scmp.ne.s32.totalorder %s83, %s85
      %p92 = scmp.eq.s32.totalorder %s28, 1
      %p93 = por %p91, %p92
      %p94 = scmp.ne.s32.totalorder %s85, %s86
      %p95 = scmp.eq.s32.totalorder %s28, 0
      %p96 = por %p94, %p95
      %p97 = scmp.ne.s32.totalorder %s85, %s86
      %p98 = scmp.eq.s32.totalorder %s29, 1
      %p99 = por %p97, %p98
      %p101 = scmp.ne.s32.totalorder %s86, %s100
      %p102 = scmp.eq.s32.totalorder %s29, 0
      %p103 = por %p101, %p102
      %s105 = sadd.s32 %s104, 1
      %p108 = scmp.eq.s32.totalorder %s23, 1
      %p109 = scmp.ne.s32.totalorder %s104, %s106
      %p110 = scmp.eq.s32.totalorder %s23, 0
      %p111 = por %p109, %p110
      %p112 = scmp.ne.s32.totalorder %s104, %s106
      %p113 = scmp.eq.s32.totalorder %s28, 1
      %p114 = por %p112, %p113
      %p115 = scmp.ne.s32.totalorder %s106, %s107
      %p116 = scmp.eq.s32.totalorder %s28, 0
      %p117 = por %p115, %p116
      %p118 = scmp.ne.s32.totalorder %s106, %s107
      %p119 = scmp.eq.s32.totalorder %s29, 1
      %p120 = por %p118, %p119
      %p122 = scmp.ne.s32.totalorder %s107, %s121
      %p123 = scmp.eq.s32.totalorder %s29, 0
      %p124 = por %p122, %p123
      %s126 = sadd.s32 %s125, 1
      %p129 = scmp.eq.s32.totalorder %s23, 1
      %p130 = scmp.ne.s32.totalorder %s125, %s127
      %p131 = scmp.eq.s32.totalorder %s23, 0
      %p132 = por %p130, %p131
      %p133 = scmp.ne.s32.totalorder %s125, %s127
      %p134 = scmp.eq.s32.totalorder %s28, 1
      %p135 = por %p133, %p134
      %p136 = scmp.ne.s32.totalorder %s127, %s128
      %p137 = scmp.eq.s32.totalorder %s28, 0
      %p138 = por %p136, %p137
      %p139 = scmp.ne.s32.totalorder %s127, %s128
      %p140 = scmp.eq.s32.totalorder %s29, 1
      %p141 = por %p139, %p140
      %p143 = scmp.ne.s32.totalorder %s128, %s142
      %p144 = scmp.eq.s32.totalorder %s29, 0
      %p145 = por %p143, %p144
      %s147 = sadd.s32 %s146, 1
      %p150 = scmp.eq.s32.totalorder %s23, 1
      %p151 = scmp.ne.s32.totalorder %s146, %s148
      %p152 = scmp.eq.s32.totalorder %s23, 0
      %p153 = por %p151, %p152
      %p154 = scmp.ne.s32.totalorder %s146, %s148
      %p155 = scmp.eq.s32.totalorder %s28, 1
      %p156 = por %p154, %p155
      %p157 = scmp.ne.s32.totalorder %s148, %s149
      %p158 = scmp.eq.s32.totalorder %s28, 0
      %p159 = por %p157, %p158
      %p160 = scmp.ne.s32.totalorder %s148, %s149
      %p161 = scmp.eq.s32.totalorder %s29, 1
      %p162 = por %p160, %p161
      %p164 = scmp.ne.s32.totalorder %s149, %s163
      %p165 = scmp.eq.s32.totalorder %s29, 0
      %p166 = por %p164, %p165
      %s168 = sadd.s32 %s167, 1
      %p171 = scmp.eq.s32.totalorder %s23, 1
      %p172 = scmp.ne.s32.totalorder %s167, %s169
      %p173 = scmp.eq.s32.totalorder %s23, 0
      %p174 = por %p172, %p173
      %p175 = scmp.ne.s32.totalorder %s167, %s169
      %p176 = scmp.eq.s32.totalorder %s28, 1
      %p177 = por %p175, %p176
      %p178 = scmp.ne.s32.totalorder %s169, %s170
      %p179 = scmp.eq.s32.totalorder %s28, 0
      %p180 = por %p178, %p179
      %p181 = scmp.ne.s32.totalorder %s169, %s170
      %p182 = scmp.eq.s32.totalorder %s29, 1
      %p183 = por %p181, %p182
      %p185 = scmp.ne.s32.totalorder %s170, %s184
      %p186 = scmp.eq.s32.totalorder %s29, 0
      %p187 = por %p185, %p186
      %s188 = ssub.s32 %s23, %s30
      %p189 = scmp.eq.s32.totalorder %s188, 0
      %s191 = sadd.s32 %s190, 1
      %s192 = scalar_select %p189, %s190, %s191
      %p195 = pneg %p189
      %p196 = scmp.eq.s32.totalorder %s23, 1
      %p197 = por %p195, %p196
      %p198 = scmp.ne.s32.totalorder %s190, %s193
      %p199 = scmp.eq.s32.totalorder %s23, 0
      %p200 = por %p198, %p199
      %p201 = scmp.ne.s32.totalorder %s190, %s193
      %p202 = scmp.eq.s32.totalorder %s28, 1
      %p203 = por %p201, %p202
      %p204 = scmp.ne.s32.totalorder %s193, %s194
      %p205 = scmp.eq.s32.totalorder %s28, 0
      %p206 = por %p204, %p205
      %p207 = scmp.ne.s32.totalorder %s193, %s194
      %p208 = scmp.eq.s32.totalorder %s29, 1
      %p209 = por %p207, %p208
      %p211 = scmp.ne.s32.totalorder %s194, %s210
      %p212 = scmp.eq.s32.totalorder %s29, 0
      %p213 = por %p211, %p212
      %p214 = scmp.le.s32.totalorder 1, %s23
      %p215 = scmp.lt.s32.totalorder %s23, 3
      %p216 = pnand %p214, %p215
      %p217 = pneg %p216
      // Predicated region
      $region9: #{tpu_custom_call.1} parent=5 // pred_check
        _
      $region10: #{tpu_custom_call.1} parent=5 // pred_check_branch
        %219 = sbr.rel (%p216) target = $region12
      $region11: #{tpu_custom_call.1} parent=5 // pred_region
        %s220 = ssub.s32 %s23, 1
        // Predicated region
        $region13: #{tpu_custom_call.1} parent=11 // pred_check
          %p221 = pneg %p96
        $region14: #{tpu_custom_call.1} parent=11 // pred_check_branch
          %223 = sbr.rel (%p221) target = $region16
        $region15: #{tpu_custom_call.1} parent=11 // pred_region
          %s225 = ssub.s32 256, 256
          %226 = vsyncadd [#allocation8], %s225
          %s227 = sshll.u32 [#allocation9], 4
          %s228 = int_to_ptr.vmem [resolvable:$true] %s227
          %233 = dma.hbm_to_vmem [thread:$0]  %s2, 256, %s228, [#allocation8], 64, 64, 4
        $region16: #{tpu_custom_call.1} parent=11 // pred_fallthru
          _
        // Predicated region
        $region17: #{tpu_custom_call.1} parent=11 // pred_check
          %p234 = pneg %p117
        $region18: #{tpu_custom_call.1} parent=11 // pred_check_branch
          %236 = sbr.rel (%p234) target = $region20
        $region19: #{tpu_custom_call.1} parent=11 // pred_region
          %s238 = ssub.s32 256, 256
          %239 = vsyncadd [#allocation11], %s238
          %s240 = sshll.u32 [#allocation10], 4
          %s241 = int_to_ptr.vmem [resolvable:$true] %s240
          %246 = dma.hbm_to_vmem [thread:$0]  %s3, 256, %s241, [#allocation11], 64, 64, 4
        $region20: #{tpu_custom_call.1} parent=11 // pred_fallthru
          _
        // Predicated region
        $region21: #{tpu_custom_call.1} parent=11 // pred_check
          %p247 = pneg %p138
        $region22: #{tpu_custom_call.1} parent=11 // pred_check_branch
          %249 = sbr.rel (%p247) target = $region24
        $region23: #{tpu_custom_call.1} parent=11 // pred_region
          _
        $region24: #{tpu_custom_call.1} parent=11 // pred_fallthru
          _
        // Predicated region
        $region25: #{tpu_custom_call.1} parent=11 // pred_check
          %p250 = pneg %p159
        $region26: #{tpu_custom_call.1} parent=11 // pred_check_branch
          %252 = sbr.rel (%p250) target = $region28
        $region27: #{tpu_custom_call.1} parent=11 // pred_region
          _
        $region28: #{tpu_custom_call.1} parent=11 // pred_fallthru
          _
        // Predicated region
        $region29: #{tpu_custom_call.1} parent=11 // pred_check
          %p253 = pneg %p180
        $region30: #{tpu_custom_call.1} parent=11 // pred_check_branch
          %255 = sbr.rel (%p253) target = $region32
        $region31: #{tpu_custom_call.1} parent=11 // pred_region
          _
        $region32: #{tpu_custom_call.1} parent=11 // pred_fallthru
          _
      $region12: #{tpu_custom_call.1} parent=5 // pred_fallthru
        _
      %p256 = scmp.lt.s32.totalorder %s23, 2
      // Predicated region
      $region33: #{tpu_custom_call.1} parent=5 // pred_check
        %p257 = pneg %p256
      $region34: #{tpu_custom_call.1} parent=5 // pred_check_branch
        %259 = sbr.rel (%p257) target = $region36
      $region35: #{tpu_custom_call.1} parent=5 // pred_region
        // Predicated region
        $region37: #{tpu_custom_call.1} parent=35 // pred_check
          %p260 = pneg %p43
        $region38: #{tpu_custom_call.1} parent=35 // pred_check_branch
          %262 = sbr.rel (%p260) target = $region40
        $region39: #{tpu_custom_call.1} parent=35 // pred_region
          %s263 = sand.u32 %s33, 1
          %s264 = scalar_lea.sflag [#allocation5], %s263
          %s265 = sand.u32 %s33, 1
          %s266 = smul.addr %s265, 128
          %s267 = scalar_lea.vmem [#allocation4], %s266
          %s268 = smul.u32 8, %s23
          %s270 = ssub.s32 2048, 2048
          %271 = vsyncadd %s264, %s270
          %s272 = smul.addr %s268, 2
          %s273 = smul.addr %s272, 128
          %s274 = scalar_lea.hbm %s0, %s273
          %s275 = sshll.u32 %s267, 4
          %s276 = int_to_ptr.vmem [resolvable:$true] %s275
          %281 = dma.hbm_to_vmem [thread:$0]  %s274, 2048, %s276, %s264, 128, 128, 8
        $region40: #{tpu_custom_call.1} parent=35 // pred_fallthru
          _
        // Predicated region
        $region41: #{tpu_custom_call.1} parent=35 // pred_check
          %p282 = pneg %p69
        $region42: #{tpu_custom_call.1} parent=35 // pred_check_branch
          %284 = sbr.rel (%p282) target = $region44
        $region43: #{tpu_custom_call.1} parent=35 // pred_region
          %s285 = sand.u32 %s23, 1
          %s286 = scalar_lea.sflag [#allocation8], %s285
          %s287 = sand.u32 %s59, 1
          %s288 = smul.addr %s287, 128
          %s289 = scalar_lea.vmem [#allocation7], %s288
          %s290 = smul.u32 8, %s23
          %s292 = ssub.s32 2048, 2048
          %293 = vsyncadd %s286, %s292
          %s294 = smul.addr %s290, 2
          %s295 = smul.addr %s294, 128
          %s296 = scalar_lea.hbm %s1, %s295
          %s297 = sshll.u32 %s289, 4
          %s298 = int_to_ptr.vmem [resolvable:$true] %s297
          %303 = dma.hbm_to_vmem [thread:$0]  %s296, 2048, %s298, %s286, 128, 128, 8
        $region44: #{tpu_custom_call.1} parent=35 // pred_fallthru
          _
      $region36: #{tpu_custom_call.1} parent=5 // pred_fallthru
        _
      %p304 = scmp.le.s32.totalorder 1, %s23
      %p305 = scmp.lt.s32.totalorder %s23, 3
      %p306 = pnand %p304, %p305
      %p307 = pneg %p306
      // Predicated region
      $region45: #{tpu_custom_call.1} parent=5 // pred_check
        _
      $region46: #{tpu_custom_call.1} parent=5 // pred_check_branch
        %309 = sbr.rel (%p306) target = $region48
      $region47: #{tpu_custom_call.1} parent=5 // pred_region
        %s310 = ssub.s32 %s23, 1
        %s311 = sand.u32 %s36, 1
        %s312 = scalar_lea.sflag [#allocation5], %s311
        %s313 = sand.u32 %s36, 1
        %s314 = smul.addr %s313, 128
        %s315 = scalar_lea.vmem [#allocation4], %s314
        // Predicated region
        $region49: #{tpu_custom_call.1} parent=47 // pred_check
          %p316 = pneg %p49
        $region50: #{tpu_custom_call.1} parent=47 // pred_check_branch
          %318 = sbr.rel (%p316) target = $region52
        $region51: #{tpu_custom_call.1} parent=47 // pred_region
          %319 = dma.done %s312, 2048
        $region52: #{tpu_custom_call.1} parent=47 // pred_fallthru
          _
        %s320 = sand.u32 %s28, 1
        %s321 = scalar_lea.sflag [#allocation8], %s320
        %s322 = sand.u32 %s62, 1
        %s323 = smul.addr %s322, 128
        %s324 = scalar_lea.vmem [#allocation7], %s323
        // Predicated region
        $region53: #{tpu_custom_call.1} parent=47 // pred_check
          %p325 = pneg %p75
        $region54: #{tpu_custom_call.1} parent=47 // pred_check_branch
          %327 = sbr.rel (%p325) target = $region56
        $region55: #{tpu_custom_call.1} parent=47 // pred_region
          %328 = dma.done %s321, 2048
        $region56: #{tpu_custom_call.1} parent=47 // pred_fallthru
          _
        // Predicated region
        $region57: #{tpu_custom_call.1} parent=47 // pred_check
          %p329 = pneg %p96
        $region58: #{tpu_custom_call.1} parent=47 // pred_check_branch
          %331 = sbr.rel (%p329) target = $region60
        $region59: #{tpu_custom_call.1} parent=47 // pred_region
          %332 = dma.done [#allocation8], 256
        $region60: #{tpu_custom_call.1} parent=47 // pred_fallthru
          _
        // Predicated region
        $region61: #{tpu_custom_call.1} parent=47 // pred_check
          %p333 = pneg %p117
        $region62: #{tpu_custom_call.1} parent=47 // pred_check_branch
          %335 = sbr.rel (%p333) target = $region64
        $region63: #{tpu_custom_call.1} parent=47 // pred_region
          %336 = dma.done [#allocation11], 256
        $region64: #{tpu_custom_call.1} parent=47 // pred_fallthru
          _
        %s337 = sand.u32 %s36, 1
        %s338 = scalar_lea.sflag [#allocation5], %s337
        %s339 = sand.u32 %s36, 1
        %s340 = smul.addr %s339, 128
        %s341 = scalar_lea.vmem [#allocation4], %s340
        %p342 = pneg %p49
        %p343 = pneg %p46
        %s344 = sand.u32 %s28, 1
        %s345 = scalar_lea.sflag [#allocation8], %s344
        %s346 = sand.u32 %s62, 1
        %s347 = smul.addr %s346, 128
        %s348 = scalar_lea.vmem [#allocation7], %s347
        %p349 = pneg %p75
        %p350 = pneg %p72
        %p351 = pneg %p96
        %p352 = pneg %p93
        %p353 = pneg %p117
        %p354 = pneg %p114
        %p355 = pneg %p138
        %p356 = pneg %p135
        %p357 = pneg %p159
        %p358 = pneg %p156
        %p359 = pneg %p180
        %p360 = pneg %p177
        %p361 = pneg %p206
        %p362 = pneg %p203
        %s363 = sand.u32 %s193, 1
        %s364 = scalar_lea.sflag [#allocation6], %s363
        %s365 = sand.u32 %s193, 1
        %s366 = smul.addr %s365, 128
        %s367 = scalar_lea.vmem [#allocation12], %s366
        %s368 = smul.u32 8, %s28
        %s369 = smul.u32 8, %s28
        %s370 = smul.u32 8, %s28
        %v372 = vld [vmem:[%s315] sm:$0xff]
        %v373 = vld [vmem:[%s315 + $0x8] sm:$0xff]
        %v374 = vld [vmem:[%s315 + $0x10] sm:$0xff]
        %v375 = vld [vmem:[%s315 + $0x18] sm:$0xff]
        %v376 = vld [vmem:[%s315 + $0x20] sm:$0xff]
        %v377 = vld [vmem:[%s315 + $0x28] sm:$0xff]
        %v378 = vld [vmem:[%s315 + $0x30] sm:$0xff]
        %v379 = vld [vmem:[%s315 + $0x38] sm:$0xff]
        %v380 = vld [vmem:[%s315 + $0x40] sm:$0xff]
        %v381 = vld [vmem:[%s315 + $0x48] sm:$0xff]
        %v382 = vld [vmem:[%s315 + $0x50] sm:$0xff]
        %v383 = vld [vmem:[%s315 + $0x58] sm:$0xff]
        %v384 = vld [vmem:[%s315 + $0x60] sm:$0xff]
        %v385 = vld [vmem:[%s315 + $0x68] sm:$0xff]
        %v386 = vld [vmem:[%s315 + $0x70] sm:$0xff]
        %v387 = vld [vmem:[%s315 + $0x78] sm:$0xff]
        %v388 = vpack.c.bf16 %v373, %v372
        %v389 = vpack.c.bf16 %v375, %v374
        %v390 = vpack.c.bf16 %v377, %v376
        %v391 = vpack.c.bf16 %v379, %v378
        %v392 = vpack.c.bf16 %v381, %v380
        %v393 = vpack.c.bf16 %v383, %v382
        %v394 = vpack.c.bf16 %v385, %v384
        %v395 = vpack.c.bf16 %v387, %v386
        %v396 = vld [vmem:[%s324] sm:$0xff]
        %v397 = vld [vmem:[%s324 + $0x8] sm:$0xff]
        %v398 = vld [vmem:[%s324 + $0x10] sm:$0xff]
        %v399 = vld [vmem:[%s324 + $0x18] sm:$0xff]
        %v400 = vld [vmem:[%s324 + $0x20] sm:$0xff]
        %v401 = vld [vmem:[%s324 + $0x28] sm:$0xff]
        %v402 = vld [vmem:[%s324 + $0x30] sm:$0xff]
        %v403 = vld [vmem:[%s324 + $0x38] sm:$0xff]
        %v404 = vld [vmem:[%s324 + $0x40] sm:$0xff]
        %v405 = vld [vmem:[%s324 + $0x48] sm:$0xff]
        %v406 = vld [vmem:[%s324 + $0x50] sm:$0xff]
        %v407 = vld [vmem:[%s324 + $0x58] sm:$0xff]
        %v408 = vld [vmem:[%s324 + $0x60] sm:$0xff]
        %v409 = vld [vmem:[%s324 + $0x68] sm:$0xff]
        %v410 = vld [vmem:[%s324 + $0x70] sm:$0xff]
        %v411 = vld [vmem:[%s324 + $0x78] sm:$0xff]
        %v412 = vpack.c.bf16 %v397, %v396
        %v413 = vpack.c.bf16 %v399, %v398
        %v414 = vpack.c.bf16 %v401, %v400
        %v415 = vpack.c.bf16 %v403, %v402
        %v416 = vpack.c.bf16 %v405, %v404
        %v417 = vpack.c.bf16 %v407, %v406
        %v418 = vpack.c.bf16 %v409, %v408
        %v419 = vpack.c.bf16 %v411, %v410
        %v420 = vld [vmem:[#allocation9] sm:$0xf]
        %v421 = vld [vmem:[#allocation9 + $0x4] sm:$0xf]
        %v422 = vld [vmem:[#allocation9 + $0x8] sm:$0xf]
        %v423 = vld [vmem:[#allocation9 + $0xc] sm:$0xf]
        %v424 = vld [vmem:[#allocation10] sm:$0xf]
        %v425 = vld [vmem:[#allocation10 + $0x4] sm:$0xf]
        %v426 = vld [vmem:[#allocation10 + $0x8] sm:$0xf]
        %v427 = vld [vmem:[#allocation10 + $0xc] sm:$0xf]
        %v432 = vunpack.c.l.b16 %v424
        %v433 = vunpack.c.l.b16 %v425
        %v434 = vunpack.c.l.b16 %v426
        %v435 = vunpack.c.l.b16 %v427
        %v436 = vpack.c.b16 %v433, %v432
        %v437 = vpack.c.b16 %v435, %v434
        %vm440 = vcmask 261120
        %v442 = vsel %vm440, %v412, 0
        %v445 = vsel %vm440, %v413, 0
        %v448 = vsel %vm440, %v414, 0
        %v451 = vsel %vm440, %v415, 0
        %v454 = vsel %vm440, %v416, 0
        %v457 = vsel %vm440, %v417, 0
        %v460 = vsel %vm440, %v418, 0
        %v463 = vsel %vm440, %v419, 0
        %465 = vmatprep.subr.bf16.mxu0 0
        %466 = vmatpush1.bf16.msra.mxu0 %v436
        %467 = vmatprep.subr.bf16.mxu0 0
        %468 = vmatpush1.bf16.msra.mxu0 %v437
        %469 = vmatprep.subr.bf16.mxu0 0
        %470 = vmatpush1.bf16.msra.mxu0 0
        %471 = vmatprep.subr.bf16.mxu0 0
        %472 = vmatpush1.bf16.msra.mxu0 0
        %473 = vmatprep.subr.bf16.mxu0 0
        %474 = vmatpush1.bf16.msra.mxu0 0
        %475 = vmatprep.subr.bf16.mxu0 0
        %476 = vmatpush1.bf16.msra.mxu0 0
        %477 = vmatprep.subr.bf16.mxu0 0
        %478 = vmatpush1.bf16.msra.mxu0 0
        %479 = vmatprep.subr.bf16.mxu0 0
        %480 = vmatpush1.bf16.msra.mxu0 0
        %481 = vmatprep.subr.bf16.mxu0 0
        %482 = vmatpush1.bf16.msra.mxu0 0
        %483 = vmatprep.subr.bf16.mxu0 0
        %484 = vmatpush1.bf16.msra.mxu0 0
        %485 = vmatprep.subr.bf16.mxu0 0
        %486 = vmatpush1.bf16.msra.mxu0 0
        %487 = vmatprep.subr.bf16.mxu0 0
        %488 = vmatpush1.bf16.msra.mxu0 0
        %489 = vmatprep.subr.bf16.mxu0 0
        %490 = vmatpush1.bf16.msra.mxu0 0
        %491 = vmatprep.subr.bf16.mxu0 0
        %492 = vmatpush1.bf16.msra.mxu0 0
        %493 = vmatprep.subr.bf16.mxu0 0
        %494 = vmatpush1.bf16.msra.mxu0 0
        %495 = vmatprep.subr.bf16.mxu0 0
        %496 = vmatpush1.bf16.msra.mxu0 0
        %497 = vmatprep.mubr.bf16.mxu0 0
        %498 = vmatmul.mubr.bf16.gmra.mrb[0].mxu0 %v442
        %v499 = vpop.f32.mrb[0].mxu0
        %v500 = vadd.f32 0.0, %v499
        %v501 = vpop.f32.mrb[0].mxu0
        %v502 = vpop.f32.mrb[0].mxu0
        %v503 = vadd.f32 0.0, %v502
        %v504 = vpop.f32.mrb[0].mxu0
        %505 = vmatprep.mubr.bf16.mxu0 0
        %506 = vmatmul.mubr.bf16.gmra.mrb[0].mxu0 %v445
        %v507 = vpop.f32.mrb[0].mxu0
        %v508 = vadd.f32 0.0, %v507
        %v509 = vpop.f32.mrb[0].mxu0
        %v510 = vpop.f32.mrb[0].mxu0
        %v511 = vadd.f32 0.0, %v510
        %v512 = vpop.f32.mrb[0].mxu0
        %513 = vmatprep.mubr.bf16.mxu0 0
        %514 = vmatmul.mubr.bf16.gmra.mrb[0].mxu0 %v448
        %v515 = vpop.f32.mrb[0].mxu0
        %v516 = vadd.f32 0.0, %v515
        %v517 = vpop.f32.mrb[0].mxu0
        %v518 = vpop.f32.mrb[0].mxu0
        %v519 = vadd.f32 0.0, %v518
        %v520 = vpop.f32.mrb[0].mxu0
        %521 = vmatprep.mubr.bf16.mxu0 0
        %522 = vmatmul.mubr.bf16.gmra.mrb[0].mxu0 %v451
        %v523 = vpop.f32.mrb[0].mxu0
        %v524 = vadd.f32 0.0, %v523
        %v525 = vpop.f32.mrb[0].mxu0
        %v526 = vpop.f32.mrb[0].mxu0
        %v527 = vadd.f32 0.0, %v526
        %v528 = vpop.f32.mrb[0].mxu0
        %529 = vmatprep.mubr.bf16.mxu0 0
        %530 = vmatmul.mubr.bf16.gmra.mrb[0].mxu0 %v454
        %v531 = vpop.f32.mrb[0].mxu0
        %v532 = vadd.f32 0.0, %v531
        %v533 = vpop.f32.mrb[0].mxu0
        %v534 = vpop.f32.mrb[0].mxu0
        %v535 = vadd.f32 0.0, %v534
        %v536 = vpop.f32.mrb[0].mxu0
        %537 = vmatprep.mubr.bf16.mxu0 0
        %538 = vmatmul.mubr.bf16.gmra.mrb[0].mxu0 %v457
        %v539 = vpop.f32.mrb[0].mxu0
        %v540 = vadd.f32 0.0, %v539
        %v541 = vpop.f32.mrb[0].mxu0
        %v542 = vpop.f32.mrb[0].mxu0
        %v543 = vadd.f32 0.0, %v542
        %v544 = vpop.f32.mrb[0].mxu0
        %545 = vmatprep.mubr.bf16.mxu0 0
        %546 = vmatmul.mubr.bf16.gmra.mrb[0].mxu0 %v460
        %v547 = vpop.f32.mrb[0].mxu0
        %v548 = vadd.f32 0.0, %v547
        %v549 = vpop.f32.mrb[0].mxu0
        %v550 = vpop.f32.mrb[0].mxu0
        %v551 = vadd.f32 0.0, %v550
        %v552 = vpop.f32.mrb[0].mxu0
        %553 = vmatprep.mubr.bf16.mxu0 0
        %554 = vmatmul.mubr.bf16.gmra.mrb[0].mxu0 %v463
        %v555 = vpop.f32.mrb[0].mxu0
        %v556 = vadd.f32 0.0, %v555
        %v557 = vpop.f32.mrb[0].mxu0
        %v558 = vpop.f32.mrb[0].mxu0
        %v559 = vadd.f32 0.0, %v558
        %v560 = vpop.f32.mrb[0].mxu0
        %561 = vdwg.mxu0
        %v566 = vunpack.c.l.b16 %v420
        %v567 = vunpack.c.l.b16 %v421
        %v568 = vunpack.c.l.b16 %v422
        %v569 = vunpack.c.l.b16 %v423
        %v570 = vpack.c.b16 %v567, %v566
        %v571 = vpack.c.b16 %v569, %v568
        %v575 = vsel %vm440, %v388, 0
        %v578 = vsel %vm440, %v389, 0
        %v581 = vsel %vm440, %v390, 0
        %v584 = vsel %vm440, %v391, 0
        %v587 = vsel %vm440, %v392, 0
        %v590 = vsel %vm440, %v393, 0
        %v593 = vsel %vm440, %v394, 0
        %v596 = vsel %vm440, %v395, 0
        %598 = vmatprep.subr.bf16.mxu0 0
        %599 = vmatpush1.bf16.msra.mxu0 %v570
        %600 = vmatprep.subr.bf16.mxu0 0
        %601 = vmatpush1.bf16.msra.mxu0 %v571
        %602 = vmatprep.subr.bf16.mxu0 0
        %603 = vmatpush1.bf16.msra.mxu0 0
        %604 = vmatprep.subr.bf16.mxu0 0
        %605 = vmatpush1.bf16.msra.mxu0 0
        %606 = vmatprep.subr.bf16.mxu0 0
        %607 = vmatpush1.bf16.msra.mxu0 0
        %608 = vmatprep.subr.bf16.mxu0 0
        %609 = vmatpush1.bf16.msra.mxu0 0
        %610 = vmatprep.subr.bf16.mxu0 0
        %611 = vmatpush1.bf16.msra.mxu0 0
        %612 = vmatprep.subr.bf16.mxu0 0
        %613 = vmatpush1.bf16.msra.mxu0 0
        %614 = vmatprep.subr.bf16.mxu0 0
        %615 = vmatpush1.bf16.msra.mxu0 0
        %616 = vmatprep.subr.bf16.mxu0 0
        %617 = vmatpush1.bf16.msra.mxu0 0
        %618 = vmatprep.subr.bf16.mxu0 0
        %619 = vmatpush1.bf16.msra.mxu0 0
        %620 = vmatprep.subr.bf16.mxu0 0
        %621 = vmatpush1.bf16.msra.mxu0 0
        %622 = vmatprep.subr.bf16.mxu0 0
        %623 = vmatpush1.bf16.msra.mxu0 0
        %624 = vmatprep.subr.bf16.mxu0 0
        %625 = vmatpush1.bf16.msra.mxu0 0
        %626 = vmatprep.subr.bf16.mxu0 0
        %627 = vmatpush1.bf16.msra.mxu0 0
        %628 = vmatprep.subr.bf16.mxu0 0
        %629 = vmatpush1.bf16.msra.mxu0 0
        %630 = vmatprep.mubr.bf16.mxu0 0
        %631 = vmatmul.mubr.bf16.gmra.mrb[0].mxu0 %v575
        %v632 = vpop.f32.mrb[0].mxu0
        %v633 = vadd.f32 %v500, %v632
        %v634 = vpop.f32.mrb[0].mxu0
        %v635 = vpop.f32.mrb[0].mxu0
        %v636 = vadd.f32 %v503, %v635
        %v637 = vpop.f32.mrb[0].mxu0
        %638 = vmatprep.mubr.bf16.mxu0 0
        %639 = vmatmul.mubr.bf16.gmra.mrb[0].mxu0 %v578
        %v640 = vpop.f32.mrb[0].mxu0
        %v641 = vadd.f32 %v508, %v640
        %v642 = vpop.f32.mrb[0].mxu0
        %v643 = vpop.f32.mrb[0].mxu0
        %v644 = vadd.f32 %v511, %v643
        %v645 = vpop.f32.mrb[0].mxu0
        %646 = vmatprep.mubr.bf16.mxu0 0
        %647 = vmatmul.mubr.bf16.gmra.mrb[0].mxu0 %v581
        %v648 = vpop.f32.mrb[0].mxu0
        %v649 = vadd.f32 %v516, %v648
        %v650 = vpop.f32.mrb[0].mxu0
        %v651 = vpop.f32.mrb[0].mxu0
        %v652 = vadd.f32 %v519, %v651
        %v653 = vpop.f32.mrb[0].mxu0
        %654 = vmatprep.mubr.bf16.mxu0 0
        %655 = vmatmul.mubr.bf16.gmra.mrb[0].mxu0 %v584
        %v656 = vpop.f32.mrb[0].mxu0
        %v657 = vadd.f32 %v524, %v656
        %v658 = vpop.f32.mrb[0].mxu0
        %v659 = vpop.f32.mrb[0].mxu0
        %v660 = vadd.f32 %v527, %v659
        %v661 = vpop.f32.mrb[0].mxu0
        %662 = vmatprep.mubr.bf16.mxu0 0
        %663 = vmatmul.mubr.bf16.gmra.mrb[0].mxu0 %v587
        %v664 = vpop.f32.mrb[0].mxu0
        %v665 = vadd.f32 %v532, %v664
        %v666 = vpop.f32.mrb[0].mxu0
        %v667 = vpop.f32.mrb[0].mxu0
        %v668 = vadd.f32 %v535, %v667
        %v669 = vpop.f32.mrb[0].mxu0
        %670 = vmatprep.mubr.bf16.mxu0 0
        %671 = vmatmul.mubr.bf16.gmra.mrb[0].mxu0 %v590
        %v672 = vpop.f32.mrb[0].mxu0
        %v673 = vadd.f32 %v540, %v672
        %v674 = vpop.f32.mrb[0].mxu0
        %v675 = vpop.f32.mrb[0].mxu0
        %v676 = vadd.f32 %v543, %v675
        %v677 = vpop.f32.mrb[0].mxu0
        %678 = vmatprep.mubr.bf16.mxu0 0
        %679 = vmatmul.mubr.bf16.gmra.mrb[0].mxu0 %v593
        %v680 = vpop.f32.mrb[0].mxu0
        %v681 = vadd.f32 %v548, %v680
        %v682 = vpop.f32.mrb[0].mxu0
        %v683 = vpop.f32.mrb[0].mxu0
        %v684 = vadd.f32 %v551, %v683
        %v685 = vpop.f32.mrb[0].mxu0
        %686 = vmatprep.mubr.bf16.mxu0 0
        %687 = vmatmul.mubr.bf16.gmra.mrb[0].mxu0 %v596
        %v688 = vpop.f32.mrb[0].mxu0
        %v689 = vadd.f32 %v556, %v688
        %v690 = vpop.f32.mrb[0].mxu0
        %v691 = vpop.f32.mrb[0].mxu0
        %v692 = vadd.f32 %v559, %v691
        %v693 = vpop.f32.mrb[0].mxu0
        %694 = vdwg.mxu0
        %v695 = vld [vmem:[%s4] sm:$0x1]
        %v697 = vlaneseq
        %v698 = vshrl.u32 %v697, 7
        %v699 = vsub.s32 0, %v698
        %v700 = vrot.slane %v695, %v699
        %v702 = vadd.f32 %v633, %v700
        %v703 = vadd.f32 %v636, %v700
        %v704 = vadd.f32 %v641, %v700
        %v705 = vadd.f32 %v644, %v700
        %v706 = vadd.f32 %v649, %v700
        %v707 = vadd.f32 %v652, %v700
        %v708 = vadd.f32 %v657, %v700
        %v709 = vadd.f32 %v660, %v700
        %v710 = vadd.f32 %v665, %v700
        %v711 = vadd.f32 %v668, %v700
        %v712 = vadd.f32 %v673, %v700
        %v713 = vadd.f32 %v676, %v700
        %v714 = vadd.f32 %v681, %v700
        %v715 = vadd.f32 %v684, %v700
        %v716 = vadd.f32 %v689, %v700
        %v717 = vadd.f32 %v692, %v700
        %v718 = vmax.f32 %v702, 0.0
        %v719 = vmax.f32 %v703, 0.0
        %v720 = vmax.f32 %v704, 0.0
        %v721 = vmax.f32 %v705, 0.0
        %v722 = vmax.f32 %v706, 0.0
        %v723 = vmax.f32 %v707, 0.0
        %v724 = vmax.f32 %v708, 0.0
        %v725 = vmax.f32 %v709, 0.0
        %v726 = vmax.f32 %v710, 0.0
        %v727 = vmax.f32 %v711, 0.0
        %v728 = vmax.f32 %v712, 0.0
        %v729 = vmax.f32 %v713, 0.0
        %v730 = vmax.f32 %v714, 0.0
        %v731 = vmax.f32 %v715, 0.0
        %v732 = vmax.f32 %v716, 0.0
        %v733 = vmax.f32 %v717, 0.0
        %v734 = vpack.c.bf16 %v719, %v718
        %v735 = vpack.c.bf16 %v721, %v720
        %v736 = vpack.c.bf16 %v723, %v722
        %v737 = vpack.c.bf16 %v725, %v724
        %v738 = vpack.c.bf16 %v727, %v726
        %v739 = vpack.c.bf16 %v729, %v728
        %v740 = vpack.c.bf16 %v731, %v730
        %v741 = vpack.c.bf16 %v733, %v732
        %vm742 = vcmask 785408
        %743 = vst.msk [vmem:[#allocation2] sm:$0xff] %vm742, %v734
        %744 = vst.msk [vmem:[#allocation2 + $0x8] sm:$0xff] %vm742, %v735
        %745 = vst.msk [vmem:[#allocation2 + $0x10] sm:$0xff] %vm742, %v736
        %746 = vst.msk [vmem:[#allocation2 + $0x18] sm:$0xff] %vm742, %v737
        %747 = vst.msk [vmem:[#allocation2 + $0x20] sm:$0xff] %vm742, %v738
        %748 = vst.msk [vmem:[#allocation2 + $0x28] sm:$0xff] %vm742, %v739
        %749 = vst.msk [vmem:[#allocation2 + $0x30] sm:$0xff] %vm742, %v740
        %750 = vst.msk [vmem:[#allocation2 + $0x38] sm:$0xff] %vm742, %v741
        %v751 = vld [vmem:[#allocation2] sm:$0xff]
        %v752 = vld [vmem:[#allocation2 + $0x8] sm:$0xff]
        %v753 = vld [vmem:[#allocation2 + $0x10] sm:$0xff]
        %v754 = vld [vmem:[#allocation2 + $0x18] sm:$0xff]
        %v755 = vld [vmem:[#allocation2 + $0x20] sm:$0xff]
        %v756 = vld [vmem:[#allocation2 + $0x28] sm:$0xff]
        %v757 = vld [vmem:[#allocation2 + $0x30] sm:$0xff]
        %v758 = vld [vmem:[#allocation2 + $0x38] sm:$0xff]
        %760 = vrot.lane.b32.xlu0 %v751, 96
        %v761 = vpop.permute.xlu0 %760
        %vm762 = vcmask 31744
        %v764 = vsel %vm762, %v751, 0
        %v767 = vsel %vm762, %v761, 0
        %769 = vmatprep.subr.bf16.mxu0 0
        %770 = vmatpush1.bf16.xpose.msra.mxu0 %v767
        %771 = vmatprep.subr.bf16.mxu0 0
        %772 = vmatpush1.bf16.xpose.msra.mxu0 0
        %773 = vmatprep.subr.bf16.mxu0 0
        %774 = vmatpush1.bf16.xpose.msra.mxu0 0
        %775 = vmatprep.subr.bf16.mxu0 0
        %776 = vmatpush1.bf16.xpose.msra.mxu0 0
        %777 = vmatprep.subr.bf16.mxu0 0
        %778 = vmatpush1.bf16.xpose.msra.mxu0 0
        %779 = vmatprep.subr.bf16.mxu0 0
        %780 = vmatpush1.bf16.xpose.msra.mxu0 0
        %781 = vmatprep.subr.bf16.mxu0 0
        %782 = vmatpush1.bf16.xpose.msra.mxu0 0
        %783 = vmatprep.subr.bf16.mxu0 0
        %784 = vmatpush1.bf16.xpose.msra.mxu0 0
        %785 = vmatprep.subr.bf16.mxu0 0
        %786 = vmatpush1.bf16.xpose.msra.mxu0 0
        %787 = vmatprep.subr.bf16.mxu0 0
        %788 = vmatpush1.bf16.xpose.msra.mxu0 0
        %789 = vmatprep.subr.bf16.mxu0 0
        %790 = vmatpush1.bf16.xpose.msra.mxu0 0
        %791 = vmatprep.subr.bf16.mxu0 0
        %792 = vmatpush1.bf16.xpose.msra.mxu0 0
        %793 = vmatprep.subr.bf16.mxu0 0
        %794 = vmatpush1.bf16.xpose.msra.mxu0 0
        %795 = vmatprep.subr.bf16.mxu0 0
        %796 = vmatpush1.bf16.xpose.msra.mxu0 0
        %797 = vmatprep.subr.bf16.mxu0 0
        %798 = vmatpush1.bf16.xpose.msra.mxu0 0
        %799 = vmatprep.subr.bf16.mxu0 0
        %800 = vmatpush1.bf16.xpose.msra.mxu0 0
        %801 = vmatprep.mubr.bf16.mxu0 0
        %802 = vmatmul.mubr.bf16.gmra.mrb[0].mxu0 %v764
        %v803 = vpop.f32.mrb[0].mxu0
        %v804 = vadd.f32 0.0, %v803
        %v805 = vpop.f32.mrb[0].mxu0
        %v806 = vpop.f32.mrb[0].mxu0
        %v807 = vadd.f32 0.0, %v806
        %v808 = vpop.f32.mrb[0].mxu0
        %809 = vdwg.mxu0
        %811 = vrot.lane.b32.xlu0 %v752, 96
        %v812 = vpop.permute.xlu0 %811
        %v814 = vsel %vm762, %v752, 0
        %v817 = vsel %vm762, %v812, 0
        %819 = vmatprep.subr.bf16.mxu0 0
        %820 = vmatpush1.bf16.xpose.msra.mxu0 %v817
        %821 = vmatprep.subr.bf16.mxu0 0
        %822 = vmatpush1.bf16.xpose.msra.mxu0 0
        %823 = vmatprep.subr.bf16.mxu0 0
        %824 = vmatpush1.bf16.xpose.msra.mxu0 0
        %825 = vmatprep.subr.bf16.mxu0 0
        %826 = vmatpush1.bf16.xpose.msra.mxu0 0
        %827 = vmatprep.subr.bf16.mxu0 0
        %828 = vmatpush1.bf16.xpose.msra.mxu0 0
        %829 = vmatprep.subr.bf16.mxu0 0
        %830 = vmatpush1.bf16.xpose.msra.mxu0 0
        %831 = vmatprep.subr.bf16.mxu0 0
        %832 = vmatpush1.bf16.xpose.msra.mxu0 0
        %833 = vmatprep.subr.bf16.mxu0 0
        %834 = vmatpush1.bf16.xpose.msra.mxu0 0
        %835 = vmatprep.subr.bf16.mxu0 0
        %836 = vmatpush1.bf16.xpose.msra.mxu0 0
        %837 = vmatprep.subr.bf16.mxu0 0
        %838 = vmatpush1.bf16.xpose.msra.mxu0 0
        %839 = vmatprep.subr.bf16.mxu0 0
        %840 = vmatpush1.bf16.xpose.msra.mxu0 0
        %841 = vmatprep.subr.bf16.mxu0 0
        %842 = vmatpush1.bf16.xpose.msra.mxu0 0
        %843 = vmatprep.subr.bf16.mxu0 0
        %844 = vmatpush1.bf16.xpose.msra.mxu0 0
        %845 = vmatprep.subr.bf16.mxu0 0
        %846 = vmatpush1.bf16.xpose.msra.mxu0 0
        %847 = vmatprep.subr.bf16.mxu0 0
        %848 = vmatpush1.bf16.xpose.msra.mxu0 0
        %849 = vmatprep.subr.bf16.mxu0 0
        %850 = vmatpush1.bf16.xpose.msra.mxu0 0
        %851 = vmatprep.mubr.bf16.mxu0 0
        %852 = vmatmul.mubr.bf16.gmra.mrb[0].mxu0 %v814
        %v853 = vpop.f32.mrb[0].mxu0
        %v854 = vadd.f32 0.0, %v853
        %v855 = vpop.f32.mrb[0].mxu0
        %v856 = vpop.f32.mrb[0].mxu0
        %v857 = vadd.f32 0.0, %v856
        %v858 = vpop.f32.mrb[0].mxu0
        %859 = vdwg.mxu0
        %861 = vrot.lane.b32.xlu0 %v753, 96
        %v862 = vpop.permute.xlu0 %861
        %v864 = vsel %vm762, %v753, 0
        %v867 = vsel %vm762, %v862, 0
        %869 = vmatprep.subr.bf16.mxu0 0
        %870 = vmatpush1.bf16.xpose.msra.mxu0 %v867
        %871 = vmatprep.subr.bf16.mxu0 0
        %872 = vmatpush1.bf16.xpose.msra.mxu0 0
        %873 = vmatprep.subr.bf16.mxu0 0
        %874 = vmatpush1.bf16.xpose.msra.mxu0 0
        %875 = vmatprep.subr.bf16.mxu0 0
        %876 = vmatpush1.bf16.xpose.msra.mxu0 0
        %877 = vmatprep.subr.bf16.mxu0 0
        %878 = vmatpush1.bf16.xpose.msra.mxu0 0
        %879 = vmatprep.subr.bf16.mxu0 0
        %880 = vmatpush1.bf16.xpose.msra.mxu0 0
        %881 = vmatprep.subr.bf16.mxu0 0
        %882 = vmatpush1.bf16.xpose.msra.mxu0 0
        %883 = vmatprep.subr.bf16.mxu0 0
        %884 = vmatpush1.bf16.xpose.msra.mxu0 0
        %885 = vmatprep.subr.bf16.mxu0 0
        %886 = vmatpush1.bf16.xpose.msra.mxu0 0
        %887 = vmatprep.subr.bf16.mxu0 0
        %888 = vmatpush1.bf16.xpose.msra.mxu0 0
        %889 = vmatprep.subr.bf16.mxu0 0
        %890 = vmatpush1.bf16.xpose.msra.mxu0 0
        %891 = vmatprep.subr.bf16.mxu0 0
        %892 = vmatpush1.bf16.xpose.msra.mxu0 0
        %893 = vmatprep.subr.bf16.mxu0 0
        %894 = vmatpush1.bf16.xpose.msra.mxu0 0
        %895 = vmatprep.subr.bf16.mxu0 0
        %896 = vmatpush1.bf16.xpose.msra.mxu0 0
        %897 = vmatprep.subr.bf16.mxu0 0
        %898 = vmatpush1.bf16.xpose.msra.mxu0 0
        %899 = vmatprep.subr.bf16.mxu0 0
        %900 = vmatpush1.bf16.xpose.msra.mxu0 0
        %901 = vmatprep.mubr.bf16.mxu0 0
        %902 = vmatmul.mubr.bf16.gmra.mrb[0].mxu0 %v864
        %v903 = vpop.f32.mrb[0].mxu0
        %v904 = vadd.f32 0.0, %v903
        %v905 = vpop.f32.mrb[0].mxu0
        %v906 = vpop.f32.mrb[0].mxu0
        %v907 = vadd.f32 0.0, %v906
        %v908 = vpop.f32.mrb[0].mxu0
        %909 = vdwg.mxu0
        %911 = vrot.lane.b32.xlu0 %v754, 96
        %v912 = vpop.permute.xlu0 %911
        %v914 = vsel %vm762, %v754, 0
        %v917 = vsel %vm762, %v912, 0
        %919 = vmatprep.subr.bf16.mxu0 0
        %920 = vmatpush1.bf16.xpose.msra.mxu0 %v917
        %921 = vmatprep.subr.bf16.mxu0 0
        %922 = vmatpush1.bf16.xpose.msra.mxu0 0
        %923 = vmatprep.subr.bf16.mxu0 0
        %924 = vmatpush1.bf16.xpose.msra.mxu0 0
        %925 = vmatprep.subr.bf16.mxu0 0
        %926 = vmatpush1.bf16.xpose.msra.mxu0 0
        %927 = vmatprep.subr.bf16.mxu0 0
        %928 = vmatpush1.bf16.xpose.msra.mxu0 0
        %929 = vmatprep.subr.bf16.mxu0 0
        %930 = vmatpush1.bf16.xpose.msra.mxu0 0
        %931 = vmatprep.subr.bf16.mxu0 0
        %932 = vmatpush1.bf16.xpose.msra.mxu0 0
        %933 = vmatprep.subr.bf16.mxu0 0
        %934 = vmatpush1.bf16.xpose.msra.mxu0 0
        %935 = vmatprep.subr.bf16.mxu0 0
        %936 = vmatpush1.bf16.xpose.msra.mxu0 0
        %937 = vmatprep.subr.bf16.mxu0 0
        %938 = vmatpush1.bf16.xpose.msra.mxu0 0
        %939 = vmatprep.subr.bf16.mxu0 0
        %940 = vmatpush1.bf16.xpose.msra.mxu0 0
        %941 = vmatprep.subr.bf16.mxu0 0
        %942 = vmatpush1.bf16.xpose.msra.mxu0 0
        %943 = vmatprep.subr.bf16.mxu0 0
        %944 = vmatpush1.bf16.xpose.msra.mxu0 0
        %945 = vmatprep.subr.bf16.mxu0 0
        %946 = vmatpush1.bf16.xpose.msra.mxu0 0
        %947 = vmatprep.subr.bf16.mxu0 0
        %948 = vmatpush1.bf16.xpose.msra.mxu0 0
        %949 = vmatprep.subr.bf16.mxu0 0
        %950 = vmatpush1.bf16.xpose.msra.mxu0 0
        %951 = vmatprep.mubr.bf16.mxu0 0
        %952 = vmatmul.mubr.bf16.gmra.mrb[0].mxu0 %v914
        %v953 = vpop.f32.mrb[0].mxu0
        %v954 = vadd.f32 0.0, %v953
        %v955 = vpop.f32.mrb[0].mxu0
        %v956 = vpop.f32.mrb[0].mxu0
        %v957 = vadd.f32 0.0, %v956
        %v958 = vpop.f32.mrb[0].mxu0
        %959 = vdwg.mxu0
        %961 = vrot.lane.b32.xlu0 %v755, 96
        %v962 = vpop.permute.xlu0 %961
        %v964 = vsel %vm762, %v755, 0
        %v967 = vsel %vm762, %v962, 0
        %969 = vmatprep.subr.bf16.mxu0 0
        %970 = vmatpush1.bf16.xpose.msra.mxu0 %v967
        %971 = vmatprep.subr.bf16.mxu0 0
        %972 = vmatpush1.bf16.xpose.msra.mxu0 0
        %973 = vmatprep.subr.bf16.mxu0 0
        %974 = vmatpush1.bf16.xpose.msra.mxu0 0
        %975 = vmatprep.subr.bf16.mxu0 0
        %976 = vmatpush1.bf16.xpose.msra.mxu0 0
        %977 = vmatprep.subr.bf16.mxu0 0
        %978 = vmatpush1.bf16.xpose.msra.mxu0 0
        %979 = vmatprep.subr.bf16.mxu0 0
        %980 = vmatpush1.bf16.xpose.msra.mxu0 0
        %981 = vmatprep.subr.bf16.mxu0 0
        %982 = vmatpush1.bf16.xpose.msra.mxu0 0
        %983 = vmatprep.subr.bf16.mxu0 0
        %984 = vmatpush1.bf16.xpose.msra.mxu0 0
        %985 = vmatprep.subr.bf16.mxu0 0
        %986 = vmatpush1.bf16.xpose.msra.mxu0 0
        %987 = vmatprep.subr.bf16.mxu0 0
        %988 = vmatpush1.bf16.xpose.msra.mxu0 0
        %989 = vmatprep.subr.bf16.mxu0 0
        %990 = vmatpush1.bf16.xpose.msra.mxu0 0
        %991 = vmatprep.subr.bf16.mxu0 0
        %992 = vmatpush1.bf16.xpose.msra.mxu0 0
        %993 = vmatprep.subr.bf16.mxu0 0
        %994 = vmatpush1.bf16.xpose.msra.mxu0 0
        %995 = vmatprep.subr.bf16.mxu0 0
        %996 = vmatpush1.bf16.xpose.msra.mxu0 0
        %997 = vmatprep.subr.bf16.mxu0 0
        %998 = vmatpush1.bf16.xpose.msra.mxu0 0
        %999 = vmatprep.subr.bf16.mxu0 0
        %1000 = vmatpush1.bf16.xpose.msra.mxu0 0
        %1001 = vmatprep.mubr.bf16.mxu0 0
        %1002 = vmatmul.mubr.bf16.gmra.mrb[0].mxu0 %v964
        %v1003 = vpop.f32.mrb[0].mxu0
        %v1004 = vadd.f32 0.0, %v1003
        %v1005 = vpop.f32.mrb[0].mxu0
        %v1006 = vpop.f32.mrb[0].mxu0
        %v1007 = vadd.f32 0.0, %v1006
        %v1008 = vpop.f32.mrb[0].mxu0
        %1009 = vdwg.mxu0
        %1011 = vrot.lane.b32.xlu0 %v756, 96
        %v1012 = vpop.permute.xlu0 %1011
        %v1014 = vsel %vm762, %v756, 0
        %v1017 = vsel %vm762, %v1012, 0
        %1019 = vmatprep.subr.bf16.mxu0 0
        %1020 = vmatpush1.bf16.xpose.msra.mxu0 %v1017
        %1021 = vmatprep.subr.bf16.mxu0 0
        %1022 = vmatpush1.bf16.xpose.msra.mxu0 0
        %1023 = vmatprep.subr.bf16.mxu0 0
        %1024 = vmatpush1.bf16.xpose.msra.mxu0 0
        %1025 = vmatprep.subr.bf16.mxu0 0
        %1026 = vmatpush1.bf16.xpose.msra.mxu0 0
        %1027 = vmatprep.subr.bf16.mxu0 0
        %1028 = vmatpush1.bf16.xpose.msra.mxu0 0
        %1029 = vmatprep.subr.bf16.mxu0 0
        %1030 = vmatpush1.bf16.xpose.msra.mxu0 0
        %1031 = vmatprep.subr.bf16.mxu0 0
        %1032 = vmatpush1.bf16.xpose.msra.mxu0 0
        %1033 = vmatprep.subr.bf16.mxu0 0
        %1034 = vmatpush1.bf16.xpose.msra.mxu0 0
        %1035 = vmatprep.subr.bf16.mxu0 0
        %1036 = vmatpush1.bf16.xpose.msra.mxu0 0
        %1037 = vmatprep.subr.bf16.mxu0 0
        %1038 = vmatpush1.bf16.xpose.msra.mxu0 0
        %1039 = vmatprep.subr.bf16.mxu0 0
        %1040 = vmatpush1.bf16.xpose.msra.mxu0 0
        %1041 = vmatprep.subr.bf16.mxu0 0
        %1042 = vmatpush1.bf16.xpose.msra.mxu0 0
        %1043 = vmatprep.subr.bf16.mxu0 0
        %1044 = vmatpush1.bf16.xpose.msra.mxu0 0
        %1045 = vmatprep.subr.bf16.mxu0 0
        %1046 = vmatpush1.bf16.xpose.msra.mxu0 0
        %1047 = vmatprep.subr.bf16.mxu0 0
        %1048 = vmatpush1.bf16.xpose.msra.mxu0 0
        %1049 = vmatprep.subr.bf16.mxu0 0
        %1050 = vmatpush1.bf16.xpose.msra.mxu0 0
        %1051 = vmatprep.mubr.bf16.mxu0 0
        %1052 = vmatmul.mubr.bf16.gmra.mrb[0].mxu0 %v1014
        %v1053 = vpop.f32.mrb[0].mxu0
        %v1054 = vadd.f32 0.0, %v1053
        %v1055 = vpop.f32.mrb[0].mxu0
        %v1056 = vpop.f32.mrb[0].mxu0
        %v1057 = vadd.f32 0.0, %v1056
        %v1058 = vpop.f32.mrb[0].mxu0
        %1059 = vdwg.mxu0
        %1061 = vrot.lane.b32.xlu0 %v757, 96
        %v1062 = vpop.permute.xlu0 %1061
        %v1064 = vsel %vm762, %v757, 0
        %v1067 = vsel %vm762, %v1062, 0
        %1069 = vmatprep.subr.bf16.mxu0 0
        %1070 = vmatpush1.bf16.xpose.msra.mxu0 %v1067
        %1071 = vmatprep.subr.bf16.mxu0 0
        %1072 = vmatpush1.bf16.xpose.msra.mxu0 0
        %1073 = vmatprep.subr.bf16.mxu0 0
        %1074 = vmatpush1.bf16.xpose.msra.mxu0 0
        %1075 = vmatprep.subr.bf16.mxu0 0
        %1076 = vmatpush1.bf16.xpose.msra.mxu0 0
        %1077 = vmatprep.subr.bf16.mxu0 0
        %1078 = vmatpush1.bf16.xpose.msra.mxu0 0
        %1079 = vmatprep.subr.bf16.mxu0 0
        %1080 = vmatpush1.bf16.xpose.msra.mxu0 0
        %1081 = vmatprep.subr.bf16.mxu0 0
        %1082 = vmatpush1.bf16.xpose.msra.mxu0 0
        %1083 = vmatprep.subr.bf16.mxu0 0
        %1084 = vmatpush1.bf16.xpose.msra.mxu0 0
        %1085 = vmatprep.subr.bf16.mxu0 0
        %1086 = vmatpush1.bf16.xpose.msra.mxu0 0
        %1087 = vmatprep.subr.bf16.mxu0 0
        %1088 = vmatpush1.bf16.xpose.msra.mxu0 0
        %1089 = vmatprep.subr.bf16.mxu0 0
        %1090 = vmatpush1.bf16.xpose.msra.mxu0 0
        %1091 = vmatprep.subr.bf16.mxu0 0
        %1092 = vmatpush1.bf16.xpose.msra.mxu0 0
        %1093 = vmatprep.subr.bf16.mxu0 0
        %1094 = vmatpush1.bf16.xpose.msra.mxu0 0
        %1095 = vmatprep.subr.bf16.mxu0 0
        %1096 = vmatpush1.bf16.xpose.msra.mxu0 0
        %1097 = vmatprep.subr.bf16.mxu0 0
        %1098 = vmatpush1.bf16.xpose.msra.mxu0 0
        %1099 = vmatprep.subr.bf16.mxu0 0
        %1100 = vmatpush1.bf16.xpose.msra.mxu0 0
        %1101 = vmatprep.mubr.bf16.mxu0 0
        %1102 = vmatmul.mubr.bf16.gmra.mrb[0].mxu0 %v1064
        %v1103 = vpop.f32.mrb[0].mxu0
        %v1104 = vadd.f32 0.0, %v1103
        %v1105 = vpop.f32.mrb[0].mxu0
        %v1106 = vpop.f32.mrb[0].mxu0
        %v1107 = vadd.f32 0.0, %v1106
        %v1108 = vpop.f32.mrb[0].mxu0
        %1109 = vdwg.mxu0
        %1111 = vrot.lane.b32.xlu0 %v758, 96
        %v1112 = vpop.permute.xlu0 %1111
        %v1114 = vsel %vm762, %v758, 0
        %v1117 = vsel %vm762, %v1112, 0
        %1119 = vmatprep.subr.bf16.mxu0 0
        %1120 = vmatpush1.bf16.xpose.msra.mxu0 %v1117
        %1121 = vmatprep.subr.bf16.mxu0 0
        %1122 = vmatpush1.bf16.xpose.msra.mxu0 0
        %1123 = vmatprep.subr.bf16.mxu0 0
        %1124 = vmatpush1.bf16.xpose.msra.mxu0 0
        %1125 = vmatprep.subr.bf16.mxu0 0
        %1126 = vmatpush1.bf16.xpose.msra.mxu0 0
        %1127 = vmatprep.subr.bf16.mxu0 0
        %1128 = vmatpush1.bf16.xpose.msra.mxu0 0
        %1129 = vmatprep.subr.bf16.mxu0 0
        %1130 = vmatpush1.bf16.xpose.msra.mxu0 0
        %1131 = vmatprep.subr.bf16.mxu0 0
        %1132 = vmatpush1.bf16.xpose.msra.mxu0 0
        %1133 = vmatprep.subr.bf16.mxu0 0
        %1134 = vmatpush1.bf16.xpose.msra.mxu0 0
        %1135 = vmatprep.subr.bf16.mxu0 0
        %1136 = vmatpush1.bf16.xpose.msra.mxu0 0
        %1137 = vmatprep.subr.bf16.mxu0 0
        %1138 = vmatpush1.bf16.xpose.msra.mxu0 0
        %1139 = vmatprep.subr.bf16.mxu0 0
        %1140 = vmatpush1.bf16.xpose.msra.mxu0 0
        %1141 = vmatprep.subr.bf16.mxu0 0
        %1142 = vmatpush1.bf16.xpose.msra.mxu0 0
        %1143 = vmatprep.subr.bf16.mxu0 0
        %1144 = vmatpush1.bf16.xpose.msra.mxu0 0
        %1145 = vmatprep.subr.bf16.mxu0 0
        %1146 = vmatpush1.bf16.xpose.msra.mxu0 0
        %1147 = vmatprep.subr.bf16.mxu0 0
        %1148 = vmatpush1.bf16.xpose.msra.mxu0 0
        %1149 = vmatprep.subr.bf16.mxu0 0
        %1150 = vmatpush1.bf16.xpose.msra.mxu0 0
        %1151 = vmatprep.mubr.bf16.mxu0 0
        %1152 = vmatmul.mubr.bf16.gmra.mrb[0].mxu0 %v1114
        %v1153 = vpop.f32.mrb[0].mxu0
        %v1154 = vadd.f32 0.0, %v1153
        %v1155 = vpop.f32.mrb[0].mxu0
        %v1156 = vpop.f32.mrb[0].mxu0
        %v1157 = vadd.f32 0.0, %v1156
        %v1158 = vpop.f32.mrb[0].mxu0
        %1159 = vdwg.mxu0
        %vm1160 = vcmask 130048
        %v1161 = vsel %vm1160, %v804, -inf
        %1162 = vmax.xlane.f32.xlu0 %v1161
        %v1163 = vpop.xlane.xlu0 %1162
        %v1164 = vsel %vm1160, %v807, -inf
        %1165 = vmax.xlane.f32.xlu0 %v1164
        %v1166 = vpop.xlane.xlu0 %1165
        %v1167 = vsel %vm1160, %v854, -inf
        %1168 = vmax.xlane.f32.xlu0 %v1167
        %v1169 = vpop.xlane.xlu0 %1168
        %v1170 = vsel %vm1160, %v857, -inf
        %1171 = vmax.xlane.f32.xlu0 %v1170
        %v1172 = vpop.xlane.xlu0 %1171
        %v1173 = vsel %vm1160, %v904, -inf
        %1174 = vmax.xlane.f32.xlu0 %v1173
        %v1175 = vpop.xlane.xlu0 %1174
        %v1176 = vsel %vm1160, %v907, -inf
        %1177 = vmax.xlane.f32.xlu0 %v1176
        %v1178 = vpop.xlane.xlu0 %1177
        %v1179 = vsel %vm1160, %v954, -inf
        %1180 = vmax.xlane.f32.xlu0 %v1179
        %v1181 = vpop.xlane.xlu0 %1180
        %v1182 = vsel %vm1160, %v957, -inf
        %1183 = vmax.xlane.f32.xlu0 %v1182
        %v1184 = vpop.xlane.xlu0 %1183
        %v1185 = vsel %vm1160, %v1004, -inf
        %1186 = vmax.xlane.f32.xlu0 %v1185
        %v1187 = vpop.xlane.xlu0 %1186
        %v1188 = vsel %vm1160, %v1007, -inf
        %1189 = vmax.xlane.f32.xlu0 %v1188
        %v1190 = vpop.xlane.xlu0 %1189
        %v1191 = vsel %vm1160, %v1054, -inf
        %1192 = vmax.xlane.f32.xlu0 %v1191
        %v1193 = vpop.xlane.xlu0 %1192
        %v1194 = vsel %vm1160, %v1057, -inf
        %1195 = vmax.xlane.f32.xlu0 %v1194
        %v1196 = vpop.xlane.xlu0 %1195
        %v1197 = vsel %vm1160, %v1104, -inf
        %1198 = vmax.xlane.f32.xlu0 %v1197
        %v1199 = vpop.xlane.xlu0 %1198
        %v1200 = vsel %vm1160, %v1107, -inf
        %1201 = vmax.xlane.f32.xlu0 %v1200
        %v1202 = vpop.xlane.xlu0 %1201
        %v1203 = vsel %vm1160, %v1154, -inf
        %1204 = vmax.xlane.f32.xlu0 %v1203
        %v1205 = vpop.xlane.xlu0 %1204
        %v1206 = vsel %vm1160, %v1157, -inf
        %1207 = vmax.xlane.f32.xlu0 %v1206
        %v1208 = vpop.xlane.xlu0 %1207
        %v1209 = vsub.f32 %v804, %v1163
        %v1210 = vsub.f32 %v807, %v1166
        %v1211 = vsub.f32 %v854, %v1169
        %v1212 = vsub.f32 %v857, %v1172
        %v1213 = vsub.f32 %v904, %v1175
        %v1214 = vsub.f32 %v907, %v1178
        %v1215 = vsub.f32 %v954, %v1181
        %v1216 = vsub.f32 %v957, %v1184
        %v1217 = vsub.f32 %v1004, %v1187
        %v1218 = vsub.f32 %v1007, %v1190
        %v1219 = vsub.f32 %v1054, %v1193
        %v1220 = vsub.f32 %v1057, %v1196
        %v1221 = vsub.f32 %v1104, %v1199
        %v1222 = vsub.f32 %v1107, %v1202
        %v1223 = vsub.f32 %v1154, %v1205
        %v1224 = vsub.f32 %v1157, %v1208
        %v1225 = vmul.f32 %v1209, 1.442695
        %v1226 = vpow.pop %v1225
        %v1227 = vmul.f32 %v1210, 1.442695
        %v1228 = vpow.pop %v1227
        %v1229 = vmul.f32 %v1211, 1.442695
        %v1230 = vpow.pop %v1229
        %v1231 = vmul.f32 %v1212, 1.442695
        %v1232 = vpow.pop %v1231
        %v1233 = vmul.f32 %v1213, 1.442695
        %v1234 = vpow.pop %v1233
        %v1235 = vmul.f32 %v1214, 1.442695
        %v1236 = vpow.pop %v1235
        %v1237 = vmul.f32 %v1215, 1.442695
        %v1238 = vpow.pop %v1237
        %v1239 = vmul.f32 %v1216, 1.442695
        %v1240 = vpow.pop %v1239
        %v1241 = vmul.f32 %v1217, 1.442695
        %v1242 = vpow.pop %v1241
        %v1243 = vmul.f32 %v1218, 1.442695
        %v1244 = vpow.pop %v1243
        %v1245 = vmul.f32 %v1219, 1.442695
        %v1246 = vpow.pop %v1245
        %v1247 = vmul.f32 %v1220, 1.442695
        %v1248 = vpow.pop %v1247
        %v1249 = vmul.f32 %v1221, 1.442695
        %v1250 = vpow.pop %v1249
        %v1251 = vmul.f32 %v1222, 1.442695
        %v1252 = vpow.pop %v1251
        %v1253 = vmul.f32 %v1223, 1.442695
        %v1254 = vpow.pop %v1253
        %v1255 = vmul.f32 %v1224, 1.442695
        %v1256 = vpow.pop %v1255
        %v1257 = vsel %vm1160, %v1226, 0.0
        %1258 = vadd.xlane.f32.xlu0 %v1257
        %v1259 = vpop.xlane.xlu0 %1258
        %v1260 = vsel %vm1160, %v1228, 0.0
        %1261 = vadd.xlane.f32.xlu0 %v1260
        %v1262 = vpop.xlane.xlu0 %1261
        %v1263 = vsel %vm1160, %v1230, 0.0
        %1264 = vadd.xlane.f32.xlu0 %v1263
        %v1265 = vpop.xlane.xlu0 %1264
        %v1266 = vsel %vm1160, %v1232, 0.0
        %1267 = vadd.xlane.f32.xlu0 %v1266
        %v1268 = vpop.xlane.xlu0 %1267
        %v1269 = vsel %vm1160, %v1234, 0.0
        %1270 = vadd.xlane.f32.xlu0 %v1269
        %v1271 = vpop.xlane.xlu0 %1270
        %v1272 = vsel %vm1160, %v1236, 0.0
        %1273 = vadd.xlane.f32.xlu0 %v1272
        %v1274 = vpop.xlane.xlu0 %1273
        %v1275 = vsel %vm1160, %v1238, 0.0
        %1276 = vadd.xlane.f32.xlu0 %v1275
        %v1277 = vpop.xlane.xlu0 %1276
        %v1278 = vsel %vm1160, %v1240, 0.0
        %1279 = vadd.xlane.f32.xlu0 %v1278
        %v1280 = vpop.xlane.xlu0 %1279
        %v1281 = vsel %vm1160, %v1242, 0.0
        %1282 = vadd.xlane.f32.xlu0 %v1281
        %v1283 = vpop.xlane.xlu0 %1282
        %v1284 = vsel %vm1160, %v1244, 0.0
        %1285 = vadd.xlane.f32.xlu0 %v1284
        %v1286 = vpop.xlane.xlu0 %1285
        %v1287 = vsel %vm1160, %v1246, 0.0
        %1288 = vadd.xlane.f32.xlu0 %v1287
        %v1289 = vpop.xlane.xlu0 %1288
        %v1290 = vsel %vm1160, %v1248, 0.0
        %1291 = vadd.xlane.f32.xlu0 %v1290
        %v1292 = vpop.xlane.xlu0 %1291
        %v1293 = vsel %vm1160, %v1250, 0.0
        %1294 = vadd.xlane.f32.xlu0 %v1293
        %v1295 = vpop.xlane.xlu0 %1294
        %v1296 = vsel %vm1160, %v1252, 0.0
        %1297 = vadd.xlane.f32.xlu0 %v1296
        %v1298 = vpop.xlane.xlu0 %1297
        %v1299 = vsel %vm1160, %v1254, 0.0
        %1300 = vadd.xlane.f32.xlu0 %v1299
        %v1301 = vpop.xlane.xlu0 %1300
        %v1302 = vsel %vm1160, %v1256, 0.0
        %1303 = vadd.xlane.f32.xlu0 %v1302
        %v1304 = vpop.xlane.xlu0 %1303
        %v1305 = vrcp.pop %v1259
        %v1306 = vrcp.pop %v1262
        %v1307 = vrcp.pop %v1265
        %v1308 = vrcp.pop %v1268
        %v1309 = vrcp.pop %v1271
        %v1310 = vrcp.pop %v1274
        %v1311 = vrcp.pop %v1277
        %v1312 = vrcp.pop %v1280
        %v1313 = vrcp.pop %v1283
        %v1314 = vrcp.pop %v1286
        %v1315 = vrcp.pop %v1289
        %v1316 = vrcp.pop %v1292
        %v1317 = vrcp.pop %v1295
        %v1318 = vrcp.pop %v1298
        %v1319 = vrcp.pop %v1301
        %v1320 = vrcp.pop %v1304
        %v1321 = vmul.f32 %v1226, %v1305
        %v1322 = vmul.f32 %v1228, %v1306
        %v1323 = vmul.f32 %v1230, %v1307
        %v1324 = vmul.f32 %v1232, %v1308
        %v1325 = vmul.f32 %v1234, %v1309
        %v1326 = vmul.f32 %v1236, %v1310
        %v1327 = vmul.f32 %v1238, %v1311
        %v1328 = vmul.f32 %v1240, %v1312
        %v1329 = vmul.f32 %v1242, %v1313
        %v1330 = vmul.f32 %v1244, %v1314
        %v1331 = vmul.f32 %v1246, %v1315
        %v1332 = vmul.f32 %v1248, %v1316
        %v1333 = vmul.f32 %v1250, %v1317
        %v1334 = vmul.f32 %v1252, %v1318
        %v1335 = vmul.f32 %v1254, %v1319
        %v1336 = vmul.f32 %v1256, %v1320
        %v1337 = vpack.c.bf16 %v1322, %v1321
        %v1338 = vpack.c.bf16 %v1324, %v1323
        %v1339 = vpack.c.bf16 %v1326, %v1325
        %v1340 = vpack.c.bf16 %v1328, %v1327
        %v1341 = vpack.c.bf16 %v1330, %v1329
        %v1342 = vpack.c.bf16 %v1332, %v1331
        %v1343 = vpack.c.bf16 %v1334, %v1333
        %v1344 = vpack.c.bf16 %v1336, %v1335
        %1345 = vrot.lane.b32.xlu0 %v751, 64
        %v1346 = vpop.permute.xlu0 %1345
        %v1349 = vsel %vm1160, %v1337, 0
        %1351 = vmatprep.subr.bf16.mxu0 0
        %1352 = vmatpush1.bf16.msra.mxu0 %v1346
        %1353 = vmatprep.subr.bf16.mxu0 0
        %1354 = vmatpush1.bf16.msra.mxu0 0
        %1355 = vmatprep.subr.bf16.mxu0 0
        %1356 = vmatpush1.bf16.msra.mxu0 0
        %1357 = vmatprep.subr.bf16.mxu0 0
        %1358 = vmatpush1.bf16.msra.mxu0 0
        %1359 = vmatprep.subr.bf16.mxu0 0
        %1360 = vmatpush1.bf16.msra.mxu0 0
        %1361 = vmatprep.subr.bf16.mxu0 0
        %1362 = vmatpush1.bf16.msra.mxu0 0
        %1363 = vmatprep.subr.bf16.mxu0 0
        %1364 = vmatpush1.bf16.msra.mxu0 0
        %1365 = vmatprep.subr.bf16.mxu0 0
        %1366 = vmatpush1.bf16.msra.mxu0 0
        %1367 = vmatprep.subr.bf16.mxu0 0
        %1368 = vmatpush1.bf16.msra.mxu0 0
        %1369 = vmatprep.subr.bf16.mxu0 0
        %1370 = vmatpush1.bf16.msra.mxu0 0
        %1371 = vmatprep.subr.bf16.mxu0 0
        %1372 = vmatpush1.bf16.msra.mxu0 0
        %1373 = vmatprep.subr.bf16.mxu0 0
        %1374 = vmatpush1.bf16.msra.mxu0 0
        %1375 = vmatprep.subr.bf16.mxu0 0
        %1376 = vmatpush1.bf16.msra.mxu0 0
        %1377 = vmatprep.subr.bf16.mxu0 0
        %1378 = vmatpush1.bf16.msra.mxu0 0
        %1379 = vmatprep.subr.bf16.mxu0 0
        %1380 = vmatpush1.bf16.msra.mxu0 0
        %1381 = vmatprep.subr.bf16.mxu0 0
        %1382 = vmatpush1.bf16.msra.mxu0 0
        %1383 = vmatprep.mubr.bf16.mxu0 0
        %1384 = vmatmul.mubr.bf16.gmra.mrb[0].mxu0 %v1349
        %v1385 = vpop.f32.mrb[0].mxu0
        %v1386 = vadd.f32 0.0, %v1385
        %v1387 = vpop.f32.mrb[0].mxu0
        %v1388 = vpop.f32.mrb[0].mxu0
        %v1389 = vadd.f32 0.0, %v1388
        %v1390 = vpop.f32.mrb[0].mxu0
        %1391 = vdwg.mxu0
        %1392 = vrot.lane.b32.xlu0 %v752, 64
        %v1393 = vpop.permute.xlu0 %1392
        %v1396 = vsel %vm1160, %v1338, 0
        %1398 = vmatprep.subr.bf16.mxu0 0
        %1399 = vmatpush1.bf16.msra.mxu0 %v1393
        %1400 = vmatprep.subr.bf16.mxu0 0
        %1401 = vmatpush1.bf16.msra.mxu0 0
        %1402 = vmatprep.subr.bf16.mxu0 0
        %1403 = vmatpush1.bf16.msra.mxu0 0
        %1404 = vmatprep.subr.bf16.mxu0 0
        %1405 = vmatpush1.bf16.msra.mxu0 0
        %1406 = vmatprep.subr.bf16.mxu0 0
        %1407 = vmatpush1.bf16.msra.mxu0 0
        %1408 = vmatprep.subr.bf16.mxu0 0
        %1409 = vmatpush1.bf16.msra.mxu0 0
        %1410 = vmatprep.subr.bf16.mxu0 0
        %1411 = vmatpush1.bf16.msra.mxu0 0
        %1412 = vmatprep.subr.bf16.mxu0 0
        %1413 = vmatpush1.bf16.msra.mxu0 0
        %1414 = vmatprep.subr.bf16.mxu0 0
        %1415 = vmatpush1.bf16.msra.mxu0 0
        %1416 = vmatprep.subr.bf16.mxu0 0
        %1417 = vmatpush1.bf16.msra.mxu0 0
        %1418 = vmatprep.subr.bf16.mxu0 0
        %1419 = vmatpush1.bf16.msra.mxu0 0
        %1420 = vmatprep.subr.bf16.mxu0 0
        %1421 = vmatpush1.bf16.msra.mxu0 0
        %1422 = vmatprep.subr.bf16.mxu0 0
        %1423 = vmatpush1.bf16.msra.mxu0 0
        %1424 = vmatprep.subr.bf16.mxu0 0
        %1425 = vmatpush1.bf16.msra.mxu0 0
        %1426 = vmatprep.subr.bf16.mxu0 0
        %1427 = vmatpush1.bf16.msra.mxu0 0
        %1428 = vmatprep.subr.bf16.mxu0 0
        %1429 = vmatpush1.bf16.msra.mxu0 0
        %1430 = vmatprep.mubr.bf16.mxu0 0
        %1431 = vmatmul.mubr.bf16.gmra.mrb[0].mxu0 %v1396
        %v1432 = vpop.f32.mrb[0].mxu0
        %v1433 = vadd.f32 0.0, %v1432
        %v1434 = vpop.f32.mrb[0].mxu0
        %v1435 = vpop.f32.mrb[0].mxu0
        %v1436 = vadd.f32 0.0, %v1435
        %v1437 = vpop.f32.mrb[0].mxu0
        %1438 = vdwg.mxu0
        %1439 = vrot.lane.b32.xlu0 %v753, 64
        %v1440 = vpop.permute.xlu0 %1439
        %v1443 = vsel %vm1160, %v1339, 0
        %1445 = vmatprep.subr.bf16.mxu0 0
        %1446 = vmatpush1.bf16.msra.mxu0 %v1440
        %1447 = vmatprep.subr.bf16.mxu0 0
        %1448 = vmatpush1.bf16.msra.mxu0 0
        %1449 = vmatprep.subr.bf16.mxu0 0
        %1450 = vmatpush1.bf16.msra.mxu0 0
        %1451 = vmatprep.subr.bf16.mxu0 0
        %1452 = vmatpush1.bf16.msra.mxu0 0
        %1453 = vmatprep.subr.bf16.mxu0 0
        %1454 = vmatpush1.bf16.msra.mxu0 0
        %1455 = vmatprep.subr.bf16.mxu0 0
        %1456 = vmatpush1.bf16.msra.mxu0 0
        %1457 = vmatprep.subr.bf16.mxu0 0
        %1458 = vmatpush1.bf16.msra.mxu0 0
        %1459 = vmatprep.subr.bf16.mxu0 0
        %1460 = vmatpush1.bf16.msra.mxu0 0
        %1461 = vmatprep.subr.bf16.mxu0 0
        %1462 = vmatpush1.bf16.msra.mxu0 0
        %1463 = vmatprep.subr.bf16.mxu0 0
        %1464 = vmatpush1.bf16.msra.mxu0 0
        %1465 = vmatprep.subr.bf16.mxu0 0
        %1466 = vmatpush1.bf16.msra.mxu0 0
        %1467 = vmatprep.subr.bf16.mxu0 0
        %1468 = vmatpush1.bf16.msra.mxu0 0
        %1469 = vmatprep.subr.bf16.mxu0 0
        %1470 = vmatpush1.bf16.msra.mxu0 0
        %1471 = vmatprep.subr.bf16.mxu0 0
        %1472 = vmatpush1.bf16.msra.mxu0 0
        %1473 = vmatprep.subr.bf16.mxu0 0
        %1474 = vmatpush1.bf16.msra.mxu0 0
        %1475 = vmatprep.subr.bf16.mxu0 0
        %1476 = vmatpush1.bf16.msra.mxu0 0
        %1477 = vmatprep.mubr.bf16.mxu0 0
        %1478 = vmatmul.mubr.bf16.gmra.mrb[0].mxu0 %v1443
        %v1479 = vpop.f32.mrb[0].mxu0
        %v1480 = vadd.f32 0.0, %v1479
        %v1481 = vpop.f32.mrb[0].mxu0
        %v1482 = vpop.f32.mrb[0].mxu0
        %v1483 = vadd.f32 0.0, %v1482
        %v1484 = vpop.f32.mrb[0].mxu0
        %1485 = vdwg.mxu0
        %1486 = vrot.lane.b32.xlu0 %v754, 64
        %v1487 = vpop.permute.xlu0 %1486
        %v1490 = vsel %vm1160, %v1340, 0
        %1492 = vmatprep.subr.bf16.mxu0 0
        %1493 = vmatpush1.bf16.msra.mxu0 %v1487
        %1494 = vmatprep.subr.bf16.mxu0 0
        %1495 = vmatpush1.bf16.msra.mxu0 0
        %1496 = vmatprep.subr.bf16.mxu0 0
        %1497 = vmatpush1.bf16.msra.mxu0 0
        %1498 = vmatprep.subr.bf16.mxu0 0
        %1499 = vmatpush1.bf16.msra.mxu0 0
        %1500 = vmatprep.subr.bf16.mxu0 0
        %1501 = vmatpush1.bf16.msra.mxu0 0
        %1502 = vmatprep.subr.bf16.mxu0 0
        %1503 = vmatpush1.bf16.msra.mxu0 0
        %1504 = vmatprep.subr.bf16.mxu0 0
        %1505 = vmatpush1.bf16.msra.mxu0 0
        %1506 = vmatprep.subr.bf16.mxu0 0
        %1507 = vmatpush1.bf16.msra.mxu0 0
        %1508 = vmatprep.subr.bf16.mxu0 0
        %1509 = vmatpush1.bf16.msra.mxu0 0
        %1510 = vmatprep.subr.bf16.mxu0 0
        %1511 = vmatpush1.bf16.msra.mxu0 0
        %1512 = vmatprep.subr.bf16.mxu0 0
        %1513 = vmatpush1.bf16.msra.mxu0 0
        %1514 = vmatprep.subr.bf16.mxu0 0
        %1515 = vmatpush1.bf16.msra.mxu0 0
        %1516 = vmatprep.subr.bf16.mxu0 0
        %1517 = vmatpush1.bf16.msra.mxu0 0
        %1518 = vmatprep.subr.bf16.mxu0 0
        %1519 = vmatpush1.bf16.msra.mxu0 0
        %1520 = vmatprep.subr.bf16.mxu0 0
        %1521 = vmatpush1.bf16.msra.mxu0 0
        %1522 = vmatprep.subr.bf16.mxu0 0
        %1523 = vmatpush1.bf16.msra.mxu0 0
        %1524 = vmatprep.mubr.bf16.mxu0 0
        %1525 = vmatmul.mubr.bf16.gmra.mrb[0].mxu0 %v1490
        %v1526 = vpop.f32.mrb[0].mxu0
        %v1527 = vadd.f32 0.0, %v1526
        %v1528 = vpop.f32.mrb[0].mxu0
        %v1529 = vpop.f32.mrb[0].mxu0
        %v1530 = vadd.f32 0.0, %v1529
        %v1531 = vpop.f32.mrb[0].mxu0
        %1532 = vdwg.mxu0
        %1533 = vrot.lane.b32.xlu0 %v755, 64
        %v1534 = vpop.permute.xlu0 %1533
        %v1537 = vsel %vm1160, %v1341, 0
        %1539 = vmatprep.subr.bf16.mxu0 0
        %1540 = vmatpush1.bf16.msra.mxu0 %v1534
        %1541 = vmatprep.subr.bf16.mxu0 0
        %1542 = vmatpush1.bf16.msra.mxu0 0
        %1543 = vmatprep.subr.bf16.mxu0 0
        %1544 = vmatpush1.bf16.msra.mxu0 0
        %1545 = vmatprep.subr.bf16.mxu0 0
        %1546 = vmatpush1.bf16.msra.mxu0 0
        %1547 = vmatprep.subr.bf16.mxu0 0
        %1548 = vmatpush1.bf16.msra.mxu0 0
        %1549 = vmatprep.subr.bf16.mxu0 0
        %1550 = vmatpush1.bf16.msra.mxu0 0
        %1551 = vmatprep.subr.bf16.mxu0 0
        %1552 = vmatpush1.bf16.msra.mxu0 0
        %1553 = vmatprep.subr.bf16.mxu0 0
        %1554 = vmatpush1.bf16.msra.mxu0 0
        %1555 = vmatprep.subr.bf16.mxu0 0
        %1556 = vmatpush1.bf16.msra.mxu0 0
        %1557 = vmatprep.subr.bf16.mxu0 0
        %1558 = vmatpush1.bf16.msra.mxu0 0
        %1559 = vmatprep.subr.bf16.mxu0 0
        %1560 = vmatpush1.bf16.msra.mxu0 0
        %1561 = vmatprep.subr.bf16.mxu0 0
        %1562 = vmatpush1.bf16.msra.mxu0 0
        %1563 = vmatprep.subr.bf16.mxu0 0
        %1564 = vmatpush1.bf16.msra.mxu0 0
        %1565 = vmatprep.subr.bf16.mxu0 0
        %1566 = vmatpush1.bf16.msra.mxu0 0
        %1567 = vmatprep.subr.bf16.mxu0 0
        %1568 = vmatpush1.bf16.msra.mxu0 0
        %1569 = vmatprep.subr.bf16.mxu0 0
        %1570 = vmatpush1.bf16.msra.mxu0 0
        %1571 = vmatprep.mubr.bf16.mxu0 0
        %1572 = vmatmul.mubr.bf16.gmra.mrb[0].mxu0 %v1537
        %v1573 = vpop.f32.mrb[0].mxu0
        %v1574 = vadd.f32 0.0, %v1573
        %v1575 = vpop.f32.mrb[0].mxu0
        %v1576 = vpop.f32.mrb[0].mxu0
        %v1577 = vadd.f32 0.0, %v1576
        %v1578 = vpop.f32.mrb[0].mxu0
        %1579 = vdwg.mxu0
        %1580 = vrot.lane.b32.xlu0 %v756, 64
        %v1581 = vpop.permute.xlu0 %1580
        %v1584 = vsel %vm1160, %v1342, 0
        %1586 = vmatprep.subr.bf16.mxu0 0
        %1587 = vmatpush1.bf16.msra.mxu0 %v1581
        %1588 = vmatprep.subr.bf16.mxu0 0
        %1589 = vmatpush1.bf16.msra.mxu0 0
        %1590 = vmatprep.subr.bf16.mxu0 0
        %1591 = vmatpush1.bf16.msra.mxu0 0
        %1592 = vmatprep.subr.bf16.mxu0 0
        %1593 = vmatpush1.bf16.msra.mxu0 0
        %1594 = vmatprep.subr.bf16.mxu0 0
        %1595 = vmatpush1.bf16.msra.mxu0 0
        %1596 = vmatprep.subr.bf16.mxu0 0
        %1597 = vmatpush1.bf16.msra.mxu0 0
        %1598 = vmatprep.subr.bf16.mxu0 0
        %1599 = vmatpush1.bf16.msra.mxu0 0
        %1600 = vmatprep.subr.bf16.mxu0 0
        %1601 = vmatpush1.bf16.msra.mxu0 0
        %1602 = vmatprep.subr.bf16.mxu0 0
        %1603 = vmatpush1.bf16.msra.mxu0 0
        %1604 = vmatprep.subr.bf16.mxu0 0
        %1605 = vmatpush1.bf16.msra.mxu0 0
        %1606 = vmatprep.subr.bf16.mxu0 0
        %1607 = vmatpush1.bf16.msra.mxu0 0
        %1608 = vmatprep.subr.bf16.mxu0 0
        %1609 = vmatpush1.bf16.msra.mxu0 0
        %1610 = vmatprep.subr.bf16.mxu0 0
        %1611 = vmatpush1.bf16.msra.mxu0 0
        %1612 = vmatprep.subr.bf16.mxu0 0
        %1613 = vmatpush1.bf16.msra.mxu0 0
        %1614 = vmatprep.subr.bf16.mxu0 0
        %1615 = vmatpush1.bf16.msra.mxu0 0
        %1616 = vmatprep.subr.bf16.mxu0 0
        %1617 = vmatpush1.bf16.msra.mxu0 0
        %1618 = vmatprep.mubr.bf16.mxu0 0
        %1619 = vmatmul.mubr.bf16.gmra.mrb[0].mxu0 %v1584
        %v1620 = vpop.f32.mrb[0].mxu0
        %v1621 = vadd.f32 0.0, %v1620
        %v1622 = vpop.f32.mrb[0].mxu0
        %v1623 = vpop.f32.mrb[0].mxu0
        %v1624 = vadd.f32 0.0, %v1623
        %v1625 = vpop.f32.mrb[0].mxu0
        %1626 = vdwg.mxu0
        %1627 = vrot.lane.b32.xlu0 %v757, 64
        %v1628 = vpop.permute.xlu0 %1627
        %v1631 = vsel %vm1160, %v1343, 0
        %1633 = vmatprep.subr.bf16.mxu0 0
        %1634 = vmatpush1.bf16.msra.mxu0 %v1628
        %1635 = vmatprep.subr.bf16.mxu0 0
        %1636 = vmatpush1.bf16.msra.mxu0 0
        %1637 = vmatprep.subr.bf16.mxu0 0
        %1638 = vmatpush1.bf16.msra.mxu0 0
        %1639 = vmatprep.subr.bf16.mxu0 0
        %1640 = vmatpush1.bf16.msra.mxu0 0
        %1641 = vmatprep.subr.bf16.mxu0 0
        %1642 = vmatpush1.bf16.msra.mxu0 0
        %1643 = vmatprep.subr.bf16.mxu0 0
        %1644 = vmatpush1.bf16.msra.mxu0 0
        %1645 = vmatprep.subr.bf16.mxu0 0
        %1646 = vmatpush1.bf16.msra.mxu0 0
        %1647 = vmatprep.subr.bf16.mxu0 0
        %1648 = vmatpush1.bf16.msra.mxu0 0
        %1649 = vmatprep.subr.bf16.mxu0 0
        %1650 = vmatpush1.bf16.msra.mxu0 0
        %1651 = vmatprep.subr.bf16.mxu0 0
        %1652 = vmatpush1.bf16.msra.mxu0 0
        %1653 = vmatprep.subr.bf16.mxu0 0
        %1654 = vmatpush1.bf16.msra.mxu0 0
        %1655 = vmatprep.subr.bf16.mxu0 0
        %1656 = vmatpush1.bf16.msra.mxu0 0
        %1657 = vmatprep.subr.bf16.mxu0 0
        %1658 = vmatpush1.bf16.msra.mxu0 0
        %1659 = vmatprep.subr.bf16.mxu0 0
        %1660 = vmatpush1.bf16.msra.mxu0 0
        %1661 = vmatprep.subr.bf16.mxu0 0
        %1662 = vmatpush1.bf16.msra.mxu0 0
        %1663 = vmatprep.subr.bf16.mxu0 0
        %1664 = vmatpush1.bf16.msra.mxu0 0
        %1665 = vmatprep.mubr.bf16.mxu0 0
        %1666 = vmatmul.mubr.bf16.gmra.mrb[0].mxu0 %v1631
        %v1667 = vpop.f32.mrb[0].mxu0
        %v1668 = vadd.f32 0.0, %v1667
        %v1669 = vpop.f32.mrb[0].mxu0
        %v1670 = vpop.f32.mrb[0].mxu0
        %v1671 = vadd.f32 0.0, %v1670
        %v1672 = vpop.f32.mrb[0].mxu0
        %1673 = vdwg.mxu0
        %1674 = vrot.lane.b32.xlu0 %v758, 64
        %v1675 = vpop.permute.xlu0 %1674
        %v1678 = vsel %vm1160, %v1344, 0
        %1680 = vmatprep.subr.bf16.mxu0 0
        %1681 = vmatpush1.bf16.msra.mxu0 %v1675
        %1682 = vmatprep.subr.bf16.mxu0 0
        %1683 = vmatpush1.bf16.msra.mxu0 0
        %1684 = vmatprep.subr.bf16.mxu0 0
        %1685 = vmatpush1.bf16.msra.mxu0 0
        %1686 = vmatprep.subr.bf16.mxu0 0
        %1687 = vmatpush1.bf16.msra.mxu0 0
        %1688 = vmatprep.subr.bf16.mxu0 0
        %1689 = vmatpush1.bf16.msra.mxu0 0
        %1690 = vmatprep.subr.bf16.mxu0 0
        %1691 = vmatpush1.bf16.msra.mxu0 0
        %1692 = vmatprep.subr.bf16.mxu0 0
        %1693 = vmatpush1.bf16.msra.mxu0 0
        %1694 = vmatprep.subr.bf16.mxu0 0
        %1695 = vmatpush1.bf16.msra.mxu0 0
        %1696 = vmatprep.subr.bf16.mxu0 0
        %1697 = vmatpush1.bf16.msra.mxu0 0
        %1698 = vmatprep.subr.bf16.mxu0 0
        %1699 = vmatpush1.bf16.msra.mxu0 0
        %1700 = vmatprep.subr.bf16.mxu0 0
        %1701 = vmatpush1.bf16.msra.mxu0 0
        %1702 = vmatprep.subr.bf16.mxu0 0
        %1703 = vmatpush1.bf16.msra.mxu0 0
        %1704 = vmatprep.subr.bf16.mxu0 0
        %1705 = vmatpush1.bf16.msra.mxu0 0
        %1706 = vmatprep.subr.bf16.mxu0 0
        %1707 = vmatpush1.bf16.msra.mxu0 0
        %1708 = vmatprep.subr.bf16.mxu0 0
        %1709 = vmatpush1.bf16.msra.mxu0 0
        %1710 = vmatprep.subr.bf16.mxu0 0
        %1711 = vmatpush1.bf16.msra.mxu0 0
        %1712 = vmatprep.mubr.bf16.mxu0 0
        %1713 = vmatmul.mubr.bf16.gmra.mrb[0].mxu0 %v1678
        %v1714 = vpop.f32.mrb[0].mxu0
        %v1715 = vadd.f32 0.0, %v1714
        %v1716 = vpop.f32.mrb[0].mxu0
        %v1717 = vpop.f32.mrb[0].mxu0
        %v1718 = vadd.f32 0.0, %v1717
        %v1719 = vpop.f32.mrb[0].mxu0
        %1720 = vdwg.mxu0
        %v1721 = vpack.c.bf16 %v1389, %v1386
        %v1722 = vpack.c.bf16 %v1436, %v1433
        %v1723 = vpack.c.bf16 %v1483, %v1480
        %v1724 = vpack.c.bf16 %v1530, %v1527
        %v1725 = vpack.c.bf16 %v1577, %v1574
        %v1726 = vpack.c.bf16 %v1624, %v1621
        %v1727 = vpack.c.bf16 %v1671, %v1668
        %v1728 = vpack.c.bf16 %v1718, %v1715
        %1729 = vst.msk [vmem:[#allocation3] sm:$0xff] %vm762, %v1721
        %1730 = vst.msk [vmem:[#allocation3 + $0x8] sm:$0xff] %vm762, %v1722
        %1731 = vst.msk [vmem:[#allocation3 + $0x10] sm:$0xff] %vm762, %v1723
        %1732 = vst.msk [vmem:[#allocation3 + $0x18] sm:$0xff] %vm762, %v1724
        %1733 = vst.msk [vmem:[#allocation3 + $0x20] sm:$0xff] %vm762, %v1725
        %1734 = vst.msk [vmem:[#allocation3 + $0x28] sm:$0xff] %vm762, %v1726
        %1735 = vst.msk [vmem:[#allocation3 + $0x30] sm:$0xff] %vm762, %v1727
        %1736 = vst.msk [vmem:[#allocation3 + $0x38] sm:$0xff] %vm762, %v1728
        %v1737 = vld [vmem:[#allocation2] sm:$0xff]
        %v1738 = vld [vmem:[#allocation2 + $0x8] sm:$0xff]
        %v1739 = vld [vmem:[#allocation2 + $0x10] sm:$0xff]
        %v1740 = vld [vmem:[#allocation2 + $0x18] sm:$0xff]
        %v1741 = vld [vmem:[#allocation2 + $0x20] sm:$0xff]
        %v1742 = vld [vmem:[#allocation2 + $0x28] sm:$0xff]
        %v1743 = vld [vmem:[#allocation2 + $0x30] sm:$0xff]
        %v1744 = vld [vmem:[#allocation2 + $0x38] sm:$0xff]
        %1746 = vrot.lane.b32.xlu0 %v1737, 124
        %v1747 = vpop.permute.xlu0 %1746
        %1748 = vrot.lane.b32.xlu0 %v1737, 92
        %v1749 = vpop.permute.xlu0 %1748
        %v1751 = vsel %vm762, %v1747, 0
        %v1754 = vsel %vm762, %v1749, 0
        %1756 = vmatprep.subr.bf16.mxu0 0
        %1757 = vmatpush1.bf16.xpose.msra.mxu0 %v1754
        %1758 = vmatprep.subr.bf16.mxu0 0
        %1759 = vmatpush1.bf16.xpose.msra.mxu0 0
        %1760 = vmatprep.subr.bf16.mxu0 0
        %1761 = vmatpush1.bf16.xpose.msra.mxu0 0
        %1762 = vmatprep.subr.bf16.mxu0 0
        %1763 = vmatpush1.bf16.xpose.msra.mxu0 0
        %1764 = vmatprep.subr.bf16.mxu0 0
        %1765 = vmatpush1.bf16.xpose.msra.mxu0 0
        %1766 = vmatprep.subr.bf16.mxu0 0
        %1767 = vmatpush1.bf16.xpose.msra.mxu0 0
        %1768 = vmatprep.subr.bf16.mxu0 0
        %1769 = vmatpush1.bf16.xpose.msra.mxu0 0
        %1770 = vmatprep.subr.bf16.mxu0 0
        %1771 = vmatpush1.bf16.xpose.msra.mxu0 0
        %1772 = vmatprep.subr.bf16.mxu0 0
        %1773 = vmatpush1.bf16.xpose.msra.mxu0 0
        %1774 = vmatprep.subr.bf16.mxu0 0
        %1775 = vmatpush1.bf16.xpose.msra.mxu0 0
        %1776 = vmatprep.subr.bf16.mxu0 0
        %1777 = vmatpush1.bf16.xpose.msra.mxu0 0
        %1778 = vmatprep.subr.bf16.mxu0 0
        %1779 = vmatpush1.bf16.xpose.msra.mxu0 0
        %1780 = vmatprep.subr.bf16.mxu0 0
        %1781 = vmatpush1.bf16.xpose.msra.mxu0 0
        %1782 = vmatprep.subr.bf16.mxu0 0
        %1783 = vmatpush1.bf16.xpose.msra.mxu0 0
        %1784 = vmatprep.subr.bf16.mxu0 0
        %1785 = vmatpush1.bf16.xpose.msra.mxu0 0
        %1786 = vmatprep.subr.bf16.mxu0 0
        %1787 = vmatpush1.bf16.xpose.msra.mxu0 0
        %1788 = vmatprep.mubr.bf16.mxu0 0
        %1789 = vmatmul.mubr.bf16.gmra.mrb[0].mxu0 %v1751
        %v1790 = vpop.f32.mrb[0].mxu0
        %v1791 = vadd.f32 0.0, %v1790
        %v1792 = vpop.f32.mrb[0].mxu0
        %v1793 = vpop.f32.mrb[0].mxu0
        %v1794 = vadd.f32 0.0, %v1793
        %v1795 = vpop.f32.mrb[0].mxu0
        %1796 = vdwg.mxu0
        %1798 = vrot.lane.b32.xlu0 %v1738, 124
        %v1799 = vpop.permute.xlu0 %1798
        %1800 = vrot.lane.b32.xlu0 %v1738, 92
        %v1801 = vpop.permute.xlu0 %1800
        %v1803 = vsel %vm762, %v1799, 0
        %v1806 = vsel %vm762, %v1801, 0
        %1808 = vmatprep.subr.bf16.mxu0 0
        %1809 = vmatpush1.bf16.xpose.msra.mxu0 %v1806
        %1810 = vmatprep.subr.bf16.mxu0 0
        %1811 = vmatpush1.bf16.xpose.msra.mxu0 0
        %1812 = vmatprep.subr.bf16.mxu0 0
        %1813 = vmatpush1.bf16.xpose.msra.mxu0 0
        %1814 = vmatprep.subr.bf16.mxu0 0
        %1815 = vmatpush1.bf16.xpose.msra.mxu0 0
        %1816 = vmatprep.subr.bf16.mxu0 0
        %1817 = vmatpush1.bf16.xpose.msra.mxu0 0
        %1818 = vmatprep.subr.bf16.mxu0 0
        %1819 = vmatpush1.bf16.xpose.msra.mxu0 0
        %1820 = vmatprep.subr.bf16.mxu0 0
        %1821 = vmatpush1.bf16.xpose.msra.mxu0 0
        %1822 = vmatprep.subr.bf16.mxu0 0
        %1823 = vmatpush1.bf16.xpose.msra.mxu0 0
        %1824 = vmatprep.subr.bf16.mxu0 0
        %1825 = vmatpush1.bf16.xpose.msra.mxu0 0
        %1826 = vmatprep.subr.bf16.mxu0 0
        %1827 = vmatpush1.bf16.xpose.msra.mxu0 0
        %1828 = vmatprep.subr.bf16.mxu0 0
        %1829 = vmatpush1.bf16.xpose.msra.mxu0 0
        %1830 = vmatprep.subr.bf16.mxu0 0
        %1831 = vmatpush1.bf16.xpose.msra.mxu0 0
        %1832 = vmatprep.subr.bf16.mxu0 0
        %1833 = vmatpush1.bf16.xpose.msra.mxu0 0
        %1834 = vmatprep.subr.bf16.mxu0 0
        %1835 = vmatpush1.bf16.xpose.msra.mxu0 0
        %1836 = vmatprep.subr.bf16.mxu0 0
        %1837 = vmatpush1.bf16.xpose.msra.mxu0 0
        %1838 = vmatprep.subr.bf16.mxu0 0
        %1839 = vmatpush1.bf16.xpose.msra.mxu0 0
        %1840 = vmatprep.mubr.bf16.mxu0 0
        %1841 = vmatmul.mubr.bf16.gmra.mrb[0].mxu0 %v1803
        %v1842 = vpop.f32.mrb[0].mxu0
        %v1843 = vadd.f32 0.0, %v1842
        %v1844 = vpop.f32.mrb[0].mxu0
        %v1845 = vpop.f32.mrb[0].mxu0
        %v1846 = vadd.f32 0.0, %v1845
        %v1847 = vpop.f32.mrb[0].mxu0
        %1848 = vdwg.mxu0
        %1850 = vrot.lane.b32.xlu0 %v1739, 124
        %v1851 = vpop.permute.xlu0 %1850
        %1852 = vrot.lane.b32.xlu0 %v1739, 92
        %v1853 = vpop.permute.xlu0 %1852
        %v1855 = vsel %vm762, %v1851, 0
        %v1858 = vsel %vm762, %v1853, 0
        %1860 = vmatprep.subr.bf16.mxu0 0
        %1861 = vmatpush1.bf16.xpose.msra.mxu0 %v1858
        %1862 = vmatprep.subr.bf16.mxu0 0
        %1863 = vmatpush1.bf16.xpose.msra.mxu0 0
        %1864 = vmatprep.subr.bf16.mxu0 0
        %1865 = vmatpush1.bf16.xpose.msra.mxu0 0
        %1866 = vmatprep.subr.bf16.mxu0 0
        %1867 = vmatpush1.bf16.xpose.msra.mxu0 0
        %1868 = vmatprep.subr.bf16.mxu0 0
        %1869 = vmatpush1.bf16.xpose.msra.mxu0 0
        %1870 = vmatprep.subr.bf16.mxu0 0
        %1871 = vmatpush1.bf16.xpose.msra.mxu0 0
        %1872 = vmatprep.subr.bf16.mxu0 0
        %1873 = vmatpush1.bf16.xpose.msra.mxu0 0
        %1874 = vmatprep.subr.bf16.mxu0 0
        %1875 = vmatpush1.bf16.xpose.msra.mxu0 0
        %1876 = vmatprep.subr.bf16.mxu0 0
        %1877 = vmatpush1.bf16.xpose.msra.mxu0 0
        %1878 = vmatprep.subr.bf16.mxu0 0
        %1879 = vmatpush1.bf16.xpose.msra.mxu0 0
        %1880 = vmatprep.subr.bf16.mxu0 0
        %1881 = vmatpush1.bf16.xpose.msra.mxu0 0
        %1882 = vmatprep.subr.bf16.mxu0 0
        %1883 = vmatpush1.bf16.xpose.msra.mxu0 0
        %1884 = vmatprep.subr.bf16.mxu0 0
        %1885 = vmatpush1.bf16.xpose.msra.mxu0 0
        %1886 = vmatprep.subr.bf16.mxu0 0
        %1887 = vmatpush1.bf16.xpose.msra.mxu0 0
        %1888 = vmatprep.subr.bf16.mxu0 0
        %1889 = vmatpush1.bf16.xpose.msra.mxu0 0
        %1890 = vmatprep.subr.bf16.mxu0 0
        %1891 = vmatpush1.bf16.xpose.msra.mxu0 0
        %1892 = vmatprep.mubr.bf16.mxu0 0
        %1893 = vmatmul.mubr.bf16.gmra.mrb[0].mxu0 %v1855
        %v1894 = vpop.f32.mrb[0].mxu0
        %v1895 = vadd.f32 0.0, %v1894
        %v1896 = vpop.f32.mrb[0].mxu0
        %v1897 = vpop.f32.mrb[0].mxu0
        %v1898 = vadd.f32 0.0, %v1897
        %v1899 = vpop.f32.mrb[0].mxu0
        %1900 = vdwg.mxu0
        %1902 = vrot.lane.b32.xlu0 %v1740, 124
        %v1903 = vpop.permute.xlu0 %1902
        %1904 = vrot.lane.b32.xlu0 %v1740, 92
        %v1905 = vpop.permute.xlu0 %1904
        %v1907 = vsel %vm762, %v1903, 0
        %v1910 = vsel %vm762, %v1905, 0
        %1912 = vmatprep.subr.bf16.mxu0 0
        %1913 = vmatpush1.bf16.xpose.msra.mxu0 %v1910
        %1914 = vmatprep.subr.bf16.mxu0 0
        %1915 = vmatpush1.bf16.xpose.msra.mxu0 0
        %1916 = vmatprep.subr.bf16.mxu0 0
        %1917 = vmatpush1.bf16.xpose.msra.mxu0 0
        %1918 = vmatprep.subr.bf16.mxu0 0
        %1919 = vmatpush1.bf16.xpose.msra.mxu0 0
        %1920 = vmatprep.subr.bf16.mxu0 0
        %1921 = vmatpush1.bf16.xpose.msra.mxu0 0
        %1922 = vmatprep.subr.bf16.mxu0 0
        %1923 = vmatpush1.bf16.xpose.msra.mxu0 0
        %1924 = vmatprep.subr.bf16.mxu0 0
        %1925 = vmatpush1.bf16.xpose.msra.mxu0 0
        %1926 = vmatprep.subr.bf16.mxu0 0
        %1927 = vmatpush1.bf16.xpose.msra.mxu0 0
        %1928 = vmatprep.subr.bf16.mxu0 0
        %1929 = vmatpush1.bf16.xpose.msra.mxu0 0
        %1930 = vmatprep.subr.bf16.mxu0 0
        %1931 = vmatpush1.bf16.xpose.msra.mxu0 0
        %1932 = vmatprep.subr.bf16.mxu0 0
        %1933 = vmatpush1.bf16.xpose.msra.mxu0 0
        %1934 = vmatprep.subr.bf16.mxu0 0
        %1935 = vmatpush1.bf16.xpose.msra.mxu0 0
        %1936 = vmatprep.subr.bf16.mxu0 0
        %1937 = vmatpush1.bf16.xpose.msra.mxu0 0
        %1938 = vmatprep.subr.bf16.mxu0 0
        %1939 = vmatpush1.bf16.xpose.msra.mxu0 0
        %1940 = vmatprep.subr.bf16.mxu0 0
        %1941 = vmatpush1.bf16.xpose.msra.mxu0 0
        %1942 = vmatprep.subr.bf16.mxu0 0
        %1943 = vmatpush1.bf16.xpose.msra.mxu0 0
        %1944 = vmatprep.mubr.bf16.mxu0 0
        %1945 = vmatmul.mubr.bf16.gmra.mrb[0].mxu0 %v1907
        %v1946 = vpop.f32.mrb[0].mxu0
        %v1947 = vadd.f32 0.0, %v1946
        %v1948 = vpop.f32.mrb[0].mxu0
        %v1949 = vpop.f32.mrb[0].mxu0
        %v1950 = vadd.f32 0.0, %v1949
        %v1951 = vpop.f32.mrb[0].mxu0
        %1952 = vdwg.mxu0
        %1954 = vrot.lane.b32.xlu0 %v1741, 124
        %v1955 = vpop.permute.xlu0 %1954
        %1956 = vrot.lane.b32.xlu0 %v1741, 92
        %v1957 = vpop.permute.xlu0 %1956
        %v1959 = vsel %vm762, %v1955, 0
        %v1962 = vsel %vm762, %v1957, 0
        %1964 = vmatprep.subr.bf16.mxu0 0
        %1965 = vmatpush1.bf16.xpose.msra.mxu0 %v1962
        %1966 = vmatprep.subr.bf16.mxu0 0
        %1967 = vmatpush1.bf16.xpose.msra.mxu0 0
        %1968 = vmatprep.subr.bf16.mxu0 0
        %1969 = vmatpush1.bf16.xpose.msra.mxu0 0
        %1970 = vmatprep.subr.bf16.mxu0 0
        %1971 = vmatpush1.bf16.xpose.msra.mxu0 0
        %1972 = vmatprep.subr.bf16.mxu0 0
        %1973 = vmatpush1.bf16.xpose.msra.mxu0 0
        %1974 = vmatprep.subr.bf16.mxu0 0
        %1975 = vmatpush1.bf16.xpose.msra.mxu0 0
        %1976 = vmatprep.subr.bf16.mxu0 0
        %1977 = vmatpush1.bf16.xpose.msra.mxu0 0
        %1978 = vmatprep.subr.bf16.mxu0 0
        %1979 = vmatpush1.bf16.xpose.msra.mxu0 0
        %1980 = vmatprep.subr.bf16.mxu0 0
        %1981 = vmatpush1.bf16.xpose.msra.mxu0 0
        %1982 = vmatprep.subr.bf16.mxu0 0
        %1983 = vmatpush1.bf16.xpose.msra.mxu0 0
        %1984 = vmatprep.subr.bf16.mxu0 0
        %1985 = vmatpush1.bf16.xpose.msra.mxu0 0
        %1986 = vmatprep.subr.bf16.mxu0 0
        %1987 = vmatpush1.bf16.xpose.msra.mxu0 0
        %1988 = vmatprep.subr.bf16.mxu0 0
        %1989 = vmatpush1.bf16.xpose.msra.mxu0 0
        %1990 = vmatprep.subr.bf16.mxu0 0
        %1991 = vmatpush1.bf16.xpose.msra.mxu0 0
        %1992 = vmatprep.subr.bf16.mxu0 0
        %1993 = vmatpush1.bf16.xpose.msra.mxu0 0
        %1994 = vmatprep.subr.bf16.mxu0 0
        %1995 = vmatpush1.bf16.xpose.msra.mxu0 0
        %1996 = vmatprep.mubr.bf16.mxu0 0
        %1997 = vmatmul.mubr.bf16.gmra.mrb[0].mxu0 %v1959
        %v1998 = vpop.f32.mrb[0].mxu0
        %v1999 = vadd.f32 0.0, %v1998
        %v2000 = vpop.f32.mrb[0].mxu0
        %v2001 = vpop.f32.mrb[0].mxu0
        %v2002 = vadd.f32 0.0, %v2001
        %v2003 = vpop.f32.mrb[0].mxu0
        %2004 = vdwg.mxu0
        %2006 = vrot.lane.b32.xlu0 %v1742, 124
        %v2007 = vpop.permute.xlu0 %2006
        %2008 = vrot.lane.b32.xlu0 %v1742, 92
        %v2009 = vpop.permute.xlu0 %2008
        %v2011 = vsel %vm762, %v2007, 0
        %v2014 = vsel %vm762, %v2009, 0
        %2016 = vmatprep.subr.bf16.mxu0 0
        %2017 = vmatpush1.bf16.xpose.msra.mxu0 %v2014
        %2018 = vmatprep.subr.bf16.mxu0 0
        %2019 = vmatpush1.bf16.xpose.msra.mxu0 0
        %2020 = vmatprep.subr.bf16.mxu0 0
        %2021 = vmatpush1.bf16.xpose.msra.mxu0 0
        %2022 = vmatprep.subr.bf16.mxu0 0
        %2023 = vmatpush1.bf16.xpose.msra.mxu0 0
        %2024 = vmatprep.subr.bf16.mxu0 0
        %2025 = vmatpush1.bf16.xpose.msra.mxu0 0
        %2026 = vmatprep.subr.bf16.mxu0 0
        %2027 = vmatpush1.bf16.xpose.msra.mxu0 0
        %2028 = vmatprep.subr.bf16.mxu0 0
        %2029 = vmatpush1.bf16.xpose.msra.mxu0 0
        %2030 = vmatprep.subr.bf16.mxu0 0
        %2031 = vmatpush1.bf16.xpose.msra.mxu0 0
        %2032 = vmatprep.subr.bf16.mxu0 0
        %2033 = vmatpush1.bf16.xpose.msra.mxu0 0
        %2034 = vmatprep.subr.bf16.mxu0 0
        %2035 = vmatpush1.bf16.xpose.msra.mxu0 0
        %2036 = vmatprep.subr.bf16.mxu0 0
        %2037 = vmatpush1.bf16.xpose.msra.mxu0 0
        %2038 = vmatprep.subr.bf16.mxu0 0
        %2039 = vmatpush1.bf16.xpose.msra.mxu0 0
        %2040 = vmatprep.subr.bf16.mxu0 0
        %2041 = vmatpush1.bf16.xpose.msra.mxu0 0
        %2042 = vmatprep.subr.bf16.mxu0 0
        %2043 = vmatpush1.bf16.xpose.msra.mxu0 0
        %2044 = vmatprep.subr.bf16.mxu0 0
        %2045 = vmatpush1.bf16.xpose.msra.mxu0 0
        %2046 = vmatprep.subr.bf16.mxu0 0
        %2047 = vmatpush1.bf16.xpose.msra.mxu0 0
        %2048 = vmatprep.mubr.bf16.mxu0 0
        %2049 = vmatmul.mubr.bf16.gmra.mrb[0].mxu0 %v2011
        %v2050 = vpop.f32.mrb[0].mxu0
        %v2051 = vadd.f32 0.0, %v2050
        %v2052 = vpop.f32.mrb[0].mxu0
        %v2053 = vpop.f32.mrb[0].mxu0
        %v2054 = vadd.f32 0.0, %v2053
        %v2055 = vpop.f32.mrb[0].mxu0
        %2056 = vdwg.mxu0
        %2058 = vrot.lane.b32.xlu0 %v1743, 124
        %v2059 = vpop.permute.xlu0 %2058
        %2060 = vrot.lane.b32.xlu0 %v1743, 92
        %v2061 = vpop.permute.xlu0 %2060
        %v2063 = vsel %vm762, %v2059, 0
        %v2066 = vsel %vm762, %v2061, 0
        %2068 = vmatprep.subr.bf16.mxu0 0
        %2069 = vmatpush1.bf16.xpose.msra.mxu0 %v2066
        %2070 = vmatprep.subr.bf16.mxu0 0
        %2071 = vmatpush1.bf16.xpose.msra.mxu0 0
        %2072 = vmatprep.subr.bf16.mxu0 0
        %2073 = vmatpush1.bf16.xpose.msra.mxu0 0
        %2074 = vmatprep.subr.bf16.mxu0 0
        %2075 = vmatpush1.bf16.xpose.msra.mxu0 0
        %2076 = vmatprep.subr.bf16.mxu0 0
        %2077 = vmatpush1.bf16.xpose.msra.mxu0 0
        %2078 = vmatprep.subr.bf16.mxu0 0
        %2079 = vmatpush1.bf16.xpose.msra.mxu0 0
        %2080 = vmatprep.subr.bf16.mxu0 0
        %2081 = vmatpush1.bf16.xpose.msra.mxu0 0
        %2082 = vmatprep.subr.bf16.mxu0 0
        %2083 = vmatpush1.bf16.xpose.msra.mxu0 0
        %2084 = vmatprep.subr.bf16.mxu0 0
        %2085 = vmatpush1.bf16.xpose.msra.mxu0 0
        %2086 = vmatprep.subr.bf16.mxu0 0
        %2087 = vmatpush1.bf16.xpose.msra.mxu0 0
        %2088 = vmatprep.subr.bf16.mxu0 0
        %2089 = vmatpush1.bf16.xpose.msra.mxu0 0
        %2090 = vmatprep.subr.bf16.mxu0 0
        %2091 = vmatpush1.bf16.xpose.msra.mxu0 0
        %2092 = vmatprep.subr.bf16.mxu0 0
        %2093 = vmatpush1.bf16.xpose.msra.mxu0 0
        %2094 = vmatprep.subr.bf16.mxu0 0
        %2095 = vmatpush1.bf16.xpose.msra.mxu0 0
        %2096 = vmatprep.subr.bf16.mxu0 0
        %2097 = vmatpush1.bf16.xpose.msra.mxu0 0
        %2098 = vmatprep.subr.bf16.mxu0 0
        %2099 = vmatpush1.bf16.xpose.msra.mxu0 0
        %2100 = vmatprep.mubr.bf16.mxu0 0
        %2101 = vmatmul.mubr.bf16.gmra.mrb[0].mxu0 %v2063
        %v2102 = vpop.f32.mrb[0].mxu0
        %v2103 = vadd.f32 0.0, %v2102
        %v2104 = vpop.f32.mrb[0].mxu0
        %v2105 = vpop.f32.mrb[0].mxu0
        %v2106 = vadd.f32 0.0, %v2105
        %v2107 = vpop.f32.mrb[0].mxu0
        %2108 = vdwg.mxu0
        %2110 = vrot.lane.b32.xlu0 %v1744, 124
        %v2111 = vpop.permute.xlu0 %2110
        %2112 = vrot.lane.b32.xlu0 %v1744, 92
        %v2113 = vpop.permute.xlu0 %2112
        %v2115 = vsel %vm762, %v2111, 0
        %v2118 = vsel %vm762, %v2113, 0
        %2120 = vmatprep.subr.bf16.mxu0 0
        %2121 = vmatpush1.bf16.xpose.msra.mxu0 %v2118
        %2122 = vmatprep.subr.bf16.mxu0 0
        %2123 = vmatpush1.bf16.xpose.msra.mxu0 0
        %2124 = vmatprep.subr.bf16.mxu0 0
        %2125 = vmatpush1.bf16.xpose.msra.mxu0 0
        %2126 = vmatprep.subr.bf16.mxu0 0
        %2127 = vmatpush1.bf16.xpose.msra.mxu0 0
        %2128 = vmatprep.subr.bf16.mxu0 0
        %2129 = vmatpush1.bf16.xpose.msra.mxu0 0
        %2130 = vmatprep.subr.bf16.mxu0 0
        %2131 = vmatpush1.bf16.xpose.msra.mxu0 0
        %2132 = vmatprep.subr.bf16.mxu0 0
        %2133 = vmatpush1.bf16.xpose.msra.mxu0 0
        %2134 = vmatprep.subr.bf16.mxu0 0
        %2135 = vmatpush1.bf16.xpose.msra.mxu0 0
        %2136 = vmatprep.subr.bf16.mxu0 0
        %2137 = vmatpush1.bf16.xpose.msra.mxu0 0
        %2138 = vmatprep.subr.bf16.mxu0 0
        %2139 = vmatpush1.bf16.xpose.msra.mxu0 0
        %2140 = vmatprep.subr.bf16.mxu0 0
        %2141 = vmatpush1.bf16.xpose.msra.mxu0 0
        %2142 = vmatprep.subr.bf16.mxu0 0
        %2143 = vmatpush1.bf16.xpose.msra.mxu0 0
        %2144 = vmatprep.subr.bf16.mxu0 0
        %2145 = vmatpush1.bf16.xpose.msra.mxu0 0
        %2146 = vmatprep.subr.bf16.mxu0 0
        %2147 = vmatpush1.bf16.xpose.msra.mxu0 0
        %2148 = vmatprep.subr.bf16.mxu0 0
        %2149 = vmatpush1.bf16.xpose.msra.mxu0 0
        %2150 = vmatprep.subr.bf16.mxu0 0
        %2151 = vmatpush1.bf16.xpose.msra.mxu0 0
        %2152 = vmatprep.mubr.bf16.mxu0 0
        %2153 = vmatmul.mubr.bf16.gmra.mrb[0].mxu0 %v2115
        %v2154 = vpop.f32.mrb[0].mxu0
        %v2155 = vadd.f32 0.0, %v2154
        %v2156 = vpop.f32.mrb[0].mxu0
        %v2157 = vpop.f32.mrb[0].mxu0
        %v2158 = vadd.f32 0.0, %v2157
        %v2159 = vpop.f32.mrb[0].mxu0
        %2160 = vdwg.mxu0
        %v2161 = vsel %vm1160, %v1791, -inf
        %2162 = vmax.xlane.f32.xlu0 %v2161
        %v2163 = vpop.xlane.xlu0 %2162
        %v2164 = vsel %vm1160, %v1794, -inf
        %2165 = vmax.xlane.f32.xlu0 %v2164
        %v2166 = vpop.xlane.xlu0 %2165
        %v2167 = vsel %vm1160, %v1843, -inf
        %2168 = vmax.xlane.f32.xlu0 %v2167
        %v2169 = vpop.xlane.xlu0 %2168
        %v2170 = vsel %vm1160, %v1846, -inf
        %2171 = vmax.xlane.f32.xlu0 %v2170
        %v2172 = vpop.xlane.xlu0 %2171
        %v2173 = vsel %vm1160, %v1895, -inf
        %2174 = vmax.xlane.f32.xlu0 %v2173
        %v2175 = vpop.xlane.xlu0 %2174
        %v2176 = vsel %vm1160, %v1898, -inf
        %2177 = vmax.xlane.f32.xlu0 %v2176
        %v2178 = vpop.xlane.xlu0 %2177
        %v2179 = vsel %vm1160, %v1947, -inf
        %2180 = vmax.xlane.f32.xlu0 %v2179
        %v2181 = vpop.xlane.xlu0 %2180
        %v2182 = vsel %vm1160, %v1950, -inf
        %2183 = vmax.xlane.f32.xlu0 %v2182
        %v2184 = vpop.xlane.xlu0 %2183
        %v2185 = vsel %vm1160, %v1999, -inf
        %2186 = vmax.xlane.f32.xlu0 %v2185
        %v2187 = vpop.xlane.xlu0 %2186
        %v2188 = vsel %vm1160, %v2002, -inf
        %2189 = vmax.xlane.f32.xlu0 %v2188
        %v2190 = vpop.xlane.xlu0 %2189
        %v2191 = vsel %vm1160, %v2051, -inf
        %2192 = vmax.xlane.f32.xlu0 %v2191
        %v2193 = vpop.xlane.xlu0 %2192
        %v2194 = vsel %vm1160, %v2054, -inf
        %2195 = vmax.xlane.f32.xlu0 %v2194
        %v2196 = vpop.xlane.xlu0 %2195
        %v2197 = vsel %vm1160, %v2103, -inf
        %2198 = vmax.xlane.f32.xlu0 %v2197
        %v2199 = vpop.xlane.xlu0 %2198
        %v2200 = vsel %vm1160, %v2106, -inf
        %2201 = vmax.xlane.f32.xlu0 %v2200
        %v2202 = vpop.xlane.xlu0 %2201
        %v2203 = vsel %vm1160, %v2155, -inf
        %2204 = vmax.xlane.f32.xlu0 %v2203
        %v2205 = vpop.xlane.xlu0 %2204
        %v2206 = vsel %vm1160, %v2158, -inf
        %2207 = vmax.xlane.f32.xlu0 %v2206
        %v2208 = vpop.xlane.xlu0 %2207
        %v2209 = vsub.f32 %v1791, %v2163
        %v2210 = vsub.f32 %v1794, %v2166
        %v2211 = vsub.f32 %v1843, %v2169
        %v2212 = vsub.f32 %v1846, %v2172
        %v2213 = vsub.f32 %v1895, %v2175
        %v2214 = vsub.f32 %v1898, %v2178
        %v2215 = vsub.f32 %v1947, %v2181
        %v2216 = vsub.f32 %v1950, %v2184
        %v2217 = vsub.f32 %v1999, %v2187
        %v2218 = vsub.f32 %v2002, %v2190
        %v2219 = vsub.f32 %v2051, %v2193
        %v2220 = vsub.f32 %v2054, %v2196
        %v2221 = vsub.f32 %v2103, %v2199
        %v2222 = vsub.f32 %v2106, %v2202
        %v2223 = vsub.f32 %v2155, %v2205
        %v2224 = vsub.f32 %v2158, %v2208
        %v2225 = vmul.f32 %v2209, 1.442695
        %v2226 = vpow.pop %v2225
        %v2227 = vmul.f32 %v2210, 1.442695
        %v2228 = vpow.pop %v2227
        %v2229 = vmul.f32 %v2211, 1.442695
        %v2230 = vpow.pop %v2229
        %v2231 = vmul.f32 %v2212, 1.442695
        %v2232 = vpow.pop %v2231
        %v2233 = vmul.f32 %v2213, 1.442695
        %v2234 = vpow.pop %v2233
        %v2235 = vmul.f32 %v2214, 1.442695
        %v2236 = vpow.pop %v2235
        %v2237 = vmul.f32 %v2215, 1.442695
        %v2238 = vpow.pop %v2237
        %v2239 = vmul.f32 %v2216, 1.442695
        %v2240 = vpow.pop %v2239
        %v2241 = vmul.f32 %v2217, 1.442695
        %v2242 = vpow.pop %v2241
        %v2243 = vmul.f32 %v2218, 1.442695
        %v2244 = vpow.pop %v2243
        %v2245 = vmul.f32 %v2219, 1.442695
        %v2246 = vpow.pop %v2245
        %v2247 = vmul.f32 %v2220, 1.442695
        %v2248 = vpow.pop %v2247
        %v2249 = vmul.f32 %v2221, 1.442695
        %v2250 = vpow.pop %v2249
        %v2251 = vmul.f32 %v2222, 1.442695
        %v2252 = vpow.pop %v2251
        %v2253 = vmul.f32 %v2223, 1.442695
        %v2254 = vpow.pop %v2253
        %v2255 = vmul.f32 %v2224, 1.442695
        %v2256 = vpow.pop %v2255
        %v2257 = vsel %vm1160, %v2226, 0.0
        %2258 = vadd.xlane.f32.xlu0 %v2257
        %v2259 = vpop.xlane.xlu0 %2258
        %v2260 = vsel %vm1160, %v2228, 0.0
        %2261 = vadd.xlane.f32.xlu0 %v2260
        %v2262 = vpop.xlane.xlu0 %2261
        %v2263 = vsel %vm1160, %v2230, 0.0
        %2264 = vadd.xlane.f32.xlu0 %v2263
        %v2265 = vpop.xlane.xlu0 %2264
        %v2266 = vsel %vm1160, %v2232, 0.0
        %2267 = vadd.xlane.f32.xlu0 %v2266
        %v2268 = vpop.xlane.xlu0 %2267
        %v2269 = vsel %vm1160, %v2234, 0.0
        %2270 = vadd.xlane.f32.xlu0 %v2269
        %v2271 = vpop.xlane.xlu0 %2270
        %v2272 = vsel %vm1160, %v2236, 0.0
        %2273 = vadd.xlane.f32.xlu0 %v2272
        %v2274 = vpop.xlane.xlu0 %2273
        %v2275 = vsel %vm1160, %v2238, 0.0
        %2276 = vadd.xlane.f32.xlu0 %v2275
        %v2277 = vpop.xlane.xlu0 %2276
        %v2278 = vsel %vm1160, %v2240, 0.0
        %2279 = vadd.xlane.f32.xlu0 %v2278
        %v2280 = vpop.xlane.xlu0 %2279
        %v2281 = vsel %vm1160, %v2242, 0.0
        %2282 = vadd.xlane.f32.xlu0 %v2281
        %v2283 = vpop.xlane.xlu0 %2282
        %v2284 = vsel %vm1160, %v2244, 0.0
        %2285 = vadd.xlane.f32.xlu0 %v2284
        %v2286 = vpop.xlane.xlu0 %2285
        %v2287 = vsel %vm1160, %v2246, 0.0
        %2288 = vadd.xlane.f32.xlu0 %v2287
        %v2289 = vpop.xlane.xlu0 %2288
        %v2290 = vsel %vm1160, %v2248, 0.0
        %2291 = vadd.xlane.f32.xlu0 %v2290
        %v2292 = vpop.xlane.xlu0 %2291
        %v2293 = vsel %vm1160, %v2250, 0.0
        %2294 = vadd.xlane.f32.xlu0 %v2293
        %v2295 = vpop.xlane.xlu0 %2294
        %v2296 = vsel %vm1160, %v2252, 0.0
        %2297 = vadd.xlane.f32.xlu0 %v2296
        %v2298 = vpop.xlane.xlu0 %2297
        %v2299 = vsel %vm1160, %v2254, 0.0
        %2300 = vadd.xlane.f32.xlu0 %v2299
        %v2301 = vpop.xlane.xlu0 %2300
        %v2302 = vsel %vm1160, %v2256, 0.0
        %2303 = vadd.xlane.f32.xlu0 %v2302
        %v2304 = vpop.xlane.xlu0 %2303
        %v2305 = vrcp.pop %v2259
        %v2306 = vrcp.pop %v2262
        %v2307 = vrcp.pop %v2265
        %v2308 = vrcp.pop %v2268
        %v2309 = vrcp.pop %v2271
        %v2310 = vrcp.pop %v2274
        %v2311 = vrcp.pop %v2277
        %v2312 = vrcp.pop %v2280
        %v2313 = vrcp.pop %v2283
        %v2314 = vrcp.pop %v2286
        %v2315 = vrcp.pop %v2289
        %v2316 = vrcp.pop %v2292
        %v2317 = vrcp.pop %v2295
        %v2318 = vrcp.pop %v2298
        %v2319 = vrcp.pop %v2301
        %v2320 = vrcp.pop %v2304
        %v2321 = vmul.f32 %v2226, %v2305
        %v2322 = vmul.f32 %v2228, %v2306
        %v2323 = vmul.f32 %v2230, %v2307
        %v2324 = vmul.f32 %v2232, %v2308
        %v2325 = vmul.f32 %v2234, %v2309
        %v2326 = vmul.f32 %v2236, %v2310
        %v2327 = vmul.f32 %v2238, %v2311
        %v2328 = vmul.f32 %v2240, %v2312
        %v2329 = vmul.f32 %v2242, %v2313
        %v2330 = vmul.f32 %v2244, %v2314
        %v2331 = vmul.f32 %v2246, %v2315
        %v2332 = vmul.f32 %v2248, %v2316
        %v2333 = vmul.f32 %v2250, %v2317
        %v2334 = vmul.f32 %v2252, %v2318
        %v2335 = vmul.f32 %v2254, %v2319
        %v2336 = vmul.f32 %v2256, %v2320
        %v2337 = vpack.c.bf16 %v2322, %v2321
        %v2338 = vpack.c.bf16 %v2324, %v2323
        %v2339 = vpack.c.bf16 %v2326, %v2325
        %v2340 = vpack.c.bf16 %v2328, %v2327
        %v2341 = vpack.c.bf16 %v2330, %v2329
        %v2342 = vpack.c.bf16 %v2332, %v2331
        %v2343 = vpack.c.bf16 %v2334, %v2333
        %v2344 = vpack.c.bf16 %v2336, %v2335
        %2345 = vrot.lane.b32.xlu0 %v1737, 60
        %v2346 = vpop.permute.xlu0 %2345
        %v2349 = vsel %vm1160, %v2337, 0
        %2351 = vmatprep.subr.bf16.mxu0 0
        %2352 = vmatpush1.bf16.msra.mxu0 %v2346
        %2353 = vmatprep.subr.bf16.mxu0 0
        %2354 = vmatpush1.bf16.msra.mxu0 0
        %2355 = vmatprep.subr.bf16.mxu0 0
        %2356 = vmatpush1.bf16.msra.mxu0 0
        %2357 = vmatprep.subr.bf16.mxu0 0
        %2358 = vmatpush1.bf16.msra.mxu0 0
        %2359 = vmatprep.subr.bf16.mxu0 0
        %2360 = vmatpush1.bf16.msra.mxu0 0
        %2361 = vmatprep.subr.bf16.mxu0 0
        %2362 = vmatpush1.bf16.msra.mxu0 0
        %2363 = vmatprep.subr.bf16.mxu0 0
        %2364 = vmatpush1.bf16.msra.mxu0 0
        %2365 = vmatprep.subr.bf16.mxu0 0
        %2366 = vmatpush1.bf16.msra.mxu0 0
        %2367 = vmatprep.subr.bf16.mxu0 0
        %2368 = vmatpush1.bf16.msra.mxu0 0
        %2369 = vmatprep.subr.bf16.mxu0 0
        %2370 = vmatpush1.bf16.msra.mxu0 0
        %2371 = vmatprep.subr.bf16.mxu0 0
        %2372 = vmatpush1.bf16.msra.mxu0 0
        %2373 = vmatprep.subr.bf16.mxu0 0
        %2374 = vmatpush1.bf16.msra.mxu0 0
        %2375 = vmatprep.subr.bf16.mxu0 0
        %2376 = vmatpush1.bf16.msra.mxu0 0
        %2377 = vmatprep.subr.bf16.mxu0 0
        %2378 = vmatpush1.bf16.msra.mxu0 0
        %2379 = vmatprep.subr.bf16.mxu0 0
        %2380 = vmatpush1.bf16.msra.mxu0 0
        %2381 = vmatprep.subr.bf16.mxu0 0
        %2382 = vmatpush1.bf16.msra.mxu0 0
        %2383 = vmatprep.mubr.bf16.mxu0 0
        %2384 = vmatmul.mubr.bf16.gmra.mrb[0].mxu0 %v2349
        %v2385 = vpop.f32.mrb[0].mxu0
        %v2386 = vadd.f32 0.0, %v2385
        %v2387 = vpop.f32.mrb[0].mxu0
        %v2388 = vpop.f32.mrb[0].mxu0
        %v2389 = vadd.f32 0.0, %v2388
        %v2390 = vpop.f32.mrb[0].mxu0
        %2391 = vdwg.mxu0
        %2392 = vrot.lane.b32.xlu0 %v1738, 60
        %v2393 = vpop.permute.xlu0 %2392
        %v2396 = vsel %vm1160, %v2338, 0
        %2398 = vmatprep.subr.bf16.mxu0 0
        %2399 = vmatpush1.bf16.msra.mxu0 %v2393
        %2400 = vmatprep.subr.bf16.mxu0 0
        %2401 = vmatpush1.bf16.msra.mxu0 0
        %2402 = vmatprep.subr.bf16.mxu0 0
        %2403 = vmatpush1.bf16.msra.mxu0 0
        %2404 = vmatprep.subr.bf16.mxu0 0
        %2405 = vmatpush1.bf16.msra.mxu0 0
        %2406 = vmatprep.subr.bf16.mxu0 0
        %2407 = vmatpush1.bf16.msra.mxu0 0
        %2408 = vmatprep.subr.bf16.mxu0 0
        %2409 = vmatpush1.bf16.msra.mxu0 0
        %2410 = vmatprep.subr.bf16.mxu0 0
        %2411 = vmatpush1.bf16.msra.mxu0 0
        %2412 = vmatprep.subr.bf16.mxu0 0
        %2413 = vmatpush1.bf16.msra.mxu0 0
        %2414 = vmatprep.subr.bf16.mxu0 0
        %2415 = vmatpush1.bf16.msra.mxu0 0
        %2416 = vmatprep.subr.bf16.mxu0 0
        %2417 = vmatpush1.bf16.msra.mxu0 0
        %2418 = vmatprep.subr.bf16.mxu0 0
        %2419 = vmatpush1.bf16.msra.mxu0 0
        %2420 = vmatprep.subr.bf16.mxu0 0
        %2421 = vmatpush1.bf16.msra.mxu0 0
        %2422 = vmatprep.subr.bf16.mxu0 0
        %2423 = vmatpush1.bf16.msra.mxu0 0
        %2424 = vmatprep.subr.bf16.mxu0 0
        %2425 = vmatpush1.bf16.msra.mxu0 0
        %2426 = vmatprep.subr.bf16.mxu0 0
        %2427 = vmatpush1.bf16.msra.mxu0 0
        %2428 = vmatprep.subr.bf16.mxu0 0
        %2429 = vmatpush1.bf16.msra.mxu0 0
        %2430 = vmatprep.mubr.bf16.mxu0 0
        %2431 = vmatmul.mubr.bf16.gmra.mrb[0].mxu0 %v2396
        %v2432 = vpop.f32.mrb[0].mxu0
        %v2433 = vadd.f32 0.0, %v2432
        %v2434 = vpop.f32.mrb[0].mxu0
        %v2435 = vpop.f32.mrb[0].mxu0
        %v2436 = vadd.f32 0.0, %v2435
        %v2437 = vpop.f32.mrb[0].mxu0
        %2438 = vdwg.mxu0
        %2439 = vrot.lane.b32.xlu0 %v1739, 60
        %v2440 = vpop.permute.xlu0 %2439
        %v2443 = vsel %vm1160, %v2339, 0
        %2445 = vmatprep.subr.bf16.mxu0 0
        %2446 = vmatpush1.bf16.msra.mxu0 %v2440
        %2447 = vmatprep.subr.bf16.mxu0 0
        %2448 = vmatpush1.bf16.msra.mxu0 0
        %2449 = vmatprep.subr.bf16.mxu0 0
        %2450 = vmatpush1.bf16.msra.mxu0 0
        %2451 = vmatprep.subr.bf16.mxu0 0
        %2452 = vmatpush1.bf16.msra.mxu0 0
        %2453 = vmatprep.subr.bf16.mxu0 0
        %2454 = vmatpush1.bf16.msra.mxu0 0
        %2455 = vmatprep.subr.bf16.mxu0 0
        %2456 = vmatpush1.bf16.msra.mxu0 0
        %2457 = vmatprep.subr.bf16.mxu0 0
        %2458 = vmatpush1.bf16.msra.mxu0 0
        %2459 = vmatprep.subr.bf16.mxu0 0
        %2460 = vmatpush1.bf16.msra.mxu0 0
        %2461 = vmatprep.subr.bf16.mxu0 0
        %2462 = vmatpush1.bf16.msra.mxu0 0
        %2463 = vmatprep.subr.bf16.mxu0 0
        %2464 = vmatpush1.bf16.msra.mxu0 0
        %2465 = vmatprep.subr.bf16.mxu0 0
        %2466 = vmatpush1.bf16.msra.mxu0 0
        %2467 = vmatprep.subr.bf16.mxu0 0
        %2468 = vmatpush1.bf16.msra.mxu0 0
        %2469 = vmatprep.subr.bf16.mxu0 0
        %2470 = vmatpush1.bf16.msra.mxu0 0
        %2471 = vmatprep.subr.bf16.mxu0 0
        %2472 = vmatpush1.bf16.msra.mxu0 0
        %2473 = vmatprep.subr.bf16.mxu0 0
        %2474 = vmatpush1.bf16.msra.mxu0 0
        %2475 = vmatprep.subr.bf16.mxu0 0
        %2476 = vmatpush1.bf16.msra.mxu0 0
        %2477 = vmatprep.mubr.bf16.mxu0 0
        %2478 = vmatmul.mubr.bf16.gmra.mrb[0].mxu0 %v2443
        %v2479 = vpop.f32.mrb[0].mxu0
        %v2480 = vadd.f32 0.0, %v2479
        %v2481 = vpop.f32.mrb[0].mxu0
        %v2482 = vpop.f32.mrb[0].mxu0
        %v2483 = vadd.f32 0.0, %v2482
        %v2484 = vpop.f32.mrb[0].mxu0
        %2485 = vdwg.mxu0
        %2486 = vrot.lane.b32.xlu0 %v1740, 60
        %v2487 = vpop.permute.xlu0 %2486
        %v2490 = vsel %vm1160, %v2340, 0
        %2492 = vmatprep.subr.bf16.mxu0 0
        %2493 = vmatpush1.bf16.msra.mxu0 %v2487
        %2494 = vmatprep.subr.bf16.mxu0 0
        %2495 = vmatpush1.bf16.msra.mxu0 0
        %2496 = vmatprep.subr.bf16.mxu0 0
        %2497 = vmatpush1.bf16.msra.mxu0 0
        %2498 = vmatprep.subr.bf16.mxu0 0
        %2499 = vmatpush1.bf16.msra.mxu0 0
        %2500 = vmatprep.subr.bf16.mxu0 0
        %2501 = vmatpush1.bf16.msra.mxu0 0
        %2502 = vmatprep.subr.bf16.mxu0 0
        %2503 = vmatpush1.bf16.msra.mxu0 0
        %2504 = vmatprep.subr.bf16.mxu0 0
        %2505 = vmatpush1.bf16.msra.mxu0 0
        %2506 = vmatprep.subr.bf16.mxu0 0
        %2507 = vmatpush1.bf16.msra.mxu0 0
        %2508 = vmatprep.subr.bf16.mxu0 0
        %2509 = vmatpush1.bf16.msra.mxu0 0
        %2510 = vmatprep.subr.bf16.mxu0 0
        %2511 = vmatpush1.bf16.msra.mxu0 0
        %2512 = vmatprep.subr.bf16.mxu0 0
        %2513 = vmatpush1.bf16.msra.mxu0 0
        %2514 = vmatprep.subr.bf16.mxu0 0
        %2515 = vmatpush1.bf16.msra.mxu0 0
        %2516 = vmatprep.subr.bf16.mxu0 0
        %2517 = vmatpush1.bf16.msra.mxu0 0
        %2518 = vmatprep.subr.bf16.mxu0 0
        %2519 = vmatpush1.bf16.msra.mxu0 0
        %2520 = vmatprep.subr.bf16.mxu0 0
        %2521 = vmatpush1.bf16.msra.mxu0 0
        %2522 = vmatprep.subr.bf16.mxu0 0
        %2523 = vmatpush1.bf16.msra.mxu0 0
        %2524 = vmatprep.mubr.bf16.mxu0 0
        %2525 = vmatmul.mubr.bf16.gmra.mrb[0].mxu0 %v2490
        %v2526 = vpop.f32.mrb[0].mxu0
        %v2527 = vadd.f32 0.0, %v2526
        %v2528 = vpop.f32.mrb[0].mxu0
        %v2529 = vpop.f32.mrb[0].mxu0
        %v2530 = vadd.f32 0.0, %v2529
        %v2531 = vpop.f32.mrb[0].mxu0
        %2532 = vdwg.mxu0
        %2533 = vrot.lane.b32.xlu0 %v1741, 60
        %v2534 = vpop.permute.xlu0 %2533
        %v2537 = vsel %vm1160, %v2341, 0
        %2539 = vmatprep.subr.bf16.mxu0 0
        %2540 = vmatpush1.bf16.msra.mxu0 %v2534
        %2541 = vmatprep.subr.bf16.mxu0 0
        %2542 = vmatpush1.bf16.msra.mxu0 0
        %2543 = vmatprep.subr.bf16.mxu0 0
        %2544 = vmatpush1.bf16.msra.mxu0 0
        %2545 = vmatprep.subr.bf16.mxu0 0
        %2546 = vmatpush1.bf16.msra.mxu0 0
        %2547 = vmatprep.subr.bf16.mxu0 0
        %2548 = vmatpush1.bf16.msra.mxu0 0
        %2549 = vmatprep.subr.bf16.mxu0 0
        %2550 = vmatpush1.bf16.msra.mxu0 0
        %2551 = vmatprep.subr.bf16.mxu0 0
        %2552 = vmatpush1.bf16.msra.mxu0 0
        %2553 = vmatprep.subr.bf16.mxu0 0
        %2554 = vmatpush1.bf16.msra.mxu0 0
        %2555 = vmatprep.subr.bf16.mxu0 0
        %2556 = vmatpush1.bf16.msra.mxu0 0
        %2557 = vmatprep.subr.bf16.mxu0 0
        %2558 = vmatpush1.bf16.msra.mxu0 0
        %2559 = vmatprep.subr.bf16.mxu0 0
        %2560 = vmatpush1.bf16.msra.mxu0 0
        %2561 = vmatprep.subr.bf16.mxu0 0
        %2562 = vmatpush1.bf16.msra.mxu0 0
        %2563 = vmatprep.subr.bf16.mxu0 0
        %2564 = vmatpush1.bf16.msra.mxu0 0
        %2565 = vmatprep.subr.bf16.mxu0 0
        %2566 = vmatpush1.bf16.msra.mxu0 0
        %2567 = vmatprep.subr.bf16.mxu0 0
        %2568 = vmatpush1.bf16.msra.mxu0 0
        %2569 = vmatprep.subr.bf16.mxu0 0
        %2570 = vmatpush1.bf16.msra.mxu0 0
        %2571 = vmatprep.mubr.bf16.mxu0 0
        %2572 = vmatmul.mubr.bf16.gmra.mrb[0].mxu0 %v2537
        %v2573 = vpop.f32.mrb[0].mxu0
        %v2574 = vadd.f32 0.0, %v2573
        %v2575 = vpop.f32.mrb[0].mxu0
        %v2576 = vpop.f32.mrb[0].mxu0
        %v2577 = vadd.f32 0.0, %v2576
        %v2578 = vpop.f32.mrb[0].mxu0
        %2579 = vdwg.mxu0
        %2580 = vrot.lane.b32.xlu0 %v1742, 60
        %v2581 = vpop.permute.xlu0 %2580
        %v2584 = vsel %vm1160, %v2342, 0
        %2586 = vmatprep.subr.bf16.mxu0 0
        %2587 = vmatpush1.bf16.msra.mxu0 %v2581
        %2588 = vmatprep.subr.bf16.mxu0 0
        %2589 = vmatpush1.bf16.msra.mxu0 0
        %2590 = vmatprep.subr.bf16.mxu0 0
        %2591 = vmatpush1.bf16.msra.mxu0 0
        %2592 = vmatprep.subr.bf16.mxu0 0
        %2593 = vmatpush1.bf16.msra.mxu0 0
        %2594 = vmatprep.subr.bf16.mxu0 0
        %2595 = vmatpush1.bf16.msra.mxu0 0
        %2596 = vmatprep.subr.bf16.mxu0 0
        %2597 = vmatpush1.bf16.msra.mxu0 0
        %2598 = vmatprep.subr.bf16.mxu0 0
        %2599 = vmatpush1.bf16.msra.mxu0 0
        %2600 = vmatprep.subr.bf16.mxu0 0
        %2601 = vmatpush1.bf16.msra.mxu0 0
        %2602 = vmatprep.subr.bf16.mxu0 0
        %2603 = vmatpush1.bf16.msra.mxu0 0
        %2604 = vmatprep.subr.bf16.mxu0 0
        %2605 = vmatpush1.bf16.msra.mxu0 0
        %2606 = vmatprep.subr.bf16.mxu0 0
        %2607 = vmatpush1.bf16.msra.mxu0 0
        %2608 = vmatprep.subr.bf16.mxu0 0
        %2609 = vmatpush1.bf16.msra.mxu0 0
        %2610 = vmatprep.subr.bf16.mxu0 0
        %2611 = vmatpush1.bf16.msra.mxu0 0
        %2612 = vmatprep.subr.bf16.mxu0 0
        %2613 = vmatpush1.bf16.msra.mxu0 0
        %2614 = vmatprep.subr.bf16.mxu0 0
        %2615 = vmatpush1.bf16.msra.mxu0 0
        %2616 = vmatprep.subr.bf16.mxu0 0
        %2617 = vmatpush1.bf16.msra.mxu0 0
        %2618 = vmatprep.mubr.bf16.mxu0 0
        %2619 = vmatmul.mubr.bf16.gmra.mrb[0].mxu0 %v2584
        %v2620 = vpop.f32.mrb[0].mxu0
        %v2621 = vadd.f32 0.0, %v2620
        %v2622 = vpop.f32.mrb[0].mxu0
        %v2623 = vpop.f32.mrb[0].mxu0
        %v2624 = vadd.f32 0.0, %v2623
        %v2625 = vpop.f32.mrb[0].mxu0
        %2626 = vdwg.mxu0
        %2627 = vrot.lane.b32.xlu0 %v1743, 60
        %v2628 = vpop.permute.xlu0 %2627
        %v2631 = vsel %vm1160, %v2343, 0
        %2633 = vmatprep.subr.bf16.mxu0 0
        %2634 = vmatpush1.bf16.msra.mxu0 %v2628
        %2635 = vmatprep.subr.bf16.mxu0 0
        %2636 = vmatpush1.bf16.msra.mxu0 0
        %2637 = vmatprep.subr.bf16.mxu0 0
        %2638 = vmatpush1.bf16.msra.mxu0 0
        %2639 = vmatprep.subr.bf16.mxu0 0
        %2640 = vmatpush1.bf16.msra.mxu0 0
        %2641 = vmatprep.subr.bf16.mxu0 0
        %2642 = vmatpush1.bf16.msra.mxu0 0
        %2643 = vmatprep.subr.bf16.mxu0 0
        %2644 = vmatpush1.bf16.msra.mxu0 0
        %2645 = vmatprep.subr.bf16.mxu0 0
        %2646 = vmatpush1.bf16.msra.mxu0 0
        %2647 = vmatprep.subr.bf16.mxu0 0
        %2648 = vmatpush1.bf16.msra.mxu0 0
        %2649 = vmatprep.subr.bf16.mxu0 0
        %2650 = vmatpush1.bf16.msra.mxu0 0
        %2651 = vmatprep.subr.bf16.mxu0 0
        %2652 = vmatpush1.bf16.msra.mxu0 0
        %2653 = vmatprep.subr.bf16.mxu0 0
        %2654 = vmatpush1.bf16.msra.mxu0 0
        %2655 = vmatprep.subr.bf16.mxu0 0
        %2656 = vmatpush1.bf16.msra.mxu0 0
        %2657 = vmatprep.subr.bf16.mxu0 0
        %2658 = vmatpush1.bf16.msra.mxu0 0
        %2659 = vmatprep.subr.bf16.mxu0 0
        %2660 = vmatpush1.bf16.msra.mxu0 0
        %2661 = vmatprep.subr.bf16.mxu0 0
        %2662 = vmatpush1.bf16.msra.mxu0 0
        %2663 = vmatprep.subr.bf16.mxu0 0
        %2664 = vmatpush1.bf16.msra.mxu0 0
        %2665 = vmatprep.mubr.bf16.mxu0 0
        %2666 = vmatmul.mubr.bf16.gmra.mrb[0].mxu0 %v2631
        %v2667 = vpop.f32.mrb[0].mxu0
        %v2668 = vadd.f32 0.0, %v2667
        %v2669 = vpop.f32.mrb[0].mxu0
        %v2670 = vpop.f32.mrb[0].mxu0
        %v2671 = vadd.f32 0.0, %v2670
        %v2672 = vpop.f32.mrb[0].mxu0
        %2673 = vdwg.mxu0
        %2674 = vrot.lane.b32.xlu0 %v1744, 60
        %v2675 = vpop.permute.xlu0 %2674
        %v2678 = vsel %vm1160, %v2344, 0
        %2680 = vmatprep.subr.bf16.mxu0 0
        %2681 = vmatpush1.bf16.msra.mxu0 %v2675
        %2682 = vmatprep.subr.bf16.mxu0 0
        %2683 = vmatpush1.bf16.msra.mxu0 0
        %2684 = vmatprep.subr.bf16.mxu0 0
        %2685 = vmatpush1.bf16.msra.mxu0 0
        %2686 = vmatprep.subr.bf16.mxu0 0
        %2687 = vmatpush1.bf16.msra.mxu0 0
        %2688 = vmatprep.subr.bf16.mxu0 0
        %2689 = vmatpush1.bf16.msra.mxu0 0
        %2690 = vmatprep.subr.bf16.mxu0 0
        %2691 = vmatpush1.bf16.msra.mxu0 0
        %2692 = vmatprep.subr.bf16.mxu0 0
        %2693 = vmatpush1.bf16.msra.mxu0 0
        %2694 = vmatprep.subr.bf16.mxu0 0
        %2695 = vmatpush1.bf16.msra.mxu0 0
        %2696 = vmatprep.subr.bf16.mxu0 0
        %2697 = vmatpush1.bf16.msra.mxu0 0
        %2698 = vmatprep.subr.bf16.mxu0 0
        %2699 = vmatpush1.bf16.msra.mxu0 0
        %2700 = vmatprep.subr.bf16.mxu0 0
        %2701 = vmatpush1.bf16.msra.mxu0 0
        %2702 = vmatprep.subr.bf16.mxu0 0
        %2703 = vmatpush1.bf16.msra.mxu0 0
        %2704 = vmatprep.subr.bf16.mxu0 0
        %2705 = vmatpush1.bf16.msra.mxu0 0
        %2706 = vmatprep.subr.bf16.mxu0 0
        %2707 = vmatpush1.bf16.msra.mxu0 0
        %2708 = vmatprep.subr.bf16.mxu0 0
        %2709 = vmatpush1.bf16.msra.mxu0 0
        %2710 = vmatprep.subr.bf16.mxu0 0
        %2711 = vmatpush1.bf16.msra.mxu0 0
        %2712 = vmatprep.mubr.bf16.mxu0 0
        %2713 = vmatmul.mubr.bf16.gmra.mrb[0].mxu0 %v2678
        %v2714 = vpop.f32.mrb[0].mxu0
        %v2715 = vadd.f32 0.0, %v2714
        %v2716 = vpop.f32.mrb[0].mxu0
        %v2717 = vpop.f32.mrb[0].mxu0
        %v2718 = vadd.f32 0.0, %v2717
        %v2719 = vpop.f32.mrb[0].mxu0
        %2720 = vdwg.mxu0
        %v2721 = vpack.c.bf16 %v2389, %v2386
        %v2722 = vpack.c.bf16 %v2436, %v2433
        %v2723 = vpack.c.bf16 %v2483, %v2480
        %v2724 = vpack.c.bf16 %v2530, %v2527
        %v2725 = vpack.c.bf16 %v2577, %v2574
        %v2726 = vpack.c.bf16 %v2624, %v2621
        %v2727 = vpack.c.bf16 %v2671, %v2668
        %v2728 = vpack.c.bf16 %v2718, %v2715
        %2737 = vrot.lane.b32.xlu0 %v2721, 4
        %v2738 = vpop.permute.xlu0 %2737
        %2739 = vrot.lane.b32.xlu0 %v2722, 4
        %v2740 = vpop.permute.xlu0 %2739
        %2741 = vrot.lane.b32.xlu0 %v2723, 4
        %v2742 = vpop.permute.xlu0 %2741
        %2743 = vrot.lane.b32.xlu0 %v2724, 4
        %v2744 = vpop.permute.xlu0 %2743
        %2745 = vrot.lane.b32.xlu0 %v2725, 4
        %v2746 = vpop.permute.xlu0 %2745
        %2747 = vrot.lane.b32.xlu0 %v2726, 4
        %v2748 = vpop.permute.xlu0 %2747
        %2749 = vrot.lane.b32.xlu0 %v2727, 4
        %v2750 = vpop.permute.xlu0 %2749
        %2751 = vrot.lane.b32.xlu0 %v2728, 4
        %v2752 = vpop.permute.xlu0 %2751
        %vm2761 = vcmask 64544
        %2762 = vst.msk [vmem:[#allocation3] sm:$0xff] %vm2761, %v2738
        %2763 = vst.msk [vmem:[#allocation3 + $0x8] sm:$0xff] %vm2761, %v2740
        %2764 = vst.msk [vmem:[#allocation3 + $0x10] sm:$0xff] %vm2761, %v2742
        %2765 = vst.msk [vmem:[#allocation3 + $0x18] sm:$0xff] %vm2761, %v2744
        %2766 = vst.msk [vmem:[#allocation3 + $0x20] sm:$0xff] %vm2761, %v2746
        %2767 = vst.msk [vmem:[#allocation3 + $0x28] sm:$0xff] %vm2761, %v2748
        %2768 = vst.msk [vmem:[#allocation3 + $0x30] sm:$0xff] %vm2761, %v2750
        %2769 = vst.msk [vmem:[#allocation3 + $0x38] sm:$0xff] %vm2761, %v2752
        %v2770 = vld [vmem:[#allocation2] sm:$0xff]
        %v2771 = vld [vmem:[#allocation2 + $0x8] sm:$0xff]
        %v2772 = vld [vmem:[#allocation2 + $0x10] sm:$0xff]
        %v2773 = vld [vmem:[#allocation2 + $0x18] sm:$0xff]
        %v2774 = vld [vmem:[#allocation2 + $0x20] sm:$0xff]
        %v2775 = vld [vmem:[#allocation2 + $0x28] sm:$0xff]
        %v2776 = vld [vmem:[#allocation2 + $0x30] sm:$0xff]
        %v2777 = vld [vmem:[#allocation2 + $0x38] sm:$0xff]
        %2779 = vrot.lane.b32.xlu0 %v2770, 120
        %v2780 = vpop.permute.xlu0 %2779
        %2781 = vrot.lane.b32.xlu0 %v2770, 88
        %v2782 = vpop.permute.xlu0 %2781
        %v2784 = vsel %vm762, %v2780, 0
        %v2787 = vsel %vm762, %v2782, 0
        %2789 = vmatprep.subr.bf16.mxu0 0
        %2790 = vmatpush1.bf16.xpose.msra.mxu0 %v2787
        %2791 = vmatprep.subr.bf16.mxu0 0
        %2792 = vmatpush1.bf16.xpose.msra.mxu0 0
        %2793 = vmatprep.subr.bf16.mxu0 0
        %2794 = vmatpush1.bf16.xpose.msra.mxu0 0
        %2795 = vmatprep.subr.bf16.mxu0 0
        %2796 = vmatpush1.bf16.xpose.msra.mxu0 0
        %2797 = vmatprep.subr.bf16.mxu0 0
        %2798 = vmatpush1.bf16.xpose.msra.mxu0 0
        %2799 = vmatprep.subr.bf16.mxu0 0
        %2800 = vmatpush1.bf16.xpose.msra.mxu0 0
        %2801 = vmatprep.subr.bf16.mxu0 0
        %2802 = vmatpush1.bf16.xpose.msra.mxu0 0
        %2803 = vmatprep.subr.bf16.mxu0 0
        %2804 = vmatpush1.bf16.xpose.msra.mxu0 0
        %2805 = vmatprep.subr.bf16.mxu0 0
        %2806 = vmatpush1.bf16.xpose.msra.mxu0 0
        %2807 = vmatprep.subr.bf16.mxu0 0
        %2808 = vmatpush1.bf16.xpose.msra.mxu0 0
        %2809 = vmatprep.subr.bf16.mxu0 0
        %2810 = vmatpush1.bf16.xpose.msra.mxu0 0
        %2811 = vmatprep.subr.bf16.mxu0 0
        %2812 = vmatpush1.bf16.xpose.msra.mxu0 0
        %2813 = vmatprep.subr.bf16.mxu0 0
        %2814 = vmatpush1.bf16.xpose.msra.mxu0 0
        %2815 = vmatprep.subr.bf16.mxu0 0
        %2816 = vmatpush1.bf16.xpose.msra.mxu0 0
        %2817 = vmatprep.subr.bf16.mxu0 0
        %2818 = vmatpush1.bf16.xpose.msra.mxu0 0
        %2819 = vmatprep.subr.bf16.mxu0 0
        %2820 = vmatpush1.bf16.xpose.msra.mxu0 0
        %2821 = vmatprep.mubr.bf16.mxu0 0
        %2822 = vmatmul.mubr.bf16.gmra.mrb[0].mxu0 %v2784
        %v2823 = vpop.f32.mrb[0].mxu0
        %v2824 = vadd.f32 0.0, %v2823
        %v2825 = vpop.f32.mrb[0].mxu0
        %v2826 = vpop.f32.mrb[0].mxu0
        %v2827 = vadd.f32 0.0, %v2826
        %v2828 = vpop.f32.mrb[0].mxu0
        %2829 = vdwg.mxu0
        %2831 = vrot.lane.b32.xlu0 %v2771, 120
        %v2832 = vpop.permute.xlu0 %2831
        %2833 = vrot.lane.b32.xlu0 %v2771, 88
        %v2834 = vpop.permute.xlu0 %2833
        %v2836 = vsel %vm762, %v2832, 0
        %v2839 = vsel %vm762, %v2834, 0
        %2841 = vmatprep.subr.bf16.mxu0 0
        %2842 = vmatpush1.bf16.xpose.msra.mxu0 %v2839
        %2843 = vmatprep.subr.bf16.mxu0 0
        %2844 = vmatpush1.bf16.xpose.msra.mxu0 0
        %2845 = vmatprep.subr.bf16.mxu0 0
        %2846 = vmatpush1.bf16.xpose.msra.mxu0 0
        %2847 = vmatprep.subr.bf16.mxu0 0
        %2848 = vmatpush1.bf16.xpose.msra.mxu0 0
        %2849 = vmatprep.subr.bf16.mxu0 0
        %2850 = vmatpush1.bf16.xpose.msra.mxu0 0
        %2851 = vmatprep.subr.bf16.mxu0 0
        %2852 = vmatpush1.bf16.xpose.msra.mxu0 0
        %2853 = vmatprep.subr.bf16.mxu0 0
        %2854 = vmatpush1.bf16.xpose.msra.mxu0 0
        %2855 = vmatprep.subr.bf16.mxu0 0
        %2856 = vmatpush1.bf16.xpose.msra.mxu0 0
        %2857 = vmatprep.subr.bf16.mxu0 0
        %2858 = vmatpush1.bf16.xpose.msra.mxu0 0
        %2859 = vmatprep.subr.bf16.mxu0 0
        %2860 = vmatpush1.bf16.xpose.msra.mxu0 0
        %2861 = vmatprep.subr.bf16.mxu0 0
        %2862 = vmatpush1.bf16.xpose.msra.mxu0 0
        %2863 = vmatprep.subr.bf16.mxu0 0
        %2864 = vmatpush1.bf16.xpose.msra.mxu0 0
        %2865 = vmatprep.subr.bf16.mxu0 0
        %2866 = vmatpush1.bf16.xpose.msra.mxu0 0
        %2867 = vmatprep.subr.bf16.mxu0 0
        %2868 = vmatpush1.bf16.xpose.msra.mxu0 0
        %2869 = vmatprep.subr.bf16.mxu0 0
        %2870 = vmatpush1.bf16.xpose.msra.mxu0 0
        %2871 = vmatprep.subr.bf16.mxu0 0
        %2872 = vmatpush1.bf16.xpose.msra.mxu0 0
        %2873 = vmatprep.mubr.bf16.mxu0 0
        %2874 = vmatmul.mubr.bf16.gmra.mrb[0].mxu0 %v2836
        %v2875 = vpop.f32.mrb[0].mxu0
        %v2876 = vadd.f32 0.0, %v2875
        %v2877 = vpop.f32.mrb[0].mxu0
        %v2878 = vpop.f32.mrb[0].mxu0
        %v2879 = vadd.f32 0.0, %v2878
        %v2880 = vpop.f32.mrb[0].mxu0
        %2881 = vdwg.mxu0
        %2883 = vrot.lane.b32.xlu0 %v2772, 120
        %v2884 = vpop.permute.xlu0 %2883
        %2885 = vrot.lane.b32.xlu0 %v2772, 88
        %v2886 = vpop.permute.xlu0 %2885
        %v2888 = vsel %vm762, %v2884, 0
        %v2891 = vsel %vm762, %v2886, 0
        %2893 = vmatprep.subr.bf16.mxu0 0
        %2894 = vmatpush1.bf16.xpose.msra.mxu0 %v2891
        %2895 = vmatprep.subr.bf16.mxu0 0
        %2896 = vmatpush1.bf16.xpose.msra.mxu0 0
        %2897 = vmatprep.subr.bf16.mxu0 0
        %2898 = vmatpush1.bf16.xpose.msra.mxu0 0
        %2899 = vmatprep.subr.bf16.mxu0 0
        %2900 = vmatpush1.bf16.xpose.msra.mxu0 0
        %2901 = vmatprep.subr.bf16.mxu0 0
        %2902 = vmatpush1.bf16.xpose.msra.mxu0 0
        %2903 = vmatprep.subr.bf16.mxu0 0
        %2904 = vmatpush1.bf16.xpose.msra.mxu0 0
        %2905 = vmatprep.subr.bf16.mxu0 0
        %2906 = vmatpush1.bf16.xpose.msra.mxu0 0
        %2907 = vmatprep.subr.bf16.mxu0 0
        %2908 = vmatpush1.bf16.xpose.msra.mxu0 0
        %2909 = vmatprep.subr.bf16.mxu0 0
        %2910 = vmatpush1.bf16.xpose.msra.mxu0 0
        %2911 = vmatprep.subr.bf16.mxu0 0
        %2912 = vmatpush1.bf16.xpose.msra.mxu0 0
        %2913 = vmatprep.subr.bf16.mxu0 0
        %2914 = vmatpush1.bf16.xpose.msra.mxu0 0
        %2915 = vmatprep.subr.bf16.mxu0 0
        %2916 = vmatpush1.bf16.xpose.msra.mxu0 0
        %2917 = vmatprep.subr.bf16.mxu0 0
        %2918 = vmatpush1.bf16.xpose.msra.mxu0 0
        %2919 = vmatprep.subr.bf16.mxu0 0
        %2920 = vmatpush1.bf16.xpose.msra.mxu0 0
        %2921 = vmatprep.subr.bf16.mxu0 0
        %2922 = vmatpush1.bf16.xpose.msra.mxu0 0
        %2923 = vmatprep.subr.bf16.mxu0 0
        %2924 = vmatpush1.bf16.xpose.msra.mxu0 0
        %2925 = vmatprep.mubr.bf16.mxu0 0
        %2926 = vmatmul.mubr.bf16.gmra.mrb[0].mxu0 %v2888
        %v2927 = vpop.f32.mrb[0].mxu0
        %v2928 = vadd.f32 0.0, %v2927
        %v2929 = vpop.f32.mrb[0].mxu0
        %v2930 = vpop.f32.mrb[0].mxu0
        %v2931 = vadd.f32 0.0, %v2930
        %v2932 = vpop.f32.mrb[0].mxu0
        %2933 = vdwg.mxu0
        %2935 = vrot.lane.b32.xlu0 %v2773, 120
        %v2936 = vpop.permute.xlu0 %2935
        %2937 = vrot.lane.b32.xlu0 %v2773, 88
        %v2938 = vpop.permute.xlu0 %2937
        %v2940 = vsel %vm762, %v2936, 0
        %v2943 = vsel %vm762, %v2938, 0
        %2945 = vmatprep.subr.bf16.mxu0 0
        %2946 = vmatpush1.bf16.xpose.msra.mxu0 %v2943
        %2947 = vmatprep.subr.bf16.mxu0 0
        %2948 = vmatpush1.bf16.xpose.msra.mxu0 0
        %2949 = vmatprep.subr.bf16.mxu0 0
        %2950 = vmatpush1.bf16.xpose.msra.mxu0 0
        %2951 = vmatprep.subr.bf16.mxu0 0
        %2952 = vmatpush1.bf16.xpose.msra.mxu0 0
        %2953 = vmatprep.subr.bf16.mxu0 0
        %2954 = vmatpush1.bf16.xpose.msra.mxu0 0
        %2955 = vmatprep.subr.bf16.mxu0 0
        %2956 = vmatpush1.bf16.xpose.msra.mxu0 0
        %2957 = vmatprep.subr.bf16.mxu0 0
        %2958 = vmatpush1.bf16.xpose.msra.mxu0 0
        %2959 = vmatprep.subr.bf16.mxu0 0
        %2960 = vmatpush1.bf16.xpose.msra.mxu0 0
        %2961 = vmatprep.subr.bf16.mxu0 0
        %2962 = vmatpush1.bf16.xpose.msra.mxu0 0
        %2963 = vmatprep.subr.bf16.mxu0 0
        %2964 = vmatpush1.bf16.xpose.msra.mxu0 0
        %2965 = vmatprep.subr.bf16.mxu0 0
        %2966 = vmatpush1.bf16.xpose.msra.mxu0 0
        %2967 = vmatprep.subr.bf16.mxu0 0
        %2968 = vmatpush1.bf16.xpose.msra.mxu0 0
        %2969 = vmatprep.subr.bf16.mxu0 0
        %2970 = vmatpush1.bf16.xpose.msra.mxu0 0
        %2971 = vmatprep.subr.bf16.mxu0 0
        %2972 = vmatpush1.bf16.xpose.msra.mxu0 0
        %2973 = vmatprep.subr.bf16.mxu0 0
        %2974 = vmatpush1.bf16.xpose.msra.mxu0 0
        %2975 = vmatprep.subr.bf16.mxu0 0
        %2976 = vmatpush1.bf16.xpose.msra.mxu0 0
        %2977 = vmatprep.mubr.bf16.mxu0 0
        %2978 = vmatmul.mubr.bf16.gmra.mrb[0].mxu0 %v2940
        %v2979 = vpop.f32.mrb[0].mxu0
        %v2980 = vadd.f32 0.0, %v2979
        %v2981 = vpop.f32.mrb[0].mxu0
        %v2982 = vpop.f32.mrb[0].mxu0
        %v2983 = vadd.f32 0.0, %v2982
        %v2984 = vpop.f32.mrb[0].mxu0
        %2985 = vdwg.mxu0
        %2987 = vrot.lane.b32.xlu0 %v2774, 120
        %v2988 = vpop.permute.xlu0 %2987
        %2989 = vrot.lane.b32.xlu0 %v2774, 88
        %v2990 = vpop.permute.xlu0 %2989
        %v2992 = vsel %vm762, %v2988, 0
        %v2995 = vsel %vm762, %v2990, 0
        %2997 = vmatprep.subr.bf16.mxu0 0
        %2998 = vmatpush1.bf16.xpose.msra.mxu0 %v2995
        %2999 = vmatprep.subr.bf16.mxu0 0
        %3000 = vmatpush1.bf16.xpose.msra.mxu0 0
        %3001 = vmatprep.subr.bf16.mxu0 0
        %3002 = vmatpush1.bf16.xpose.msra.mxu0 0
        %3003 = vmatprep.subr.bf16.mxu0 0
        %3004 = vmatpush1.bf16.xpose.msra.mxu0 0
        %3005 = vmatprep.subr.bf16.mxu0 0
        %3006 = vmatpush1.bf16.xpose.msra.mxu0 0
        %3007 = vmatprep.subr.bf16.mxu0 0
        %3008 = vmatpush1.bf16.xpose.msra.mxu0 0
        %3009 = vmatprep.subr.bf16.mxu0 0
        %3010 = vmatpush1.bf16.xpose.msra.mxu0 0
        %3011 = vmatprep.subr.bf16.mxu0 0
        %3012 = vmatpush1.bf16.xpose.msra.mxu0 0
        %3013 = vmatprep.subr.bf16.mxu0 0
        %3014 = vmatpush1.bf16.xpose.msra.mxu0 0
        %3015 = vmatprep.subr.bf16.mxu0 0
        %3016 = vmatpush1.bf16.xpose.msra.mxu0 0
        %3017 = vmatprep.subr.bf16.mxu0 0
        %3018 = vmatpush1.bf16.xpose.msra.mxu0 0
        %3019 = vmatprep.subr.bf16.mxu0 0
        %3020 = vmatpush1.bf16.xpose.msra.mxu0 0
        %3021 = vmatprep.subr.bf16.mxu0 0
        %3022 = vmatpush1.bf16.xpose.msra.mxu0 0
        %3023 = vmatprep.subr.bf16.mxu0 0
        %3024 = vmatpush1.bf16.xpose.msra.mxu0 0
        %3025 = vmatprep.subr.bf16.mxu0 0
        %3026 = vmatpush1.bf16.xpose.msra.mxu0 0
        %3027 = vmatprep.subr.bf16.mxu0 0
        %3028 = vmatpush1.bf16.xpose.msra.mxu0 0
        %3029 = vmatprep.mubr.bf16.mxu0 0
        %3030 = vmatmul.mubr.bf16.gmra.mrb[0].mxu0 %v2992
        %v3031 = vpop.f32.mrb[0].mxu0
        %v3032 = vadd.f32 0.0, %v3031
        %v3033 = vpop.f32.mrb[0].mxu0
        %v3034 = vpop.f32.mrb[0].mxu0
        %v3035 = vadd.f32 0.0, %v3034
        %v3036 = vpop.f32.mrb[0].mxu0
        %3037 = vdwg.mxu0
        %3039 = vrot.lane.b32.xlu0 %v2775, 120
        %v3040 = vpop.permute.xlu0 %3039
        %3041 = vrot.lane.b32.xlu0 %v2775, 88
        %v3042 = vpop.permute.xlu0 %3041
        %v3044 = vsel %vm762, %v3040, 0
        %v3047 = vsel %vm762, %v3042, 0
        %3049 = vmatprep.subr.bf16.mxu0 0
        %3050 = vmatpush1.bf16.xpose.msra.mxu0 %v3047
        %3051 = vmatprep.subr.bf16.mxu0 0
        %3052 = vmatpush1.bf16.xpose.msra.mxu0 0
        %3053 = vmatprep.subr.bf16.mxu0 0
        %3054 = vmatpush1.bf16.xpose.msra.mxu0 0
        %3055 = vmatprep.subr.bf16.mxu0 0
        %3056 = vmatpush1.bf16.xpose.msra.mxu0 0
        %3057 = vmatprep.subr.bf16.mxu0 0
        %3058 = vmatpush1.bf16.xpose.msra.mxu0 0
        %3059 = vmatprep.subr.bf16.mxu0 0
        %3060 = vmatpush1.bf16.xpose.msra.mxu0 0
        %3061 = vmatprep.subr.bf16.mxu0 0
        %3062 = vmatpush1.bf16.xpose.msra.mxu0 0
        %3063 = vmatprep.subr.bf16.mxu0 0
        %3064 = vmatpush1.bf16.xpose.msra.mxu0 0
        %3065 = vmatprep.subr.bf16.mxu0 0
        %3066 = vmatpush1.bf16.xpose.msra.mxu0 0
        %3067 = vmatprep.subr.bf16.mxu0 0
        %3068 = vmatpush1.bf16.xpose.msra.mxu0 0
        %3069 = vmatprep.subr.bf16.mxu0 0
        %3070 = vmatpush1.bf16.xpose.msra.mxu0 0
        %3071 = vmatprep.subr.bf16.mxu0 0
        %3072 = vmatpush1.bf16.xpose.msra.mxu0 0
        %3073 = vmatprep.subr.bf16.mxu0 0
        %3074 = vmatpush1.bf16.xpose.msra.mxu0 0
        %3075 = vmatprep.subr.bf16.mxu0 0
        %3076 = vmatpush1.bf16.xpose.msra.mxu0 0
        %3077 = vmatprep.subr.bf16.mxu0 0
        %3078 = vmatpush1.bf16.xpose.msra.mxu0 0
        %3079 = vmatprep.subr.bf16.mxu0 0
        %3080 = vmatpush1.bf16.xpose.msra.mxu0 0
        %3081 = vmatprep.mubr.bf16.mxu0 0
        %3082 = vmatmul.mubr.bf16.gmra.mrb[0].mxu0 %v3044
        %v3083 = vpop.f32.mrb[0].mxu0
        %v3084 = vadd.f32 0.0, %v3083
        %v3085 = vpop.f32.mrb[0].mxu0
        %v3086 = vpop.f32.mrb[0].mxu0
        %v3087 = vadd.f32 0.0, %v3086
        %v3088 = vpop.f32.mrb[0].mxu0
        %3089 = vdwg.mxu0
        %3091 = vrot.lane.b32.xlu0 %v2776, 120
        %v3092 = vpop.permute.xlu0 %3091
        %3093 = vrot.lane.b32.xlu0 %v2776, 88
        %v3094 = vpop.permute.xlu0 %3093
        %v3096 = vsel %vm762, %v3092, 0
        %v3099 = vsel %vm762, %v3094, 0
        %3101 = vmatprep.subr.bf16.mxu0 0
        %3102 = vmatpush1.bf16.xpose.msra.mxu0 %v3099
        %3103 = vmatprep.subr.bf16.mxu0 0
        %3104 = vmatpush1.bf16.xpose.msra.mxu0 0
        %3105 = vmatprep.subr.bf16.mxu0 0
        %3106 = vmatpush1.bf16.xpose.msra.mxu0 0
        %3107 = vmatprep.subr.bf16.mxu0 0
        %3108 = vmatpush1.bf16.xpose.msra.mxu0 0
        %3109 = vmatprep.subr.bf16.mxu0 0
        %3110 = vmatpush1.bf16.xpose.msra.mxu0 0
        %3111 = vmatprep.subr.bf16.mxu0 0
        %3112 = vmatpush1.bf16.xpose.msra.mxu0 0
        %3113 = vmatprep.subr.bf16.mxu0 0
        %3114 = vmatpush1.bf16.xpose.msra.mxu0 0
        %3115 = vmatprep.subr.bf16.mxu0 0
        %3116 = vmatpush1.bf16.xpose.msra.mxu0 0
        %3117 = vmatprep.subr.bf16.mxu0 0
        %3118 = vmatpush1.bf16.xpose.msra.mxu0 0
        %3119 = vmatprep.subr.bf16.mxu0 0
        %3120 = vmatpush1.bf16.xpose.msra.mxu0 0
        %3121 = vmatprep.subr.bf16.mxu0 0
        %3122 = vmatpush1.bf16.xpose.msra.mxu0 0
        %3123 = vmatprep.subr.bf16.mxu0 0
        %3124 = vmatpush1.bf16.xpose.msra.mxu0 0
        %3125 = vmatprep.subr.bf16.mxu0 0
        %3126 = vmatpush1.bf16.xpose.msra.mxu0 0
        %3127 = vmatprep.subr.bf16.mxu0 0
        %3128 = vmatpush1.bf16.xpose.msra.mxu0 0
        %3129 = vmatprep.subr.bf16.mxu0 0
        %3130 = vmatpush1.bf16.xpose.msra.mxu0 0
        %3131 = vmatprep.subr.bf16.mxu0 0
        %3132 = vmatpush1.bf16.xpose.msra.mxu0 0
        %3133 = vmatprep.mubr.bf16.mxu0 0
        %3134 = vmatmul.mubr.bf16.gmra.mrb[0].mxu0 %v3096
        %v3135 = vpop.f32.mrb[0].mxu0
        %v3136 = vadd.f32 0.0, %v3135
        %v3137 = vpop.f32.mrb[0].mxu0
        %v3138 = vpop.f32.mrb[0].mxu0
        %v3139 = vadd.f32 0.0, %v3138
        %v3140 = vpop.f32.mrb[0].mxu0
        %3141 = vdwg.mxu0
        %3143 = vrot.lane.b32.xlu0 %v2777, 120
        %v3144 = vpop.permute.xlu0 %3143
        %3145 = vrot.lane.b32.xlu0 %v2777, 88
        %v3146 = vpop.permute.xlu0 %3145
        %v3148 = vsel %vm762, %v3144, 0
        %v3151 = vsel %vm762, %v3146, 0
        %3153 = vmatprep.subr.bf16.mxu0 0
        %3154 = vmatpush1.bf16.xpose.msra.mxu0 %v3151
        %3155 = vmatprep.subr.bf16.mxu0 0
        %3156 = vmatpush1.bf16.xpose.msra.mxu0 0
        %3157 = vmatprep.subr.bf16.mxu0 0
        %3158 = vmatpush1.bf16.xpose.msra.mxu0 0
        %3159 = vmatprep.subr.bf16.mxu0 0
        %3160 = vmatpush1.bf16.xpose.msra.mxu0 0
        %3161 = vmatprep.subr.bf16.mxu0 0
        %3162 = vmatpush1.bf16.xpose.msra.mxu0 0
        %3163 = vmatprep.subr.bf16.mxu0 0
        %3164 = vmatpush1.bf16.xpose.msra.mxu0 0
        %3165 = vmatprep.subr.bf16.mxu0 0
        %3166 = vmatpush1.bf16.xpose.msra.mxu0 0
        %3167 = vmatprep.subr.bf16.mxu0 0
        %3168 = vmatpush1.bf16.xpose.msra.mxu0 0
        %3169 = vmatprep.subr.bf16.mxu0 0
        %3170 = vmatpush1.bf16.xpose.msra.mxu0 0
        %3171 = vmatprep.subr.bf16.mxu0 0
        %3172 = vmatpush1.bf16.xpose.msra.mxu0 0
        %3173 = vmatprep.subr.bf16.mxu0 0
        %3174 = vmatpush1.bf16.xpose.msra.mxu0 0
        %3175 = vmatprep.subr.bf16.mxu0 0
        %3176 = vmatpush1.bf16.xpose.msra.mxu0 0
        %3177 = vmatprep.subr.bf16.mxu0 0
        %3178 = vmatpush1.bf16.xpose.msra.mxu0 0
        %3179 = vmatprep.subr.bf16.mxu0 0
        %3180 = vmatpush1.bf16.xpose.msra.mxu0 0
        %3181 = vmatprep.subr.bf16.mxu0 0
        %3182 = vmatpush1.bf16.xpose.msra.mxu0 0
        %3183 = vmatprep.subr.bf16.mxu0 0
        %3184 = vmatpush1.bf16.xpose.msra.mxu0 0
        %3185 = vmatprep.mubr.bf16.mxu0 0
        %3186 = vmatmul.mubr.bf16.gmra.mrb[0].mxu0 %v3148
        %v3187 = vpop.f32.mrb[0].mxu0
        %v3188 = vadd.f32 0.0, %v3187
        %v3189 = vpop.f32.mrb[0].mxu0
        %v3190 = vpop.f32.mrb[0].mxu0
        %v3191 = vadd.f32 0.0, %v3190
        %v3192 = vpop.f32.mrb[0].mxu0
        %3193 = vdwg.mxu0
        %v3194 = vsel %vm1160, %v2824, -inf
        %3195 = vmax.xlane.f32.xlu0 %v3194
        %v3196 = vpop.xlane.xlu0 %3195
        %v3197 = vsel %vm1160, %v2827, -inf
        %3198 = vmax.xlane.f32.xlu0 %v3197
        %v3199 = vpop.xlane.xlu0 %3198
        %v3200 = vsel %vm1160, %v2876, -inf
        %3201 = vmax.xlane.f32.xlu0 %v3200
        %v3202 = vpop.xlane.xlu0 %3201
        %v3203 = vsel %vm1160, %v2879, -inf
        %3204 = vmax.xlane.f32.xlu0 %v3203
        %v3205 = vpop.xlane.xlu0 %3204
        %v3206 = vsel %vm1160, %v2928, -inf
        %3207 = vmax.xlane.f32.xlu0 %v3206
        %v3208 = vpop.xlane.xlu0 %3207
        %v3209 = vsel %vm1160, %v2931, -inf
        %3210 = vmax.xlane.f32.xlu0 %v3209
        %v3211 = vpop.xlane.xlu0 %3210
        %v3212 = vsel %vm1160, %v2980, -inf
        %3213 = vmax.xlane.f32.xlu0 %v3212
        %v3214 = vpop.xlane.xlu0 %3213
        %v3215 = vsel %vm1160, %v2983, -inf
        %3216 = vmax.xlane.f32.xlu0 %v3215
        %v3217 = vpop.xlane.xlu0 %3216
        %v3218 = vsel %vm1160, %v3032, -inf
        %3219 = vmax.xlane.f32.xlu0 %v3218
        %v3220 = vpop.xlane.xlu0 %3219
        %v3221 = vsel %vm1160, %v3035, -inf
        %3222 = vmax.xlane.f32.xlu0 %v3221
        %v3223 = vpop.xlane.xlu0 %3222
        %v3224 = vsel %vm1160, %v3084, -inf
        %3225 = vmax.xlane.f32.xlu0 %v3224
        %v3226 = vpop.xlane.xlu0 %3225
        %v3227 = vsel %vm1160, %v3087, -inf
        %3228 = vmax.xlane.f32.xlu0 %v3227
        %v3229 = vpop.xlane.xlu0 %3228
        %v3230 = vsel %vm1160, %v3136, -inf
        %3231 = vmax.xlane.f32.xlu0 %v3230
        %v3232 = vpop.xlane.xlu0 %3231
        %v3233 = vsel %vm1160, %v3139, -inf
        %3234 = vmax.xlane.f32.xlu0 %v3233
        %v3235 = vpop.xlane.xlu0 %3234
        %v3236 = vsel %vm1160, %v3188, -inf
        %3237 = vmax.xlane.f32.xlu0 %v3236
        %v3238 = vpop.xlane.xlu0 %3237
        %v3239 = vsel %vm1160, %v3191, -inf
        %3240 = vmax.xlane.f32.xlu0 %v3239
        %v3241 = vpop.xlane.xlu0 %3240
        %v3242 = vsub.f32 %v2824, %v3196
        %v3243 = vsub.f32 %v2827, %v3199
        %v3244 = vsub.f32 %v2876, %v3202
        %v3245 = vsub.f32 %v2879, %v3205
        %v3246 = vsub.f32 %v2928, %v3208
        %v3247 = vsub.f32 %v2931, %v3211
        %v3248 = vsub.f32 %v2980, %v3214
        %v3249 = vsub.f32 %v2983, %v3217
        %v3250 = vsub.f32 %v3032, %v3220
        %v3251 = vsub.f32 %v3035, %v3223
        %v3252 = vsub.f32 %v3084, %v3226
        %v3253 = vsub.f32 %v3087, %v3229
        %v3254 = vsub.f32 %v3136, %v3232
        %v3255 = vsub.f32 %v3139, %v3235
        %v3256 = vsub.f32 %v3188, %v3238
        %v3257 = vsub.f32 %v3191, %v3241
        %v3258 = vmul.f32 %v3242, 1.442695
        %v3259 = vpow.pop %v3258
        %v3260 = vmul.f32 %v3243, 1.442695
        %v3261 = vpow.pop %v3260
        %v3262 = vmul.f32 %v3244, 1.442695
        %v3263 = vpow.pop %v3262
        %v3264 = vmul.f32 %v3245, 1.442695
        %v3265 = vpow.pop %v3264
        %v3266 = vmul.f32 %v3246, 1.442695
        %v3267 = vpow.pop %v3266
        %v3268 = vmul.f32 %v3247, 1.442695
        %v3269 = vpow.pop %v3268
        %v3270 = vmul.f32 %v3248, 1.442695
        %v3271 = vpow.pop %v3270
        %v3272 = vmul.f32 %v3249, 1.442695
        %v3273 = vpow.pop %v3272
        %v3274 = vmul.f32 %v3250, 1.442695
        %v3275 = vpow.pop %v3274
        %v3276 = vmul.f32 %v3251, 1.442695
        %v3277 = vpow.pop %v3276
        %v3278 = vmul.f32 %v3252, 1.442695
        %v3279 = vpow.pop %v3278
        %v3280 = vmul.f32 %v3253, 1.442695
        %v3281 = vpow.pop %v3280
        %v3282 = vmul.f32 %v3254, 1.442695
        %v3283 = vpow.pop %v3282
        %v3284 = vmul.f32 %v3255, 1.442695
        %v3285 = vpow.pop %v3284
        %v3286 = vmul.f32 %v3256, 1.442695
        %v3287 = vpow.pop %v3286
        %v3288 = vmul.f32 %v3257, 1.442695
        %v3289 = vpow.pop %v3288
        %v3290 = vsel %vm1160, %v3259, 0.0
        %3291 = vadd.xlane.f32.xlu0 %v3290
        %v3292 = vpop.xlane.xlu0 %3291
        %v3293 = vsel %vm1160, %v3261, 0.0
        %3294 = vadd.xlane.f32.xlu0 %v3293
        %v3295 = vpop.xlane.xlu0 %3294
        %v3296 = vsel %vm1160, %v3263, 0.0
        %3297 = vadd.xlane.f32.xlu0 %v3296
        %v3298 = vpop.xlane.xlu0 %3297
        %v3299 = vsel %vm1160, %v3265, 0.0
        %3300 = vadd.xlane.f32.xlu0 %v3299
        %v3301 = vpop.xlane.xlu0 %3300
        %v3302 = vsel %vm1160, %v3267, 0.0
        %3303 = vadd.xlane.f32.xlu0 %v3302
        %v3304 = vpop.xlane.xlu0 %3303
        %v3305 = vsel %vm1160, %v3269, 0.0
        %3306 = vadd.xlane.f32.xlu0 %v3305
        %v3307 = vpop.xlane.xlu0 %3306
        %v3308 = vsel %vm1160, %v3271, 0.0
        %3309 = vadd.xlane.f32.xlu0 %v3308
        %v3310 = vpop.xlane.xlu0 %3309
        %v3311 = vsel %vm1160, %v3273, 0.0
        %3312 = vadd.xlane.f32.xlu0 %v3311
        %v3313 = vpop.xlane.xlu0 %3312
        %v3314 = vsel %vm1160, %v3275, 0.0
        %3315 = vadd.xlane.f32.xlu0 %v3314
        %v3316 = vpop.xlane.xlu0 %3315
        %v3317 = vsel %vm1160, %v3277, 0.0
        %3318 = vadd.xlane.f32.xlu0 %v3317
        %v3319 = vpop.xlane.xlu0 %3318
        %v3320 = vsel %vm1160, %v3279, 0.0
        %3321 = vadd.xlane.f32.xlu0 %v3320
        %v3322 = vpop.xlane.xlu0 %3321
        %v3323 = vsel %vm1160, %v3281, 0.0
        %3324 = vadd.xlane.f32.xlu0 %v3323
        %v3325 = vpop.xlane.xlu0 %3324
        %v3326 = vsel %vm1160, %v3283, 0.0
        %3327 = vadd.xlane.f32.xlu0 %v3326
        %v3328 = vpop.xlane.xlu0 %3327
        %v3329 = vsel %vm1160, %v3285, 0.0
        %3330 = vadd.xlane.f32.xlu0 %v3329
        %v3331 = vpop.xlane.xlu0 %3330
        %v3332 = vsel %vm1160, %v3287, 0.0
        %3333 = vadd.xlane.f32.xlu0 %v3332
        %v3334 = vpop.xlane.xlu0 %3333
        %v3335 = vsel %vm1160, %v3289, 0.0
        %3336 = vadd.xlane.f32.xlu0 %v3335
        %v3337 = vpop.xlane.xlu0 %3336
        %v3338 = vrcp.pop %v3292
        %v3339 = vrcp.pop %v3295
        %v3340 = vrcp.pop %v3298
        %v3341 = vrcp.pop %v3301
        %v3342 = vrcp.pop %v3304
        %v3343 = vrcp.pop %v3307
        %v3344 = vrcp.pop %v3310
        %v3345 = vrcp.pop %v3313
        %v3346 = vrcp.pop %v3316
        %v3347 = vrcp.pop %v3319
        %v3348 = vrcp.pop %v3322
        %v3349 = vrcp.pop %v3325
        %v3350 = vrcp.pop %v3328
        %v3351 = vrcp.pop %v3331
        %v3352 = vrcp.pop %v3334
        %v3353 = vrcp.pop %v3337
        %v3354 = vmul.f32 %v3259, %v3338
        %v3355 = vmul.f32 %v3261, %v3339
        %v3356 = vmul.f32 %v3263, %v3340
        %v3357 = vmul.f32 %v3265, %v3341
        %v3358 = vmul.f32 %v3267, %v3342
        %v3359 = vmul.f32 %v3269, %v3343
        %v3360 = vmul.f32 %v3271, %v3344
        %v3361 = vmul.f32 %v3273, %v3345
        %v3362 = vmul.f32 %v3275, %v3346
        %v3363 = vmul.f32 %v3277, %v3347
        %v3364 = vmul.f32 %v3279, %v3348
        %v3365 = vmul.f32 %v3281, %v3349
        %v3366 = vmul.f32 %v3283, %v3350
        %v3367 = vmul.f32 %v3285, %v3351
        %v3368 = vmul.f32 %v3287, %v3352
        %v3369 = vmul.f32 %v3289, %v3353
        %v3370 = vpack.c.bf16 %v3355, %v3354
        %v3371 = vpack.c.bf16 %v3357, %v3356
        %v3372 = vpack.c.bf16 %v3359, %v3358
        %v3373 = vpack.c.bf16 %v3361, %v3360
        %v3374 = vpack.c.bf16 %v3363, %v3362
        %v3375 = vpack.c.bf16 %v3365, %v3364
        %v3376 = vpack.c.bf16 %v3367, %v3366
        %v3377 = vpack.c.bf16 %v3369, %v3368
        %3378 = vrot.lane.b32.xlu0 %v2770, 56
        %v3379 = vpop.permute.xlu0 %3378
        %v3382 = vsel %vm1160, %v3370, 0
        %3384 = vmatprep.subr.bf16.mxu0 0
        %3385 = vmatpush1.bf16.msra.mxu0 %v3379
        %3386 = vmatprep.subr.bf16.mxu0 0
        %3387 = vmatpush1.bf16.msra.mxu0 0
        %3388 = vmatprep.subr.bf16.mxu0 0
        %3389 = vmatpush1.bf16.msra.mxu0 0
        %3390 = vmatprep.subr.bf16.mxu0 0
        %3391 = vmatpush1.bf16.msra.mxu0 0
        %3392 = vmatprep.subr.bf16.mxu0 0
        %3393 = vmatpush1.bf16.msra.mxu0 0
        %3394 = vmatprep.subr.bf16.mxu0 0
        %3395 = vmatpush1.bf16.msra.mxu0 0
        %3396 = vmatprep.subr.bf16.mxu0 0
        %3397 = vmatpush1.bf16.msra.mxu0 0
        %3398 = vmatprep.subr.bf16.mxu0 0
        %3399 = vmatpush1.bf16.msra.mxu0 0
        %3400 = vmatprep.subr.bf16.mxu0 0
        %3401 = vmatpush1.bf16.msra.mxu0 0
        %3402 = vmatprep.subr.bf16.mxu0 0
        %3403 = vmatpush1.bf16.msra.mxu0 0
        %3404 = vmatprep.subr.bf16.mxu0 0
        %3405 = vmatpush1.bf16.msra.mxu0 0
        %3406 = vmatprep.subr.bf16.mxu0 0
        %3407 = vmatpush1.bf16.msra.mxu0 0
        %3408 = vmatprep.subr.bf16.mxu0 0
        %3409 = vmatpush1.bf16.msra.mxu0 0
        %3410 = vmatprep.subr.bf16.mxu0 0
        %3411 = vmatpush1.bf16.msra.mxu0 0
        %3412 = vmatprep.subr.bf16.mxu0 0
        %3413 = vmatpush1.bf16.msra.mxu0 0
        %3414 = vmatprep.subr.bf16.mxu0 0
        %3415 = vmatpush1.bf16.msra.mxu0 0
        %3416 = vmatprep.mubr.bf16.mxu0 0
        %3417 = vmatmul.mubr.bf16.gmra.mrb[0].mxu0 %v3382
        %v3418 = vpop.f32.mrb[0].mxu0
        %v3419 = vadd.f32 0.0, %v3418
        %v3420 = vpop.f32.mrb[0].mxu0
        %v3421 = vpop.f32.mrb[0].mxu0
        %v3422 = vadd.f32 0.0, %v3421
        %v3423 = vpop.f32.mrb[0].mxu0
        %3424 = vdwg.mxu0
        %3425 = vrot.lane.b32.xlu0 %v2771, 56
        %v3426 = vpop.permute.xlu0 %3425
        %v3429 = vsel %vm1160, %v3371, 0
        %3431 = vmatprep.subr.bf16.mxu0 0
        %3432 = vmatpush1.bf16.msra.mxu0 %v3426
        %3433 = vmatprep.subr.bf16.mxu0 0
        %3434 = vmatpush1.bf16.msra.mxu0 0
        %3435 = vmatprep.subr.bf16.mxu0 0
        %3436 = vmatpush1.bf16.msra.mxu0 0
        %3437 = vmatprep.subr.bf16.mxu0 0
        %3438 = vmatpush1.bf16.msra.mxu0 0
        %3439 = vmatprep.subr.bf16.mxu0 0
        %3440 = vmatpush1.bf16.msra.mxu0 0
        %3441 = vmatprep.subr.bf16.mxu0 0
        %3442 = vmatpush1.bf16.msra.mxu0 0
        %3443 = vmatprep.subr.bf16.mxu0 0
        %3444 = vmatpush1.bf16.msra.mxu0 0
        %3445 = vmatprep.subr.bf16.mxu0 0
        %3446 = vmatpush1.bf16.msra.mxu0 0
        %3447 = vmatprep.subr.bf16.mxu0 0
        %3448 = vmatpush1.bf16.msra.mxu0 0
        %3449 = vmatprep.subr.bf16.mxu0 0
        %3450 = vmatpush1.bf16.msra.mxu0 0
        %3451 = vmatprep.subr.bf16.mxu0 0
        %3452 = vmatpush1.bf16.msra.mxu0 0
        %3453 = vmatprep.subr.bf16.mxu0 0
        %3454 = vmatpush1.bf16.msra.mxu0 0
        %3455 = vmatprep.subr.bf16.mxu0 0
        %3456 = vmatpush1.bf16.msra.mxu0 0
        %3457 = vmatprep.subr.bf16.mxu0 0
        %3458 = vmatpush1.bf16.msra.mxu0 0
        %3459 = vmatprep.subr.bf16.mxu0 0
        %3460 = vmatpush1.bf16.msra.mxu0 0
        %3461 = vmatprep.subr.bf16.mxu0 0
        %3462 = vmatpush1.bf16.msra.mxu0 0
        %3463 = vmatprep.mubr.bf16.mxu0 0
        %3464 = vmatmul.mubr.bf16.gmra.mrb[0].mxu0 %v3429
        %v3465 = vpop.f32.mrb[0].mxu0
        %v3466 = vadd.f32 0.0, %v3465
        %v3467 = vpop.f32.mrb[0].mxu0
        %v3468 = vpop.f32.mrb[0].mxu0
        %v3469 = vadd.f32 0.0, %v3468
        %v3470 = vpop.f32.mrb[0].mxu0
        %3471 = vdwg.mxu0
        %3472 = vrot.lane.b32.xlu0 %v2772, 56
        %v3473 = vpop.permute.xlu0 %3472
        %v3476 = vsel %vm1160, %v3372, 0
        %3478 = vmatprep.subr.bf16.mxu0 0
        %3479 = vmatpush1.bf16.msra.mxu0 %v3473
        %3480 = vmatprep.subr.bf16.mxu0 0
        %3481 = vmatpush1.bf16.msra.mxu0 0
        %3482 = vmatprep.subr.bf16.mxu0 0
        %3483 = vmatpush1.bf16.msra.mxu0 0
        %3484 = vmatprep.subr.bf16.mxu0 0
        %3485 = vmatpush1.bf16.msra.mxu0 0
        %3486 = vmatprep.subr.bf16.mxu0 0
        %3487 = vmatpush1.bf16.msra.mxu0 0
        %3488 = vmatprep.subr.bf16.mxu0 0
        %3489 = vmatpush1.bf16.msra.mxu0 0
        %3490 = vmatprep.subr.bf16.mxu0 0
        %3491 = vmatpush1.bf16.msra.mxu0 0
        %3492 = vmatprep.subr.bf16.mxu0 0
        %3493 = vmatpush1.bf16.msra.mxu0 0
        %3494 = vmatprep.subr.bf16.mxu0 0
        %3495 = vmatpush1.bf16.msra.mxu0 0
        %3496 = vmatprep.subr.bf16.mxu0 0
        %3497 = vmatpush1.bf16.msra.mxu0 0
        %3498 = vmatprep.subr.bf16.mxu0 0
        %3499 = vmatpush1.bf16.msra.mxu0 0
        %3500 = vmatprep.subr.bf16.mxu0 0
        %3501 = vmatpush1.bf16.msra.mxu0 0
        %3502 = vmatprep.subr.bf16.mxu0 0
        %3503 = vmatpush1.bf16.msra.mxu0 0
        %3504 = vmatprep.subr.bf16.mxu0 0
        %3505 = vmatpush1.bf16.msra.mxu0 0
        %3506 = vmatprep.subr.bf16.mxu0 0
        %3507 = vmatpush1.bf16.msra.mxu0 0
        %3508 = vmatprep.subr.bf16.mxu0 0
        %3509 = vmatpush1.bf16.msra.mxu0 0
        %3510 = vmatprep.mubr.bf16.mxu0 0
        %3511 = vmatmul.mubr.bf16.gmra.mrb[0].mxu0 %v3476
        %v3512 = vpop.f32.mrb[0].mxu0
        %v3513 = vadd.f32 0.0, %v3512
        %v3514 = vpop.f32.mrb[0].mxu0
        %v3515 = vpop.f32.mrb[0].mxu0
        %v3516 = vadd.f32 0.0, %v3515
        %v3517 = vpop.f32.mrb[0].mxu0
        %3518 = vdwg.mxu0
        %3519 = vrot.lane.b32.xlu0 %v2773, 56
        %v3520 = vpop.permute.xlu0 %3519
        %v3523 = vsel %vm1160, %v3373, 0
        %3525 = vmatprep.subr.bf16.mxu0 0
        %3526 = vmatpush1.bf16.msra.mxu0 %v3520
        %3527 = vmatprep.subr.bf16.mxu0 0
        %3528 = vmatpush1.bf16.msra.mxu0 0
        %3529 = vmatprep.subr.bf16.mxu0 0
        %3530 = vmatpush1.bf16.msra.mxu0 0
        %3531 = vmatprep.subr.bf16.mxu0 0
        %3532 = vmatpush1.bf16.msra.mxu0 0
        %3533 = vmatprep.subr.bf16.mxu0 0
        %3534 = vmatpush1.bf16.msra.mxu0 0
        %3535 = vmatprep.subr.bf16.mxu0 0
        %3536 = vmatpush1.bf16.msra.mxu0 0
        %3537 = vmatprep.subr.bf16.mxu0 0
        %3538 = vmatpush1.bf16.msra.mxu0 0
        %3539 = vmatprep.subr.bf16.mxu0 0
        %3540 = vmatpush1.bf16.msra.mxu0 0
        %3541 = vmatprep.subr.bf16.mxu0 0
        %3542 = vmatpush1.bf16.msra.mxu0 0
        %3543 = vmatprep.subr.bf16.mxu0 0
        %3544 = vmatpush1.bf16.msra.mxu0 0
        %3545 = vmatprep.subr.bf16.mxu0 0
        %3546 = vmatpush1.bf16.msra.mxu0 0
        %3547 = vmatprep.subr.bf16.mxu0 0
        %3548 = vmatpush1.bf16.msra.mxu0 0
        %3549 = vmatprep.subr.bf16.mxu0 0
        %3550 = vmatpush1.bf16.msra.mxu0 0
        %3551 = vmatprep.subr.bf16.mxu0 0
        %3552 = vmatpush1.bf16.msra.mxu0 0
        %3553 = vmatprep.subr.bf16.mxu0 0
        %3554 = vmatpush1.bf16.msra.mxu0 0
        %3555 = vmatprep.subr.bf16.mxu0 0
        %3556 = vmatpush1.bf16.msra.mxu0 0
        %3557 = vmatprep.mubr.bf16.mxu0 0
        %3558 = vmatmul.mubr.bf16.gmra.mrb[0].mxu0 %v3523
        %v3559 = vpop.f32.mrb[0].mxu0
        %v3560 = vadd.f32 0.0, %v3559
        %v3561 = vpop.f32.mrb[0].mxu0
        %v3562 = vpop.f32.mrb[0].mxu0
        %v3563 = vadd.f32 0.0, %v3562
        %v3564 = vpop.f32.mrb[0].mxu0
        %3565 = vdwg.mxu0
        %3566 = vrot.lane.b32.xlu0 %v2774, 56
        %v3567 = vpop.permute.xlu0 %3566
        %v3570 = vsel %vm1160, %v3374, 0
        %3572 = vmatprep.subr.bf16.mxu0 0
        %3573 = vmatpush1.bf16.msra.mxu0 %v3567
        %3574 = vmatprep.subr.bf16.mxu0 0
        %3575 = vmatpush1.bf16.msra.mxu0 0
        %3576 = vmatprep.subr.bf16.mxu0 0
        %3577 = vmatpush1.bf16.msra.mxu0 0
        %3578 = vmatprep.subr.bf16.mxu0 0
        %3579 = vmatpush1.bf16.msra.mxu0 0
        %3580 = vmatprep.subr.bf16.mxu0 0
        %3581 = vmatpush1.bf16.msra.mxu0 0
        %3582 = vmatprep.subr.bf16.mxu0 0
        %3583 = vmatpush1.bf16.msra.mxu0 0
        %3584 = vmatprep.subr.bf16.mxu0 0
        %3585 = vmatpush1.bf16.msra.mxu0 0
        %3586 = vmatprep.subr.bf16.mxu0 0
        %3587 = vmatpush1.bf16.msra.mxu0 0
        %3588 = vmatprep.subr.bf16.mxu0 0
        %3589 = vmatpush1.bf16.msra.mxu0 0
        %3590 = vmatprep.subr.bf16.mxu0 0
        %3591 = vmatpush1.bf16.msra.mxu0 0
        %3592 = vmatprep.subr.bf16.mxu0 0
        %3593 = vmatpush1.bf16.msra.mxu0 0
        %3594 = vmatprep.subr.bf16.mxu0 0
        %3595 = vmatpush1.bf16.msra.mxu0 0
        %3596 = vmatprep.subr.bf16.mxu0 0
        %3597 = vmatpush1.bf16.msra.mxu0 0
        %3598 = vmatprep.subr.bf16.mxu0 0
        %3599 = vmatpush1.bf16.msra.mxu0 0
        %3600 = vmatprep.subr.bf16.mxu0 0
        %3601 = vmatpush1.bf16.msra.mxu0 0
        %3602 = vmatprep.subr.bf16.mxu0 0
        %3603 = vmatpush1.bf16.msra.mxu0 0
        %3604 = vmatprep.mubr.bf16.mxu0 0
        %3605 = vmatmul.mubr.bf16.gmra.mrb[0].mxu0 %v3570
        %v3606 = vpop.f32.mrb[0].mxu0
        %v3607 = vadd.f32 0.0, %v3606
        %v3608 = vpop.f32.mrb[0].mxu0
        %v3609 = vpop.f32.mrb[0].mxu0
        %v3610 = vadd.f32 0.0, %v3609
        %v3611 = vpop.f32.mrb[0].mxu0
        %3612 = vdwg.mxu0
        %3613 = vrot.lane.b32.xlu0 %v2775, 56
        %v3614 = vpop.permute.xlu0 %3613
        %v3617 = vsel %vm1160, %v3375, 0
        %3619 = vmatprep.subr.bf16.mxu0 0
        %3620 = vmatpush1.bf16.msra.mxu0 %v3614
        %3621 = vmatprep.subr.bf16.mxu0 0
        %3622 = vmatpush1.bf16.msra.mxu0 0
        %3623 = vmatprep.subr.bf16.mxu0 0
        %3624 = vmatpush1.bf16.msra.mxu0 0
        %3625 = vmatprep.subr.bf16.mxu0 0
        %3626 = vmatpush1.bf16.msra.mxu0 0
        %3627 = vmatprep.subr.bf16.mxu0 0
        %3628 = vmatpush1.bf16.msra.mxu0 0
        %3629 = vmatprep.subr.bf16.mxu0 0
        %3630 = vmatpush1.bf16.msra.mxu0 0
        %3631 = vmatprep.subr.bf16.mxu0 0
        %3632 = vmatpush1.bf16.msra.mxu0 0
        %3633 = vmatprep.subr.bf16.mxu0 0
        %3634 = vmatpush1.bf16.msra.mxu0 0
        %3635 = vmatprep.subr.bf16.mxu0 0
        %3636 = vmatpush1.bf16.msra.mxu0 0
        %3637 = vmatprep.subr.bf16.mxu0 0
        %3638 = vmatpush1.bf16.msra.mxu0 0
        %3639 = vmatprep.subr.bf16.mxu0 0
        %3640 = vmatpush1.bf16.msra.mxu0 0
        %3641 = vmatprep.subr.bf16.mxu0 0
        %3642 = vmatpush1.bf16.msra.mxu0 0
        %3643 = vmatprep.subr.bf16.mxu0 0
        %3644 = vmatpush1.bf16.msra.mxu0 0
        %3645 = vmatprep.subr.bf16.mxu0 0
        %3646 = vmatpush1.bf16.msra.mxu0 0
        %3647 = vmatprep.subr.bf16.mxu0 0
        %3648 = vmatpush1.bf16.msra.mxu0 0
        %3649 = vmatprep.subr.bf16.mxu0 0
        %3650 = vmatpush1.bf16.msra.mxu0 0
        %3651 = vmatprep.mubr.bf16.mxu0 0
        %3652 = vmatmul.mubr.bf16.gmra.mrb[0].mxu0 %v3617
        %v3653 = vpop.f32.mrb[0].mxu0
        %v3654 = vadd.f32 0.0, %v3653
        %v3655 = vpop.f32.mrb[0].mxu0
        %v3656 = vpop.f32.mrb[0].mxu0
        %v3657 = vadd.f32 0.0, %v3656
        %v3658 = vpop.f32.mrb[0].mxu0
        %3659 = vdwg.mxu0
        %3660 = vrot.lane.b32.xlu0 %v2776, 56
        %v3661 = vpop.permute.xlu0 %3660
        %v3664 = vsel %vm1160, %v3376, 0
        %3666 = vmatprep.subr.bf16.mxu0 0
        %3667 = vmatpush1.bf16.msra.mxu0 %v3661
        %3668 = vmatprep.subr.bf16.mxu0 0
        %3669 = vmatpush1.bf16.msra.mxu0 0
        %3670 = vmatprep.subr.bf16.mxu0 0
        %3671 = vmatpush1.bf16.msra.mxu0 0
        %3672 = vmatprep.subr.bf16.mxu0 0
        %3673 = vmatpush1.bf16.msra.mxu0 0
        %3674 = vmatprep.subr.bf16.mxu0 0
        %3675 = vmatpush1.bf16.msra.mxu0 0
        %3676 = vmatprep.subr.bf16.mxu0 0
        %3677 = vmatpush1.bf16.msra.mxu0 0
        %3678 = vmatprep.subr.bf16.mxu0 0
        %3679 = vmatpush1.bf16.msra.mxu0 0
        %3680 = vmatprep.subr.bf16.mxu0 0
        %3681 = vmatpush1.bf16.msra.mxu0 0
        %3682 = vmatprep.subr.bf16.mxu0 0
        %3683 = vmatpush1.bf16.msra.mxu0 0
        %3684 = vmatprep.subr.bf16.mxu0 0
        %3685 = vmatpush1.bf16.msra.mxu0 0
        %3686 = vmatprep.subr.bf16.mxu0 0
        %3687 = vmatpush1.bf16.msra.mxu0 0
        %3688 = vmatprep.subr.bf16.mxu0 0
        %3689 = vmatpush1.bf16.msra.mxu0 0
        %3690 = vmatprep.subr.bf16.mxu0 0
        %3691 = vmatpush1.bf16.msra.mxu0 0
        %3692 = vmatprep.subr.bf16.mxu0 0
        %3693 = vmatpush1.bf16.msra.mxu0 0
        %3694 = vmatprep.subr.bf16.mxu0 0
        %3695 = vmatpush1.bf16.msra.mxu0 0
        %3696 = vmatprep.subr.bf16.mxu0 0
        %3697 = vmatpush1.bf16.msra.mxu0 0
        %3698 = vmatprep.mubr.bf16.mxu0 0
        %3699 = vmatmul.mubr.bf16.gmra.mrb[0].mxu0 %v3664
        %v3700 = vpop.f32.mrb[0].mxu0
        %v3701 = vadd.f32 0.0, %v3700
        %v3702 = vpop.f32.mrb[0].mxu0
        %v3703 = vpop.f32.mrb[0].mxu0
        %v3704 = vadd.f32 0.0, %v3703
        %v3705 = vpop.f32.mrb[0].mxu0
        %3706 = vdwg.mxu0
        %3707 = vrot.lane.b32.xlu0 %v2777, 56
        %v3708 = vpop.permute.xlu0 %3707
        %v3711 = vsel %vm1160, %v3377, 0
        %3713 = vmatprep.subr.bf16.mxu0 0
        %3714 = vmatpush1.bf16.msra.mxu0 %v3708
        %3715 = vmatprep.subr.bf16.mxu0 0
        %3716 = vmatpush1.bf16.msra.mxu0 0
        %3717 = vmatprep.subr.bf16.mxu0 0
        %3718 = vmatpush1.bf16.msra.mxu0 0
        %3719 = vmatprep.subr.bf16.mxu0 0
        %3720 = vmatpush1.bf16.msra.mxu0 0
        %3721 = vmatprep.subr.bf16.mxu0 0
        %3722 = vmatpush1.bf16.msra.mxu0 0
        %3723 = vmatprep.subr.bf16.mxu0 0
        %3724 = vmatpush1.bf16.msra.mxu0 0
        %3725 = vmatprep.subr.bf16.mxu0 0
        %3726 = vmatpush1.bf16.msra.mxu0 0
        %3727 = vmatprep.subr.bf16.mxu0 0
        %3728 = vmatpush1.bf16.msra.mxu0 0
        %3729 = vmatprep.subr.bf16.mxu0 0
        %3730 = vmatpush1.bf16.msra.mxu0 0
        %3731 = vmatprep.subr.bf16.mxu0 0
        %3732 = vmatpush1.bf16.msra.mxu0 0
        %3733 = vmatprep.subr.bf16.mxu0 0
        %3734 = vmatpush1.bf16.msra.mxu0 0
        %3735 = vmatprep.subr.bf16.mxu0 0
        %3736 = vmatpush1.bf16.msra.mxu0 0
        %3737 = vmatprep.subr.bf16.mxu0 0
        %3738 = vmatpush1.bf16.msra.mxu0 0
        %3739 = vmatprep.subr.bf16.mxu0 0
        %3740 = vmatpush1.bf16.msra.mxu0 0
        %3741 = vmatprep.subr.bf16.mxu0 0
        %3742 = vmatpush1.bf16.msra.mxu0 0
        %3743 = vmatprep.subr.bf16.mxu0 0
        %3744 = vmatpush1.bf16.msra.mxu0 0
        %3745 = vmatprep.mubr.bf16.mxu0 0
        %3746 = vmatmul.mubr.bf16.gmra.mrb[0].mxu0 %v3711
        %v3747 = vpop.f32.mrb[0].mxu0
        %v3748 = vadd.f32 0.0, %v3747
        %v3749 = vpop.f32.mrb[0].mxu0
        %v3750 = vpop.f32.mrb[0].mxu0
        %v3751 = vadd.f32 0.0, %v3750
        %v3752 = vpop.f32.mrb[0].mxu0
        %3753 = vdwg.mxu0
        %v3754 = vpack.c.bf16 %v3422, %v3419
        %v3755 = vpack.c.bf16 %v3469, %v3466
        %v3756 = vpack.c.bf16 %v3516, %v3513
        %v3757 = vpack.c.bf16 %v3563, %v3560
        %v3758 = vpack.c.bf16 %v3610, %v3607
        %v3759 = vpack.c.bf16 %v3657, %v3654
        %v3760 = vpack.c.bf16 %v3704, %v3701
        %v3761 = vpack.c.bf16 %v3751, %v3748
        %3770 = vrot.lane.b32.xlu0 %v3754, 8
        %v3771 = vpop.permute.xlu0 %3770
        %3772 = vrot.lane.b32.xlu0 %v3755, 8
        %v3773 = vpop.permute.xlu0 %3772
        %3774 = vrot.lane.b32.xlu0 %v3756, 8
        %v3775 = vpop.permute.xlu0 %3774
        %3776 = vrot.lane.b32.xlu0 %v3757, 8
        %v3777 = vpop.permute.xlu0 %3776
        %3778 = vrot.lane.b32.xlu0 %v3758, 8
        %v3779 = vpop.permute.xlu0 %3778
        %3780 = vrot.lane.b32.xlu0 %v3759, 8
        %v3781 = vpop.permute.xlu0 %3780
        %3782 = vrot.lane.b32.xlu0 %v3760, 8
        %v3783 = vpop.permute.xlu0 %3782
        %3784 = vrot.lane.b32.xlu0 %v3761, 8
        %v3785 = vpop.permute.xlu0 %3784
        %vm3794 = vcmask 97344
        %3795 = vst.msk [vmem:[#allocation3] sm:$0xff] %vm3794, %v3771
        %3796 = vst.msk [vmem:[#allocation3 + $0x8] sm:$0xff] %vm3794, %v3773
        %3797 = vst.msk [vmem:[#allocation3 + $0x10] sm:$0xff] %vm3794, %v3775
        %3798 = vst.msk [vmem:[#allocation3 + $0x18] sm:$0xff] %vm3794, %v3777
        %3799 = vst.msk [vmem:[#allocation3 + $0x20] sm:$0xff] %vm3794, %v3779
        %3800 = vst.msk [vmem:[#allocation3 + $0x28] sm:$0xff] %vm3794, %v3781
        %3801 = vst.msk [vmem:[#allocation3 + $0x30] sm:$0xff] %vm3794, %v3783
        %3802 = vst.msk [vmem:[#allocation3 + $0x38] sm:$0xff] %vm3794, %v3785
        %v3803 = vld [vmem:[#allocation2] sm:$0xff]
        %v3804 = vld [vmem:[#allocation2 + $0x8] sm:$0xff]
        %v3805 = vld [vmem:[#allocation2 + $0x10] sm:$0xff]
        %v3806 = vld [vmem:[#allocation2 + $0x18] sm:$0xff]
        %v3807 = vld [vmem:[#allocation2 + $0x20] sm:$0xff]
        %v3808 = vld [vmem:[#allocation2 + $0x28] sm:$0xff]
        %v3809 = vld [vmem:[#allocation2 + $0x30] sm:$0xff]
        %v3810 = vld [vmem:[#allocation2 + $0x38] sm:$0xff]
        %3812 = vrot.lane.b32.xlu0 %v3803, 116
        %v3813 = vpop.permute.xlu0 %3812
        %3814 = vrot.lane.b32.xlu0 %v3803, 84
        %v3815 = vpop.permute.xlu0 %3814
        %v3817 = vsel %vm762, %v3813, 0
        %v3820 = vsel %vm762, %v3815, 0
        %3822 = vmatprep.subr.bf16.mxu0 0
        %3823 = vmatpush1.bf16.xpose.msra.mxu0 %v3820
        %3824 = vmatprep.subr.bf16.mxu0 0
        %3825 = vmatpush1.bf16.xpose.msra.mxu0 0
        %3826 = vmatprep.subr.bf16.mxu0 0
        %3827 = vmatpush1.bf16.xpose.msra.mxu0 0
        %3828 = vmatprep.subr.bf16.mxu0 0
        %3829 = vmatpush1.bf16.xpose.msra.mxu0 0
        %3830 = vmatprep.subr.bf16.mxu0 0
        %3831 = vmatpush1.bf16.xpose.msra.mxu0 0
        %3832 = vmatprep.subr.bf16.mxu0 0
        %3833 = vmatpush1.bf16.xpose.msra.mxu0 0
        %3834 = vmatprep.subr.bf16.mxu0 0
        %3835 = vmatpush1.bf16.xpose.msra.mxu0 0
        %3836 = vmatprep.subr.bf16.mxu0 0
        %3837 = vmatpush1.bf16.xpose.msra.mxu0 0
        %3838 = vmatprep.subr.bf16.mxu0 0
        %3839 = vmatpush1.bf16.xpose.msra.mxu0 0
        %3840 = vmatprep.subr.bf16.mxu0 0
        %3841 = vmatpush1.bf16.xpose.msra.mxu0 0
        %3842 = vmatprep.subr.bf16.mxu0 0
        %3843 = vmatpush1.bf16.xpose.msra.mxu0 0
        %3844 = vmatprep.subr.bf16.mxu0 0
        %3845 = vmatpush1.bf16.xpose.msra.mxu0 0
        %3846 = vmatprep.subr.bf16.mxu0 0
        %3847 = vmatpush1.bf16.xpose.msra.mxu0 0
        %3848 = vmatprep.subr.bf16.mxu0 0
        %3849 = vmatpush1.bf16.xpose.msra.mxu0 0
        %3850 = vmatprep.subr.bf16.mxu0 0
        %3851 = vmatpush1.bf16.xpose.msra.mxu0 0
        %3852 = vmatprep.subr.bf16.mxu0 0
        %3853 = vmatpush1.bf16.xpose.msra.mxu0 0
        %3854 = vmatprep.mubr.bf16.mxu0 0
        %3855 = vmatmul.mubr.bf16.gmra.mrb[0].mxu0 %v3817
        %v3856 = vpop.f32.mrb[0].mxu0
        %v3857 = vadd.f32 0.0, %v3856
        %v3858 = vpop.f32.mrb[0].mxu0
        %v3859 = vpop.f32.mrb[0].mxu0
        %v3860 = vadd.f32 0.0, %v3859
        %v3861 = vpop.f32.mrb[0].mxu0
        %3862 = vdwg.mxu0
        %3864 = vrot.lane.b32.xlu0 %v3804, 116
        %v3865 = vpop.permute.xlu0 %3864
        %3866 = vrot.lane.b32.xlu0 %v3804, 84
        %v3867 = vpop.permute.xlu0 %3866
        %v3869 = vsel %vm762, %v3865, 0
        %v3872 = vsel %vm762, %v3867, 0
        %3874 = vmatprep.subr.bf16.mxu0 0
        %3875 = vmatpush1.bf16.xpose.msra.mxu0 %v3872
        %3876 = vmatprep.subr.bf16.mxu0 0
        %3877 = vmatpush1.bf16.xpose.msra.mxu0 0
        %3878 = vmatprep.subr.bf16.mxu0 0
        %3879 = vmatpush1.bf16.xpose.msra.mxu0 0
        %3880 = vmatprep.subr.bf16.mxu0 0
        %3881 = vmatpush1.bf16.xpose.msra.mxu0 0
        %3882 = vmatprep.subr.bf16.mxu0 0
        %3883 = vmatpush1.bf16.xpose.msra.mxu0 0
        %3884 = vmatprep.subr.bf16.mxu0 0
        %3885 = vmatpush1.bf16.xpose.msra.mxu0 0
        %3886 = vmatprep.subr.bf16.mxu0 0
        %3887 = vmatpush1.bf16.xpose.msra.mxu0 0
        %3888 = vmatprep.subr.bf16.mxu0 0
        %3889 = vmatpush1.bf16.xpose.msra.mxu0 0
        %3890 = vmatprep.subr.bf16.mxu0 0
        %3891 = vmatpush1.bf16.xpose.msra.mxu0 0
        %3892 = vmatprep.subr.bf16.mxu0 0
        %3893 = vmatpush1.bf16.xpose.msra.mxu0 0
        %3894 = vmatprep.subr.bf16.mxu0 0
        %3895 = vmatpush1.bf16.xpose.msra.mxu0 0
        %3896 = vmatprep.subr.bf16.mxu0 0
        %3897 = vmatpush1.bf16.xpose.msra.mxu0 0
        %3898 = vmatprep.subr.bf16.mxu0 0
        %3899 = vmatpush1.bf16.xpose.msra.mxu0 0
        %3900 = vmatprep.subr.bf16.mxu0 0
        %3901 = vmatpush1.bf16.xpose.msra.mxu0 0
        %3902 = vmatprep.subr.bf16.mxu0 0
        %3903 = vmatpush1.bf16.xpose.msra.mxu0 0
        %3904 = vmatprep.subr.bf16.mxu0 0
        %3905 = vmatpush1.bf16.xpose.msra.mxu0 0
        %3906 = vmatprep.mubr.bf16.mxu0 0
        %3907 = vmatmul.mubr.bf16.gmra.mrb[0].mxu0 %v3869
        %v3908 = vpop.f32.mrb[0].mxu0
        %v3909 = vadd.f32 0.0, %v3908
        %v3910 = vpop.f32.mrb[0].mxu0
        %v3911 = vpop.f32.mrb[0].mxu0
        %v3912 = vadd.f32 0.0, %v3911
        %v3913 = vpop.f32.mrb[0].mxu0
        %3914 = vdwg.mxu0
        %3916 = vrot.lane.b32.xlu0 %v3805, 116
        %v3917 = vpop.permute.xlu0 %3916
        %3918 = vrot.lane.b32.xlu0 %v3805, 84
        %v3919 = vpop.permute.xlu0 %3918
        %v3921 = vsel %vm762, %v3917, 0
        %v3924 = vsel %vm762, %v3919, 0
        %3926 = vmatprep.subr.bf16.mxu0 0
        %3927 = vmatpush1.bf16.xpose.msra.mxu0 %v3924
        %3928 = vmatprep.subr.bf16.mxu0 0
        %3929 = vmatpush1.bf16.xpose.msra.mxu0 0
        %3930 = vmatprep.subr.bf16.mxu0 0
        %3931 = vmatpush1.bf16.xpose.msra.mxu0 0
        %3932 = vmatprep.subr.bf16.mxu0 0
        %3933 = vmatpush1.bf16.xpose.msra.mxu0 0
        %3934 = vmatprep.subr.bf16.mxu0 0
        %3935 = vmatpush1.bf16.xpose.msra.mxu0 0
        %3936 = vmatprep.subr.bf16.mxu0 0
        %3937 = vmatpush1.bf16.xpose.msra.mxu0 0
        %3938 = vmatprep.subr.bf16.mxu0 0
        %3939 = vmatpush1.bf16.xpose.msra.mxu0 0
        %3940 = vmatprep.subr.bf16.mxu0 0
        %3941 = vmatpush1.bf16.xpose.msra.mxu0 0
        %3942 = vmatprep.subr.bf16.mxu0 0
        %3943 = vmatpush1.bf16.xpose.msra.mxu0 0
        %3944 = vmatprep.subr.bf16.mxu0 0
        %3945 = vmatpush1.bf16.xpose.msra.mxu0 0
        %3946 = vmatprep.subr.bf16.mxu0 0
        %3947 = vmatpush1.bf16.xpose.msra.mxu0 0
        %3948 = vmatprep.subr.bf16.mxu0 0
        %3949 = vmatpush1.bf16.xpose.msra.mxu0 0
        %3950 = vmatprep.subr.bf16.mxu0 0
        %3951 = vmatpush1.bf16.xpose.msra.mxu0 0
        %3952 = vmatprep.subr.bf16.mxu0 0
        %3953 = vmatpush1.bf16.xpose.msra.mxu0 0
        %3954 = vmatprep.subr.bf16.mxu0 0
        %3955 = vmatpush1.bf16.xpose.msra.mxu0 0
        %3956 = vmatprep.subr.bf16.mxu0 0
        %3957 = vmatpush1.bf16.xpose.msra.mxu0 0
        %3958 = vmatprep.mubr.bf16.mxu0 0
        %3959 = vmatmul.mubr.bf16.gmra.mrb[0].mxu0 %v3921
        %v3960 = vpop.f32.mrb[0].mxu0
        %v3961 = vadd.f32 0.0, %v3960
        %v3962 = vpop.f32.mrb[0].mxu0
        %v3963 = vpop.f32.mrb[0].mxu0
        %v3964 = vadd.f32 0.0, %v3963
        %v3965 = vpop.f32.mrb[0].mxu0
        %3966 = vdwg.mxu0
        %3968 = vrot.lane.b32.xlu0 %v3806, 116
        %v3969 = vpop.permute.xlu0 %3968
        %3970 = vrot.lane.b32.xlu0 %v3806, 84
        %v3971 = vpop.permute.xlu0 %3970
        %v3973 = vsel %vm762, %v3969, 0
        %v3976 = vsel %vm762, %v3971, 0
        %3978 = vmatprep.subr.bf16.mxu0 0
        %3979 = vmatpush1.bf16.xpose.msra.mxu0 %v3976
        %3980 = vmatprep.subr.bf16.mxu0 0
        %3981 = vmatpush1.bf16.xpose.msra.mxu0 0
        %3982 = vmatprep.subr.bf16.mxu0 0
        %3983 = vmatpush1.bf16.xpose.msra.mxu0 0
        %3984 = vmatprep.subr.bf16.mxu0 0
        %3985 = vmatpush1.bf16.xpose.msra.mxu0 0
        %3986 = vmatprep.subr.bf16.mxu0 0
        %3987 = vmatpush1.bf16.xpose.msra.mxu0 0
        %3988 = vmatprep.subr.bf16.mxu0 0
        %3989 = vmatpush1.bf16.xpose.msra.mxu0 0
        %3990 = vmatprep.subr.bf16.mxu0 0
        %3991 = vmatpush1.bf16.xpose.msra.mxu0 0
        %3992 = vmatprep.subr.bf16.mxu0 0
        %3993 = vmatpush1.bf16.xpose.msra.mxu0 0
        %3994 = vmatprep.subr.bf16.mxu0 0
        %3995 = vmatpush1.bf16.xpose.msra.mxu0 0
        %3996 = vmatprep.subr.bf16.mxu0 0
        %3997 = vmatpush1.bf16.xpose.msra.mxu0 0
        %3998 = vmatprep.subr.bf16.mxu0 0
        %3999 = vmatpush1.bf16.xpose.msra.mxu0 0
        %4000 = vmatprep.subr.bf16.mxu0 0
        %4001 = vmatpush1.bf16.xpose.msra.mxu0 0
        %4002 = vmatprep.subr.bf16.mxu0 0
        %4003 = vmatpush1.bf16.xpose.msra.mxu0 0
        %4004 = vmatprep.subr.bf16.mxu0 0
        %4005 = vmatpush1.bf16.xpose.msra.mxu0 0
        %4006 = vmatprep.subr.bf16.mxu0 0
        %4007 = vmatpush1.bf16.xpose.msra.mxu0 0
        %4008 = vmatprep.subr.bf16.mxu0 0
        %4009 = vmatpush1.bf16.xpose.msra.mxu0 0
        %4010 = vmatprep.mubr.bf16.mxu0 0
        %4011 = vmatmul.mubr.bf16.gmra.mrb[0].mxu0 %v3973
        %v4012 = vpop.f32.mrb[0].mxu0
        %v4013 = vadd.f32 0.0, %v4012
        %v4014 = vpop.f32.mrb[0].mxu0
        %v4015 = vpop.f32.mrb[0].mxu0
        %v4016 = vadd.f32 0.0, %v4015
        %v4017 = vpop.f32.mrb[0].mxu0
        %4018 = vdwg.mxu0
        %4020 = vrot.lane.b32.xlu0 %v3807, 116
        %v4021 = vpop.permute.xlu0 %4020
        %4022 = vrot.lane.b32.xlu0 %v3807, 84
        %v4023 = vpop.permute.xlu0 %4022
        %v4025 = vsel %vm762, %v4021, 0
        %v4028 = vsel %vm762, %v4023, 0
        %4030 = vmatprep.subr.bf16.mxu0 0
        %4031 = vmatpush1.bf16.xpose.msra.mxu0 %v4028
        %4032 = vmatprep.subr.bf16.mxu0 0
        %4033 = vmatpush1.bf16.xpose.msra.mxu0 0
        %4034 = vmatprep.subr.bf16.mxu0 0
        %4035 = vmatpush1.bf16.xpose.msra.mxu0 0
        %4036 = vmatprep.subr.bf16.mxu0 0
        %4037 = vmatpush1.bf16.xpose.msra.mxu0 0
        %4038 = vmatprep.subr.bf16.mxu0 0
        %4039 = vmatpush1.bf16.xpose.msra.mxu0 0
        %4040 = vmatprep.subr.bf16.mxu0 0
        %4041 = vmatpush1.bf16.xpose.msra.mxu0 0
        %4042 = vmatprep.subr.bf16.mxu0 0
        %4043 = vmatpush1.bf16.xpose.msra.mxu0 0
        %4044 = vmatprep.subr.bf16.mxu0 0
        %4045 = vmatpush1.bf16.xpose.msra.mxu0 0
        %4046 = vmatprep.subr.bf16.mxu0 0
        %4047 = vmatpush1.bf16.xpose.msra.mxu0 0
        %4048 = vmatprep.subr.bf16.mxu0 0
        %4049 = vmatpush1.bf16.xpose.msra.mxu0 0
        %4050 = vmatprep.subr.bf16.mxu0 0
        %4051 = vmatpush1.bf16.xpose.msra.mxu0 0
        %4052 = vmatprep.subr.bf16.mxu0 0
        %4053 = vmatpush1.bf16.xpose.msra.mxu0 0
        %4054 = vmatprep.subr.bf16.mxu0 0
        %4055 = vmatpush1.bf16.xpose.msra.mxu0 0
        %4056 = vmatprep.subr.bf16.mxu0 0
        %4057 = vmatpush1.bf16.xpose.msra.mxu0 0
        %4058 = vmatprep.subr.bf16.mxu0 0
        %4059 = vmatpush1.bf16.xpose.msra.mxu0 0
        %4060 = vmatprep.subr.bf16.mxu0 0
        %4061 = vmatpush1.bf16.xpose.msra.mxu0 0
        %4062 = vmatprep.mubr.bf16.mxu0 0
        %4063 = vmatmul.mubr.bf16.gmra.mrb[0].mxu0 %v4025
        %v4064 = vpop.f32.mrb[0].mxu0
        %v4065 = vadd.f32 0.0, %v4064
        %v4066 = vpop.f32.mrb[0].mxu0
        %v4067 = vpop.f32.mrb[0].mxu0
        %v4068 = vadd.f32 0.0, %v4067
        %v4069 = vpop.f32.mrb[0].mxu0
        %4070 = vdwg.mxu0
        %4072 = vrot.lane.b32.xlu0 %v3808, 116
        %v4073 = vpop.permute.xlu0 %4072
        %4074 = vrot.lane.b32.xlu0 %v3808, 84
        %v4075 = vpop.permute.xlu0 %4074
        %v4077 = vsel %vm762, %v4073, 0
        %v4080 = vsel %vm762, %v4075, 0
        %4082 = vmatprep.subr.bf16.mxu0 0
        %4083 = vmatpush1.bf16.xpose.msra.mxu0 %v4080
        %4084 = vmatprep.subr.bf16.mxu0 0
        %4085 = vmatpush1.bf16.xpose.msra.mxu0 0
        %4086 = vmatprep.subr.bf16.mxu0 0
        %4087 = vmatpush1.bf16.xpose.msra.mxu0 0
        %4088 = vmatprep.subr.bf16.mxu0 0
        %4089 = vmatpush1.bf16.xpose.msra.mxu0 0
        %4090 = vmatprep.subr.bf16.mxu0 0
        %4091 = vmatpush1.bf16.xpose.msra.mxu0 0
        %4092 = vmatprep.subr.bf16.mxu0 0
        %4093 = vmatpush1.bf16.xpose.msra.mxu0 0
        %4094 = vmatprep.subr.bf16.mxu0 0
        %4095 = vmatpush1.bf16.xpose.msra.mxu0 0
        %4096 = vmatprep.subr.bf16.mxu0 0
        %4097 = vmatpush1.bf16.xpose.msra.mxu0 0
        %4098 = vmatprep.subr.bf16.mxu0 0
        %4099 = vmatpush1.bf16.xpose.msra.mxu0 0
        %4100 = vmatprep.subr.bf16.mxu0 0
        %4101 = vmatpush1.bf16.xpose.msra.mxu0 0
        %4102 = vmatprep.subr.bf16.mxu0 0
        %4103 = vmatpush1.bf16.xpose.msra.mxu0 0
        %4104 = vmatprep.subr.bf16.mxu0 0
        %4105 = vmatpush1.bf16.xpose.msra.mxu0 0
        %4106 = vmatprep.subr.bf16.mxu0 0
        %4107 = vmatpush1.bf16.xpose.msra.mxu0 0
        %4108 = vmatprep.subr.bf16.mxu0 0
        %4109 = vmatpush1.bf16.xpose.msra.mxu0 0
        %4110 = vmatprep.subr.bf16.mxu0 0
        %4111 = vmatpush1.bf16.xpose.msra.mxu0 0
        %4112 = vmatprep.subr.bf16.mxu0 0
        %4113 = vmatpush1.bf16.xpose.msra.mxu0 0
        %4114 = vmatprep.mubr.bf16.mxu0 0
        %4115 = vmatmul.mubr.bf16.gmra.mrb[0].mxu0 %v4077
        %v4116 = vpop.f32.mrb[0].mxu0
        %v4117 = vadd.f32 0.0, %v4116
        %v4118 = vpop.f32.mrb[0].mxu0
        %v4119 = vpop.f32.mrb[0].mxu0
        %v4120 = vadd.f32 0.0, %v4119
        %v4121 = vpop.f32.mrb[0].mxu0
        %4122 = vdwg.mxu0
        %4124 = vrot.lane.b32.xlu0 %v3809, 116
        %v4125 = vpop.permute.xlu0 %4124
        %4126 = vrot.lane.b32.xlu0 %v3809, 84
        %v4127 = vpop.permute.xlu0 %4126
        %v4129 = vsel %vm762, %v4125, 0
        %v4132 = vsel %vm762, %v4127, 0
        %4134 = vmatprep.subr.bf16.mxu0 0
        %4135 = vmatpush1.bf16.xpose.msra.mxu0 %v4132
        %4136 = vmatprep.subr.bf16.mxu0 0
        %4137 = vmatpush1.bf16.xpose.msra.mxu0 0
        %4138 = vmatprep.subr.bf16.mxu0 0
        %4139 = vmatpush1.bf16.xpose.msra.mxu0 0
        %4140 = vmatprep.subr.bf16.mxu0 0
        %4141 = vmatpush1.bf16.xpose.msra.mxu0 0
        %4142 = vmatprep.subr.bf16.mxu0 0
        %4143 = vmatpush1.bf16.xpose.msra.mxu0 0
        %4144 = vmatprep.subr.bf16.mxu0 0
        %4145 = vmatpush1.bf16.xpose.msra.mxu0 0
        %4146 = vmatprep.subr.bf16.mxu0 0
        %4147 = vmatpush1.bf16.xpose.msra.mxu0 0
        %4148 = vmatprep.subr.bf16.mxu0 0
        %4149 = vmatpush1.bf16.xpose.msra.mxu0 0
        %4150 = vmatprep.subr.bf16.mxu0 0
        %4151 = vmatpush1.bf16.xpose.msra.mxu0 0
        %4152 = vmatprep.subr.bf16.mxu0 0
        %4153 = vmatpush1.bf16.xpose.msra.mxu0 0
        %4154 = vmatprep.subr.bf16.mxu0 0
        %4155 = vmatpush1.bf16.xpose.msra.mxu0 0
        %4156 = vmatprep.subr.bf16.mxu0 0
        %4157 = vmatpush1.bf16.xpose.msra.mxu0 0
        %4158 = vmatprep.subr.bf16.mxu0 0
        %4159 = vmatpush1.bf16.xpose.msra.mxu0 0
        %4160 = vmatprep.subr.bf16.mxu0 0
        %4161 = vmatpush1.bf16.xpose.msra.mxu0 0
        %4162 = vmatprep.subr.bf16.mxu0 0
        %4163 = vmatpush1.bf16.xpose.msra.mxu0 0
        %4164 = vmatprep.subr.bf16.mxu0 0
        %4165 = vmatpush1.bf16.xpose.msra.mxu0 0
        %4166 = vmatprep.mubr.bf16.mxu0 0
        %4167 = vmatmul.mubr.bf16.gmra.mrb[0].mxu0 %v4129
        %v4168 = vpop.f32.mrb[0].mxu0
        %v4169 = vadd.f32 0.0, %v4168
        %v4170 = vpop.f32.mrb[0].mxu0
        %v4171 = vpop.f32.mrb[0].mxu0
        %v4172 = vadd.f32 0.0, %v4171
        %v4173 = vpop.f32.mrb[0].mxu0
        %4174 = vdwg.mxu0
        %4176 = vrot.lane.b32.xlu0 %v3810, 116
        %v4177 = vpop.permute.xlu0 %4176
        %4178 = vrot.lane.b32.xlu0 %v3810, 84
        %v4179 = vpop.permute.xlu0 %4178
        %v4181 = vsel %vm762, %v4177, 0
        %v4184 = vsel %vm762, %v4179, 0
        %4186 = vmatprep.subr.bf16.mxu0 0
        %4187 = vmatpush1.bf16.xpose.msra.mxu0 %v4184
        %4188 = vmatprep.subr.bf16.mxu0 0
        %4189 = vmatpush1.bf16.xpose.msra.mxu0 0
        %4190 = vmatprep.subr.bf16.mxu0 0
        %4191 = vmatpush1.bf16.xpose.msra.mxu0 0
        %4192 = vmatprep.subr.bf16.mxu0 0
        %4193 = vmatpush1.bf16.xpose.msra.mxu0 0
        %4194 = vmatprep.subr.bf16.mxu0 0
        %4195 = vmatpush1.bf16.xpose.msra.mxu0 0
        %4196 = vmatprep.subr.bf16.mxu0 0
        %4197 = vmatpush1.bf16.xpose.msra.mxu0 0
        %4198 = vmatprep.subr.bf16.mxu0 0
        %4199 = vmatpush1.bf16.xpose.msra.mxu0 0
        %4200 = vmatprep.subr.bf16.mxu0 0
        %4201 = vmatpush1.bf16.xpose.msra.mxu0 0
        %4202 = vmatprep.subr.bf16.mxu0 0
        %4203 = vmatpush1.bf16.xpose.msra.mxu0 0
        %4204 = vmatprep.subr.bf16.mxu0 0
        %4205 = vmatpush1.bf16.xpose.msra.mxu0 0
        %4206 = vmatprep.subr.bf16.mxu0 0
        %4207 = vmatpush1.bf16.xpose.msra.mxu0 0
        %4208 = vmatprep.subr.bf16.mxu0 0
        %4209 = vmatpush1.bf16.xpose.msra.mxu0 0
        %4210 = vmatprep.subr.bf16.mxu0 0
        %4211 = vmatpush1.bf16.xpose.msra.mxu0 0
        %4212 = vmatprep.subr.bf16.mxu0 0
        %4213 = vmatpush1.bf16.xpose.msra.mxu0 0
        %4214 = vmatprep.subr.bf16.mxu0 0
        %4215 = vmatpush1.bf16.xpose.msra.mxu0 0
        %4216 = vmatprep.subr.bf16.mxu0 0
        %4217 = vmatpush1.bf16.xpose.msra.mxu0 0
        %4218 = vmatprep.mubr.bf16.mxu0 0
        %4219 = vmatmul.mubr.bf16.gmra.mrb[0].mxu0 %v4181
        %v4220 = vpop.f32.mrb[0].mxu0
        %v4221 = vadd.f32 0.0, %v4220
        %v4222 = vpop.f32.mrb[0].mxu0
        %v4223 = vpop.f32.mrb[0].mxu0
        %v4224 = vadd.f32 0.0, %v4223
        %v4225 = vpop.f32.mrb[0].mxu0
        %4226 = vdwg.mxu0
        %v4227 = vsel %vm1160, %v3857, -inf
        %4228 = vmax.xlane.f32.xlu0 %v4227
        %v4229 = vpop.xlane.xlu0 %4228
        %v4230 = vsel %vm1160, %v3860, -inf
        %4231 = vmax.xlane.f32.xlu0 %v4230
        %v4232 = vpop.xlane.xlu0 %4231
        %v4233 = vsel %vm1160, %v3909, -inf
        %4234 = vmax.xlane.f32.xlu0 %v4233
        %v4235 = vpop.xlane.xlu0 %4234
        %v4236 = vsel %vm1160, %v3912, -inf
        %4237 = vmax.xlane.f32.xlu0 %v4236
        %v4238 = vpop.xlane.xlu0 %4237
        %v4239 = vsel %vm1160, %v3961, -inf
        %4240 = vmax.xlane.f32.xlu0 %v4239
        %v4241 = vpop.xlane.xlu0 %4240
        %v4242 = vsel %vm1160, %v3964, -inf
        %4243 = vmax.xlane.f32.xlu0 %v4242
        %v4244 = vpop.xlane.xlu0 %4243
        %v4245 = vsel %vm1160, %v4013, -inf
        %4246 = vmax.xlane.f32.xlu0 %v4245
        %v4247 = vpop.xlane.xlu0 %4246
        %v4248 = vsel %vm1160, %v4016, -inf
        %4249 = vmax.xlane.f32.xlu0 %v4248
        %v4250 = vpop.xlane.xlu0 %4249
        %v4251 = vsel %vm1160, %v4065, -inf
        %4252 = vmax.xlane.f32.xlu0 %v4251
        %v4253 = vpop.xlane.xlu0 %4252
        %v4254 = vsel %vm1160, %v4068, -inf
        %4255 = vmax.xlane.f32.xlu0 %v4254
        %v4256 = vpop.xlane.xlu0 %4255
        %v4257 = vsel %vm1160, %v4117, -inf
        %4258 = vmax.xlane.f32.xlu0 %v4257
        %v4259 = vpop.xlane.xlu0 %4258
        %v4260 = vsel %vm1160, %v4120, -inf
        %4261 = vmax.xlane.f32.xlu0 %v4260
        %v4262 = vpop.xlane.xlu0 %4261
        %v4263 = vsel %vm1160, %v4169, -inf
        %4264 = vmax.xlane.f32.xlu0 %v4263
        %v4265 = vpop.xlane.xlu0 %4264
        %v4266 = vsel %vm1160, %v4172, -inf
        %4267 = vmax.xlane.f32.xlu0 %v4266
        %v4268 = vpop.xlane.xlu0 %4267
        %v4269 = vsel %vm1160, %v4221, -inf
        %4270 = vmax.xlane.f32.xlu0 %v4269
        %v4271 = vpop.xlane.xlu0 %4270
        %v4272 = vsel %vm1160, %v4224, -inf
        %4273 = vmax.xlane.f32.xlu0 %v4272
        %v4274 = vpop.xlane.xlu0 %4273
        %v4275 = vsub.f32 %v3857, %v4229
        %v4276 = vsub.f32 %v3860, %v4232
        %v4277 = vsub.f32 %v3909, %v4235
        %v4278 = vsub.f32 %v3912, %v4238
        %v4279 = vsub.f32 %v3961, %v4241
        %v4280 = vsub.f32 %v3964, %v4244
        %v4281 = vsub.f32 %v4013, %v4247
        %v4282 = vsub.f32 %v4016, %v4250
        %v4283 = vsub.f32 %v4065, %v4253
        %v4284 = vsub.f32 %v4068, %v4256
        %v4285 = vsub.f32 %v4117, %v4259
        %v4286 = vsub.f32 %v4120, %v4262
        %v4287 = vsub.f32 %v4169, %v4265
        %v4288 = vsub.f32 %v4172, %v4268
        %v4289 = vsub.f32 %v4221, %v4271
        %v4290 = vsub.f32 %v4224, %v4274
        %v4291 = vmul.f32 %v4275, 1.442695
        %v4292 = vpow.pop %v4291
        %v4293 = vmul.f32 %v4276, 1.442695
        %v4294 = vpow.pop %v4293
        %v4295 = vmul.f32 %v4277, 1.442695
        %v4296 = vpow.pop %v4295
        %v4297 = vmul.f32 %v4278, 1.442695
        %v4298 = vpow.pop %v4297
        %v4299 = vmul.f32 %v4279, 1.442695
        %v4300 = vpow.pop %v4299
        %v4301 = vmul.f32 %v4280, 1.442695
        %v4302 = vpow.pop %v4301
        %v4303 = vmul.f32 %v4281, 1.442695
        %v4304 = vpow.pop %v4303
        %v4305 = vmul.f32 %v4282, 1.442695
        %v4306 = vpow.pop %v4305
        %v4307 = vmul.f32 %v4283, 1.442695
        %v4308 = vpow.pop %v4307
        %v4309 = vmul.f32 %v4284, 1.442695
        %v4310 = vpow.pop %v4309
        %v4311 = vmul.f32 %v4285, 1.442695
        %v4312 = vpow.pop %v4311
        %v4313 = vmul.f32 %v4286, 1.442695
        %v4314 = vpow.pop %v4313
        %v4315 = vmul.f32 %v4287, 1.442695
        %v4316 = vpow.pop %v4315
        %v4317 = vmul.f32 %v4288, 1.442695
        %v4318 = vpow.pop %v4317
        %v4319 = vmul.f32 %v4289, 1.442695
        %v4320 = vpow.pop %v4319
        %v4321 = vmul.f32 %v4290, 1.442695
        %v4322 = vpow.pop %v4321
        %v4323 = vsel %vm1160, %v4292, 0.0
        %4324 = vadd.xlane.f32.xlu0 %v4323
        %v4325 = vpop.xlane.xlu0 %4324
        %v4326 = vsel %vm1160, %v4294, 0.0
        %4327 = vadd.xlane.f32.xlu0 %v4326
        %v4328 = vpop.xlane.xlu0 %4327
        %v4329 = vsel %vm1160, %v4296, 0.0
        %4330 = vadd.xlane.f32.xlu0 %v4329
        %v4331 = vpop.xlane.xlu0 %4330
        %v4332 = vsel %vm1160, %v4298, 0.0
        %4333 = vadd.xlane.f32.xlu0 %v4332
        %v4334 = vpop.xlane.xlu0 %4333
        %v4335 = vsel %vm1160, %v4300, 0.0
        %4336 = vadd.xlane.f32.xlu0 %v4335
        %v4337 = vpop.xlane.xlu0 %4336
        %v4338 = vsel %vm1160, %v4302, 0.0
        %4339 = vadd.xlane.f32.xlu0 %v4338
        %v4340 = vpop.xlane.xlu0 %4339
        %v4341 = vsel %vm1160, %v4304, 0.0
        %4342 = vadd.xlane.f32.xlu0 %v4341
        %v4343 = vpop.xlane.xlu0 %4342
        %v4344 = vsel %vm1160, %v4306, 0.0
        %4345 = vadd.xlane.f32.xlu0 %v4344
        %v4346 = vpop.xlane.xlu0 %4345
        %v4347 = vsel %vm1160, %v4308, 0.0
        %4348 = vadd.xlane.f32.xlu0 %v4347
        %v4349 = vpop.xlane.xlu0 %4348
        %v4350 = vsel %vm1160, %v4310, 0.0
        %4351 = vadd.xlane.f32.xlu0 %v4350
        %v4352 = vpop.xlane.xlu0 %4351
        %v4353 = vsel %vm1160, %v4312, 0.0
        %4354 = vadd.xlane.f32.xlu0 %v4353
        %v4355 = vpop.xlane.xlu0 %4354
        %v4356 = vsel %vm1160, %v4314, 0.0
        %4357 = vadd.xlane.f32.xlu0 %v4356
        %v4358 = vpop.xlane.xlu0 %4357
        %v4359 = vsel %vm1160, %v4316, 0.0
        %4360 = vadd.xlane.f32.xlu0 %v4359
        %v4361 = vpop.xlane.xlu0 %4360
        %v4362 = vsel %vm1160, %v4318, 0.0
        %4363 = vadd.xlane.f32.xlu0 %v4362
        %v4364 = vpop.xlane.xlu0 %4363
        %v4365 = vsel %vm1160, %v4320, 0.0
        %4366 = vadd.xlane.f32.xlu0 %v4365
        %v4367 = vpop.xlane.xlu0 %4366
        %v4368 = vsel %vm1160, %v4322, 0.0
        %4369 = vadd.xlane.f32.xlu0 %v4368
        %v4370 = vpop.xlane.xlu0 %4369
        %v4371 = vrcp.pop %v4325
        %v4372 = vrcp.pop %v4328
        %v4373 = vrcp.pop %v4331
        %v4374 = vrcp.pop %v4334
        %v4375 = vrcp.pop %v4337
        %v4376 = vrcp.pop %v4340
        %v4377 = vrcp.pop %v4343
        %v4378 = vrcp.pop %v4346
        %v4379 = vrcp.pop %v4349
        %v4380 = vrcp.pop %v4352
        %v4381 = vrcp.pop %v4355
        %v4382 = vrcp.pop %v4358
        %v4383 = vrcp.pop %v4361
        %v4384 = vrcp.pop %v4364
        %v4385 = vrcp.pop %v4367
        %v4386 = vrcp.pop %v4370
        %v4387 = vmul.f32 %v4292, %v4371
        %v4388 = vmul.f32 %v4294, %v4372
        %v4389 = vmul.f32 %v4296, %v4373
        %v4390 = vmul.f32 %v4298, %v4374
        %v4391 = vmul.f32 %v4300, %v4375
        %v4392 = vmul.f32 %v4302, %v4376
        %v4393 = vmul.f32 %v4304, %v4377
        %v4394 = vmul.f32 %v4306, %v4378
        %v4395 = vmul.f32 %v4308, %v4379
        %v4396 = vmul.f32 %v4310, %v4380
        %v4397 = vmul.f32 %v4312, %v4381
        %v4398 = vmul.f32 %v4314, %v4382
        %v4399 = vmul.f32 %v4316, %v4383
        %v4400 = vmul.f32 %v4318, %v4384
        %v4401 = vmul.f32 %v4320, %v4385
        %v4402 = vmul.f32 %v4322, %v4386
        %v4403 = vpack.c.bf16 %v4388, %v4387
        %v4404 = vpack.c.bf16 %v4390, %v4389
        %v4405 = vpack.c.bf16 %v4392, %v4391
        %v4406 = vpack.c.bf16 %v4394, %v4393
        %v4407 = vpack.c.bf16 %v4396, %v4395
        %v4408 = vpack.c.bf16 %v4398, %v4397
        %v4409 = vpack.c.bf16 %v4400, %v4399
        %v4410 = vpack.c.bf16 %v4402, %v4401
        %4411 = vrot.lane.b32.xlu0 %v3803, 52
        %v4412 = vpop.permute.xlu0 %4411
        %v4415 = vsel %vm1160, %v4403, 0
        %4417 = vmatprep.subr.bf16.mxu0 0
        %4418 = vmatpush1.bf16.msra.mxu0 %v4412
        %4419 = vmatprep.subr.bf16.mxu0 0
        %4420 = vmatpush1.bf16.msra.mxu0 0
        %4421 = vmatprep.subr.bf16.mxu0 0
        %4422 = vmatpush1.bf16.msra.mxu0 0
        %4423 = vmatprep.subr.bf16.mxu0 0
        %4424 = vmatpush1.bf16.msra.mxu0 0
        %4425 = vmatprep.subr.bf16.mxu0 0
        %4426 = vmatpush1.bf16.msra.mxu0 0
        %4427 = vmatprep.subr.bf16.mxu0 0
        %4428 = vmatpush1.bf16.msra.mxu0 0
        %4429 = vmatprep.subr.bf16.mxu0 0
        %4430 = vmatpush1.bf16.msra.mxu0 0
        %4431 = vmatprep.subr.bf16.mxu0 0
        %4432 = vmatpush1.bf16.msra.mxu0 0
        %4433 = vmatprep.subr.bf16.mxu0 0
        %4434 = vmatpush1.bf16.msra.mxu0 0
        %4435 = vmatprep.subr.bf16.mxu0 0
        %4436 = vmatpush1.bf16.msra.mxu0 0
        %4437 = vmatprep.subr.bf16.mxu0 0
        %4438 = vmatpush1.bf16.msra.mxu0 0
        %4439 = vmatprep.subr.bf16.mxu0 0
        %4440 = vmatpush1.bf16.msra.mxu0 0
        %4441 = vmatprep.subr.bf16.mxu0 0
        %4442 = vmatpush1.bf16.msra.mxu0 0
        %4443 = vmatprep.subr.bf16.mxu0 0
        %4444 = vmatpush1.bf16.msra.mxu0 0
        %4445 = vmatprep.subr.bf16.mxu0 0
        %4446 = vmatpush1.bf16.msra.mxu0 0
        %4447 = vmatprep.subr.bf16.mxu0 0
        %4448 = vmatpush1.bf16.msra.mxu0 0
        %4449 = vmatprep.mubr.bf16.mxu0 0
        %4450 = vmatmul.mubr.bf16.gmra.mrb[0].mxu0 %v4415
        %v4451 = vpop.f32.mrb[0].mxu0
        %v4452 = vadd.f32 0.0, %v4451
        %v4453 = vpop.f32.mrb[0].mxu0
        %v4454 = vpop.f32.mrb[0].mxu0
        %v4455 = vadd.f32 0.0, %v4454
        %v4456 = vpop.f32.mrb[0].mxu0
        %4457 = vdwg.mxu0
        %4458 = vrot.lane.b32.xlu0 %v3804, 52
        %v4459 = vpop.permute.xlu0 %4458
        %v4462 = vsel %vm1160, %v4404, 0
        %4464 = vmatprep.subr.bf16.mxu0 0
        %4465 = vmatpush1.bf16.msra.mxu0 %v4459
        %4466 = vmatprep.subr.bf16.mxu0 0
        %4467 = vmatpush1.bf16.msra.mxu0 0
        %4468 = vmatprep.subr.bf16.mxu0 0
        %4469 = vmatpush1.bf16.msra.mxu0 0
        %4470 = vmatprep.subr.bf16.mxu0 0
        %4471 = vmatpush1.bf16.msra.mxu0 0
        %4472 = vmatprep.subr.bf16.mxu0 0
        %4473 = vmatpush1.bf16.msra.mxu0 0
        %4474 = vmatprep.subr.bf16.mxu0 0
        %4475 = vmatpush1.bf16.msra.mxu0 0
        %4476 = vmatprep.subr.bf16.mxu0 0
        %4477 = vmatpush1.bf16.msra.mxu0 0
        %4478 = vmatprep.subr.bf16.mxu0 0
        %4479 = vmatpush1.bf16.msra.mxu0 0
        %4480 = vmatprep.subr.bf16.mxu0 0
        %4481 = vmatpush1.bf16.msra.mxu0 0
        %4482 = vmatprep.subr.bf16.mxu0 0
        %4483 = vmatpush1.bf16.msra.mxu0 0
        %4484 = vmatprep.subr.bf16.mxu0 0
        %4485 = vmatpush1.bf16.msra.mxu0 0
        %4486 = vmatprep.subr.bf16.mxu0 0
        %4487 = vmatpush1.bf16.msra.mxu0 0
        %4488 = vmatprep.subr.bf16.mxu0 0
        %4489 = vmatpush1.bf16.msra.mxu0 0
        %4490 = vmatprep.subr.bf16.mxu0 0
        %4491 = vmatpush1.bf16.msra.mxu0 0
        %4492 = vmatprep.subr.bf16.mxu0 0
        %4493 = vmatpush1.bf16.msra.mxu0 0
        %4494 = vmatprep.subr.bf16.mxu0 0
        %4495 = vmatpush1.bf16.msra.mxu0 0
        %4496 = vmatprep.mubr.bf16.mxu0 0
        %4497 = vmatmul.mubr.bf16.gmra.mrb[0].mxu0 %v4462
        %v4498 = vpop.f32.mrb[0].mxu0
        %v4499 = vadd.f32 0.0, %v4498
        %v4500 = vpop.f32.mrb[0].mxu0
        %v4501 = vpop.f32.mrb[0].mxu0
        %v4502 = vadd.f32 0.0, %v4501
        %v4503 = vpop.f32.mrb[0].mxu0
        %4504 = vdwg.mxu0
        %4505 = vrot.lane.b32.xlu0 %v3805, 52
        %v4506 = vpop.permute.xlu0 %4505
        %v4509 = vsel %vm1160, %v4405, 0
        %4511 = vmatprep.subr.bf16.mxu0 0
        %4512 = vmatpush1.bf16.msra.mxu0 %v4506
        %4513 = vmatprep.subr.bf16.mxu0 0
        %4514 = vmatpush1.bf16.msra.mxu0 0
        %4515 = vmatprep.subr.bf16.mxu0 0
        %4516 = vmatpush1.bf16.msra.mxu0 0
        %4517 = vmatprep.subr.bf16.mxu0 0
        %4518 = vmatpush1.bf16.msra.mxu0 0
        %4519 = vmatprep.subr.bf16.mxu0 0
        %4520 = vmatpush1.bf16.msra.mxu0 0
        %4521 = vmatprep.subr.bf16.mxu0 0
        %4522 = vmatpush1.bf16.msra.mxu0 0
        %4523 = vmatprep.subr.bf16.mxu0 0
        %4524 = vmatpush1.bf16.msra.mxu0 0
        %4525 = vmatprep.subr.bf16.mxu0 0
        %4526 = vmatpush1.bf16.msra.mxu0 0
        %4527 = vmatprep.subr.bf16.mxu0 0
        %4528 = vmatpush1.bf16.msra.mxu0 0
        %4529 = vmatprep.subr.bf16.mxu0 0
        %4530 = vmatpush1.bf16.msra.mxu0 0
        %4531 = vmatprep.subr.bf16.mxu0 0
        %4532 = vmatpush1.bf16.msra.mxu0 0
        %4533 = vmatprep.subr.bf16.mxu0 0
        %4534 = vmatpush1.bf16.msra.mxu0 0
        %4535 = vmatprep.subr.bf16.mxu0 0
        %4536 = vmatpush1.bf16.msra.mxu0 0
        %4537 = vmatprep.subr.bf16.mxu0 0
        %4538 = vmatpush1.bf16.msra.mxu0 0
        %4539 = vmatprep.subr.bf16.mxu0 0
        %4540 = vmatpush1.bf16.msra.mxu0 0
        %4541 = vmatprep.subr.bf16.mxu0 0
        %4542 = vmatpush1.bf16.msra.mxu0 0
        %4543 = vmatprep.mubr.bf16.mxu0 0
        %4544 = vmatmul.mubr.bf16.gmra.mrb[0].mxu0 %v4509
        %v4545 = vpop.f32.mrb[0].mxu0
        %v4546 = vadd.f32 0.0, %v4545
        %v4547 = vpop.f32.mrb[0].mxu0
        %v4548 = vpop.f32.mrb[0].mxu0
        %v4549 = vadd.f32 0.0, %v4548
        %v4550 = vpop.f32.mrb[0].mxu0
        %4551 = vdwg.mxu0
        %4552 = vrot.lane.b32.xlu0 %v3806, 52
        %v4553 = vpop.permute.xlu0 %4552
        %v4556 = vsel %vm1160, %v4406, 0
        %4558 = vmatprep.subr.bf16.mxu0 0
        %4559 = vmatpush1.bf16.msra.mxu0 %v4553
        %4560 = vmatprep.subr.bf16.mxu0 0
        %4561 = vmatpush1.bf16.msra.mxu0 0
        %4562 = vmatprep.subr.bf16.mxu0 0
        %4563 = vmatpush1.bf16.msra.mxu0 0
        %4564 = vmatprep.subr.bf16.mxu0 0
        %4565 = vmatpush1.bf16.msra.mxu0 0
        %4566 = vmatprep.subr.bf16.mxu0 0
        %4567 = vmatpush1.bf16.msra.mxu0 0
        %4568 = vmatprep.subr.bf16.mxu0 0
        %4569 = vmatpush1.bf16.msra.mxu0 0
        %4570 = vmatprep.subr.bf16.mxu0 0
        %4571 = vmatpush1.bf16.msra.mxu0 0
        %4572 = vmatprep.subr.bf16.mxu0 0
        %4573 = vmatpush1.bf16.msra.mxu0 0
        %4574 = vmatprep.subr.bf16.mxu0 0
        %4575 = vmatpush1.bf16.msra.mxu0 0
        %4576 = vmatprep.subr.bf16.mxu0 0
        %4577 = vmatpush1.bf16.msra.mxu0 0
        %4578 = vmatprep.subr.bf16.mxu0 0
        %4579 = vmatpush1.bf16.msra.mxu0 0
        %4580 = vmatprep.subr.bf16.mxu0 0
        %4581 = vmatpush1.bf16.msra.mxu0 0
        %4582 = vmatprep.subr.bf16.mxu0 0
        %4583 = vmatpush1.bf16.msra.mxu0 0
        %4584 = vmatprep.subr.bf16.mxu0 0
        %4585 = vmatpush1.bf16.msra.mxu0 0
        %4586 = vmatprep.subr.bf16.mxu0 0
        %4587 = vmatpush1.bf16.msra.mxu0 0
        %4588 = vmatprep.subr.bf16.mxu0 0
        %4589 = vmatpush1.bf16.msra.mxu0 0
        %4590 = vmatprep.mubr.bf16.mxu0 0
        %4591 = vmatmul.mubr.bf16.gmra.mrb[0].mxu0 %v4556
        %v4592 = vpop.f32.mrb[0].mxu0
        %v4593 = vadd.f32 0.0, %v4592
        %v4594 = vpop.f32.mrb[0].mxu0
        %v4595 = vpop.f32.mrb[0].mxu0
        %v4596 = vadd.f32 0.0, %v4595
        %v4597 = vpop.f32.mrb[0].mxu0
        %4598 = vdwg.mxu0
        %4599 = vrot.lane.b32.xlu0 %v3807, 52
        %v4600 = vpop.permute.xlu0 %4599
        %v4603 = vsel %vm1160, %v4407, 0
        %4605 = vmatprep.subr.bf16.mxu0 0
        %4606 = vmatpush1.bf16.msra.mxu0 %v4600
        %4607 = vmatprep.subr.bf16.mxu0 0
        %4608 = vmatpush1.bf16.msra.mxu0 0
        %4609 = vmatprep.subr.bf16.mxu0 0
        %4610 = vmatpush1.bf16.msra.mxu0 0
        %4611 = vmatprep.subr.bf16.mxu0 0
        %4612 = vmatpush1.bf16.msra.mxu0 0
        %4613 = vmatprep.subr.bf16.mxu0 0
        %4614 = vmatpush1.bf16.msra.mxu0 0
        %4615 = vmatprep.subr.bf16.mxu0 0
        %4616 = vmatpush1.bf16.msra.mxu0 0
        %4617 = vmatprep.subr.bf16.mxu0 0
        %4618 = vmatpush1.bf16.msra.mxu0 0
        %4619 = vmatprep.subr.bf16.mxu0 0
        %4620 = vmatpush1.bf16.msra.mxu0 0
        %4621 = vmatprep.subr.bf16.mxu0 0
        %4622 = vmatpush1.bf16.msra.mxu0 0
        %4623 = vmatprep.subr.bf16.mxu0 0
        %4624 = vmatpush1.bf16.msra.mxu0 0
        %4625 = vmatprep.subr.bf16.mxu0 0
        %4626 = vmatpush1.bf16.msra.mxu0 0
        %4627 = vmatprep.subr.bf16.mxu0 0
        %4628 = vmatpush1.bf16.msra.mxu0 0
        %4629 = vmatprep.subr.bf16.mxu0 0
        %4630 = vmatpush1.bf16.msra.mxu0 0
        %4631 = vmatprep.subr.bf16.mxu0 0
        %4632 = vmatpush1.bf16.msra.mxu0 0
        %4633 = vmatprep.subr.bf16.mxu0 0
        %4634 = vmatpush1.bf16.msra.mxu0 0
        %4635 = vmatprep.subr.bf16.mxu0 0
        %4636 = vmatpush1.bf16.msra.mxu0 0
        %4637 = vmatprep.mubr.bf16.mxu0 0
        %4638 = vmatmul.mubr.bf16.gmra.mrb[0].mxu0 %v4603
        %v4639 = vpop.f32.mrb[0].mxu0
        %v4640 = vadd.f32 0.0, %v4639
        %v4641 = vpop.f32.mrb[0].mxu0
        %v4642 = vpop.f32.mrb[0].mxu0
        %v4643 = vadd.f32 0.0, %v4642
        %v4644 = vpop.f32.mrb[0].mxu0
        %4645 = vdwg.mxu0
        %4646 = vrot.lane.b32.xlu0 %v3808, 52
        %v4647 = vpop.permute.xlu0 %4646
        %v4650 = vsel %vm1160, %v4408, 0
        %4652 = vmatprep.subr.bf16.mxu0 0
        %4653 = vmatpush1.bf16.msra.mxu0 %v4647
        %4654 = vmatprep.subr.bf16.mxu0 0
        %4655 = vmatpush1.bf16.msra.mxu0 0
        %4656 = vmatprep.subr.bf16.mxu0 0
        %4657 = vmatpush1.bf16.msra.mxu0 0
        %4658 = vmatprep.subr.bf16.mxu0 0
        %4659 = vmatpush1.bf16.msra.mxu0 0
        %4660 = vmatprep.subr.bf16.mxu0 0
        %4661 = vmatpush1.bf16.msra.mxu0 0
        %4662 = vmatprep.subr.bf16.mxu0 0
        %4663 = vmatpush1.bf16.msra.mxu0 0
        %4664 = vmatprep.subr.bf16.mxu0 0
        %4665 = vmatpush1.bf16.msra.mxu0 0
        %4666 = vmatprep.subr.bf16.mxu0 0
        %4667 = vmatpush1.bf16.msra.mxu0 0
        %4668 = vmatprep.subr.bf16.mxu0 0
        %4669 = vmatpush1.bf16.msra.mxu0 0
        %4670 = vmatprep.subr.bf16.mxu0 0
        %4671 = vmatpush1.bf16.msra.mxu0 0
        %4672 = vmatprep.subr.bf16.mxu0 0
        %4673 = vmatpush1.bf16.msra.mxu0 0
        %4674 = vmatprep.subr.bf16.mxu0 0
        %4675 = vmatpush1.bf16.msra.mxu0 0
        %4676 = vmatprep.subr.bf16.mxu0 0
        %4677 = vmatpush1.bf16.msra.mxu0 0
        %4678 = vmatprep.subr.bf16.mxu0 0
        %4679 = vmatpush1.bf16.msra.mxu0 0
        %4680 = vmatprep.subr.bf16.mxu0 0
        %4681 = vmatpush1.bf16.msra.mxu0 0
        %4682 = vmatprep.subr.bf16.mxu0 0
        %4683 = vmatpush1.bf16.msra.mxu0 0
        %4684 = vmatprep.mubr.bf16.mxu0 0
        %4685 = vmatmul.mubr.bf16.gmra.mrb[0].mxu0 %v4650
        %v4686 = vpop.f32.mrb[0].mxu0
        %v4687 = vadd.f32 0.0, %v4686
        %v4688 = vpop.f32.mrb[0].mxu0
        %v4689 = vpop.f32.mrb[0].mxu0
        %v4690 = vadd.f32 0.0, %v4689
        %v4691 = vpop.f32.mrb[0].mxu0
        %4692 = vdwg.mxu0
        %4693 = vrot.lane.b32.xlu0 %v3809, 52
        %v4694 = vpop.permute.xlu0 %4693
        %v4697 = vsel %vm1160, %v4409, 0
        %4699 = vmatprep.subr.bf16.mxu0 0
        %4700 = vmatpush1.bf16.msra.mxu0 %v4694
        %4701 = vmatprep.subr.bf16.mxu0 0
        %4702 = vmatpush1.bf16.msra.mxu0 0
        %4703 = vmatprep.subr.bf16.mxu0 0
        %4704 = vmatpush1.bf16.msra.mxu0 0
        %4705 = vmatprep.subr.bf16.mxu0 0
        %4706 = vmatpush1.bf16.msra.mxu0 0
        %4707 = vmatprep.subr.bf16.mxu0 0
        %4708 = vmatpush1.bf16.msra.mxu0 0
        %4709 = vmatprep.subr.bf16.mxu0 0
        %4710 = vmatpush1.bf16.msra.mxu0 0
        %4711 = vmatprep.subr.bf16.mxu0 0
        %4712 = vmatpush1.bf16.msra.mxu0 0
        %4713 = vmatprep.subr.bf16.mxu0 0
        %4714 = vmatpush1.bf16.msra.mxu0 0
        %4715 = vmatprep.subr.bf16.mxu0 0
        %4716 = vmatpush1.bf16.msra.mxu0 0
        %4717 = vmatprep.subr.bf16.mxu0 0
        %4718 = vmatpush1.bf16.msra.mxu0 0
        %4719 = vmatprep.subr.bf16.mxu0 0
        %4720 = vmatpush1.bf16.msra.mxu0 0
        %4721 = vmatprep.subr.bf16.mxu0 0
        %4722 = vmatpush1.bf16.msra.mxu0 0
        %4723 = vmatprep.subr.bf16.mxu0 0
        %4724 = vmatpush1.bf16.msra.mxu0 0
        %4725 = vmatprep.subr.bf16.mxu0 0
        %4726 = vmatpush1.bf16.msra.mxu0 0
        %4727 = vmatprep.subr.bf16.mxu0 0
        %4728 = vmatpush1.bf16.msra.mxu0 0
        %4729 = vmatprep.subr.bf16.mxu0 0
        %4730 = vmatpush1.bf16.msra.mxu0 0
        %4731 = vmatprep.mubr.bf16.mxu0 0
        %4732 = vmatmul.mubr.bf16.gmra.mrb[0].mxu0 %v4697
        %v4733 = vpop.f32.mrb[0].mxu0
        %v4734 = vadd.f32 0.0, %v4733
        %v4735 = vpop.f32.mrb[0].mxu0
        %v4736 = vpop.f32.mrb[0].mxu0
        %v4737 = vadd.f32 0.0, %v4736
        %v4738 = vpop.f32.mrb[0].mxu0
        %4739 = vdwg.mxu0
        %4740 = vrot.lane.b32.xlu0 %v3810, 52
        %v4741 = vpop.permute.xlu0 %4740
        %v4744 = vsel %vm1160, %v4410, 0
        %4746 = vmatprep.subr.bf16.mxu0 0
        %4747 = vmatpush1.bf16.msra.mxu0 %v4741
        %4748 = vmatprep.subr.bf16.mxu0 0
        %4749 = vmatpush1.bf16.msra.mxu0 0
        %4750 = vmatprep.subr.bf16.mxu0 0
        %4751 = vmatpush1.bf16.msra.mxu0 0
        %4752 = vmatprep.subr.bf16.mxu0 0
        %4753 = vmatpush1.bf16.msra.mxu0 0
        %4754 = vmatprep.subr.bf16.mxu0 0
        %4755 = vmatpush1.bf16.msra.mxu0 0
        %4756 = vmatprep.subr.bf16.mxu0 0
        %4757 = vmatpush1.bf16.msra.mxu0 0
        %4758 = vmatprep.subr.bf16.mxu0 0
        %4759 = vmatpush1.bf16.msra.mxu0 0
        %4760 = vmatprep.subr.bf16.mxu0 0
        %4761 = vmatpush1.bf16.msra.mxu0 0
        %4762 = vmatprep.subr.bf16.mxu0 0
        %4763 = vmatpush1.bf16.msra.mxu0 0
        %4764 = vmatprep.subr.bf16.mxu0 0
        %4765 = vmatpush1.bf16.msra.mxu0 0
        %4766 = vmatprep.subr.bf16.mxu0 0
        %4767 = vmatpush1.bf16.msra.mxu0 0
        %4768 = vmatprep.subr.bf16.mxu0 0
        %4769 = vmatpush1.bf16.msra.mxu0 0
        %4770 = vmatprep.subr.bf16.mxu0 0
        %4771 = vmatpush1.bf16.msra.mxu0 0
        %4772 = vmatprep.subr.bf16.mxu0 0
        %4773 = vmatpush1.bf16.msra.mxu0 0
        %4774 = vmatprep.subr.bf16.mxu0 0
        %4775 = vmatpush1.bf16.msra.mxu0 0
        %4776 = vmatprep.subr.bf16.mxu0 0
        %4777 = vmatpush1.bf16.msra.mxu0 0
        %4778 = vmatprep.mubr.bf16.mxu0 0
        %4779 = vmatmul.mubr.bf16.gmra.mrb[0].mxu0 %v4744
        %v4780 = vpop.f32.mrb[0].mxu0
        %v4781 = vadd.f32 0.0, %v4780
        %v4782 = vpop.f32.mrb[0].mxu0
        %v4783 = vpop.f32.mrb[0].mxu0
        %v4784 = vadd.f32 0.0, %v4783
        %v4785 = vpop.f32.mrb[0].mxu0
        %4786 = vdwg.mxu0
        %v4787 = vpack.c.bf16 %v4455, %v4452
        %v4788 = vpack.c.bf16 %v4502, %v4499
        %v4789 = vpack.c.bf16 %v4549, %v4546
        %v4790 = vpack.c.bf16 %v4596, %v4593
        %v4791 = vpack.c.bf16 %v4643, %v4640
        %v4792 = vpack.c.bf16 %v4690, %v4687
        %v4793 = vpack.c.bf16 %v4737, %v4734
        %v4794 = vpack.c.bf16 %v4784, %v4781
        %4803 = vrot.lane.b32.xlu0 %v4787, 12
        %v4804 = vpop.permute.xlu0 %4803
        %4805 = vrot.lane.b32.xlu0 %v4788, 12
        %v4806 = vpop.permute.xlu0 %4805
        %4807 = vrot.lane.b32.xlu0 %v4789, 12
        %v4808 = vpop.permute.xlu0 %4807
        %4809 = vrot.lane.b32.xlu0 %v4790, 12
        %v4810 = vpop.permute.xlu0 %4809
        %4811 = vrot.lane.b32.xlu0 %v4791, 12
        %v4812 = vpop.permute.xlu0 %4811
        %4813 = vrot.lane.b32.xlu0 %v4792, 12
        %v4814 = vpop.permute.xlu0 %4813
        %4815 = vrot.lane.b32.xlu0 %v4793, 12
        %v4816 = vpop.permute.xlu0 %4815
        %4817 = vrot.lane.b32.xlu0 %v4794, 12
        %v4818 = vpop.permute.xlu0 %4817
        %vm4827 = vcmask 130144
        %4828 = vst.msk [vmem:[#allocation3] sm:$0xff] %vm4827, %v4804
        %4829 = vst.msk [vmem:[#allocation3 + $0x8] sm:$0xff] %vm4827, %v4806
        %4830 = vst.msk [vmem:[#allocation3 + $0x10] sm:$0xff] %vm4827, %v4808
        %4831 = vst.msk [vmem:[#allocation3 + $0x18] sm:$0xff] %vm4827, %v4810
        %4832 = vst.msk [vmem:[#allocation3 + $0x20] sm:$0xff] %vm4827, %v4812
        %4833 = vst.msk [vmem:[#allocation3 + $0x28] sm:$0xff] %vm4827, %v4814
        %4834 = vst.msk [vmem:[#allocation3 + $0x30] sm:$0xff] %vm4827, %v4816
        %4835 = vst.msk [vmem:[#allocation3 + $0x38] sm:$0xff] %vm4827, %v4818
        %v4836 = vld [vmem:[#allocation2] sm:$0xff]
        %v4837 = vld [vmem:[#allocation2 + $0x8] sm:$0xff]
        %v4838 = vld [vmem:[#allocation2 + $0x10] sm:$0xff]
        %v4839 = vld [vmem:[#allocation2 + $0x18] sm:$0xff]
        %v4840 = vld [vmem:[#allocation2 + $0x20] sm:$0xff]
        %v4841 = vld [vmem:[#allocation2 + $0x28] sm:$0xff]
        %v4842 = vld [vmem:[#allocation2 + $0x30] sm:$0xff]
        %v4843 = vld [vmem:[#allocation2 + $0x38] sm:$0xff]
        %4845 = vrot.lane.b32.xlu0 %v4836, 112
        %v4846 = vpop.permute.xlu0 %4845
        %4847 = vrot.lane.b32.xlu0 %v4836, 80
        %v4848 = vpop.permute.xlu0 %4847
        %v4850 = vsel %vm762, %v4846, 0
        %v4853 = vsel %vm762, %v4848, 0
        %4855 = vmatprep.subr.bf16.mxu0 0
        %4856 = vmatpush1.bf16.xpose.msra.mxu0 %v4853
        %4857 = vmatprep.subr.bf16.mxu0 0
        %4858 = vmatpush1.bf16.xpose.msra.mxu0 0
        %4859 = vmatprep.subr.bf16.mxu0 0
        %4860 = vmatpush1.bf16.xpose.msra.mxu0 0
        %4861 = vmatprep.subr.bf16.mxu0 0
        %4862 = vmatpush1.bf16.xpose.msra.mxu0 0
        %4863 = vmatprep.subr.bf16.mxu0 0
        %4864 = vmatpush1.bf16.xpose.msra.mxu0 0
        %4865 = vmatprep.subr.bf16.mxu0 0
        %4866 = vmatpush1.bf16.xpose.msra.mxu0 0
        %4867 = vmatprep.subr.bf16.mxu0 0
        %4868 = vmatpush1.bf16.xpose.msra.mxu0 0
        %4869 = vmatprep.subr.bf16.mxu0 0
        %4870 = vmatpush1.bf16.xpose.msra.mxu0 0
        %4871 = vmatprep.subr.bf16.mxu0 0
        %4872 = vmatpush1.bf16.xpose.msra.mxu0 0
        %4873 = vmatprep.subr.bf16.mxu0 0
        %4874 = vmatpush1.bf16.xpose.msra.mxu0 0
        %4875 = vmatprep.subr.bf16.mxu0 0
        %4876 = vmatpush1.bf16.xpose.msra.mxu0 0
        %4877 = vmatprep.subr.bf16.mxu0 0
        %4878 = vmatpush1.bf16.xpose.msra.mxu0 0
        %4879 = vmatprep.subr.bf16.mxu0 0
        %4880 = vmatpush1.bf16.xpose.msra.mxu0 0
        %4881 = vmatprep.subr.bf16.mxu0 0
        %4882 = vmatpush1.bf16.xpose.msra.mxu0 0
        %4883 = vmatprep.subr.bf16.mxu0 0
        %4884 = vmatpush1.bf16.xpose.msra.mxu0 0
        %4885 = vmatprep.subr.bf16.mxu0 0
        %4886 = vmatpush1.bf16.xpose.msra.mxu0 0
        %4887 = vmatprep.mubr.bf16.mxu0 0
        %4888 = vmatmul.mubr.bf16.gmra.mrb[0].mxu0 %v4850
        %v4889 = vpop.f32.mrb[0].mxu0
        %v4890 = vadd.f32 0.0, %v4889
        %v4891 = vpop.f32.mrb[0].mxu0
        %v4892 = vpop.f32.mrb[0].mxu0
        %v4893 = vadd.f32 0.0, %v4892
        %v4894 = vpop.f32.mrb[0].mxu0
        %4895 = vdwg.mxu0
        %4897 = vrot.lane.b32.xlu0 %v4837, 112
        %v4898 = vpop.permute.xlu0 %4897
        %4899 = vrot.lane.b32.xlu0 %v4837, 80
        %v4900 = vpop.permute.xlu0 %4899
        %v4902 = vsel %vm762, %v4898, 0
        %v4905 = vsel %vm762, %v4900, 0
        %4907 = vmatprep.subr.bf16.mxu0 0
        %4908 = vmatpush1.bf16.xpose.msra.mxu0 %v4905
        %4909 = vmatprep.subr.bf16.mxu0 0
        %4910 = vmatpush1.bf16.xpose.msra.mxu0 0
        %4911 = vmatprep.subr.bf16.mxu0 0
        %4912 = vmatpush1.bf16.xpose.msra.mxu0 0
        %4913 = vmatprep.subr.bf16.mxu0 0
        %4914 = vmatpush1.bf16.xpose.msra.mxu0 0
        %4915 = vmatprep.subr.bf16.mxu0 0
        %4916 = vmatpush1.bf16.xpose.msra.mxu0 0
        %4917 = vmatprep.subr.bf16.mxu0 0
        %4918 = vmatpush1.bf16.xpose.msra.mxu0 0
        %4919 = vmatprep.subr.bf16.mxu0 0
        %4920 = vmatpush1.bf16.xpose.msra.mxu0 0
        %4921 = vmatprep.subr.bf16.mxu0 0
        %4922 = vmatpush1.bf16.xpose.msra.mxu0 0
        %4923 = vmatprep.subr.bf16.mxu0 0
        %4924 = vmatpush1.bf16.xpose.msra.mxu0 0
        %4925 = vmatprep.subr.bf16.mxu0 0
        %4926 = vmatpush1.bf16.xpose.msra.mxu0 0
        %4927 = vmatprep.subr.bf16.mxu0 0
        %4928 = vmatpush1.bf16.xpose.msra.mxu0 0
        %4929 = vmatprep.subr.bf16.mxu0 0
        %4930 = vmatpush1.bf16.xpose.msra.mxu0 0
        %4931 = vmatprep.subr.bf16.mxu0 0
        %4932 = vmatpush1.bf16.xpose.msra.mxu0 0
        %4933 = vmatprep.subr.bf16.mxu0 0
        %4934 = vmatpush1.bf16.xpose.msra.mxu0 0
        %4935 = vmatprep.subr.bf16.mxu0 0
        %4936 = vmatpush1.bf16.xpose.msra.mxu0 0
        %4937 = vmatprep.subr.bf16.mxu0 0
        %4938 = vmatpush1.bf16.xpose.msra.mxu0 0
        %4939 = vmatprep.mubr.bf16.mxu0 0
        %4940 = vmatmul.mubr.bf16.gmra.mrb[0].mxu0 %v4902
        %v4941 = vpop.f32.mrb[0].mxu0
        %v4942 = vadd.f32 0.0, %v4941
        %v4943 = vpop.f32.mrb[0].mxu0
        %v4944 = vpop.f32.mrb[0].mxu0
        %v4945 = vadd.f32 0.0, %v4944
        %v4946 = vpop.f32.mrb[0].mxu0
        %4947 = vdwg.mxu0
        %4949 = vrot.lane.b32.xlu0 %v4838, 112
        %v4950 = vpop.permute.xlu0 %4949
        %4951 = vrot.lane.b32.xlu0 %v4838, 80
        %v4952 = vpop.permute.xlu0 %4951
        %v4954 = vsel %vm762, %v4950, 0
        %v4957 = vsel %vm762, %v4952, 0
        %4959 = vmatprep.subr.bf16.mxu0 0
        %4960 = vmatpush1.bf16.xpose.msra.mxu0 %v4957
        %4961 = vmatprep.subr.bf16.mxu0 0
        %4962 = vmatpush1.bf16.xpose.msra.mxu0 0
        %4963 = vmatprep.subr.bf16.mxu0 0
        %4964 = vmatpush1.bf16.xpose.msra.mxu0 0
        %4965 = vmatprep.subr.bf16.mxu0 0
        %4966 = vmatpush1.bf16.xpose.msra.mxu0 0
        %4967 = vmatprep.subr.bf16.mxu0 0
        %4968 = vmatpush1.bf16.xpose.msra.mxu0 0
        %4969 = vmatprep.subr.bf16.mxu0 0
        %4970 = vmatpush1.bf16.xpose.msra.mxu0 0
        %4971 = vmatprep.subr.bf16.mxu0 0
        %4972 = vmatpush1.bf16.xpose.msra.mxu0 0
        %4973 = vmatprep.subr.bf16.mxu0 0
        %4974 = vmatpush1.bf16.xpose.msra.mxu0 0
        %4975 = vmatprep.subr.bf16.mxu0 0
        %4976 = vmatpush1.bf16.xpose.msra.mxu0 0
        %4977 = vmatprep.subr.bf16.mxu0 0
        %4978 = vmatpush1.bf16.xpose.msra.mxu0 0
        %4979 = vmatprep.subr.bf16.mxu0 0
        %4980 = vmatpush1.bf16.xpose.msra.mxu0 0
        %4981 = vmatprep.subr.bf16.mxu0 0
        %4982 = vmatpush1.bf16.xpose.msra.mxu0 0
        %4983 = vmatprep.subr.bf16.mxu0 0
        %4984 = vmatpush1.bf16.xpose.msra.mxu0 0
        %4985 = vmatprep.subr.bf16.mxu0 0
        %4986 = vmatpush1.bf16.xpose.msra.mxu0 0
        %4987 = vmatprep.subr.bf16.mxu0 0
        %4988 = vmatpush1.bf16.xpose.msra.mxu0 0
        %4989 = vmatprep.subr.bf16.mxu0 0
        %4990 = vmatpush1.bf16.xpose.msra.mxu0 0
        %4991 = vmatprep.mubr.bf16.mxu0 0
        %4992 = vmatmul.mubr.bf16.gmra.mrb[0].mxu0 %v4954
        %v4993 = vpop.f32.mrb[0].mxu0
        %v4994 = vadd.f32 0.0, %v4993
        %v4995 = vpop.f32.mrb[0].mxu0
        %v4996 = vpop.f32.mrb[0].mxu0
        %v4997 = vadd.f32 0.0, %v4996
        %v4998 = vpop.f32.mrb[0].mxu0
        %4999 = vdwg.mxu0
        %5001 = vrot.lane.b32.xlu0 %v4839, 112
        %v5002 = vpop.permute.xlu0 %5001
        %5003 = vrot.lane.b32.xlu0 %v4839, 80
        %v5004 = vpop.permute.xlu0 %5003
        %v5006 = vsel %vm762, %v5002, 0
        %v5009 = vsel %vm762, %v5004, 0
        %5011 = vmatprep.subr.bf16.mxu0 0
        %5012 = vmatpush1.bf16.xpose.msra.mxu0 %v5009
        %5013 = vmatprep.subr.bf16.mxu0 0
        %5014 = vmatpush1.bf16.xpose.msra.mxu0 0
        %5015 = vmatprep.subr.bf16.mxu0 0
        %5016 = vmatpush1.bf16.xpose.msra.mxu0 0
        %5017 = vmatprep.subr.bf16.mxu0 0
        %5018 = vmatpush1.bf16.xpose.msra.mxu0 0
        %5019 = vmatprep.subr.bf16.mxu0 0
        %5020 = vmatpush1.bf16.xpose.msra.mxu0 0
        %5021 = vmatprep.subr.bf16.mxu0 0
        %5022 = vmatpush1.bf16.xpose.msra.mxu0 0
        %5023 = vmatprep.subr.bf16.mxu0 0
        %5024 = vmatpush1.bf16.xpose.msra.mxu0 0
        %5025 = vmatprep.subr.bf16.mxu0 0
        %5026 = vmatpush1.bf16.xpose.msra.mxu0 0
        %5027 = vmatprep.subr.bf16.mxu0 0
        %5028 = vmatpush1.bf16.xpose.msra.mxu0 0
        %5029 = vmatprep.subr.bf16.mxu0 0
        %5030 = vmatpush1.bf16.xpose.msra.mxu0 0
        %5031 = vmatprep.subr.bf16.mxu0 0
        %5032 = vmatpush1.bf16.xpose.msra.mxu0 0
        %5033 = vmatprep.subr.bf16.mxu0 0
        %5034 = vmatpush1.bf16.xpose.msra.mxu0 0
        %5035 = vmatprep.subr.bf16.mxu0 0
        %5036 = vmatpush1.bf16.xpose.msra.mxu0 0
        %5037 = vmatprep.subr.bf16.mxu0 0
        %5038 = vmatpush1.bf16.xpose.msra.mxu0 0
        %5039 = vmatprep.subr.bf16.mxu0 0
        %5040 = vmatpush1.bf16.xpose.msra.mxu0 0
        %5041 = vmatprep.subr.bf16.mxu0 0
        %5042 = vmatpush1.bf16.xpose.msra.mxu0 0
        %5043 = vmatprep.mubr.bf16.mxu0 0
        %5044 = vmatmul.mubr.bf16.gmra.mrb[0].mxu0 %v5006
        %v5045 = vpop.f32.mrb[0].mxu0
        %v5046 = vadd.f32 0.0, %v5045
        %v5047 = vpop.f32.mrb[0].mxu0
        %v5048 = vpop.f32.mrb[0].mxu0
        %v5049 = vadd.f32 0.0, %v5048
        %v5050 = vpop.f32.mrb[0].mxu0
        %5051 = vdwg.mxu0
        %5053 = vrot.lane.b32.xlu0 %v4840, 112
        %v5054 = vpop.permute.xlu0 %5053
        %5055 = vrot.lane.b32.xlu0 %v4840, 80
        %v5056 = vpop.permute.xlu0 %5055
        %v5058 = vsel %vm762, %v5054, 0
        %v5061 = vsel %vm762, %v5056, 0
        %5063 = vmatprep.subr.bf16.mxu0 0
        %5064 = vmatpush1.bf16.xpose.msra.mxu0 %v5061
        %5065 = vmatprep.subr.bf16.mxu0 0
        %5066 = vmatpush1.bf16.xpose.msra.mxu0 0
        %5067 = vmatprep.subr.bf16.mxu0 0
        %5068 = vmatpush1.bf16.xpose.msra.mxu0 0
        %5069 = vmatprep.subr.bf16.mxu0 0
        %5070 = vmatpush1.bf16.xpose.msra.mxu0 0
        %5071 = vmatprep.subr.bf16.mxu0 0
        %5072 = vmatpush1.bf16.xpose.msra.mxu0 0
        %5073 = vmatprep.subr.bf16.mxu0 0
        %5074 = vmatpush1.bf16.xpose.msra.mxu0 0
        %5075 = vmatprep.subr.bf16.mxu0 0
        %5076 = vmatpush1.bf16.xpose.msra.mxu0 0
        %5077 = vmatprep.subr.bf16.mxu0 0
        %5078 = vmatpush1.bf16.xpose.msra.mxu0 0
        %5079 = vmatprep.subr.bf16.mxu0 0
        %5080 = vmatpush1.bf16.xpose.msra.mxu0 0
        %5081 = vmatprep.subr.bf16.mxu0 0
        %5082 = vmatpush1.bf16.xpose.msra.mxu0 0
        %5083 = vmatprep.subr.bf16.mxu0 0
        %5084 = vmatpush1.bf16.xpose.msra.mxu0 0
        %5085 = vmatprep.subr.bf16.mxu0 0
        %5086 = vmatpush1.bf16.xpose.msra.mxu0 0
        %5087 = vmatprep.subr.bf16.mxu0 0
        %5088 = vmatpush1.bf16.xpose.msra.mxu0 0
        %5089 = vmatprep.subr.bf16.mxu0 0
        %5090 = vmatpush1.bf16.xpose.msra.mxu0 0
        %5091 = vmatprep.subr.bf16.mxu0 0
        %5092 = vmatpush1.bf16.xpose.msra.mxu0 0
        %5093 = vmatprep.subr.bf16.mxu0 0
        %5094 = vmatpush1.bf16.xpose.msra.mxu0 0
        %5095 = vmatprep.mubr.bf16.mxu0 0
        %5096 = vmatmul.mubr.bf16.gmra.mrb[0].mxu0 %v5058
        %v5097 = vpop.f32.mrb[0].mxu0
        %v5098 = vadd.f32 0.0, %v5097
        %v5099 = vpop.f32.mrb[0].mxu0
        %v5100 = vpop.f32.mrb[0].mxu0
        %v5101 = vadd.f32 0.0, %v5100
        %v5102 = vpop.f32.mrb[0].mxu0
        %5103 = vdwg.mxu0
        %5105 = vrot.lane.b32.xlu0 %v4841, 112
        %v5106 = vpop.permute.xlu0 %5105
        %5107 = vrot.lane.b32.xlu0 %v4841, 80
        %v5108 = vpop.permute.xlu0 %5107
        %v5110 = vsel %vm762, %v5106, 0
        %v5113 = vsel %vm762, %v5108, 0
        %5115 = vmatprep.subr.bf16.mxu0 0
        %5116 = vmatpush1.bf16.xpose.msra.mxu0 %v5113
        %5117 = vmatprep.subr.bf16.mxu0 0
        %5118 = vmatpush1.bf16.xpose.msra.mxu0 0
        %5119 = vmatprep.subr.bf16.mxu0 0
        %5120 = vmatpush1.bf16.xpose.msra.mxu0 0
        %5121 = vmatprep.subr.bf16.mxu0 0
        %5122 = vmatpush1.bf16.xpose.msra.mxu0 0
        %5123 = vmatprep.subr.bf16.mxu0 0
        %5124 = vmatpush1.bf16.xpose.msra.mxu0 0
        %5125 = vmatprep.subr.bf16.mxu0 0
        %5126 = vmatpush1.bf16.xpose.msra.mxu0 0
        %5127 = vmatprep.subr.bf16.mxu0 0
        %5128 = vmatpush1.bf16.xpose.msra.mxu0 0
        %5129 = vmatprep.subr.bf16.mxu0 0
        %5130 = vmatpush1.bf16.xpose.msra.mxu0 0
        %5131 = vmatprep.subr.bf16.mxu0 0
        %5132 = vmatpush1.bf16.xpose.msra.mxu0 0
        %5133 = vmatprep.subr.bf16.mxu0 0
        %5134 = vmatpush1.bf16.xpose.msra.mxu0 0
        %5135 = vmatprep.subr.bf16.mxu0 0
        %5136 = vmatpush1.bf16.xpose.msra.mxu0 0
        %5137 = vmatprep.subr.bf16.mxu0 0
        %5138 = vmatpush1.bf16.xpose.msra.mxu0 0
        %5139 = vmatprep.subr.bf16.mxu0 0
        %5140 = vmatpush1.bf16.xpose.msra.mxu0 0
        %5141 = vmatprep.subr.bf16.mxu0 0
        %5142 = vmatpush1.bf16.xpose.msra.mxu0 0
        %5143 = vmatprep.subr.bf16.mxu0 0
        %5144 = vmatpush1.bf16.xpose.msra.mxu0 0
        %5145 = vmatprep.subr.bf16.mxu0 0
        %5146 = vmatpush1.bf16.xpose.msra.mxu0 0
        %5147 = vmatprep.mubr.bf16.mxu0 0
        %5148 = vmatmul.mubr.bf16.gmra.mrb[0].mxu0 %v5110
        %v5149 = vpop.f32.mrb[0].mxu0
        %v5150 = vadd.f32 0.0, %v5149
        %v5151 = vpop.f32.mrb[0].mxu0
        %v5152 = vpop.f32.mrb[0].mxu0
        %v5153 = vadd.f32 0.0, %v5152
        %v5154 = vpop.f32.mrb[0].mxu0
        %5155 = vdwg.mxu0
        %5157 = vrot.lane.b32.xlu0 %v4842, 112
        %v5158 = vpop.permute.xlu0 %5157
        %5159 = vrot.lane.b32.xlu0 %v4842, 80
        %v5160 = vpop.permute.xlu0 %5159
        %v5162 = vsel %vm762, %v5158, 0
        %v5165 = vsel %vm762, %v5160, 0
        %5167 = vmatprep.subr.bf16.mxu0 0
        %5168 = vmatpush1.bf16.xpose.msra.mxu0 %v5165
        %5169 = vmatprep.subr.bf16.mxu0 0
        %5170 = vmatpush1.bf16.xpose.msra.mxu0 0
        %5171 = vmatprep.subr.bf16.mxu0 0
        %5172 = vmatpush1.bf16.xpose.msra.mxu0 0
        %5173 = vmatprep.subr.bf16.mxu0 0
        %5174 = vmatpush1.bf16.xpose.msra.mxu0 0
        %5175 = vmatprep.subr.bf16.mxu0 0
        %5176 = vmatpush1.bf16.xpose.msra.mxu0 0
        %5177 = vmatprep.subr.bf16.mxu0 0
        %5178 = vmatpush1.bf16.xpose.msra.mxu0 0
        %5179 = vmatprep.subr.bf16.mxu0 0
        %5180 = vmatpush1.bf16.xpose.msra.mxu0 0
        %5181 = vmatprep.subr.bf16.mxu0 0
        %5182 = vmatpush1.bf16.xpose.msra.mxu0 0
        %5183 = vmatprep.subr.bf16.mxu0 0
        %5184 = vmatpush1.bf16.xpose.msra.mxu0 0
        %5185 = vmatprep.subr.bf16.mxu0 0
        %5186 = vmatpush1.bf16.xpose.msra.mxu0 0
        %5187 = vmatprep.subr.bf16.mxu0 0
        %5188 = vmatpush1.bf16.xpose.msra.mxu0 0
        %5189 = vmatprep.subr.bf16.mxu0 0
        %5190 = vmatpush1.bf16.xpose.msra.mxu0 0
        %5191 = vmatprep.subr.bf16.mxu0 0
        %5192 = vmatpush1.bf16.xpose.msra.mxu0 0
        %5193 = vmatprep.subr.bf16.mxu0 0
        %5194 = vmatpush1.bf16.xpose.msra.mxu0 0
        %5195 = vmatprep.subr.bf16.mxu0 0
        %5196 = vmatpush1.bf16.xpose.msra.mxu0 0
        %5197 = vmatprep.subr.bf16.mxu0 0
        %5198 = vmatpush1.bf16.xpose.msra.mxu0 0
        %5199 = vmatprep.mubr.bf16.mxu0 0
        %5200 = vmatmul.mubr.bf16.gmra.mrb[0].mxu0 %v5162
        %v5201 = vpop.f32.mrb[0].mxu0
        %v5202 = vadd.f32 0.0, %v5201
        %v5203 = vpop.f32.mrb[0].mxu0
        %v5204 = vpop.f32.mrb[0].mxu0
        %v5205 = vadd.f32 0.0, %v5204
        %v5206 = vpop.f32.mrb[0].mxu0
        %5207 = vdwg.mxu0
        %5209 = vrot.lane.b32.xlu0 %v4843, 112
        %v5210 = vpop.permute.xlu0 %5209
        %5211 = vrot.lane.b32.xlu0 %v4843, 80
        %v5212 = vpop.permute.xlu0 %5211
        %v5214 = vsel %vm762, %v5210, 0
        %v5217 = vsel %vm762, %v5212, 0
        %5219 = vmatprep.subr.bf16.mxu0 0
        %5220 = vmatpush1.bf16.xpose.msra.mxu0 %v5217
        %5221 = vmatprep.subr.bf16.mxu0 0
        %5222 = vmatpush1.bf16.xpose.msra.mxu0 0
        %5223 = vmatprep.subr.bf16.mxu0 0
        %5224 = vmatpush1.bf16.xpose.msra.mxu0 0
        %5225 = vmatprep.subr.bf16.mxu0 0
        %5226 = vmatpush1.bf16.xpose.msra.mxu0 0
        %5227 = vmatprep.subr.bf16.mxu0 0
        %5228 = vmatpush1.bf16.xpose.msra.mxu0 0
        %5229 = vmatprep.subr.bf16.mxu0 0
        %5230 = vmatpush1.bf16.xpose.msra.mxu0 0
        %5231 = vmatprep.subr.bf16.mxu0 0
        %5232 = vmatpush1.bf16.xpose.msra.mxu0 0
        %5233 = vmatprep.subr.bf16.mxu0 0
        %5234 = vmatpush1.bf16.xpose.msra.mxu0 0
        %5235 = vmatprep.subr.bf16.mxu0 0
        %5236 = vmatpush1.bf16.xpose.msra.mxu0 0
        %5237 = vmatprep.subr.bf16.mxu0 0
        %5238 = vmatpush1.bf16.xpose.msra.mxu0 0
        %5239 = vmatprep.subr.bf16.mxu0 0
        %5240 = vmatpush1.bf16.xpose.msra.mxu0 0
        %5241 = vmatprep.subr.bf16.mxu0 0
        %5242 = vmatpush1.bf16.xpose.msra.mxu0 0
        %5243 = vmatprep.subr.bf16.mxu0 0
        %5244 = vmatpush1.bf16.xpose.msra.mxu0 0
        %5245 = vmatprep.subr.bf16.mxu0 0
        %5246 = vmatpush1.bf16.xpose.msra.mxu0 0
        %5247 = vmatprep.subr.bf16.mxu0 0
        %5248 = vmatpush1.bf16.xpose.msra.mxu0 0
        %5249 = vmatprep.subr.bf16.mxu0 0
        %5250 = vmatpush1.bf16.xpose.msra.mxu0 0
        %5251 = vmatprep.mubr.bf16.mxu0 0
        %5252 = vmatmul.mubr.bf16.gmra.mrb[0].mxu0 %v5214
        %v5253 = vpop.f32.mrb[0].mxu0
        %v5254 = vadd.f32 0.0, %v5253
        %v5255 = vpop.f32.mrb[0].mxu0
        %v5256 = vpop.f32.mrb[0].mxu0
        %v5257 = vadd.f32 0.0, %v5256
        %v5258 = vpop.f32.mrb[0].mxu0
        %5259 = vdwg.mxu0
        %v5260 = vsel %vm1160, %v4890, -inf
        %5261 = vmax.xlane.f32.xlu0 %v5260
        %v5262 = vpop.xlane.xlu0 %5261
        %v5263 = vsel %vm1160, %v4893, -inf
        %5264 = vmax.xlane.f32.xlu0 %v5263
        %v5265 = vpop.xlane.xlu0 %5264
        %v5266 = vsel %vm1160, %v4942, -inf
        %5267 = vmax.xlane.f32.xlu0 %v5266
        %v5268 = vpop.xlane.xlu0 %5267
        %v5269 = vsel %vm1160, %v4945, -inf
        %5270 = vmax.xlane.f32.xlu0 %v5269
        %v5271 = vpop.xlane.xlu0 %5270
        %v5272 = vsel %vm1160, %v4994, -inf
        %5273 = vmax.xlane.f32.xlu0 %v5272
        %v5274 = vpop.xlane.xlu0 %5273
        %v5275 = vsel %vm1160, %v4997, -inf
        %5276 = vmax.xlane.f32.xlu0 %v5275
        %v5277 = vpop.xlane.xlu0 %5276
        %v5278 = vsel %vm1160, %v5046, -inf
        %5279 = vmax.xlane.f32.xlu0 %v5278
        %v5280 = vpop.xlane.xlu0 %5279
        %v5281 = vsel %vm1160, %v5049, -inf
        %5282 = vmax.xlane.f32.xlu0 %v5281
        %v5283 = vpop.xlane.xlu0 %5282
        %v5284 = vsel %vm1160, %v5098, -inf
        %5285 = vmax.xlane.f32.xlu0 %v5284
        %v5286 = vpop.xlane.xlu0 %5285
        %v5287 = vsel %vm1160, %v5101, -inf
        %5288 = vmax.xlane.f32.xlu0 %v5287
        %v5289 = vpop.xlane.xlu0 %5288
        %v5290 = vsel %vm1160, %v5150, -inf
        %5291 = vmax.xlane.f32.xlu0 %v5290
        %v5292 = vpop.xlane.xlu0 %5291
        %v5293 = vsel %vm1160, %v5153, -inf
        %5294 = vmax.xlane.f32.xlu0 %v5293
        %v5295 = vpop.xlane.xlu0 %5294
        %v5296 = vsel %vm1160, %v5202, -inf
        %5297 = vmax.xlane.f32.xlu0 %v5296
        %v5298 = vpop.xlane.xlu0 %5297
        %v5299 = vsel %vm1160, %v5205, -inf
        %5300 = vmax.xlane.f32.xlu0 %v5299
        %v5301 = vpop.xlane.xlu0 %5300
        %v5302 = vsel %vm1160, %v5254, -inf
        %5303 = vmax.xlane.f32.xlu0 %v5302
        %v5304 = vpop.xlane.xlu0 %5303
        %v5305 = vsel %vm1160, %v5257, -inf
        %5306 = vmax.xlane.f32.xlu0 %v5305
        %v5307 = vpop.xlane.xlu0 %5306
        %v5308 = vsub.f32 %v4890, %v5262
        %v5309 = vsub.f32 %v4893, %v5265
        %v5310 = vsub.f32 %v4942, %v5268
        %v5311 = vsub.f32 %v4945, %v5271
        %v5312 = vsub.f32 %v4994, %v5274
        %v5313 = vsub.f32 %v4997, %v5277
        %v5314 = vsub.f32 %v5046, %v5280
        %v5315 = vsub.f32 %v5049, %v5283
        %v5316 = vsub.f32 %v5098, %v5286
        %v5317 = vsub.f32 %v5101, %v5289
        %v5318 = vsub.f32 %v5150, %v5292
        %v5319 = vsub.f32 %v5153, %v5295
        %v5320 = vsub.f32 %v5202, %v5298
        %v5321 = vsub.f32 %v5205, %v5301
        %v5322 = vsub.f32 %v5254, %v5304
        %v5323 = vsub.f32 %v5257, %v5307
        %v5324 = vmul.f32 %v5308, 1.442695
        %v5325 = vpow.pop %v5324
        %v5326 = vmul.f32 %v5309, 1.442695
        %v5327 = vpow.pop %v5326
        %v5328 = vmul.f32 %v5310, 1.442695
        %v5329 = vpow.pop %v5328
        %v5330 = vmul.f32 %v5311, 1.442695
        %v5331 = vpow.pop %v5330
        %v5332 = vmul.f32 %v5312, 1.442695
        %v5333 = vpow.pop %v5332
        %v5334 = vmul.f32 %v5313, 1.442695
        %v5335 = vpow.pop %v5334
        %v5336 = vmul.f32 %v5314, 1.442695
        %v5337 = vpow.pop %v5336
        %v5338 = vmul.f32 %v5315, 1.442695
        %v5339 = vpow.pop %v5338
        %v5340 = vmul.f32 %v5316, 1.442695
        %v5341 = vpow.pop %v5340
        %v5342 = vmul.f32 %v5317, 1.442695
        %v5343 = vpow.pop %v5342
        %v5344 = vmul.f32 %v5318, 1.442695
        %v5345 = vpow.pop %v5344
        %v5346 = vmul.f32 %v5319, 1.442695
        %v5347 = vpow.pop %v5346
        %v5348 = vmul.f32 %v5320, 1.442695
        %v5349 = vpow.pop %v5348
        %v5350 = vmul.f32 %v5321, 1.442695
        %v5351 = vpow.pop %v5350
        %v5352 = vmul.f32 %v5322, 1.442695
        %v5353 = vpow.pop %v5352
        %v5354 = vmul.f32 %v5323, 1.442695
        %v5355 = vpow.pop %v5354
        %v5356 = vsel %vm1160, %v5325, 0.0
        %5357 = vadd.xlane.f32.xlu0 %v5356
        %v5358 = vpop.xlane.xlu0 %5357
        %v5359 = vsel %vm1160, %v5327, 0.0
        %5360 = vadd.xlane.f32.xlu0 %v5359
        %v5361 = vpop.xlane.xlu0 %5360
        %v5362 = vsel %vm1160, %v5329, 0.0
        %5363 = vadd.xlane.f32.xlu0 %v5362
        %v5364 = vpop.xlane.xlu0 %5363
        %v5365 = vsel %vm1160, %v5331, 0.0
        %5366 = vadd.xlane.f32.xlu0 %v5365
        %v5367 = vpop.xlane.xlu0 %5366
        %v5368 = vsel %vm1160, %v5333, 0.0
        %5369 = vadd.xlane.f32.xlu0 %v5368
        %v5370 = vpop.xlane.xlu0 %5369
        %v5371 = vsel %vm1160, %v5335, 0.0
        %5372 = vadd.xlane.f32.xlu0 %v5371
        %v5373 = vpop.xlane.xlu0 %5372
        %v5374 = vsel %vm1160, %v5337, 0.0
        %5375 = vadd.xlane.f32.xlu0 %v5374
        %v5376 = vpop.xlane.xlu0 %5375
        %v5377 = vsel %vm1160, %v5339, 0.0
        %5378 = vadd.xlane.f32.xlu0 %v5377
        %v5379 = vpop.xlane.xlu0 %5378
        %v5380 = vsel %vm1160, %v5341, 0.0
        %5381 = vadd.xlane.f32.xlu0 %v5380
        %v5382 = vpop.xlane.xlu0 %5381
        %v5383 = vsel %vm1160, %v5343, 0.0
        %5384 = vadd.xlane.f32.xlu0 %v5383
        %v5385 = vpop.xlane.xlu0 %5384
        %v5386 = vsel %vm1160, %v5345, 0.0
        %5387 = vadd.xlane.f32.xlu0 %v5386
        %v5388 = vpop.xlane.xlu0 %5387
        %v5389 = vsel %vm1160, %v5347, 0.0
        %5390 = vadd.xlane.f32.xlu0 %v5389
        %v5391 = vpop.xlane.xlu0 %5390
        %v5392 = vsel %vm1160, %v5349, 0.0
        %5393 = vadd.xlane.f32.xlu0 %v5392
        %v5394 = vpop.xlane.xlu0 %5393
        %v5395 = vsel %vm1160, %v5351, 0.0
        %5396 = vadd.xlane.f32.xlu0 %v5395
        %v5397 = vpop.xlane.xlu0 %5396
        %v5398 = vsel %vm1160, %v5353, 0.0
        %5399 = vadd.xlane.f32.xlu0 %v5398
        %v5400 = vpop.xlane.xlu0 %5399
        %v5401 = vsel %vm1160, %v5355, 0.0
        %5402 = vadd.xlane.f32.xlu0 %v5401
        %v5403 = vpop.xlane.xlu0 %5402
        %v5404 = vrcp.pop %v5358
        %v5405 = vrcp.pop %v5361
        %v5406 = vrcp.pop %v5364
        %v5407 = vrcp.pop %v5367
        %v5408 = vrcp.pop %v5370
        %v5409 = vrcp.pop %v5373
        %v5410 = vrcp.pop %v5376
        %v5411 = vrcp.pop %v5379
        %v5412 = vrcp.pop %v5382
        %v5413 = vrcp.pop %v5385
        %v5414 = vrcp.pop %v5388
        %v5415 = vrcp.pop %v5391
        %v5416 = vrcp.pop %v5394
        %v5417 = vrcp.pop %v5397
        %v5418 = vrcp.pop %v5400
        %v5419 = vrcp.pop %v5403
        %v5420 = vmul.f32 %v5325, %v5404
        %v5421 = vmul.f32 %v5327, %v5405
        %v5422 = vmul.f32 %v5329, %v5406
        %v5423 = vmul.f32 %v5331, %v5407
        %v5424 = vmul.f32 %v5333, %v5408
        %v5425 = vmul.f32 %v5335, %v5409
        %v5426 = vmul.f32 %v5337, %v5410
        %v5427 = vmul.f32 %v5339, %v5411
        %v5428 = vmul.f32 %v5341, %v5412
        %v5429 = vmul.f32 %v5343, %v5413
        %v5430 = vmul.f32 %v5345, %v5414
        %v5431 = vmul.f32 %v5347, %v5415
        %v5432 = vmul.f32 %v5349, %v5416
        %v5433 = vmul.f32 %v5351, %v5417
        %v5434 = vmul.f32 %v5353, %v5418
        %v5435 = vmul.f32 %v5355, %v5419
        %v5436 = vpack.c.bf16 %v5421, %v5420
        %v5437 = vpack.c.bf16 %v5423, %v5422
        %v5438 = vpack.c.bf16 %v5425, %v5424
        %v5439 = vpack.c.bf16 %v5427, %v5426
        %v5440 = vpack.c.bf16 %v5429, %v5428
        %v5441 = vpack.c.bf16 %v5431, %v5430
        %v5442 = vpack.c.bf16 %v5433, %v5432
        %v5443 = vpack.c.bf16 %v5435, %v5434
        %5444 = vrot.lane.b32.xlu0 %v4836, 48
        %v5445 = vpop.permute.xlu0 %5444
        %v5448 = vsel %vm1160, %v5436, 0
        %5450 = vmatprep.subr.bf16.mxu0 0
        %5451 = vmatpush1.bf16.msra.mxu0 %v5445
        %5452 = vmatprep.subr.bf16.mxu0 0
        %5453 = vmatpush1.bf16.msra.mxu0 0
        %5454 = vmatprep.subr.bf16.mxu0 0
        %5455 = vmatpush1.bf16.msra.mxu0 0
        %5456 = vmatprep.subr.bf16.mxu0 0
        %5457 = vmatpush1.bf16.msra.mxu0 0
        %5458 = vmatprep.subr.bf16.mxu0 0
        %5459 = vmatpush1.bf16.msra.mxu0 0
        %5460 = vmatprep.subr.bf16.mxu0 0
        %5461 = vmatpush1.bf16.msra.mxu0 0
        %5462 = vmatprep.subr.bf16.mxu0 0
        %5463 = vmatpush1.bf16.msra.mxu0 0
        %5464 = vmatprep.subr.bf16.mxu0 0
        %5465 = vmatpush1.bf16.msra.mxu0 0
        %5466 = vmatprep.subr.bf16.mxu0 0
        %5467 = vmatpush1.bf16.msra.mxu0 0
        %5468 = vmatprep.subr.bf16.mxu0 0
        %5469 = vmatpush1.bf16.msra.mxu0 0
        %5470 = vmatprep.subr.bf16.mxu0 0
        %5471 = vmatpush1.bf16.msra.mxu0 0
        %5472 = vmatprep.subr.bf16.mxu0 0
        %5473 = vmatpush1.bf16.msra.mxu0 0
        %5474 = vmatprep.subr.bf16.mxu0 0
        %5475 = vmatpush1.bf16.msra.mxu0 0
        %5476 = vmatprep.subr.bf16.mxu0 0
        %5477 = vmatpush1.bf16.msra.mxu0 0
        %5478 = vmatprep.subr.bf16.mxu0 0
        %5479 = vmatpush1.bf16.msra.mxu0 0
        %5480 = vmatprep.subr.bf16.mxu0 0
        %5481 = vmatpush1.bf16.msra.mxu0 0
        %5482 = vmatprep.mubr.bf16.mxu0 0
        %5483 = vmatmul.mubr.bf16.gmra.mrb[0].mxu0 %v5448
        %v5484 = vpop.f32.mrb[0].mxu0
        %v5485 = vadd.f32 0.0, %v5484
        %v5486 = vpop.f32.mrb[0].mxu0
        %v5487 = vpop.f32.mrb[0].mxu0
        %v5488 = vadd.f32 0.0, %v5487
        %v5489 = vpop.f32.mrb[0].mxu0
        %5490 = vdwg.mxu0
        %5491 = vrot.lane.b32.xlu0 %v4837, 48
        %v5492 = vpop.permute.xlu0 %5491
        %v5495 = vsel %vm1160, %v5437, 0
        %5497 = vmatprep.subr.bf16.mxu0 0
        %5498 = vmatpush1.bf16.msra.mxu0 %v5492
        %5499 = vmatprep.subr.bf16.mxu0 0
        %5500 = vmatpush1.bf16.msra.mxu0 0
        %5501 = vmatprep.subr.bf16.mxu0 0
        %5502 = vmatpush1.bf16.msra.mxu0 0
        %5503 = vmatprep.subr.bf16.mxu0 0
        %5504 = vmatpush1.bf16.msra.mxu0 0
        %5505 = vmatprep.subr.bf16.mxu0 0
        %5506 = vmatpush1.bf16.msra.mxu0 0
        %5507 = vmatprep.subr.bf16.mxu0 0
        %5508 = vmatpush1.bf16.msra.mxu0 0
        %5509 = vmatprep.subr.bf16.mxu0 0
        %5510 = vmatpush1.bf16.msra.mxu0 0
        %5511 = vmatprep.subr.bf16.mxu0 0
        %5512 = vmatpush1.bf16.msra.mxu0 0
        %5513 = vmatprep.subr.bf16.mxu0 0
        %5514 = vmatpush1.bf16.msra.mxu0 0
        %5515 = vmatprep.subr.bf16.mxu0 0
        %5516 = vmatpush1.bf16.msra.mxu0 0
        %5517 = vmatprep.subr.bf16.mxu0 0
        %5518 = vmatpush1.bf16.msra.mxu0 0
        %5519 = vmatprep.subr.bf16.mxu0 0
        %5520 = vmatpush1.bf16.msra.mxu0 0
        %5521 = vmatprep.subr.bf16.mxu0 0
        %5522 = vmatpush1.bf16.msra.mxu0 0
        %5523 = vmatprep.subr.bf16.mxu0 0
        %5524 = vmatpush1.bf16.msra.mxu0 0
        %5525 = vmatprep.subr.bf16.mxu0 0
        %5526 = vmatpush1.bf16.msra.mxu0 0
        %5527 = vmatprep.subr.bf16.mxu0 0
        %5528 = vmatpush1.bf16.msra.mxu0 0
        %5529 = vmatprep.mubr.bf16.mxu0 0
        %5530 = vmatmul.mubr.bf16.gmra.mrb[0].mxu0 %v5495
        %v5531 = vpop.f32.mrb[0].mxu0
        %v5532 = vadd.f32 0.0, %v5531
        %v5533 = vpop.f32.mrb[0].mxu0
        %v5534 = vpop.f32.mrb[0].mxu0
        %v5535 = vadd.f32 0.0, %v5534
        %v5536 = vpop.f32.mrb[0].mxu0
        %5537 = vdwg.mxu0
        %5538 = vrot.lane.b32.xlu0 %v4838, 48
        %v5539 = vpop.permute.xlu0 %5538
        %v5542 = vsel %vm1160, %v5438, 0
        %5544 = vmatprep.subr.bf16.mxu0 0
        %5545 = vmatpush1.bf16.msra.mxu0 %v5539
        %5546 = vmatprep.subr.bf16.mxu0 0
        %5547 = vmatpush1.bf16.msra.mxu0 0
        %5548 = vmatprep.subr.bf16.mxu0 0
        %5549 = vmatpush1.bf16.msra.mxu0 0
        %5550 = vmatprep.subr.bf16.mxu0 0
        %5551 = vmatpush1.bf16.msra.mxu0 0
        %5552 = vmatprep.subr.bf16.mxu0 0
        %5553 = vmatpush1.bf16.msra.mxu0 0
        %5554 = vmatprep.subr.bf16.mxu0 0
        %5555 = vmatpush1.bf16.msra.mxu0 0
        %5556 = vmatprep.subr.bf16.mxu0 0
        %5557 = vmatpush1.bf16.msra.mxu0 0
        %5558 = vmatprep.subr.bf16.mxu0 0
        %5559 = vmatpush1.bf16.msra.mxu0 0
        %5560 = vmatprep.subr.bf16.mxu0 0
        %5561 = vmatpush1.bf16.msra.mxu0 0
        %5562 = vmatprep.subr.bf16.mxu0 0
        %5563 = vmatpush1.bf16.msra.mxu0 0
        %5564 = vmatprep.subr.bf16.mxu0 0
        %5565 = vmatpush1.bf16.msra.mxu0 0
        %5566 = vmatprep.subr.bf16.mxu0 0
        %5567 = vmatpush1.bf16.msra.mxu0 0
        %5568 = vmatprep.subr.bf16.mxu0 0
        %5569 = vmatpush1.bf16.msra.mxu0 0
        %5570 = vmatprep.subr.bf16.mxu0 0
        %5571 = vmatpush1.bf16.msra.mxu0 0
        %5572 = vmatprep.subr.bf16.mxu0 0
        %5573 = vmatpush1.bf16.msra.mxu0 0
        %5574 = vmatprep.subr.bf16.mxu0 0
        %5575 = vmatpush1.bf16.msra.mxu0 0
        %5576 = vmatprep.mubr.bf16.mxu0 0
        %5577 = vmatmul.mubr.bf16.gmra.mrb[0].mxu0 %v5542
        %v5578 = vpop.f32.mrb[0].mxu0
        %v5579 = vadd.f32 0.0, %v5578
        %v5580 = vpop.f32.mrb[0].mxu0
        %v5581 = vpop.f32.mrb[0].mxu0
        %v5582 = vadd.f32 0.0, %v5581
        %v5583 = vpop.f32.mrb[0].mxu0
        %5584 = vdwg.mxu0
        %5585 = vrot.lane.b32.xlu0 %v4839, 48
        %v5586 = vpop.permute.xlu0 %5585
        %v5589 = vsel %vm1160, %v5439, 0
        %5591 = vmatprep.subr.bf16.mxu0 0
        %5592 = vmatpush1.bf16.msra.mxu0 %v5586
        %5593 = vmatprep.subr.bf16.mxu0 0
        %5594 = vmatpush1.bf16.msra.mxu0 0
        %5595 = vmatprep.subr.bf16.mxu0 0
        %5596 = vmatpush1.bf16.msra.mxu0 0
        %5597 = vmatprep.subr.bf16.mxu0 0
        %5598 = vmatpush1.bf16.msra.mxu0 0
        %5599 = vmatprep.subr.bf16.mxu0 0
        %5600 = vmatpush1.bf16.msra.mxu0 0
        %5601 = vmatprep.subr.bf16.mxu0 0
        %5602 = vmatpush1.bf16.msra.mxu0 0
        %5603 = vmatprep.subr.bf16.mxu0 0
        %5604 = vmatpush1.bf16.msra.mxu0 0
        %5605 = vmatprep.subr.bf16.mxu0 0
        %5606 = vmatpush1.bf16.msra.mxu0 0
        %5607 = vmatprep.subr.bf16.mxu0 0
        %5608 = vmatpush1.bf16.msra.mxu0 0
        %5609 = vmatprep.subr.bf16.mxu0 0
        %5610 = vmatpush1.bf16.msra.mxu0 0
        %5611 = vmatprep.subr.bf16.mxu0 0
        %5612 = vmatpush1.bf16.msra.mxu0 0
        %5613 = vmatprep.subr.bf16.mxu0 0
        %5614 = vmatpush1.bf16.msra.mxu0 0
        %5615 = vmatprep.subr.bf16.mxu0 0
        %5616 = vmatpush1.bf16.msra.mxu0 0
        %5617 = vmatprep.subr.bf16.mxu0 0
        %5618 = vmatpush1.bf16.msra.mxu0 0
        %5619 = vmatprep.subr.bf16.mxu0 0
        %5620 = vmatpush1.bf16.msra.mxu0 0
        %5621 = vmatprep.subr.bf16.mxu0 0
        %5622 = vmatpush1.bf16.msra.mxu0 0
        %5623 = vmatprep.mubr.bf16.mxu0 0
        %5624 = vmatmul.mubr.bf16.gmra.mrb[0].mxu0 %v5589
        %v5625 = vpop.f32.mrb[0].mxu0
        %v5626 = vadd.f32 0.0, %v5625
        %v5627 = vpop.f32.mrb[0].mxu0
        %v5628 = vpop.f32.mrb[0].mxu0
        %v5629 = vadd.f32 0.0, %v5628
        %v5630 = vpop.f32.mrb[0].mxu0
        %5631 = vdwg.mxu0
        %5632 = vrot.lane.b32.xlu0 %v4840, 48
        %v5633 = vpop.permute.xlu0 %5632
        %v5636 = vsel %vm1160, %v5440, 0
        %5638 = vmatprep.subr.bf16.mxu0 0
        %5639 = vmatpush1.bf16.msra.mxu0 %v5633
        %5640 = vmatprep.subr.bf16.mxu0 0
        %5641 = vmatpush1.bf16.msra.mxu0 0
        %5642 = vmatprep.subr.bf16.mxu0 0
        %5643 = vmatpush1.bf16.msra.mxu0 0
        %5644 = vmatprep.subr.bf16.mxu0 0
        %5645 = vmatpush1.bf16.msra.mxu0 0
        %5646 = vmatprep.subr.bf16.mxu0 0
        %5647 = vmatpush1.bf16.msra.mxu0 0
        %5648 = vmatprep.subr.bf16.mxu0 0
        %5649 = vmatpush1.bf16.msra.mxu0 0
        %5650 = vmatprep.subr.bf16.mxu0 0
        %5651 = vmatpush1.bf16.msra.mxu0 0
        %5652 = vmatprep.subr.bf16.mxu0 0
        %5653 = vmatpush1.bf16.msra.mxu0 0
        %5654 = vmatprep.subr.bf16.mxu0 0
        %5655 = vmatpush1.bf16.msra.mxu0 0
        %5656 = vmatprep.subr.bf16.mxu0 0
        %5657 = vmatpush1.bf16.msra.mxu0 0
        %5658 = vmatprep.subr.bf16.mxu0 0
        %5659 = vmatpush1.bf16.msra.mxu0 0
        %5660 = vmatprep.subr.bf16.mxu0 0
        %5661 = vmatpush1.bf16.msra.mxu0 0
        %5662 = vmatprep.subr.bf16.mxu0 0
        %5663 = vmatpush1.bf16.msra.mxu0 0
        %5664 = vmatprep.subr.bf16.mxu0 0
        %5665 = vmatpush1.bf16.msra.mxu0 0
        %5666 = vmatprep.subr.bf16.mxu0 0
        %5667 = vmatpush1.bf16.msra.mxu0 0
        %5668 = vmatprep.subr.bf16.mxu0 0
        %5669 = vmatpush1.bf16.msra.mxu0 0
        %5670 = vmatprep.mubr.bf16.mxu0 0
        %5671 = vmatmul.mubr.bf16.gmra.mrb[0].mxu0 %v5636
        %v5672 = vpop.f32.mrb[0].mxu0
        %v5673 = vadd.f32 0.0, %v5672
        %v5674 = vpop.f32.mrb[0].mxu0
        %v5675 = vpop.f32.mrb[0].mxu0
        %v5676 = vadd.f32 0.0, %v5675
        %v5677 = vpop.f32.mrb[0].mxu0
        %5678 = vdwg.mxu0
        %5679 = vrot.lane.b32.xlu0 %v4841, 48
        %v5680 = vpop.permute.xlu0 %5679
        %v5683 = vsel %vm1160, %v5441, 0
        %5685 = vmatprep.subr.bf16.mxu0 0
        %5686 = vmatpush1.bf16.msra.mxu0 %v5680
        %5687 = vmatprep.subr.bf16.mxu0 0
        %5688 = vmatpush1.bf16.msra.mxu0 0
        %5689 = vmatprep.subr.bf16.mxu0 0
        %5690 = vmatpush1.bf16.msra.mxu0 0
        %5691 = vmatprep.subr.bf16.mxu0 0
        %5692 = vmatpush1.bf16.msra.mxu0 0
        %5693 = vmatprep.subr.bf16.mxu0 0
        %5694 = vmatpush1.bf16.msra.mxu0 0
        %5695 = vmatprep.subr.bf16.mxu0 0
        %5696 = vmatpush1.bf16.msra.mxu0 0
        %5697 = vmatprep.subr.bf16.mxu0 0
        %5698 = vmatpush1.bf16.msra.mxu0 0
        %5699 = vmatprep.subr.bf16.mxu0 0
        %5700 = vmatpush1.bf16.msra.mxu0 0
        %5701 = vmatprep.subr.bf16.mxu0 0
        %5702 = vmatpush1.bf16.msra.mxu0 0
        %5703 = vmatprep.subr.bf16.mxu0 0
        %5704 = vmatpush1.bf16.msra.mxu0 0
        %5705 = vmatprep.subr.bf16.mxu0 0
        %5706 = vmatpush1.bf16.msra.mxu0 0
        %5707 = vmatprep.subr.bf16.mxu0 0
        %5708 = vmatpush1.bf16.msra.mxu0 0
        %5709 = vmatprep.subr.bf16.mxu0 0
        %5710 = vmatpush1.bf16.msra.mxu0 0
        %5711 = vmatprep.subr.bf16.mxu0 0
        %5712 = vmatpush1.bf16.msra.mxu0 0
        %5713 = vmatprep.subr.bf16.mxu0 0
        %5714 = vmatpush1.bf16.msra.mxu0 0
        %5715 = vmatprep.subr.bf16.mxu0 0
        %5716 = vmatpush1.bf16.msra.mxu0 0
        %5717 = vmatprep.mubr.bf16.mxu0 0
        %5718 = vmatmul.mubr.bf16.gmra.mrb[0].mxu0 %v5683
        %v5719 = vpop.f32.mrb[0].mxu0
        %v5720 = vadd.f32 0.0, %v5719
        %v5721 = vpop.f32.mrb[0].mxu0
        %v5722 = vpop.f32.mrb[0].mxu0
        %v5723 = vadd.f32 0.0, %v5722
        %v5724 = vpop.f32.mrb[0].mxu0
        %5725 = vdwg.mxu0
        %5726 = vrot.lane.b32.xlu0 %v4842, 48
        %v5727 = vpop.permute.xlu0 %5726
        %v5730 = vsel %vm1160, %v5442, 0
        %5732 = vmatprep.subr.bf16.mxu0 0
        %5733 = vmatpush1.bf16.msra.mxu0 %v5727
        %5734 = vmatprep.subr.bf16.mxu0 0
        %5735 = vmatpush1.bf16.msra.mxu0 0
        %5736 = vmatprep.subr.bf16.mxu0 0
        %5737 = vmatpush1.bf16.msra.mxu0 0
        %5738 = vmatprep.subr.bf16.mxu0 0
        %5739 = vmatpush1.bf16.msra.mxu0 0
        %5740 = vmatprep.subr.bf16.mxu0 0
        %5741 = vmatpush1.bf16.msra.mxu0 0
        %5742 = vmatprep.subr.bf16.mxu0 0
        %5743 = vmatpush1.bf16.msra.mxu0 0
        %5744 = vmatprep.subr.bf16.mxu0 0
        %5745 = vmatpush1.bf16.msra.mxu0 0
        %5746 = vmatprep.subr.bf16.mxu0 0
        %5747 = vmatpush1.bf16.msra.mxu0 0
        %5748 = vmatprep.subr.bf16.mxu0 0
        %5749 = vmatpush1.bf16.msra.mxu0 0
        %5750 = vmatprep.subr.bf16.mxu0 0
        %5751 = vmatpush1.bf16.msra.mxu0 0
        %5752 = vmatprep.subr.bf16.mxu0 0
        %5753 = vmatpush1.bf16.msra.mxu0 0
        %5754 = vmatprep.subr.bf16.mxu0 0
        %5755 = vmatpush1.bf16.msra.mxu0 0
        %5756 = vmatprep.subr.bf16.mxu0 0
        %5757 = vmatpush1.bf16.msra.mxu0 0
        %5758 = vmatprep.subr.bf16.mxu0 0
        %5759 = vmatpush1.bf16.msra.mxu0 0
        %5760 = vmatprep.subr.bf16.mxu0 0
        %5761 = vmatpush1.bf16.msra.mxu0 0
        %5762 = vmatprep.subr.bf16.mxu0 0
        %5763 = vmatpush1.bf16.msra.mxu0 0
        %5764 = vmatprep.mubr.bf16.mxu0 0
        %5765 = vmatmul.mubr.bf16.gmra.mrb[0].mxu0 %v5730
        %v5766 = vpop.f32.mrb[0].mxu0
        %v5767 = vadd.f32 0.0, %v5766
        %v5768 = vpop.f32.mrb[0].mxu0
        %v5769 = vpop.f32.mrb[0].mxu0
        %v5770 = vadd.f32 0.0, %v5769
        %v5771 = vpop.f32.mrb[0].mxu0
        %5772 = vdwg.mxu0
        %5773 = vrot.lane.b32.xlu0 %v4843, 48
        %v5774 = vpop.permute.xlu0 %5773
        %v5777 = vsel %vm1160, %v5443, 0
        %5779 = vmatprep.subr.bf16.mxu0 0
        %5780 = vmatpush1.bf16.msra.mxu0 %v5774
        %5781 = vmatprep.subr.bf16.mxu0 0
        %5782 = vmatpush1.bf16.msra.mxu0 0
        %5783 = vmatprep.subr.bf16.mxu0 0
        %5784 = vmatpush1.bf16.msra.mxu0 0
        %5785 = vmatprep.subr.bf16.mxu0 0
        %5786 = vmatpush1.bf16.msra.mxu0 0
        %5787 = vmatprep.subr.bf16.mxu0 0
        %5788 = vmatpush1.bf16.msra.mxu0 0
        %5789 = vmatprep.subr.bf16.mxu0 0
        %5790 = vmatpush1.bf16.msra.mxu0 0
        %5791 = vmatprep.subr.bf16.mxu0 0
        %5792 = vmatpush1.bf16.msra.mxu0 0
        %5793 = vmatprep.subr.bf16.mxu0 0
        %5794 = vmatpush1.bf16.msra.mxu0 0
        %5795 = vmatprep.subr.bf16.mxu0 0
        %5796 = vmatpush1.bf16.msra.mxu0 0
        %5797 = vmatprep.subr.bf16.mxu0 0
        %5798 = vmatpush1.bf16.msra.mxu0 0
        %5799 = vmatprep.subr.bf16.mxu0 0
        %5800 = vmatpush1.bf16.msra.mxu0 0
        %5801 = vmatprep.subr.bf16.mxu0 0
        %5802 = vmatpush1.bf16.msra.mxu0 0
        %5803 = vmatprep.subr.bf16.mxu0 0
        %5804 = vmatpush1.bf16.msra.mxu0 0
        %5805 = vmatprep.subr.bf16.mxu0 0
        %5806 = vmatpush1.bf16.msra.mxu0 0
        %5807 = vmatprep.subr.bf16.mxu0 0
        %5808 = vmatpush1.bf16.msra.mxu0 0
        %5809 = vmatprep.subr.bf16.mxu0 0
        %5810 = vmatpush1.bf16.msra.mxu0 0
        %5811 = vmatprep.mubr.bf16.mxu0 0
        %5812 = vmatmul.mubr.bf16.gmra.mrb[0].mxu0 %v5777
        %v5813 = vpop.f32.mrb[0].mxu0
        %v5814 = vadd.f32 0.0, %v5813
        %v5815 = vpop.f32.mrb[0].mxu0
        %v5816 = vpop.f32.mrb[0].mxu0
        %v5817 = vadd.f32 0.0, %v5816
        %v5818 = vpop.f32.mrb[0].mxu0
        %5819 = vdwg.mxu0
        %v5820 = vpack.c.bf16 %v5488, %v5485
        %v5821 = vpack.c.bf16 %v5535, %v5532
        %v5822 = vpack.c.bf16 %v5582, %v5579
        %v5823 = vpack.c.bf16 %v5629, %v5626
        %v5824 = vpack.c.bf16 %v5676, %v5673
        %v5825 = vpack.c.bf16 %v5723, %v5720
        %v5826 = vpack.c.bf16 %v5770, %v5767
        %v5827 = vpack.c.bf16 %v5817, %v5814
        %5836 = vrot.lane.b32.xlu0 %v5820, 16
        %v5837 = vpop.permute.xlu0 %5836
        %5838 = vrot.lane.b32.xlu0 %v5821, 16
        %v5839 = vpop.permute.xlu0 %5838
        %5840 = vrot.lane.b32.xlu0 %v5822, 16
        %v5841 = vpop.permute.xlu0 %5840
        %5842 = vrot.lane.b32.xlu0 %v5823, 16
        %v5843 = vpop.permute.xlu0 %5842
        %5844 = vrot.lane.b32.xlu0 %v5824, 16
        %v5845 = vpop.permute.xlu0 %5844
        %5846 = vrot.lane.b32.xlu0 %v5825, 16
        %v5847 = vpop.permute.xlu0 %5846
        %5848 = vrot.lane.b32.xlu0 %v5826, 16
        %v5849 = vpop.permute.xlu0 %5848
        %5850 = vrot.lane.b32.xlu0 %v5827, 16
        %v5851 = vpop.permute.xlu0 %5850
        %vm5860 = vcmask 162944
        %5861 = vst.msk [vmem:[#allocation3] sm:$0xff] %vm5860, %v5837
        %5862 = vst.msk [vmem:[#allocation3 + $0x8] sm:$0xff] %vm5860, %v5839
        %5863 = vst.msk [vmem:[#allocation3 + $0x10] sm:$0xff] %vm5860, %v5841
        %5864 = vst.msk [vmem:[#allocation3 + $0x18] sm:$0xff] %vm5860, %v5843
        %5865 = vst.msk [vmem:[#allocation3 + $0x20] sm:$0xff] %vm5860, %v5845
        %5866 = vst.msk [vmem:[#allocation3 + $0x28] sm:$0xff] %vm5860, %v5847
        %5867 = vst.msk [vmem:[#allocation3 + $0x30] sm:$0xff] %vm5860, %v5849
        %5868 = vst.msk [vmem:[#allocation3 + $0x38] sm:$0xff] %vm5860, %v5851
        %v5869 = vld [vmem:[#allocation2] sm:$0xff]
        %v5870 = vld [vmem:[#allocation2 + $0x8] sm:$0xff]
        %v5871 = vld [vmem:[#allocation2 + $0x10] sm:$0xff]
        %v5872 = vld [vmem:[#allocation2 + $0x18] sm:$0xff]
        %v5873 = vld [vmem:[#allocation2 + $0x20] sm:$0xff]
        %v5874 = vld [vmem:[#allocation2 + $0x28] sm:$0xff]
        %v5875 = vld [vmem:[#allocation2 + $0x30] sm:$0xff]
        %v5876 = vld [vmem:[#allocation2 + $0x38] sm:$0xff]
        %5878 = vrot.lane.b32.xlu0 %v5869, 108
        %v5879 = vpop.permute.xlu0 %5878
        %5880 = vrot.lane.b32.xlu0 %v5869, 76
        %v5881 = vpop.permute.xlu0 %5880
        %v5883 = vsel %vm762, %v5879, 0
        %v5886 = vsel %vm762, %v5881, 0
        %5888 = vmatprep.subr.bf16.mxu0 0
        %5889 = vmatpush1.bf16.xpose.msra.mxu0 %v5886
        %5890 = vmatprep.subr.bf16.mxu0 0
        %5891 = vmatpush1.bf16.xpose.msra.mxu0 0
        %5892 = vmatprep.subr.bf16.mxu0 0
        %5893 = vmatpush1.bf16.xpose.msra.mxu0 0
        %5894 = vmatprep.subr.bf16.mxu0 0
        %5895 = vmatpush1.bf16.xpose.msra.mxu0 0
        %5896 = vmatprep.subr.bf16.mxu0 0
        %5897 = vmatpush1.bf16.xpose.msra.mxu0 0
        %5898 = vmatprep.subr.bf16.mxu0 0
        %5899 = vmatpush1.bf16.xpose.msra.mxu0 0
        %5900 = vmatprep.subr.bf16.mxu0 0
        %5901 = vmatpush1.bf16.xpose.msra.mxu0 0
        %5902 = vmatprep.subr.bf16.mxu0 0
        %5903 = vmatpush1.bf16.xpose.msra.mxu0 0
        %5904 = vmatprep.subr.bf16.mxu0 0
        %5905 = vmatpush1.bf16.xpose.msra.mxu0 0
        %5906 = vmatprep.subr.bf16.mxu0 0
        %5907 = vmatpush1.bf16.xpose.msra.mxu0 0
        %5908 = vmatprep.subr.bf16.mxu0 0
        %5909 = vmatpush1.bf16.xpose.msra.mxu0 0
        %5910 = vmatprep.subr.bf16.mxu0 0
        %5911 = vmatpush1.bf16.xpose.msra.mxu0 0
        %5912 = vmatprep.subr.bf16.mxu0 0
        %5913 = vmatpush1.bf16.xpose.msra.mxu0 0
        %5914 = vmatprep.subr.bf16.mxu0 0
        %5915 = vmatpush1.bf16.xpose.msra.mxu0 0
        %5916 = vmatprep.subr.bf16.mxu0 0
        %5917 = vmatpush1.bf16.xpose.msra.mxu0 0
        %5918 = vmatprep.subr.bf16.mxu0 0
        %5919 = vmatpush1.bf16.xpose.msra.mxu0 0
        %5920 = vmatprep.mubr.bf16.mxu0 0
        %5921 = vmatmul.mubr.bf16.gmra.mrb[0].mxu0 %v5883
        %v5922 = vpop.f32.mrb[0].mxu0
        %v5923 = vadd.f32 0.0, %v5922
        %v5924 = vpop.f32.mrb[0].mxu0
        %v5925 = vpop.f32.mrb[0].mxu0
        %v5926 = vadd.f32 0.0, %v5925
        %v5927 = vpop.f32.mrb[0].mxu0
        %5928 = vdwg.mxu0
        %5930 = vrot.lane.b32.xlu0 %v5870, 108
        %v5931 = vpop.permute.xlu0 %5930
        %5932 = vrot.lane.b32.xlu0 %v5870, 76
        %v5933 = vpop.permute.xlu0 %5932
        %v5935 = vsel %vm762, %v5931, 0
        %v5938 = vsel %vm762, %v5933, 0
        %5940 = vmatprep.subr.bf16.mxu0 0
        %5941 = vmatpush1.bf16.xpose.msra.mxu0 %v5938
        %5942 = vmatprep.subr.bf16.mxu0 0
        %5943 = vmatpush1.bf16.xpose.msra.mxu0 0
        %5944 = vmatprep.subr.bf16.mxu0 0
        %5945 = vmatpush1.bf16.xpose.msra.mxu0 0
        %5946 = vmatprep.subr.bf16.mxu0 0
        %5947 = vmatpush1.bf16.xpose.msra.mxu0 0
        %5948 = vmatprep.subr.bf16.mxu0 0
        %5949 = vmatpush1.bf16.xpose.msra.mxu0 0
        %5950 = vmatprep.subr.bf16.mxu0 0
        %5951 = vmatpush1.bf16.xpose.msra.mxu0 0
        %5952 = vmatprep.subr.bf16.mxu0 0
        %5953 = vmatpush1.bf16.xpose.msra.mxu0 0
        %5954 = vmatprep.subr.bf16.mxu0 0
        %5955 = vmatpush1.bf16.xpose.msra.mxu0 0
        %5956 = vmatprep.subr.bf16.mxu0 0
        %5957 = vmatpush1.bf16.xpose.msra.mxu0 0
        %5958 = vmatprep.subr.bf16.mxu0 0
        %5959 = vmatpush1.bf16.xpose.msra.mxu0 0
        %5960 = vmatprep.subr.bf16.mxu0 0
        %5961 = vmatpush1.bf16.xpose.msra.mxu0 0
        %5962 = vmatprep.subr.bf16.mxu0 0
        %5963 = vmatpush1.bf16.xpose.msra.mxu0 0
        %5964 = vmatprep.subr.bf16.mxu0 0
        %5965 = vmatpush1.bf16.xpose.msra.mxu0 0
        %5966 = vmatprep.subr.bf16.mxu0 0
        %5967 = vmatpush1.bf16.xpose.msra.mxu0 0
        %5968 = vmatprep.subr.bf16.mxu0 0
        %5969 = vmatpush1.bf16.xpose.msra.mxu0 0
        %5970 = vmatprep.subr.bf16.mxu0 0
        %5971 = vmatpush1.bf16.xpose.msra.mxu0 0
        %5972 = vmatprep.mubr.bf16.mxu0 0
        %5973 = vmatmul.mubr.bf16.gmra.mrb[0].mxu0 %v5935
        %v5974 = vpop.f32.mrb[0].mxu0
        %v5975 = vadd.f32 0.0, %v5974
        %v5976 = vpop.f32.mrb[0].mxu0
        %v5977 = vpop.f32.mrb[0].mxu0
        %v5978 = vadd.f32 0.0, %v5977
        %v5979 = vpop.f32.mrb[0].mxu0
        %5980 = vdwg.mxu0
        %5982 = vrot.lane.b32.xlu0 %v5871, 108
        %v5983 = vpop.permute.xlu0 %5982
        %5984 = vrot.lane.b32.xlu0 %v5871, 76
        %v5985 = vpop.permute.xlu0 %5984
        %v5987 = vsel %vm762, %v5983, 0
        %v5990 = vsel %vm762, %v5985, 0
        %5992 = vmatprep.subr.bf16.mxu0 0
        %5993 = vmatpush1.bf16.xpose.msra.mxu0 %v5990
        %5994 = vmatprep.subr.bf16.mxu0 0
        %5995 = vmatpush1.bf16.xpose.msra.mxu0 0
        %5996 = vmatprep.subr.bf16.mxu0 0
        %5997 = vmatpush1.bf16.xpose.msra.mxu0 0
        %5998 = vmatprep.subr.bf16.mxu0 0
        %5999 = vmatpush1.bf16.xpose.msra.mxu0 0
        %6000 = vmatprep.subr.bf16.mxu0 0
        %6001 = vmatpush1.bf16.xpose.msra.mxu0 0
        %6002 = vmatprep.subr.bf16.mxu0 0
        %6003 = vmatpush1.bf16.xpose.msra.mxu0 0
        %6004 = vmatprep.subr.bf16.mxu0 0
        %6005 = vmatpush1.bf16.xpose.msra.mxu0 0
        %6006 = vmatprep.subr.bf16.mxu0 0
        %6007 = vmatpush1.bf16.xpose.msra.mxu0 0
        %6008 = vmatprep.subr.bf16.mxu0 0
        %6009 = vmatpush1.bf16.xpose.msra.mxu0 0
        %6010 = vmatprep.subr.bf16.mxu0 0
        %6011 = vmatpush1.bf16.xpose.msra.mxu0 0
        %6012 = vmatprep.subr.bf16.mxu0 0
        %6013 = vmatpush1.bf16.xpose.msra.mxu0 0
        %6014 = vmatprep.subr.bf16.mxu0 0
        %6015 = vmatpush1.bf16.xpose.msra.mxu0 0
        %6016 = vmatprep.subr.bf16.mxu0 0
        %6017 = vmatpush1.bf16.xpose.msra.mxu0 0
        %6018 = vmatprep.subr.bf16.mxu0 0
        %6019 = vmatpush1.bf16.xpose.msra.mxu0 0
        %6020 = vmatprep.subr.bf16.mxu0 0
        %6021 = vmatpush1.bf16.xpose.msra.mxu0 0
        %6022 = vmatprep.subr.bf16.mxu0 0
        %6023 = vmatpush1.bf16.xpose.msra.mxu0 0
        %6024 = vmatprep.mubr.bf16.mxu0 0
        %6025 = vmatmul.mubr.bf16.gmra.mrb[0].mxu0 %v5987
        %v6026 = vpop.f32.mrb[0].mxu0
        %v6027 = vadd.f32 0.0, %v6026
        %v6028 = vpop.f32.mrb[0].mxu0
        %v6029 = vpop.f32.mrb[0].mxu0
        %v6030 = vadd.f32 0.0, %v6029
        %v6031 = vpop.f32.mrb[0].mxu0
        %6032 = vdwg.mxu0
        %6034 = vrot.lane.b32.xlu0 %v5872, 108
        %v6035 = vpop.permute.xlu0 %6034
        %6036 = vrot.lane.b32.xlu0 %v5872, 76
        %v6037 = vpop.permute.xlu0 %6036
        %v6039 = vsel %vm762, %v6035, 0
        %v6042 = vsel %vm762, %v6037, 0
        %6044 = vmatprep.subr.bf16.mxu0 0
        %6045 = vmatpush1.bf16.xpose.msra.mxu0 %v6042
        %6046 = vmatprep.subr.bf16.mxu0 0
        %6047 = vmatpush1.bf16.xpose.msra.mxu0 0
        %6048 = vmatprep.subr.bf16.mxu0 0
        %6049 = vmatpush1.bf16.xpose.msra.mxu0 0
        %6050 = vmatprep.subr.bf16.mxu0 0
        %6051 = vmatpush1.bf16.xpose.msra.mxu0 0
        %6052 = vmatprep.subr.bf16.mxu0 0
        %6053 = vmatpush1.bf16.xpose.msra.mxu0 0
        %6054 = vmatprep.subr.bf16.mxu0 0
        %6055 = vmatpush1.bf16.xpose.msra.mxu0 0
        %6056 = vmatprep.subr.bf16.mxu0 0
        %6057 = vmatpush1.bf16.xpose.msra.mxu0 0
        %6058 = vmatprep.subr.bf16.mxu0 0
        %6059 = vmatpush1.bf16.xpose.msra.mxu0 0
        %6060 = vmatprep.subr.bf16.mxu0 0
        %6061 = vmatpush1.bf16.xpose.msra.mxu0 0
        %6062 = vmatprep.subr.bf16.mxu0 0
        %6063 = vmatpush1.bf16.xpose.msra.mxu0 0
        %6064 = vmatprep.subr.bf16.mxu0 0
        %6065 = vmatpush1.bf16.xpose.msra.mxu0 0
        %6066 = vmatprep.subr.bf16.mxu0 0
        %6067 = vmatpush1.bf16.xpose.msra.mxu0 0
        %6068 = vmatprep.subr.bf16.mxu0 0
        %6069 = vmatpush1.bf16.xpose.msra.mxu0 0
        %6070 = vmatprep.subr.bf16.mxu0 0
        %6071 = vmatpush1.bf16.xpose.msra.mxu0 0
        %6072 = vmatprep.subr.bf16.mxu0 0
        %6073 = vmatpush1.bf16.xpose.msra.mxu0 0
        %6074 = vmatprep.subr.bf16.mxu0 0
        %6075 = vmatpush1.bf16.xpose.msra.mxu0 0
        %6076 = vmatprep.mubr.bf16.mxu0 0
        %6077 = vmatmul.mubr.bf16.gmra.mrb[0].mxu0 %v6039
        %v6078 = vpop.f32.mrb[0].mxu0
        %v6079 = vadd.f32 0.0, %v6078
        %v6080 = vpop.f32.mrb[0].mxu0
        %v6081 = vpop.f32.mrb[0].mxu0
        %v6082 = vadd.f32 0.0, %v6081
        %v6083 = vpop.f32.mrb[0].mxu0
        %6084 = vdwg.mxu0
        %6086 = vrot.lane.b32.xlu0 %v5873, 108
        %v6087 = vpop.permute.xlu0 %6086
        %6088 = vrot.lane.b32.xlu0 %v5873, 76
        %v6089 = vpop.permute.xlu0 %6088
        %v6091 = vsel %vm762, %v6087, 0
        %v6094 = vsel %vm762, %v6089, 0
        %6096 = vmatprep.subr.bf16.mxu0 0
        %6097 = vmatpush1.bf16.xpose.msra.mxu0 %v6094
        %6098 = vmatprep.subr.bf16.mxu0 0
        %6099 = vmatpush1.bf16.xpose.msra.mxu0 0
        %6100 = vmatprep.subr.bf16.mxu0 0
        %6101 = vmatpush1.bf16.xpose.msra.mxu0 0
        %6102 = vmatprep.subr.bf16.mxu0 0
        %6103 = vmatpush1.bf16.xpose.msra.mxu0 0
        %6104 = vmatprep.subr.bf16.mxu0 0
        %6105 = vmatpush1.bf16.xpose.msra.mxu0 0
        %6106 = vmatprep.subr.bf16.mxu0 0
        %6107 = vmatpush1.bf16.xpose.msra.mxu0 0
        %6108 = vmatprep.subr.bf16.mxu0 0
        %6109 = vmatpush1.bf16.xpose.msra.mxu0 0
        %6110 = vmatprep.subr.bf16.mxu0 0
        %6111 = vmatpush1.bf16.xpose.msra.mxu0 0
        %6112 = vmatprep.subr.bf16.mxu0 0
        %6113 = vmatpush1.bf16.xpose.msra.mxu0 0
        %6114 = vmatprep.subr.bf16.mxu0 0
        %6115 = vmatpush1.bf16.xpose.msra.mxu0 0
        %6116 = vmatprep.subr.bf16.mxu0 0
        %6117 = vmatpush1.bf16.xpose.msra.mxu0 0
        %6118 = vmatprep.subr.bf16.mxu0 0
        %6119 = vmatpush1.bf16.xpose.msra.mxu0 0
        %6120 = vmatprep.subr.bf16.mxu0 0
        %6121 = vmatpush1.bf16.xpose.msra.mxu0 0
        %6122 = vmatprep.subr.bf16.mxu0 0
        %6123 = vmatpush1.bf16.xpose.msra.mxu0 0
        %6124 = vmatprep.subr.bf16.mxu0 0
        %6125 = vmatpush1.bf16.xpose.msra.mxu0 0
        %6126 = vmatprep.subr.bf16.mxu0 0
        %6127 = vmatpush1.bf16.xpose.msra.mxu0 0
        %6128 = vmatprep.mubr.bf16.mxu0 0
        %6129 = vmatmul.mubr.bf16.gmra.mrb[0].mxu0 %v6091
        %v6130 = vpop.f32.mrb[0].mxu0
        %v6131 = vadd.f32 0.0, %v6130
        %v6132 = vpop.f32.mrb[0].mxu0
        %v6133 = vpop.f32.mrb[0].mxu0
        %v6134 = vadd.f32 0.0, %v6133
        %v6135 = vpop.f32.mrb[0].mxu0
        %6136 = vdwg.mxu0
        %6138 = vrot.lane.b32.xlu0 %v5874, 108
        %v6139 = vpop.permute.xlu0 %6138
        %6140 = vrot.lane.b32.xlu0 %v5874, 76
        %v6141 = vpop.permute.xlu0 %6140
        %v6143 = vsel %vm762, %v6139, 0
        %v6146 = vsel %vm762, %v6141, 0
        %6148 = vmatprep.subr.bf16.mxu0 0
        %6149 = vmatpush1.bf16.xpose.msra.mxu0 %v6146
        %6150 = vmatprep.subr.bf16.mxu0 0
        %6151 = vmatpush1.bf16.xpose.msra.mxu0 0
        %6152 = vmatprep.subr.bf16.mxu0 0
        %6153 = vmatpush1.bf16.xpose.msra.mxu0 0
        %6154 = vmatprep.subr.bf16.mxu0 0
        %6155 = vmatpush1.bf16.xpose.msra.mxu0 0
        %6156 = vmatprep.subr.bf16.mxu0 0
        %6157 = vmatpush1.bf16.xpose.msra.mxu0 0
        %6158 = vmatprep.subr.bf16.mxu0 0
        %6159 = vmatpush1.bf16.xpose.msra.mxu0 0
        %6160 = vmatprep.subr.bf16.mxu0 0
        %6161 = vmatpush1.bf16.xpose.msra.mxu0 0
        %6162 = vmatprep.subr.bf16.mxu0 0
        %6163 = vmatpush1.bf16.xpose.msra.mxu0 0
        %6164 = vmatprep.subr.bf16.mxu0 0
        %6165 = vmatpush1.bf16.xpose.msra.mxu0 0
        %6166 = vmatprep.subr.bf16.mxu0 0
        %6167 = vmatpush1.bf16.xpose.msra.mxu0 0
        %6168 = vmatprep.subr.bf16.mxu0 0
        %6169 = vmatpush1.bf16.xpose.msra.mxu0 0
        %6170 = vmatprep.subr.bf16.mxu0 0
        %6171 = vmatpush1.bf16.xpose.msra.mxu0 0
        %6172 = vmatprep.subr.bf16.mxu0 0
        %6173 = vmatpush1.bf16.xpose.msra.mxu0 0
        %6174 = vmatprep.subr.bf16.mxu0 0
        %6175 = vmatpush1.bf16.xpose.msra.mxu0 0
        %6176 = vmatprep.subr.bf16.mxu0 0
        %6177 = vmatpush1.bf16.xpose.msra.mxu0 0
        %6178 = vmatprep.subr.bf16.mxu0 0
        %6179 = vmatpush1.bf16.xpose.msra.mxu0 0
        %6180 = vmatprep.mubr.bf16.mxu0 0
        %6181 = vmatmul.mubr.bf16.gmra.mrb[0].mxu0 %v6143
        %v6182 = vpop.f32.mrb[0].mxu0
        %v6183 = vadd.f32 0.0, %v6182
        %v6184 = vpop.f32.mrb[0].mxu0
        %v6185 = vpop.f32.mrb[0].mxu0
        %v6186 = vadd.f32 0.0, %v6185
        %v6187 = vpop.f32.mrb[0].mxu0
        %6188 = vdwg.mxu0
        %6190 = vrot.lane.b32.xlu0 %v5875, 108
        %v6191 = vpop.permute.xlu0 %6190
        %6192 = vrot.lane.b32.xlu0 %v5875, 76
        %v6193 = vpop.permute.xlu0 %6192
        %v6195 = vsel %vm762, %v6191, 0
        %v6198 = vsel %vm762, %v6193, 0
        %6200 = vmatprep.subr.bf16.mxu0 0
        %6201 = vmatpush1.bf16.xpose.msra.mxu0 %v6198
        %6202 = vmatprep.subr.bf16.mxu0 0
        %6203 = vmatpush1.bf16.xpose.msra.mxu0 0
        %6204 = vmatprep.subr.bf16.mxu0 0
        %6205 = vmatpush1.bf16.xpose.msra.mxu0 0
        %6206 = vmatprep.subr.bf16.mxu0 0
        %6207 = vmatpush1.bf16.xpose.msra.mxu0 0
        %6208 = vmatprep.subr.bf16.mxu0 0
        %6209 = vmatpush1.bf16.xpose.msra.mxu0 0
        %6210 = vmatprep.subr.bf16.mxu0 0
        %6211 = vmatpush1.bf16.xpose.msra.mxu0 0
        %6212 = vmatprep.subr.bf16.mxu0 0
        %6213 = vmatpush1.bf16.xpose.msra.mxu0 0
        %6214 = vmatprep.subr.bf16.mxu0 0
        %6215 = vmatpush1.bf16.xpose.msra.mxu0 0
        %6216 = vmatprep.subr.bf16.mxu0 0
        %6217 = vmatpush1.bf16.xpose.msra.mxu0 0
        %6218 = vmatprep.subr.bf16.mxu0 0
        %6219 = vmatpush1.bf16.xpose.msra.mxu0 0
        %6220 = vmatprep.subr.bf16.mxu0 0
        %6221 = vmatpush1.bf16.xpose.msra.mxu0 0
        %6222 = vmatprep.subr.bf16.mxu0 0
        %6223 = vmatpush1.bf16.xpose.msra.mxu0 0
        %6224 = vmatprep.subr.bf16.mxu0 0
        %6225 = vmatpush1.bf16.xpose.msra.mxu0 0
        %6226 = vmatprep.subr.bf16.mxu0 0
        %6227 = vmatpush1.bf16.xpose.msra.mxu0 0
        %6228 = vmatprep.subr.bf16.mxu0 0
        %6229 = vmatpush1.bf16.xpose.msra.mxu0 0
        %6230 = vmatprep.subr.bf16.mxu0 0
        %6231 = vmatpush1.bf16.xpose.msra.mxu0 0
        %6232 = vmatprep.mubr.bf16.mxu0 0
        %6233 = vmatmul.mubr.bf16.gmra.mrb[0].mxu0 %v6195
        %v6234 = vpop.f32.mrb[0].mxu0
        %v6235 = vadd.f32 0.0, %v6234
        %v6236 = vpop.f32.mrb[0].mxu0
        %v6237 = vpop.f32.mrb[0].mxu0
        %v6238 = vadd.f32 0.0, %v6237
        %v6239 = vpop.f32.mrb[0].mxu0
        %6240 = vdwg.mxu0
        %6242 = vrot.lane.b32.xlu0 %v5876, 108
        %v6243 = vpop.permute.xlu0 %6242
        %6244 = vrot.lane.b32.xlu0 %v5876, 76
        %v6245 = vpop.permute.xlu0 %6244
        %v6247 = vsel %vm762, %v6243, 0
        %v6250 = vsel %vm762, %v6245, 0
        %6252 = vmatprep.subr.bf16.mxu0 0
        %6253 = vmatpush1.bf16.xpose.msra.mxu0 %v6250
        %6254 = vmatprep.subr.bf16.mxu0 0
        %6255 = vmatpush1.bf16.xpose.msra.mxu0 0
        %6256 = vmatprep.subr.bf16.mxu0 0
        %6257 = vmatpush1.bf16.xpose.msra.mxu0 0
        %6258 = vmatprep.subr.bf16.mxu0 0
        %6259 = vmatpush1.bf16.xpose.msra.mxu0 0
        %6260 = vmatprep.subr.bf16.mxu0 0
        %6261 = vmatpush1.bf16.xpose.msra.mxu0 0
        %6262 = vmatprep.subr.bf16.mxu0 0
        %6263 = vmatpush1.bf16.xpose.msra.mxu0 0
        %6264 = vmatprep.subr.bf16.mxu0 0
        %6265 = vmatpush1.bf16.xpose.msra.mxu0 0
        %6266 = vmatprep.subr.bf16.mxu0 0
        %6267 = vmatpush1.bf16.xpose.msra.mxu0 0
        %6268 = vmatprep.subr.bf16.mxu0 0
        %6269 = vmatpush1.bf16.xpose.msra.mxu0 0
        %6270 = vmatprep.subr.bf16.mxu0 0
        %6271 = vmatpush1.bf16.xpose.msra.mxu0 0
        %6272 = vmatprep.subr.bf16.mxu0 0
        %6273 = vmatpush1.bf16.xpose.msra.mxu0 0
        %6274 = vmatprep.subr.bf16.mxu0 0
        %6275 = vmatpush1.bf16.xpose.msra.mxu0 0
        %6276 = vmatprep.subr.bf16.mxu0 0
        %6277 = vmatpush1.bf16.xpose.msra.mxu0 0
        %6278 = vmatprep.subr.bf16.mxu0 0
        %6279 = vmatpush1.bf16.xpose.msra.mxu0 0
        %6280 = vmatprep.subr.bf16.mxu0 0
        %6281 = vmatpush1.bf16.xpose.msra.mxu0 0
        %6282 = vmatprep.subr.bf16.mxu0 0
        %6283 = vmatpush1.bf16.xpose.msra.mxu0 0
        %6284 = vmatprep.mubr.bf16.mxu0 0
        %6285 = vmatmul.mubr.bf16.gmra.mrb[0].mxu0 %v6247
        %v6286 = vpop.f32.mrb[0].mxu0
        %v6287 = vadd.f32 0.0, %v6286
        %v6288 = vpop.f32.mrb[0].mxu0
        %v6289 = vpop.f32.mrb[0].mxu0
        %v6290 = vadd.f32 0.0, %v6289
        %v6291 = vpop.f32.mrb[0].mxu0
        %6292 = vdwg.mxu0
        %v6293 = vsel %vm1160, %v5923, -inf
        %6294 = vmax.xlane.f32.xlu0 %v6293
        %v6295 = vpop.xlane.xlu0 %6294
        %v6296 = vsel %vm1160, %v5926, -inf
        %6297 = vmax.xlane.f32.xlu0 %v6296
        %v6298 = vpop.xlane.xlu0 %6297
        %v6299 = vsel %vm1160, %v5975, -inf
        %6300 = vmax.xlane.f32.xlu0 %v6299
        %v6301 = vpop.xlane.xlu0 %6300
        %v6302 = vsel %vm1160, %v5978, -inf
        %6303 = vmax.xlane.f32.xlu0 %v6302
        %v6304 = vpop.xlane.xlu0 %6303
        %v6305 = vsel %vm1160, %v6027, -inf
        %6306 = vmax.xlane.f32.xlu0 %v6305
        %v6307 = vpop.xlane.xlu0 %6306
        %v6308 = vsel %vm1160, %v6030, -inf
        %6309 = vmax.xlane.f32.xlu0 %v6308
        %v6310 = vpop.xlane.xlu0 %6309
        %v6311 = vsel %vm1160, %v6079, -inf
        %6312 = vmax.xlane.f32.xlu0 %v6311
        %v6313 = vpop.xlane.xlu0 %6312
        %v6314 = vsel %vm1160, %v6082, -inf
        %6315 = vmax.xlane.f32.xlu0 %v6314
        %v6316 = vpop.xlane.xlu0 %6315
        %v6317 = vsel %vm1160, %v6131, -inf
        %6318 = vmax.xlane.f32.xlu0 %v6317
        %v6319 = vpop.xlane.xlu0 %6318
        %v6320 = vsel %vm1160, %v6134, -inf
        %6321 = vmax.xlane.f32.xlu0 %v6320
        %v6322 = vpop.xlane.xlu0 %6321
        %v6323 = vsel %vm1160, %v6183, -inf
        %6324 = vmax.xlane.f32.xlu0 %v6323
        %v6325 = vpop.xlane.xlu0 %6324
        %v6326 = vsel %vm1160, %v6186, -inf
        %6327 = vmax.xlane.f32.xlu0 %v6326
        %v6328 = vpop.xlane.xlu0 %6327
        %v6329 = vsel %vm1160, %v6235, -inf
        %6330 = vmax.xlane.f32.xlu0 %v6329
        %v6331 = vpop.xlane.xlu0 %6330
        %v6332 = vsel %vm1160, %v6238, -inf
        %6333 = vmax.xlane.f32.xlu0 %v6332
        %v6334 = vpop.xlane.xlu0 %6333
        %v6335 = vsel %vm1160, %v6287, -inf
        %6336 = vmax.xlane.f32.xlu0 %v6335
        %v6337 = vpop.xlane.xlu0 %6336
        %v6338 = vsel %vm1160, %v6290, -inf
        %6339 = vmax.xlane.f32.xlu0 %v6338
        %v6340 = vpop.xlane.xlu0 %6339
        %v6341 = vsub.f32 %v5923, %v6295
        %v6342 = vsub.f32 %v5926, %v6298
        %v6343 = vsub.f32 %v5975, %v6301
        %v6344 = vsub.f32 %v5978, %v6304
        %v6345 = vsub.f32 %v6027, %v6307
        %v6346 = vsub.f32 %v6030, %v6310
        %v6347 = vsub.f32 %v6079, %v6313
        %v6348 = vsub.f32 %v6082, %v6316
        %v6349 = vsub.f32 %v6131, %v6319
        %v6350 = vsub.f32 %v6134, %v6322
        %v6351 = vsub.f32 %v6183, %v6325
        %v6352 = vsub.f32 %v6186, %v6328
        %v6353 = vsub.f32 %v6235, %v6331
        %v6354 = vsub.f32 %v6238, %v6334
        %v6355 = vsub.f32 %v6287, %v6337
        %v6356 = vsub.f32 %v6290, %v6340
        %v6357 = vmul.f32 %v6341, 1.442695
        %v6358 = vpow.pop %v6357
        %v6359 = vmul.f32 %v6342, 1.442695
        %v6360 = vpow.pop %v6359
        %v6361 = vmul.f32 %v6343, 1.442695
        %v6362 = vpow.pop %v6361
        %v6363 = vmul.f32 %v6344, 1.442695
        %v6364 = vpow.pop %v6363
        %v6365 = vmul.f32 %v6345, 1.442695
        %v6366 = vpow.pop %v6365
        %v6367 = vmul.f32 %v6346, 1.442695
        %v6368 = vpow.pop %v6367
        %v6369 = vmul.f32 %v6347, 1.442695
        %v6370 = vpow.pop %v6369
        %v6371 = vmul.f32 %v6348, 1.442695
        %v6372 = vpow.pop %v6371
        %v6373 = vmul.f32 %v6349, 1.442695
        %v6374 = vpow.pop %v6373
        %v6375 = vmul.f32 %v6350, 1.442695
        %v6376 = vpow.pop %v6375
        %v6377 = vmul.f32 %v6351, 1.442695
        %v6378 = vpow.pop %v6377
        %v6379 = vmul.f32 %v6352, 1.442695
        %v6380 = vpow.pop %v6379
        %v6381 = vmul.f32 %v6353, 1.442695
        %v6382 = vpow.pop %v6381
        %v6383 = vmul.f32 %v6354, 1.442695
        %v6384 = vpow.pop %v6383
        %v6385 = vmul.f32 %v6355, 1.442695
        %v6386 = vpow.pop %v6385
        %v6387 = vmul.f32 %v6356, 1.442695
        %v6388 = vpow.pop %v6387
        %v6389 = vsel %vm1160, %v6358, 0.0
        %6390 = vadd.xlane.f32.xlu0 %v6389
        %v6391 = vpop.xlane.xlu0 %6390
        %v6392 = vsel %vm1160, %v6360, 0.0
        %6393 = vadd.xlane.f32.xlu0 %v6392
        %v6394 = vpop.xlane.xlu0 %6393
        %v6395 = vsel %vm1160, %v6362, 0.0
        %6396 = vadd.xlane.f32.xlu0 %v6395
        %v6397 = vpop.xlane.xlu0 %6396
        %v6398 = vsel %vm1160, %v6364, 0.0
        %6399 = vadd.xlane.f32.xlu0 %v6398
        %v6400 = vpop.xlane.xlu0 %6399
        %v6401 = vsel %vm1160, %v6366, 0.0
        %6402 = vadd.xlane.f32.xlu0 %v6401
        %v6403 = vpop.xlane.xlu0 %6402
        %v6404 = vsel %vm1160, %v6368, 0.0
        %6405 = vadd.xlane.f32.xlu0 %v6404
        %v6406 = vpop.xlane.xlu0 %6405
        %v6407 = vsel %vm1160, %v6370, 0.0
        %6408 = vadd.xlane.f32.xlu0 %v6407
        %v6409 = vpop.xlane.xlu0 %6408
        %v6410 = vsel %vm1160, %v6372, 0.0
        %6411 = vadd.xlane.f32.xlu0 %v6410
        %v6412 = vpop.xlane.xlu0 %6411
        %v6413 = vsel %vm1160, %v6374, 0.0
        %6414 = vadd.xlane.f32.xlu0 %v6413
        %v6415 = vpop.xlane.xlu0 %6414
        %v6416 = vsel %vm1160, %v6376, 0.0
        %6417 = vadd.xlane.f32.xlu0 %v6416
        %v6418 = vpop.xlane.xlu0 %6417
        %v6419 = vsel %vm1160, %v6378, 0.0
        %6420 = vadd.xlane.f32.xlu0 %v6419
        %v6421 = vpop.xlane.xlu0 %6420
        %v6422 = vsel %vm1160, %v6380, 0.0
        %6423 = vadd.xlane.f32.xlu0 %v6422
        %v6424 = vpop.xlane.xlu0 %6423
        %v6425 = vsel %vm1160, %v6382, 0.0
        %6426 = vadd.xlane.f32.xlu0 %v6425
        %v6427 = vpop.xlane.xlu0 %6426
        %v6428 = vsel %vm1160, %v6384, 0.0
        %6429 = vadd.xlane.f32.xlu0 %v6428
        %v6430 = vpop.xlane.xlu0 %6429
        %v6431 = vsel %vm1160, %v6386, 0.0
        %6432 = vadd.xlane.f32.xlu0 %v6431
        %v6433 = vpop.xlane.xlu0 %6432
        %v6434 = vsel %vm1160, %v6388, 0.0
        %6435 = vadd.xlane.f32.xlu0 %v6434
        %v6436 = vpop.xlane.xlu0 %6435
        %v6437 = vrcp.pop %v6391
        %v6438 = vrcp.pop %v6394
        %v6439 = vrcp.pop %v6397
        %v6440 = vrcp.pop %v6400
        %v6441 = vrcp.pop %v6403
        %v6442 = vrcp.pop %v6406
        %v6443 = vrcp.pop %v6409
        %v6444 = vrcp.pop %v6412
        %v6445 = vrcp.pop %v6415
        %v6446 = vrcp.pop %v6418
        %v6447 = vrcp.pop %v6421
        %v6448 = vrcp.pop %v6424
        %v6449 = vrcp.pop %v6427
        %v6450 = vrcp.pop %v6430
        %v6451 = vrcp.pop %v6433
        %v6452 = vrcp.pop %v6436
        %v6453 = vmul.f32 %v6358, %v6437
        %v6454 = vmul.f32 %v6360, %v6438
        %v6455 = vmul.f32 %v6362, %v6439
        %v6456 = vmul.f32 %v6364, %v6440
        %v6457 = vmul.f32 %v6366, %v6441
        %v6458 = vmul.f32 %v6368, %v6442
        %v6459 = vmul.f32 %v6370, %v6443
        %v6460 = vmul.f32 %v6372, %v6444
        %v6461 = vmul.f32 %v6374, %v6445
        %v6462 = vmul.f32 %v6376, %v6446
        %v6463 = vmul.f32 %v6378, %v6447
        %v6464 = vmul.f32 %v6380, %v6448
        %v6465 = vmul.f32 %v6382, %v6449
        %v6466 = vmul.f32 %v6384, %v6450
        %v6467 = vmul.f32 %v6386, %v6451
        %v6468 = vmul.f32 %v6388, %v6452
        %v6469 = vpack.c.bf16 %v6454, %v6453
        %v6470 = vpack.c.bf16 %v6456, %v6455
        %v6471 = vpack.c.bf16 %v6458, %v6457
        %v6472 = vpack.c.bf16 %v6460, %v6459
        %v6473 = vpack.c.bf16 %v6462, %v6461
        %v6474 = vpack.c.bf16 %v6464, %v6463
        %v6475 = vpack.c.bf16 %v6466, %v6465
        %v6476 = vpack.c.bf16 %v6468, %v6467
        %6477 = vrot.lane.b32.xlu0 %v5869, 44
        %v6478 = vpop.permute.xlu0 %6477
        %v6481 = vsel %vm1160, %v6469, 0
        %6483 = vmatprep.subr.bf16.mxu0 0
        %6484 = vmatpush1.bf16.msra.mxu0 %v6478
        %6485 = vmatprep.subr.bf16.mxu0 0
        %6486 = vmatpush1.bf16.msra.mxu0 0
        %6487 = vmatprep.subr.bf16.mxu0 0
        %6488 = vmatpush1.bf16.msra.mxu0 0
        %6489 = vmatprep.subr.bf16.mxu0 0
        %6490 = vmatpush1.bf16.msra.mxu0 0
        %6491 = vmatprep.subr.bf16.mxu0 0
        %6492 = vmatpush1.bf16.msra.mxu0 0
        %6493 = vmatprep.subr.bf16.mxu0 0
        %6494 = vmatpush1.bf16.msra.mxu0 0
        %6495 = vmatprep.subr.bf16.mxu0 0
        %6496 = vmatpush1.bf16.msra.mxu0 0
        %6497 = vmatprep.subr.bf16.mxu0 0
        %6498 = vmatpush1.bf16.msra.mxu0 0
        %6499 = vmatprep.subr.bf16.mxu0 0
        %6500 = vmatpush1.bf16.msra.mxu0 0
        %6501 = vmatprep.subr.bf16.mxu0 0
        %6502 = vmatpush1.bf16.msra.mxu0 0
        %6503 = vmatprep.subr.bf16.mxu0 0
        %6504 = vmatpush1.bf16.msra.mxu0 0
        %6505 = vmatprep.subr.bf16.mxu0 0
        %6506 = vmatpush1.bf16.msra.mxu0 0
        %6507 = vmatprep.subr.bf16.mxu0 0
        %6508 = vmatpush1.bf16.msra.mxu0 0
        %6509 = vmatprep.subr.bf16.mxu0 0
        %6510 = vmatpush1.bf16.msra.mxu0 0
        %6511 = vmatprep.subr.bf16.mxu0 0
        %6512 = vmatpush1.bf16.msra.mxu0 0
        %6513 = vmatprep.subr.bf16.mxu0 0
        %6514 = vmatpush1.bf16.msra.mxu0 0
        %6515 = vmatprep.mubr.bf16.mxu0 0
        %6516 = vmatmul.mubr.bf16.gmra.mrb[0].mxu0 %v6481
        %v6517 = vpop.f32.mrb[0].mxu0
        %v6518 = vadd.f32 0.0, %v6517
        %v6519 = vpop.f32.mrb[0].mxu0
        %v6520 = vpop.f32.mrb[0].mxu0
        %v6521 = vadd.f32 0.0, %v6520
        %v6522 = vpop.f32.mrb[0].mxu0
        %6523 = vdwg.mxu0
        %6524 = vrot.lane.b32.xlu0 %v5870, 44
        %v6525 = vpop.permute.xlu0 %6524
        %v6528 = vsel %vm1160, %v6470, 0
        %6530 = vmatprep.subr.bf16.mxu0 0
        %6531 = vmatpush1.bf16.msra.mxu0 %v6525
        %6532 = vmatprep.subr.bf16.mxu0 0
        %6533 = vmatpush1.bf16.msra.mxu0 0
        %6534 = vmatprep.subr.bf16.mxu0 0
        %6535 = vmatpush1.bf16.msra.mxu0 0
        %6536 = vmatprep.subr.bf16.mxu0 0
        %6537 = vmatpush1.bf16.msra.mxu0 0
        %6538 = vmatprep.subr.bf16.mxu0 0
        %6539 = vmatpush1.bf16.msra.mxu0 0
        %6540 = vmatprep.subr.bf16.mxu0 0
        %6541 = vmatpush1.bf16.msra.mxu0 0
        %6542 = vmatprep.subr.bf16.mxu0 0
        %6543 = vmatpush1.bf16.msra.mxu0 0
        %6544 = vmatprep.subr.bf16.mxu0 0
        %6545 = vmatpush1.bf16.msra.mxu0 0
        %6546 = vmatprep.subr.bf16.mxu0 0
        %6547 = vmatpush1.bf16.msra.mxu0 0
        %6548 = vmatprep.subr.bf16.mxu0 0
        %6549 = vmatpush1.bf16.msra.mxu0 0
        %6550 = vmatprep.subr.bf16.mxu0 0
        %6551 = vmatpush1.bf16.msra.mxu0 0
        %6552 = vmatprep.subr.bf16.mxu0 0
        %6553 = vmatpush1.bf16.msra.mxu0 0
        %6554 = vmatprep.subr.bf16.mxu0 0
        %6555 = vmatpush1.bf16.msra.mxu0 0
        %6556 = vmatprep.subr.bf16.mxu0 0
        %6557 = vmatpush1.bf16.msra.mxu0 0
        %6558 = vmatprep.subr.bf16.mxu0 0
        %6559 = vmatpush1.bf16.msra.mxu0 0
        %6560 = vmatprep.subr.bf16.mxu0 0
        %6561 = vmatpush1.bf16.msra.mxu0 0
        %6562 = vmatprep.mubr.bf16.mxu0 0
        %6563 = vmatmul.mubr.bf16.gmra.mrb[0].mxu0 %v6528
        %v6564 = vpop.f32.mrb[0].mxu0
        %v6565 = vadd.f32 0.0, %v6564
        %v6566 = vpop.f32.mrb[0].mxu0
        %v6567 = vpop.f32.mrb[0].mxu0
        %v6568 = vadd.f32 0.0, %v6567
        %v6569 = vpop.f32.mrb[0].mxu0
        %6570 = vdwg.mxu0
        %6571 = vrot.lane.b32.xlu0 %v5871, 44
        %v6572 = vpop.permute.xlu0 %6571
        %v6575 = vsel %vm1160, %v6471, 0
        %6577 = vmatprep.subr.bf16.mxu0 0
        %6578 = vmatpush1.bf16.msra.mxu0 %v6572
        %6579 = vmatprep.subr.bf16.mxu0 0
        %6580 = vmatpush1.bf16.msra.mxu0 0
        %6581 = vmatprep.subr.bf16.mxu0 0
        %6582 = vmatpush1.bf16.msra.mxu0 0
        %6583 = vmatprep.subr.bf16.mxu0 0
        %6584 = vmatpush1.bf16.msra.mxu0 0
        %6585 = vmatprep.subr.bf16.mxu0 0
        %6586 = vmatpush1.bf16.msra.mxu0 0
        %6587 = vmatprep.subr.bf16.mxu0 0
        %6588 = vmatpush1.bf16.msra.mxu0 0
        %6589 = vmatprep.subr.bf16.mxu0 0
        %6590 = vmatpush1.bf16.msra.mxu0 0
        %6591 = vmatprep.subr.bf16.mxu0 0
        %6592 = vmatpush1.bf16.msra.mxu0 0
        %6593 = vmatprep.subr.bf16.mxu0 0
        %6594 = vmatpush1.bf16.msra.mxu0 0
        %6595 = vmatprep.subr.bf16.mxu0 0
        %6596 = vmatpush1.bf16.msra.mxu0 0
        %6597 = vmatprep.subr.bf16.mxu0 0
        %6598 = vmatpush1.bf16.msra.mxu0 0
        %6599 = vmatprep.subr.bf16.mxu0 0
        %6600 = vmatpush1.bf16.msra.mxu0 0
        %6601 = vmatprep.subr.bf16.mxu0 0
        %6602 = vmatpush1.bf16.msra.mxu0 0
        %6603 = vmatprep.subr.bf16.mxu0 0
        %6604 = vmatpush1.bf16.msra.mxu0 0
        %6605 = vmatprep.subr.bf16.mxu0 0
        %6606 = vmatpush1.bf16.msra.mxu0 0
        %6607 = vmatprep.subr.bf16.mxu0 0
        %6608 = vmatpush1.bf16.msra.mxu0 0
        %6609 = vmatprep.mubr.bf16.mxu0 0
        %6610 = vmatmul.mubr.bf16.gmra.mrb[0].mxu0 %v6575
        %v6611 = vpop.f32.mrb[0].mxu0
        %v6612 = vadd.f32 0.0, %v6611
        %v6613 = vpop.f32.mrb[0].mxu0
        %v6614 = vpop.f32.mrb[0].mxu0
        %v6615 = vadd.f32 0.0, %v6614
        %v6616 = vpop.f32.mrb[0].mxu0
        %6617 = vdwg.mxu0
        %6618 = vrot.lane.b32.xlu0 %v5872, 44
        %v6619 = vpop.permute.xlu0 %6618
        %v6622 = vsel %vm1160, %v6472, 0
        %6624 = vmatprep.subr.bf16.mxu0 0
        %6625 = vmatpush1.bf16.msra.mxu0 %v6619
        %6626 = vmatprep.subr.bf16.mxu0 0
        %6627 = vmatpush1.bf16.msra.mxu0 0
        %6628 = vmatprep.subr.bf16.mxu0 0
        %6629 = vmatpush1.bf16.msra.mxu0 0
        %6630 = vmatprep.subr.bf16.mxu0 0
        %6631 = vmatpush1.bf16.msra.mxu0 0
        %6632 = vmatprep.subr.bf16.mxu0 0
        %6633 = vmatpush1.bf16.msra.mxu0 0
        %6634 = vmatprep.subr.bf16.mxu0 0
        %6635 = vmatpush1.bf16.msra.mxu0 0
        %6636 = vmatprep.subr.bf16.mxu0 0
        %6637 = vmatpush1.bf16.msra.mxu0 0
        %6638 = vmatprep.subr.bf16.mxu0 0
        %6639 = vmatpush1.bf16.msra.mxu0 0
        %6640 = vmatprep.subr.bf16.mxu0 0
        %6641 = vmatpush1.bf16.msra.mxu0 0
        %6642 = vmatprep.subr.bf16.mxu0 0
        %6643 = vmatpush1.bf16.msra.mxu0 0
        %6644 = vmatprep.subr.bf16.mxu0 0
        %6645 = vmatpush1.bf16.msra.mxu0 0
        %6646 = vmatprep.subr.bf16.mxu0 0
        %6647 = vmatpush1.bf16.msra.mxu0 0
        %6648 = vmatprep.subr.bf16.mxu0 0
        %6649 = vmatpush1.bf16.msra.mxu0 0
        %6650 = vmatprep.subr.bf16.mxu0 0
        %6651 = vmatpush1.bf16.msra.mxu0 0
        %6652 = vmatprep.subr.bf16.mxu0 0
        %6653 = vmatpush1.bf16.msra.mxu0 0
        %6654 = vmatprep.subr.bf16.mxu0 0
        %6655 = vmatpush1.bf16.msra.mxu0 0
        %6656 = vmatprep.mubr.bf16.mxu0 0
        %6657 = vmatmul.mubr.bf16.gmra.mrb[0].mxu0 %v6622
        %v6658 = vpop.f32.mrb[0].mxu0
        %v6659 = vadd.f32 0.0, %v6658
        %v6660 = vpop.f32.mrb[0].mxu0
        %v6661 = vpop.f32.mrb[0].mxu0
        %v6662 = vadd.f32 0.0, %v6661
        %v6663 = vpop.f32.mrb[0].mxu0
        %6664 = vdwg.mxu0
        %6665 = vrot.lane.b32.xlu0 %v5873, 44
        %v6666 = vpop.permute.xlu0 %6665
        %v6669 = vsel %vm1160, %v6473, 0
        %6671 = vmatprep.subr.bf16.mxu0 0
        %6672 = vmatpush1.bf16.msra.mxu0 %v6666
        %6673 = vmatprep.subr.bf16.mxu0 0
        %6674 = vmatpush1.bf16.msra.mxu0 0
        %6675 = vmatprep.subr.bf16.mxu0 0
        %6676 = vmatpush1.bf16.msra.mxu0 0
        %6677 = vmatprep.subr.bf16.mxu0 0
        %6678 = vmatpush1.bf16.msra.mxu0 0
        %6679 = vmatprep.subr.bf16.mxu0 0
        %6680 = vmatpush1.bf16.msra.mxu0 0
        %6681 = vmatprep.subr.bf16.mxu0 0
        %6682 = vmatpush1.bf16.msra.mxu0 0
        %6683 = vmatprep.subr.bf16.mxu0 0
        %6684 = vmatpush1.bf16.msra.mxu0 0
        %6685 = vmatprep.subr.bf16.mxu0 0
        %6686 = vmatpush1.bf16.msra.mxu0 0
        %6687 = vmatprep.subr.bf16.mxu0 0
        %6688 = vmatpush1.bf16.msra.mxu0 0
        %6689 = vmatprep.subr.bf16.mxu0 0
        %6690 = vmatpush1.bf16.msra.mxu0 0
        %6691 = vmatprep.subr.bf16.mxu0 0
        %6692 = vmatpush1.bf16.msra.mxu0 0
        %6693 = vmatprep.subr.bf16.mxu0 0
        %6694 = vmatpush1.bf16.msra.mxu0 0
        %6695 = vmatprep.subr.bf16.mxu0 0
        %6696 = vmatpush1.bf16.msra.mxu0 0
        %6697 = vmatprep.subr.bf16.mxu0 0
        %6698 = vmatpush1.bf16.msra.mxu0 0
        %6699 = vmatprep.subr.bf16.mxu0 0
        %6700 = vmatpush1.bf16.msra.mxu0 0
        %6701 = vmatprep.subr.bf16.mxu0 0
        %6702 = vmatpush1.bf16.msra.mxu0 0
        %6703 = vmatprep.mubr.bf16.mxu0 0
        %6704 = vmatmul.mubr.bf16.gmra.mrb[0].mxu0 %v6669
        %v6705 = vpop.f32.mrb[0].mxu0
        %v6706 = vadd.f32 0.0, %v6705
        %v6707 = vpop.f32.mrb[0].mxu0
        %v6708 = vpop.f32.mrb[0].mxu0
        %v6709 = vadd.f32 0.0, %v6708
        %v6710 = vpop.f32.mrb[0].mxu0
        %6711 = vdwg.mxu0
        %6712 = vrot.lane.b32.xlu0 %v5874, 44
        %v6713 = vpop.permute.xlu0 %6712
        %v6716 = vsel %vm1160, %v6474, 0
        %6718 = vmatprep.subr.bf16.mxu0 0
        %6719 = vmatpush1.bf16.msra.mxu0 %v6713
        %6720 = vmatprep.subr.bf16.mxu0 0
        %6721 = vmatpush1.bf16.msra.mxu0 0
        %6722 = vmatprep.subr.bf16.mxu0 0
        %6723 = vmatpush1.bf16.msra.mxu0 0
        %6724 = vmatprep.subr.bf16.mxu0 0
        %6725 = vmatpush1.bf16.msra.mxu0 0
        %6726 = vmatprep.subr.bf16.mxu0 0
        %6727 = vmatpush1.bf16.msra.mxu0 0
        %6728 = vmatprep.subr.bf16.mxu0 0
        %6729 = vmatpush1.bf16.msra.mxu0 0
        %6730 = vmatprep.subr.bf16.mxu0 0
        %6731 = vmatpush1.bf16.msra.mxu0 0
        %6732 = vmatprep.subr.bf16.mxu0 0
        %6733 = vmatpush1.bf16.msra.mxu0 0
        %6734 = vmatprep.subr.bf16.mxu0 0
        %6735 = vmatpush1.bf16.msra.mxu0 0
        %6736 = vmatprep.subr.bf16.mxu0 0
        %6737 = vmatpush1.bf16.msra.mxu0 0
        %6738 = vmatprep.subr.bf16.mxu0 0
        %6739 = vmatpush1.bf16.msra.mxu0 0
        %6740 = vmatprep.subr.bf16.mxu0 0
        %6741 = vmatpush1.bf16.msra.mxu0 0
        %6742 = vmatprep.subr.bf16.mxu0 0
        %6743 = vmatpush1.bf16.msra.mxu0 0
        %6744 = vmatprep.subr.bf16.mxu0 0
        %6745 = vmatpush1.bf16.msra.mxu0 0
        %6746 = vmatprep.subr.bf16.mxu0 0
        %6747 = vmatpush1.bf16.msra.mxu0 0
        %6748 = vmatprep.subr.bf16.mxu0 0
        %6749 = vmatpush1.bf16.msra.mxu0 0
        %6750 = vmatprep.mubr.bf16.mxu0 0
        %6751 = vmatmul.mubr.bf16.gmra.mrb[0].mxu0 %v6716
        %v6752 = vpop.f32.mrb[0].mxu0
        %v6753 = vadd.f32 0.0, %v6752
        %v6754 = vpop.f32.mrb[0].mxu0
        %v6755 = vpop.f32.mrb[0].mxu0
        %v6756 = vadd.f32 0.0, %v6755
        %v6757 = vpop.f32.mrb[0].mxu0
        %6758 = vdwg.mxu0
        %6759 = vrot.lane.b32.xlu0 %v5875, 44
        %v6760 = vpop.permute.xlu0 %6759
        %v6763 = vsel %vm1160, %v6475, 0
        %6765 = vmatprep.subr.bf16.mxu0 0
        %6766 = vmatpush1.bf16.msra.mxu0 %v6760
        %6767 = vmatprep.subr.bf16.mxu0 0
        %6768 = vmatpush1.bf16.msra.mxu0 0
        %6769 = vmatprep.subr.bf16.mxu0 0
        %6770 = vmatpush1.bf16.msra.mxu0 0
        %6771 = vmatprep.subr.bf16.mxu0 0
        %6772 = vmatpush1.bf16.msra.mxu0 0
        %6773 = vmatprep.subr.bf16.mxu0 0
        %6774 = vmatpush1.bf16.msra.mxu0 0
        %6775 = vmatprep.subr.bf16.mxu0 0
        %6776 = vmatpush1.bf16.msra.mxu0 0
        %6777 = vmatprep.subr.bf16.mxu0 0
        %6778 = vmatpush1.bf16.msra.mxu0 0
        %6779 = vmatprep.subr.bf16.mxu0 0
        %6780 = vmatpush1.bf16.msra.mxu0 0
        %6781 = vmatprep.subr.bf16.mxu0 0
        %6782 = vmatpush1.bf16.msra.mxu0 0
        %6783 = vmatprep.subr.bf16.mxu0 0
        %6784 = vmatpush1.bf16.msra.mxu0 0
        %6785 = vmatprep.subr.bf16.mxu0 0
        %6786 = vmatpush1.bf16.msra.mxu0 0
        %6787 = vmatprep.subr.bf16.mxu0 0
        %6788 = vmatpush1.bf16.msra.mxu0 0
        %6789 = vmatprep.subr.bf16.mxu0 0
        %6790 = vmatpush1.bf16.msra.mxu0 0
        %6791 = vmatprep.subr.bf16.mxu0 0
        %6792 = vmatpush1.bf16.msra.mxu0 0
        %6793 = vmatprep.subr.bf16.mxu0 0
        %6794 = vmatpush1.bf16.msra.mxu0 0
        %6795 = vmatprep.subr.bf16.mxu0 0
        %6796 = vmatpush1.bf16.msra.mxu0 0
        %6797 = vmatprep.mubr.bf16.mxu0 0
        %6798 = vmatmul.mubr.bf16.gmra.mrb[0].mxu0 %v6763
        %v6799 = vpop.f32.mrb[0].mxu0
        %v6800 = vadd.f32 0.0, %v6799
        %v6801 = vpop.f32.mrb[0].mxu0
        %v6802 = vpop.f32.mrb[0].mxu0
        %v6803 = vadd.f32 0.0, %v6802
        %v6804 = vpop.f32.mrb[0].mxu0
        %6805 = vdwg.mxu0
        %6806 = vrot.lane.b32.xlu0 %v5876, 44
        %v6807 = vpop.permute.xlu0 %6806
        %v6810 = vsel %vm1160, %v6476, 0
        %6812 = vmatprep.subr.bf16.mxu0 0
        %6813 = vmatpush1.bf16.msra.mxu0 %v6807
        %6814 = vmatprep.subr.bf16.mxu0 0
        %6815 = vmatpush1.bf16.msra.mxu0 0
        %6816 = vmatprep.subr.bf16.mxu0 0
        %6817 = vmatpush1.bf16.msra.mxu0 0
        %6818 = vmatprep.subr.bf16.mxu0 0
        %6819 = vmatpush1.bf16.msra.mxu0 0
        %6820 = vmatprep.subr.bf16.mxu0 0
        %6821 = vmatpush1.bf16.msra.mxu0 0
        %6822 = vmatprep.subr.bf16.mxu0 0
        %6823 = vmatpush1.bf16.msra.mxu0 0
        %6824 = vmatprep.subr.bf16.mxu0 0
        %6825 = vmatpush1.bf16.msra.mxu0 0
        %6826 = vmatprep.subr.bf16.mxu0 0
        %6827 = vmatpush1.bf16.msra.mxu0 0
        %6828 = vmatprep.subr.bf16.mxu0 0
        %6829 = vmatpush1.bf16.msra.mxu0 0
        %6830 = vmatprep.subr.bf16.mxu0 0
        %6831 = vmatpush1.bf16.msra.mxu0 0
        %6832 = vmatprep.subr.bf16.mxu0 0
        %6833 = vmatpush1.bf16.msra.mxu0 0
        %6834 = vmatprep.subr.bf16.mxu0 0
        %6835 = vmatpush1.bf16.msra.mxu0 0
        %6836 = vmatprep.subr.bf16.mxu0 0
        %6837 = vmatpush1.bf16.msra.mxu0 0
        %6838 = vmatprep.subr.bf16.mxu0 0
        %6839 = vmatpush1.bf16.msra.mxu0 0
        %6840 = vmatprep.subr.bf16.mxu0 0
        %6841 = vmatpush1.bf16.msra.mxu0 0
        %6842 = vmatprep.subr.bf16.mxu0 0
        %6843 = vmatpush1.bf16.msra.mxu0 0
        %6844 = vmatprep.mubr.bf16.mxu0 0
        %6845 = vmatmul.mubr.bf16.gmra.mrb[0].mxu0 %v6810
        %v6846 = vpop.f32.mrb[0].mxu0
        %v6847 = vadd.f32 0.0, %v6846
        %v6848 = vpop.f32.mrb[0].mxu0
        %v6849 = vpop.f32.mrb[0].mxu0
        %v6850 = vadd.f32 0.0, %v6849
        %v6851 = vpop.f32.mrb[0].mxu0
        %6852 = vdwg.mxu0
        %v6853 = vpack.c.bf16 %v6521, %v6518
        %v6854 = vpack.c.bf16 %v6568, %v6565
        %v6855 = vpack.c.bf16 %v6615, %v6612
        %v6856 = vpack.c.bf16 %v6662, %v6659
        %v6857 = vpack.c.bf16 %v6709, %v6706
        %v6858 = vpack.c.bf16 %v6756, %v6753
        %v6859 = vpack.c.bf16 %v6803, %v6800
        %v6860 = vpack.c.bf16 %v6850, %v6847
        %6869 = vrot.lane.b32.xlu0 %v6853, 20
        %v6870 = vpop.permute.xlu0 %6869
        %6871 = vrot.lane.b32.xlu0 %v6854, 20
        %v6872 = vpop.permute.xlu0 %6871
        %6873 = vrot.lane.b32.xlu0 %v6855, 20
        %v6874 = vpop.permute.xlu0 %6873
        %6875 = vrot.lane.b32.xlu0 %v6856, 20
        %v6876 = vpop.permute.xlu0 %6875
        %6877 = vrot.lane.b32.xlu0 %v6857, 20
        %v6878 = vpop.permute.xlu0 %6877
        %6879 = vrot.lane.b32.xlu0 %v6858, 20
        %v6880 = vpop.permute.xlu0 %6879
        %6881 = vrot.lane.b32.xlu0 %v6859, 20
        %v6882 = vpop.permute.xlu0 %6881
        %6883 = vrot.lane.b32.xlu0 %v6860, 20
        %v6884 = vpop.permute.xlu0 %6883
        %vm6893 = vcmask 195744
        %6894 = vst.msk [vmem:[#allocation3] sm:$0xff] %vm6893, %v6870
        %6895 = vst.msk [vmem:[#allocation3 + $0x8] sm:$0xff] %vm6893, %v6872
        %6896 = vst.msk [vmem:[#allocation3 + $0x10] sm:$0xff] %vm6893, %v6874
        %6897 = vst.msk [vmem:[#allocation3 + $0x18] sm:$0xff] %vm6893, %v6876
        %6898 = vst.msk [vmem:[#allocation3 + $0x20] sm:$0xff] %vm6893, %v6878
        %6899 = vst.msk [vmem:[#allocation3 + $0x28] sm:$0xff] %vm6893, %v6880
        %6900 = vst.msk [vmem:[#allocation3 + $0x30] sm:$0xff] %vm6893, %v6882
        %6901 = vst.msk [vmem:[#allocation3 + $0x38] sm:$0xff] %vm6893, %v6884
        %v6902 = vld [vmem:[#allocation2] sm:$0xff]
        %v6903 = vld [vmem:[#allocation2 + $0x8] sm:$0xff]
        %v6904 = vld [vmem:[#allocation2 + $0x10] sm:$0xff]
        %v6905 = vld [vmem:[#allocation2 + $0x18] sm:$0xff]
        %v6906 = vld [vmem:[#allocation2 + $0x20] sm:$0xff]
        %v6907 = vld [vmem:[#allocation2 + $0x28] sm:$0xff]
        %v6908 = vld [vmem:[#allocation2 + $0x30] sm:$0xff]
        %v6909 = vld [vmem:[#allocation2 + $0x38] sm:$0xff]
        %6911 = vrot.lane.b32.xlu0 %v6902, 104
        %v6912 = vpop.permute.xlu0 %6911
        %6913 = vrot.lane.b32.xlu0 %v6902, 72
        %v6914 = vpop.permute.xlu0 %6913
        %v6916 = vsel %vm762, %v6912, 0
        %v6919 = vsel %vm762, %v6914, 0
        %6921 = vmatprep.subr.bf16.mxu0 0
        %6922 = vmatpush1.bf16.xpose.msra.mxu0 %v6919
        %6923 = vmatprep.subr.bf16.mxu0 0
        %6924 = vmatpush1.bf16.xpose.msra.mxu0 0
        %6925 = vmatprep.subr.bf16.mxu0 0
        %6926 = vmatpush1.bf16.xpose.msra.mxu0 0
        %6927 = vmatprep.subr.bf16.mxu0 0
        %6928 = vmatpush1.bf16.xpose.msra.mxu0 0
        %6929 = vmatprep.subr.bf16.mxu0 0
        %6930 = vmatpush1.bf16.xpose.msra.mxu0 0
        %6931 = vmatprep.subr.bf16.mxu0 0
        %6932 = vmatpush1.bf16.xpose.msra.mxu0 0
        %6933 = vmatprep.subr.bf16.mxu0 0
        %6934 = vmatpush1.bf16.xpose.msra.mxu0 0
        %6935 = vmatprep.subr.bf16.mxu0 0
        %6936 = vmatpush1.bf16.xpose.msra.mxu0 0
        %6937 = vmatprep.subr.bf16.mxu0 0
        %6938 = vmatpush1.bf16.xpose.msra.mxu0 0
        %6939 = vmatprep.subr.bf16.mxu0 0
        %6940 = vmatpush1.bf16.xpose.msra.mxu0 0
        %6941 = vmatprep.subr.bf16.mxu0 0
        %6942 = vmatpush1.bf16.xpose.msra.mxu0 0
        %6943 = vmatprep.subr.bf16.mxu0 0
        %6944 = vmatpush1.bf16.xpose.msra.mxu0 0
        %6945 = vmatprep.subr.bf16.mxu0 0
        %6946 = vmatpush1.bf16.xpose.msra.mxu0 0
        %6947 = vmatprep.subr.bf16.mxu0 0
        %6948 = vmatpush1.bf16.xpose.msra.mxu0 0
        %6949 = vmatprep.subr.bf16.mxu0 0
        %6950 = vmatpush1.bf16.xpose.msra.mxu0 0
        %6951 = vmatprep.subr.bf16.mxu0 0
        %6952 = vmatpush1.bf16.xpose.msra.mxu0 0
        %6953 = vmatprep.mubr.bf16.mxu0 0
        %6954 = vmatmul.mubr.bf16.gmra.mrb[0].mxu0 %v6916
        %v6955 = vpop.f32.mrb[0].mxu0
        %v6956 = vadd.f32 0.0, %v6955
        %v6957 = vpop.f32.mrb[0].mxu0
        %v6958 = vpop.f32.mrb[0].mxu0
        %v6959 = vadd.f32 0.0, %v6958
        %v6960 = vpop.f32.mrb[0].mxu0
        %6961 = vdwg.mxu0
        %6963 = vrot.lane.b32.xlu0 %v6903, 104
        %v6964 = vpop.permute.xlu0 %6963
        %6965 = vrot.lane.b32.xlu0 %v6903, 72
        %v6966 = vpop.permute.xlu0 %6965
        %v6968 = vsel %vm762, %v6964, 0
        %v6971 = vsel %vm762, %v6966, 0
        %6973 = vmatprep.subr.bf16.mxu0 0
        %6974 = vmatpush1.bf16.xpose.msra.mxu0 %v6971
        %6975 = vmatprep.subr.bf16.mxu0 0
        %6976 = vmatpush1.bf16.xpose.msra.mxu0 0
        %6977 = vmatprep.subr.bf16.mxu0 0
        %6978 = vmatpush1.bf16.xpose.msra.mxu0 0
        %6979 = vmatprep.subr.bf16.mxu0 0
        %6980 = vmatpush1.bf16.xpose.msra.mxu0 0
        %6981 = vmatprep.subr.bf16.mxu0 0
        %6982 = vmatpush1.bf16.xpose.msra.mxu0 0
        %6983 = vmatprep.subr.bf16.mxu0 0
        %6984 = vmatpush1.bf16.xpose.msra.mxu0 0
        %6985 = vmatprep.subr.bf16.mxu0 0
        %6986 = vmatpush1.bf16.xpose.msra.mxu0 0
        %6987 = vmatprep.subr.bf16.mxu0 0
        %6988 = vmatpush1.bf16.xpose.msra.mxu0 0
        %6989 = vmatprep.subr.bf16.mxu0 0
        %6990 = vmatpush1.bf16.xpose.msra.mxu0 0
        %6991 = vmatprep.subr.bf16.mxu0 0
        %6992 = vmatpush1.bf16.xpose.msra.mxu0 0
        %6993 = vmatprep.subr.bf16.mxu0 0
        %6994 = vmatpush1.bf16.xpose.msra.mxu0 0
        %6995 = vmatprep.subr.bf16.mxu0 0
        %6996 = vmatpush1.bf16.xpose.msra.mxu0 0
        %6997 = vmatprep.subr.bf16.mxu0 0
        %6998 = vmatpush1.bf16.xpose.msra.mxu0 0
        %6999 = vmatprep.subr.bf16.mxu0 0
        %7000 = vmatpush1.bf16.xpose.msra.mxu0 0
        %7001 = vmatprep.subr.bf16.mxu0 0
        %7002 = vmatpush1.bf16.xpose.msra.mxu0 0
        %7003 = vmatprep.subr.bf16.mxu0 0
        %7004 = vmatpush1.bf16.xpose.msra.mxu0 0
        %7005 = vmatprep.mubr.bf16.mxu0 0
        %7006 = vmatmul.mubr.bf16.gmra.mrb[0].mxu0 %v6968
        %v7007 = vpop.f32.mrb[0].mxu0
        %v7008 = vadd.f32 0.0, %v7007
        %v7009 = vpop.f32.mrb[0].mxu0
        %v7010 = vpop.f32.mrb[0].mxu0
        %v7011 = vadd.f32 0.0, %v7010
        %v7012 = vpop.f32.mrb[0].mxu0
        %7013 = vdwg.mxu0
        %7015 = vrot.lane.b32.xlu0 %v6904, 104
        %v7016 = vpop.permute.xlu0 %7015
        %7017 = vrot.lane.b32.xlu0 %v6904, 72
        %v7018 = vpop.permute.xlu0 %7017
        %v7020 = vsel %vm762, %v7016, 0
        %v7023 = vsel %vm762, %v7018, 0
        %7025 = vmatprep.subr.bf16.mxu0 0
        %7026 = vmatpush1.bf16.xpose.msra.mxu0 %v7023
        %7027 = vmatprep.subr.bf16.mxu0 0
        %7028 = vmatpush1.bf16.xpose.msra.mxu0 0
        %7029 = vmatprep.subr.bf16.mxu0 0
        %7030 = vmatpush1.bf16.xpose.msra.mxu0 0
        %7031 = vmatprep.subr.bf16.mxu0 0
        %7032 = vmatpush1.bf16.xpose.msra.mxu0 0
        %7033 = vmatprep.subr.bf16.mxu0 0
        %7034 = vmatpush1.bf16.xpose.msra.mxu0 0
        %7035 = vmatprep.subr.bf16.mxu0 0
        %7036 = vmatpush1.bf16.xpose.msra.mxu0 0
        %7037 = vmatprep.subr.bf16.mxu0 0
        %7038 = vmatpush1.bf16.xpose.msra.mxu0 0
        %7039 = vmatprep.subr.bf16.mxu0 0
        %7040 = vmatpush1.bf16.xpose.msra.mxu0 0
        %7041 = vmatprep.subr.bf16.mxu0 0
        %7042 = vmatpush1.bf16.xpose.msra.mxu0 0
        %7043 = vmatprep.subr.bf16.mxu0 0
        %7044 = vmatpush1.bf16.xpose.msra.mxu0 0
        %7045 = vmatprep.subr.bf16.mxu0 0
        %7046 = vmatpush1.bf16.xpose.msra.mxu0 0
        %7047 = vmatprep.subr.bf16.mxu0 0
        %7048 = vmatpush1.bf16.xpose.msra.mxu0 0
        %7049 = vmatprep.subr.bf16.mxu0 0
        %7050 = vmatpush1.bf16.xpose.msra.mxu0 0
        %7051 = vmatprep.subr.bf16.mxu0 0
        %7052 = vmatpush1.bf16.xpose.msra.mxu0 0
        %7053 = vmatprep.subr.bf16.mxu0 0
        %7054 = vmatpush1.bf16.xpose.msra.mxu0 0
        %7055 = vmatprep.subr.bf16.mxu0 0
        %7056 = vmatpush1.bf16.xpose.msra.mxu0 0
        %7057 = vmatprep.mubr.bf16.mxu0 0
        %7058 = vmatmul.mubr.bf16.gmra.mrb[0].mxu0 %v7020
        %v7059 = vpop.f32.mrb[0].mxu0
        %v7060 = vadd.f32 0.0, %v7059
        %v7061 = vpop.f32.mrb[0].mxu0
        %v7062 = vpop.f32.mrb[0].mxu0
        %v7063 = vadd.f32 0.0, %v7062
        %v7064 = vpop.f32.mrb[0].mxu0
        %7065 = vdwg.mxu0
        %7067 = vrot.lane.b32.xlu0 %v6905, 104
        %v7068 = vpop.permute.xlu0 %7067
        %7069 = vrot.lane.b32.xlu0 %v6905, 72
        %v7070 = vpop.permute.xlu0 %7069
        %v7072 = vsel %vm762, %v7068, 0
        %v7075 = vsel %vm762, %v7070, 0
        %7077 = vmatprep.subr.bf16.mxu0 0
        %7078 = vmatpush1.bf16.xpose.msra.mxu0 %v7075
        %7079 = vmatprep.subr.bf16.mxu0 0
        %7080 = vmatpush1.bf16.xpose.msra.mxu0 0
        %7081 = vmatprep.subr.bf16.mxu0 0
        %7082 = vmatpush1.bf16.xpose.msra.mxu0 0
        %7083 = vmatprep.subr.bf16.mxu0 0
        %7084 = vmatpush1.bf16.xpose.msra.mxu0 0
        %7085 = vmatprep.subr.bf16.mxu0 0
        %7086 = vmatpush1.bf16.xpose.msra.mxu0 0
        %7087 = vmatprep.subr.bf16.mxu0 0
        %7088 = vmatpush1.bf16.xpose.msra.mxu0 0
        %7089 = vmatprep.subr.bf16.mxu0 0
        %7090 = vmatpush1.bf16.xpose.msra.mxu0 0
        %7091 = vmatprep.subr.bf16.mxu0 0
        %7092 = vmatpush1.bf16.xpose.msra.mxu0 0
        %7093 = vmatprep.subr.bf16.mxu0 0
        %7094 = vmatpush1.bf16.xpose.msra.mxu0 0
        %7095 = vmatprep.subr.bf16.mxu0 0
        %7096 = vmatpush1.bf16.xpose.msra.mxu0 0
        %7097 = vmatprep.subr.bf16.mxu0 0
        %7098 = vmatpush1.bf16.xpose.msra.mxu0 0
        %7099 = vmatprep.subr.bf16.mxu0 0
        %7100 = vmatpush1.bf16.xpose.msra.mxu0 0
        %7101 = vmatprep.subr.bf16.mxu0 0
        %7102 = vmatpush1.bf16.xpose.msra.mxu0 0
        %7103 = vmatprep.subr.bf16.mxu0 0
        %7104 = vmatpush1.bf16.xpose.msra.mxu0 0
        %7105 = vmatprep.subr.bf16.mxu0 0
        %7106 = vmatpush1.bf16.xpose.msra.mxu0 0
        %7107 = vmatprep.subr.bf16.mxu0 0
        %7108 = vmatpush1.bf16.xpose.msra.mxu0 0
        %7109 = vmatprep.mubr.bf16.mxu0 0
        %7110 = vmatmul.mubr.bf16.gmra.mrb[0].mxu0 %v7072
        %v7111 = vpop.f32.mrb[0].mxu0
        %v7112 = vadd.f32 0.0, %v7111
        %v7113 = vpop.f32.mrb[0].mxu0
        %v7114 = vpop.f32.mrb[0].mxu0
        %v7115 = vadd.f32 0.0, %v7114
        %v7116 = vpop.f32.mrb[0].mxu0
        %7117 = vdwg.mxu0
        %7119 = vrot.lane.b32.xlu0 %v6906, 104
        %v7120 = vpop.permute.xlu0 %7119
        %7121 = vrot.lane.b32.xlu0 %v6906, 72
        %v7122 = vpop.permute.xlu0 %7121
        %v7124 = vsel %vm762, %v7120, 0
        %v7127 = vsel %vm762, %v7122, 0
        %7129 = vmatprep.subr.bf16.mxu0 0
        %7130 = vmatpush1.bf16.xpose.msra.mxu0 %v7127
        %7131 = vmatprep.subr.bf16.mxu0 0
        %7132 = vmatpush1.bf16.xpose.msra.mxu0 0
        %7133 = vmatprep.subr.bf16.mxu0 0
        %7134 = vmatpush1.bf16.xpose.msra.mxu0 0
        %7135 = vmatprep.subr.bf16.mxu0 0
        %7136 = vmatpush1.bf16.xpose.msra.mxu0 0
        %7137 = vmatprep.subr.bf16.mxu0 0
        %7138 = vmatpush1.bf16.xpose.msra.mxu0 0
        %7139 = vmatprep.subr.bf16.mxu0 0
        %7140 = vmatpush1.bf16.xpose.msra.mxu0 0
        %7141 = vmatprep.subr.bf16.mxu0 0
        %7142 = vmatpush1.bf16.xpose.msra.mxu0 0
        %7143 = vmatprep.subr.bf16.mxu0 0
        %7144 = vmatpush1.bf16.xpose.msra.mxu0 0
        %7145 = vmatprep.subr.bf16.mxu0 0
        %7146 = vmatpush1.bf16.xpose.msra.mxu0 0
        %7147 = vmatprep.subr.bf16.mxu0 0
        %7148 = vmatpush1.bf16.xpose.msra.mxu0 0
        %7149 = vmatprep.subr.bf16.mxu0 0
        %7150 = vmatpush1.bf16.xpose.msra.mxu0 0
        %7151 = vmatprep.subr.bf16.mxu0 0
        %7152 = vmatpush1.bf16.xpose.msra.mxu0 0
        %7153 = vmatprep.subr.bf16.mxu0 0
        %7154 = vmatpush1.bf16.xpose.msra.mxu0 0
        %7155 = vmatprep.subr.bf16.mxu0 0
        %7156 = vmatpush1.bf16.xpose.msra.mxu0 0
        %7157 = vmatprep.subr.bf16.mxu0 0
        %7158 = vmatpush1.bf16.xpose.msra.mxu0 0
        %7159 = vmatprep.subr.bf16.mxu0 0
        %7160 = vmatpush1.bf16.xpose.msra.mxu0 0
        %7161 = vmatprep.mubr.bf16.mxu0 0
        %7162 = vmatmul.mubr.bf16.gmra.mrb[0].mxu0 %v7124
        %v7163 = vpop.f32.mrb[0].mxu0
        %v7164 = vadd.f32 0.0, %v7163
        %v7165 = vpop.f32.mrb[0].mxu0
        %v7166 = vpop.f32.mrb[0].mxu0
        %v7167 = vadd.f32 0.0, %v7166
        %v7168 = vpop.f32.mrb[0].mxu0
        %7169 = vdwg.mxu0
        %7171 = vrot.lane.b32.xlu0 %v6907, 104
        %v7172 = vpop.permute.xlu0 %7171
        %7173 = vrot.lane.b32.xlu0 %v6907, 72
        %v7174 = vpop.permute.xlu0 %7173
        %v7176 = vsel %vm762, %v7172, 0
        %v7179 = vsel %vm762, %v7174, 0
        %7181 = vmatprep.subr.bf16.mxu0 0
        %7182 = vmatpush1.bf16.xpose.msra.mxu0 %v7179
        %7183 = vmatprep.subr.bf16.mxu0 0
        %7184 = vmatpush1.bf16.xpose.msra.mxu0 0
        %7185 = vmatprep.subr.bf16.mxu0 0
        %7186 = vmatpush1.bf16.xpose.msra.mxu0 0
        %7187 = vmatprep.subr.bf16.mxu0 0
        %7188 = vmatpush1.bf16.xpose.msra.mxu0 0
        %7189 = vmatprep.subr.bf16.mxu0 0
        %7190 = vmatpush1.bf16.xpose.msra.mxu0 0
        %7191 = vmatprep.subr.bf16.mxu0 0
        %7192 = vmatpush1.bf16.xpose.msra.mxu0 0
        %7193 = vmatprep.subr.bf16.mxu0 0
        %7194 = vmatpush1.bf16.xpose.msra.mxu0 0
        %7195 = vmatprep.subr.bf16.mxu0 0
        %7196 = vmatpush1.bf16.xpose.msra.mxu0 0
        %7197 = vmatprep.subr.bf16.mxu0 0
        %7198 = vmatpush1.bf16.xpose.msra.mxu0 0
        %7199 = vmatprep.subr.bf16.mxu0 0
        %7200 = vmatpush1.bf16.xpose.msra.mxu0 0
        %7201 = vmatprep.subr.bf16.mxu0 0
        %7202 = vmatpush1.bf16.xpose.msra.mxu0 0
        %7203 = vmatprep.subr.bf16.mxu0 0
        %7204 = vmatpush1.bf16.xpose.msra.mxu0 0
        %7205 = vmatprep.subr.bf16.mxu0 0
        %7206 = vmatpush1.bf16.xpose.msra.mxu0 0
        %7207 = vmatprep.subr.bf16.mxu0 0
        %7208 = vmatpush1.bf16.xpose.msra.mxu0 0
        %7209 = vmatprep.subr.bf16.mxu0 0
        %7210 = vmatpush1.bf16.xpose.msra.mxu0 0
        %7211 = vmatprep.subr.bf16.mxu0 0
        %7212 = vmatpush1.bf16.xpose.msra.mxu0 0
        %7213 = vmatprep.mubr.bf16.mxu0 0
        %7214 = vmatmul.mubr.bf16.gmra.mrb[0].mxu0 %v7176
        %v7215 = vpop.f32.mrb[0].mxu0
        %v7216 = vadd.f32 0.0, %v7215
        %v7217 = vpop.f32.mrb[0].mxu0
        %v7218 = vpop.f32.mrb[0].mxu0
        %v7219 = vadd.f32 0.0, %v7218
        %v7220 = vpop.f32.mrb[0].mxu0
        %7221 = vdwg.mxu0
        %7223 = vrot.lane.b32.xlu0 %v6908, 104
        %v7224 = vpop.permute.xlu0 %7223
        %7225 = vrot.lane.b32.xlu0 %v6908, 72
        %v7226 = vpop.permute.xlu0 %7225
        %v7228 = vsel %vm762, %v7224, 0
        %v7231 = vsel %vm762, %v7226, 0
        %7233 = vmatprep.subr.bf16.mxu0 0
        %7234 = vmatpush1.bf16.xpose.msra.mxu0 %v7231
        %7235 = vmatprep.subr.bf16.mxu0 0
        %7236 = vmatpush1.bf16.xpose.msra.mxu0 0
        %7237 = vmatprep.subr.bf16.mxu0 0
        %7238 = vmatpush1.bf16.xpose.msra.mxu0 0
        %7239 = vmatprep.subr.bf16.mxu0 0
        %7240 = vmatpush1.bf16.xpose.msra.mxu0 0
        %7241 = vmatprep.subr.bf16.mxu0 0
        %7242 = vmatpush1.bf16.xpose.msra.mxu0 0
        %7243 = vmatprep.subr.bf16.mxu0 0
        %7244 = vmatpush1.bf16.xpose.msra.mxu0 0
        %7245 = vmatprep.subr.bf16.mxu0 0
        %7246 = vmatpush1.bf16.xpose.msra.mxu0 0
        %7247 = vmatprep.subr.bf16.mxu0 0
        %7248 = vmatpush1.bf16.xpose.msra.mxu0 0
        %7249 = vmatprep.subr.bf16.mxu0 0
        %7250 = vmatpush1.bf16.xpose.msra.mxu0 0
        %7251 = vmatprep.subr.bf16.mxu0 0
        %7252 = vmatpush1.bf16.xpose.msra.mxu0 0
        %7253 = vmatprep.subr.bf16.mxu0 0
        %7254 = vmatpush1.bf16.xpose.msra.mxu0 0
        %7255 = vmatprep.subr.bf16.mxu0 0
        %7256 = vmatpush1.bf16.xpose.msra.mxu0 0
        %7257 = vmatprep.subr.bf16.mxu0 0
        %7258 = vmatpush1.bf16.xpose.msra.mxu0 0
        %7259 = vmatprep.subr.bf16.mxu0 0
        %7260 = vmatpush1.bf16.xpose.msra.mxu0 0
        %7261 = vmatprep.subr.bf16.mxu0 0
        %7262 = vmatpush1.bf16.xpose.msra.mxu0 0
        %7263 = vmatprep.subr.bf16.mxu0 0
        %7264 = vmatpush1.bf16.xpose.msra.mxu0 0
        %7265 = vmatprep.mubr.bf16.mxu0 0
        %7266 = vmatmul.mubr.bf16.gmra.mrb[0].mxu0 %v7228
        %v7267 = vpop.f32.mrb[0].mxu0
        %v7268 = vadd.f32 0.0, %v7267
        %v7269 = vpop.f32.mrb[0].mxu0
        %v7270 = vpop.f32.mrb[0].mxu0
        %v7271 = vadd.f32 0.0, %v7270
        %v7272 = vpop.f32.mrb[0].mxu0
        %7273 = vdwg.mxu0
        %7275 = vrot.lane.b32.xlu0 %v6909, 104
        %v7276 = vpop.permute.xlu0 %7275
        %7277 = vrot.lane.b32.xlu0 %v6909, 72
        %v7278 = vpop.permute.xlu0 %7277
        %v7280 = vsel %vm762, %v7276, 0
        %v7283 = vsel %vm762, %v7278, 0
        %7285 = vmatprep.subr.bf16.mxu0 0
        %7286 = vmatpush1.bf16.xpose.msra.mxu0 %v7283
        %7287 = vmatprep.subr.bf16.mxu0 0
        %7288 = vmatpush1.bf16.xpose.msra.mxu0 0
        %7289 = vmatprep.subr.bf16.mxu0 0
        %7290 = vmatpush1.bf16.xpose.msra.mxu0 0
        %7291 = vmatprep.subr.bf16.mxu0 0
        %7292 = vmatpush1.bf16.xpose.msra.mxu0 0
        %7293 = vmatprep.subr.bf16.mxu0 0
        %7294 = vmatpush1.bf16.xpose.msra.mxu0 0
        %7295 = vmatprep.subr.bf16.mxu0 0
        %7296 = vmatpush1.bf16.xpose.msra.mxu0 0
        %7297 = vmatprep.subr.bf16.mxu0 0
        %7298 = vmatpush1.bf16.xpose.msra.mxu0 0
        %7299 = vmatprep.subr.bf16.mxu0 0
        %7300 = vmatpush1.bf16.xpose.msra.mxu0 0
        %7301 = vmatprep.subr.bf16.mxu0 0
        %7302 = vmatpush1.bf16.xpose.msra.mxu0 0
        %7303 = vmatprep.subr.bf16.mxu0 0
        %7304 = vmatpush1.bf16.xpose.msra.mxu0 0
        %7305 = vmatprep.subr.bf16.mxu0 0
        %7306 = vmatpush1.bf16.xpose.msra.mxu0 0
        %7307 = vmatprep.subr.bf16.mxu0 0
        %7308 = vmatpush1.bf16.xpose.msra.mxu0 0
        %7309 = vmatprep.subr.bf16.mxu0 0
        %7310 = vmatpush1.bf16.xpose.msra.mxu0 0
        %7311 = vmatprep.subr.bf16.mxu0 0
        %7312 = vmatpush1.bf16.xpose.msra.mxu0 0
        %7313 = vmatprep.subr.bf16.mxu0 0
        %7314 = vmatpush1.bf16.xpose.msra.mxu0 0
        %7315 = vmatprep.subr.bf16.mxu0 0
        %7316 = vmatpush1.bf16.xpose.msra.mxu0 0
        %7317 = vmatprep.mubr.bf16.mxu0 0
        %7318 = vmatmul.mubr.bf16.gmra.mrb[0].mxu0 %v7280
        %v7319 = vpop.f32.mrb[0].mxu0
        %v7320 = vadd.f32 0.0, %v7319
        %v7321 = vpop.f32.mrb[0].mxu0
        %v7322 = vpop.f32.mrb[0].mxu0
        %v7323 = vadd.f32 0.0, %v7322
        %v7324 = vpop.f32.mrb[0].mxu0
        %7325 = vdwg.mxu0
        %v7326 = vsel %vm1160, %v6956, -inf
        %7327 = vmax.xlane.f32.xlu0 %v7326
        %v7328 = vpop.xlane.xlu0 %7327
        %v7329 = vsel %vm1160, %v6959, -inf
        %7330 = vmax.xlane.f32.xlu0 %v7329
        %v7331 = vpop.xlane.xlu0 %7330
        %v7332 = vsel %vm1160, %v7008, -inf
        %7333 = vmax.xlane.f32.xlu0 %v7332
        %v7334 = vpop.xlane.xlu0 %7333
        %v7335 = vsel %vm1160, %v7011, -inf
        %7336 = vmax.xlane.f32.xlu0 %v7335
        %v7337 = vpop.xlane.xlu0 %7336
        %v7338 = vsel %vm1160, %v7060, -inf
        %7339 = vmax.xlane.f32.xlu0 %v7338
        %v7340 = vpop.xlane.xlu0 %7339
        %v7341 = vsel %vm1160, %v7063, -inf
        %7342 = vmax.xlane.f32.xlu0 %v7341
        %v7343 = vpop.xlane.xlu0 %7342
        %v7344 = vsel %vm1160, %v7112, -inf
        %7345 = vmax.xlane.f32.xlu0 %v7344
        %v7346 = vpop.xlane.xlu0 %7345
        %v7347 = vsel %vm1160, %v7115, -inf
        %7348 = vmax.xlane.f32.xlu0 %v7347
        %v7349 = vpop.xlane.xlu0 %7348
        %v7350 = vsel %vm1160, %v7164, -inf
        %7351 = vmax.xlane.f32.xlu0 %v7350
        %v7352 = vpop.xlane.xlu0 %7351
        %v7353 = vsel %vm1160, %v7167, -inf
        %7354 = vmax.xlane.f32.xlu0 %v7353
        %v7355 = vpop.xlane.xlu0 %7354
        %v7356 = vsel %vm1160, %v7216, -inf
        %7357 = vmax.xlane.f32.xlu0 %v7356
        %v7358 = vpop.xlane.xlu0 %7357
        %v7359 = vsel %vm1160, %v7219, -inf
        %7360 = vmax.xlane.f32.xlu0 %v7359
        %v7361 = vpop.xlane.xlu0 %7360
        %v7362 = vsel %vm1160, %v7268, -inf
        %7363 = vmax.xlane.f32.xlu0 %v7362
        %v7364 = vpop.xlane.xlu0 %7363
        %v7365 = vsel %vm1160, %v7271, -inf
        %7366 = vmax.xlane.f32.xlu0 %v7365
        %v7367 = vpop.xlane.xlu0 %7366
        %v7368 = vsel %vm1160, %v7320, -inf
        %7369 = vmax.xlane.f32.xlu0 %v7368
        %v7370 = vpop.xlane.xlu0 %7369
        %v7371 = vsel %vm1160, %v7323, -inf
        %7372 = vmax.xlane.f32.xlu0 %v7371
        %v7373 = vpop.xlane.xlu0 %7372
        %v7374 = vsub.f32 %v6956, %v7328
        %v7375 = vsub.f32 %v6959, %v7331
        %v7376 = vsub.f32 %v7008, %v7334
        %v7377 = vsub.f32 %v7011, %v7337
        %v7378 = vsub.f32 %v7060, %v7340
        %v7379 = vsub.f32 %v7063, %v7343
        %v7380 = vsub.f32 %v7112, %v7346
        %v7381 = vsub.f32 %v7115, %v7349
        %v7382 = vsub.f32 %v7164, %v7352
        %v7383 = vsub.f32 %v7167, %v7355
        %v7384 = vsub.f32 %v7216, %v7358
        %v7385 = vsub.f32 %v7219, %v7361
        %v7386 = vsub.f32 %v7268, %v7364
        %v7387 = vsub.f32 %v7271, %v7367
        %v7388 = vsub.f32 %v7320, %v7370
        %v7389 = vsub.f32 %v7323, %v7373
        %v7390 = vmul.f32 %v7374, 1.442695
        %v7391 = vpow.pop %v7390
        %v7392 = vmul.f32 %v7375, 1.442695
        %v7393 = vpow.pop %v7392
        %v7394 = vmul.f32 %v7376, 1.442695
        %v7395 = vpow.pop %v7394
        %v7396 = vmul.f32 %v7377, 1.442695
        %v7397 = vpow.pop %v7396
        %v7398 = vmul.f32 %v7378, 1.442695
        %v7399 = vpow.pop %v7398
        %v7400 = vmul.f32 %v7379, 1.442695
        %v7401 = vpow.pop %v7400
        %v7402 = vmul.f32 %v7380, 1.442695
        %v7403 = vpow.pop %v7402
        %v7404 = vmul.f32 %v7381, 1.442695
        %v7405 = vpow.pop %v7404
        %v7406 = vmul.f32 %v7382, 1.442695
        %v7407 = vpow.pop %v7406
        %v7408 = vmul.f32 %v7383, 1.442695
        %v7409 = vpow.pop %v7408
        %v7410 = vmul.f32 %v7384, 1.442695
        %v7411 = vpow.pop %v7410
        %v7412 = vmul.f32 %v7385, 1.442695
        %v7413 = vpow.pop %v7412
        %v7414 = vmul.f32 %v7386, 1.442695
        %v7415 = vpow.pop %v7414
        %v7416 = vmul.f32 %v7387, 1.442695
        %v7417 = vpow.pop %v7416
        %v7418 = vmul.f32 %v7388, 1.442695
        %v7419 = vpow.pop %v7418
        %v7420 = vmul.f32 %v7389, 1.442695
        %v7421 = vpow.pop %v7420
        %v7422 = vsel %vm1160, %v7391, 0.0
        %7423 = vadd.xlane.f32.xlu0 %v7422
        %v7424 = vpop.xlane.xlu0 %7423
        %v7425 = vsel %vm1160, %v7393, 0.0
        %7426 = vadd.xlane.f32.xlu0 %v7425
        %v7427 = vpop.xlane.xlu0 %7426
        %v7428 = vsel %vm1160, %v7395, 0.0
        %7429 = vadd.xlane.f32.xlu0 %v7428
        %v7430 = vpop.xlane.xlu0 %7429
        %v7431 = vsel %vm1160, %v7397, 0.0
        %7432 = vadd.xlane.f32.xlu0 %v7431
        %v7433 = vpop.xlane.xlu0 %7432
        %v7434 = vsel %vm1160, %v7399, 0.0
        %7435 = vadd.xlane.f32.xlu0 %v7434
        %v7436 = vpop.xlane.xlu0 %7435
        %v7437 = vsel %vm1160, %v7401, 0.0
        %7438 = vadd.xlane.f32.xlu0 %v7437
        %v7439 = vpop.xlane.xlu0 %7438
        %v7440 = vsel %vm1160, %v7403, 0.0
        %7441 = vadd.xlane.f32.xlu0 %v7440
        %v7442 = vpop.xlane.xlu0 %7441
        %v7443 = vsel %vm1160, %v7405, 0.0
        %7444 = vadd.xlane.f32.xlu0 %v7443
        %v7445 = vpop.xlane.xlu0 %7444
        %v7446 = vsel %vm1160, %v7407, 0.0
        %7447 = vadd.xlane.f32.xlu0 %v7446
        %v7448 = vpop.xlane.xlu0 %7447
        %v7449 = vsel %vm1160, %v7409, 0.0
        %7450 = vadd.xlane.f32.xlu0 %v7449
        %v7451 = vpop.xlane.xlu0 %7450
        %v7452 = vsel %vm1160, %v7411, 0.0
        %7453 = vadd.xlane.f32.xlu0 %v7452
        %v7454 = vpop.xlane.xlu0 %7453
        %v7455 = vsel %vm1160, %v7413, 0.0
        %7456 = vadd.xlane.f32.xlu0 %v7455
        %v7457 = vpop.xlane.xlu0 %7456
        %v7458 = vsel %vm1160, %v7415, 0.0
        %7459 = vadd.xlane.f32.xlu0 %v7458
        %v7460 = vpop.xlane.xlu0 %7459
        %v7461 = vsel %vm1160, %v7417, 0.0
        %7462 = vadd.xlane.f32.xlu0 %v7461
        %v7463 = vpop.xlane.xlu0 %7462
        %v7464 = vsel %vm1160, %v7419, 0.0
        %7465 = vadd.xlane.f32.xlu0 %v7464
        %v7466 = vpop.xlane.xlu0 %7465
        %v7467 = vsel %vm1160, %v7421, 0.0
        %7468 = vadd.xlane.f32.xlu0 %v7467
        %v7469 = vpop.xlane.xlu0 %7468
        %v7470 = vrcp.pop %v7424
        %v7471 = vrcp.pop %v7427
        %v7472 = vrcp.pop %v7430
        %v7473 = vrcp.pop %v7433
        %v7474 = vrcp.pop %v7436
        %v7475 = vrcp.pop %v7439
        %v7476 = vrcp.pop %v7442
        %v7477 = vrcp.pop %v7445
        %v7478 = vrcp.pop %v7448
        %v7479 = vrcp.pop %v7451
        %v7480 = vrcp.pop %v7454
        %v7481 = vrcp.pop %v7457
        %v7482 = vrcp.pop %v7460
        %v7483 = vrcp.pop %v7463
        %v7484 = vrcp.pop %v7466
        %v7485 = vrcp.pop %v7469
        %v7486 = vmul.f32 %v7391, %v7470
        %v7487 = vmul.f32 %v7393, %v7471
        %v7488 = vmul.f32 %v7395, %v7472
        %v7489 = vmul.f32 %v7397, %v7473
        %v7490 = vmul.f32 %v7399, %v7474
        %v7491 = vmul.f32 %v7401, %v7475
        %v7492 = vmul.f32 %v7403, %v7476
        %v7493 = vmul.f32 %v7405, %v7477
        %v7494 = vmul.f32 %v7407, %v7478
        %v7495 = vmul.f32 %v7409, %v7479
        %v7496 = vmul.f32 %v7411, %v7480
        %v7497 = vmul.f32 %v7413, %v7481
        %v7498 = vmul.f32 %v7415, %v7482
        %v7499 = vmul.f32 %v7417, %v7483
        %v7500 = vmul.f32 %v7419, %v7484
        %v7501 = vmul.f32 %v7421, %v7485
        %v7502 = vpack.c.bf16 %v7487, %v7486
        %v7503 = vpack.c.bf16 %v7489, %v7488
        %v7504 = vpack.c.bf16 %v7491, %v7490
        %v7505 = vpack.c.bf16 %v7493, %v7492
        %v7506 = vpack.c.bf16 %v7495, %v7494
        %v7507 = vpack.c.bf16 %v7497, %v7496
        %v7508 = vpack.c.bf16 %v7499, %v7498
        %v7509 = vpack.c.bf16 %v7501, %v7500
        %7510 = vrot.lane.b32.xlu0 %v6902, 40
        %v7511 = vpop.permute.xlu0 %7510
        %v7514 = vsel %vm1160, %v7502, 0
        %7516 = vmatprep.subr.bf16.mxu0 0
        %7517 = vmatpush1.bf16.msra.mxu0 %v7511
        %7518 = vmatprep.subr.bf16.mxu0 0
        %7519 = vmatpush1.bf16.msra.mxu0 0
        %7520 = vmatprep.subr.bf16.mxu0 0
        %7521 = vmatpush1.bf16.msra.mxu0 0
        %7522 = vmatprep.subr.bf16.mxu0 0
        %7523 = vmatpush1.bf16.msra.mxu0 0
        %7524 = vmatprep.subr.bf16.mxu0 0
        %7525 = vmatpush1.bf16.msra.mxu0 0
        %7526 = vmatprep.subr.bf16.mxu0 0
        %7527 = vmatpush1.bf16.msra.mxu0 0
        %7528 = vmatprep.subr.bf16.mxu0 0
        %7529 = vmatpush1.bf16.msra.mxu0 0
        %7530 = vmatprep.subr.bf16.mxu0 0
        %7531 = vmatpush1.bf16.msra.mxu0 0
        %7532 = vmatprep.subr.bf16.mxu0 0
        %7533 = vmatpush1.bf16.msra.mxu0 0
        %7534 = vmatprep.subr.bf16.mxu0 0
        %7535 = vmatpush1.bf16.msra.mxu0 0
        %7536 = vmatprep.subr.bf16.mxu0 0
        %7537 = vmatpush1.bf16.msra.mxu0 0
        %7538 = vmatprep.subr.bf16.mxu0 0
        %7539 = vmatpush1.bf16.msra.mxu0 0
        %7540 = vmatprep.subr.bf16.mxu0 0
        %7541 = vmatpush1.bf16.msra.mxu0 0
        %7542 = vmatprep.subr.bf16.mxu0 0
        %7543 = vmatpush1.bf16.msra.mxu0 0
        %7544 = vmatprep.subr.bf16.mxu0 0
        %7545 = vmatpush1.bf16.msra.mxu0 0
        %7546 = vmatprep.subr.bf16.mxu0 0
        %7547 = vmatpush1.bf16.msra.mxu0 0
        %7548 = vmatprep.mubr.bf16.mxu0 0
        %7549 = vmatmul.mubr.bf16.gmra.mrb[0].mxu0 %v7514
        %v7550 = vpop.f32.mrb[0].mxu0
        %v7551 = vadd.f32 0.0, %v7550
        %v7552 = vpop.f32.mrb[0].mxu0
        %v7553 = vpop.f32.mrb[0].mxu0
        %v7554 = vadd.f32 0.0, %v7553
        %v7555 = vpop.f32.mrb[0].mxu0
        %7556 = vdwg.mxu0
        %7557 = vrot.lane.b32.xlu0 %v6903, 40
        %v7558 = vpop.permute.xlu0 %7557
        %v7561 = vsel %vm1160, %v7503, 0
        %7563 = vmatprep.subr.bf16.mxu0 0
        %7564 = vmatpush1.bf16.msra.mxu0 %v7558
        %7565 = vmatprep.subr.bf16.mxu0 0
        %7566 = vmatpush1.bf16.msra.mxu0 0
        %7567 = vmatprep.subr.bf16.mxu0 0
        %7568 = vmatpush1.bf16.msra.mxu0 0
        %7569 = vmatprep.subr.bf16.mxu0 0
        %7570 = vmatpush1.bf16.msra.mxu0 0
        %7571 = vmatprep.subr.bf16.mxu0 0
        %7572 = vmatpush1.bf16.msra.mxu0 0
        %7573 = vmatprep.subr.bf16.mxu0 0
        %7574 = vmatpush1.bf16.msra.mxu0 0
        %7575 = vmatprep.subr.bf16.mxu0 0
        %7576 = vmatpush1.bf16.msra.mxu0 0
        %7577 = vmatprep.subr.bf16.mxu0 0
        %7578 = vmatpush1.bf16.msra.mxu0 0
        %7579 = vmatprep.subr.bf16.mxu0 0
        %7580 = vmatpush1.bf16.msra.mxu0 0
        %7581 = vmatprep.subr.bf16.mxu0 0
        %7582 = vmatpush1.bf16.msra.mxu0 0
        %7583 = vmatprep.subr.bf16.mxu0 0
        %7584 = vmatpush1.bf16.msra.mxu0 0
        %7585 = vmatprep.subr.bf16.mxu0 0
        %7586 = vmatpush1.bf16.msra.mxu0 0
        %7587 = vmatprep.subr.bf16.mxu0 0
        %7588 = vmatpush1.bf16.msra.mxu0 0
        %7589 = vmatprep.subr.bf16.mxu0 0
        %7590 = vmatpush1.bf16.msra.mxu0 0
        %7591 = vmatprep.subr.bf16.mxu0 0
        %7592 = vmatpush1.bf16.msra.mxu0 0
        %7593 = vmatprep.subr.bf16.mxu0 0
        %7594 = vmatpush1.bf16.msra.mxu0 0
        %7595 = vmatprep.mubr.bf16.mxu0 0
        %7596 = vmatmul.mubr.bf16.gmra.mrb[0].mxu0 %v7561
        %v7597 = vpop.f32.mrb[0].mxu0
        %v7598 = vadd.f32 0.0, %v7597
        %v7599 = vpop.f32.mrb[0].mxu0
        %v7600 = vpop.f32.mrb[0].mxu0
        %v7601 = vadd.f32 0.0, %v7600
        %v7602 = vpop.f32.mrb[0].mxu0
        %7603 = vdwg.mxu0
        %7604 = vrot.lane.b32.xlu0 %v6904, 40
        %v7605 = vpop.permute.xlu0 %7604
        %v7608 = vsel %vm1160, %v7504, 0
        %7610 = vmatprep.subr.bf16.mxu0 0
        %7611 = vmatpush1.bf16.msra.mxu0 %v7605
        %7612 = vmatprep.subr.bf16.mxu0 0
        %7613 = vmatpush1.bf16.msra.mxu0 0
        %7614 = vmatprep.subr.bf16.mxu0 0
        %7615 = vmatpush1.bf16.msra.mxu0 0
        %7616 = vmatprep.subr.bf16.mxu0 0
        %7617 = vmatpush1.bf16.msra.mxu0 0
        %7618 = vmatprep.subr.bf16.mxu0 0
        %7619 = vmatpush1.bf16.msra.mxu0 0
        %7620 = vmatprep.subr.bf16.mxu0 0
        %7621 = vmatpush1.bf16.msra.mxu0 0
        %7622 = vmatprep.subr.bf16.mxu0 0
        %7623 = vmatpush1.bf16.msra.mxu0 0
        %7624 = vmatprep.subr.bf16.mxu0 0
        %7625 = vmatpush1.bf16.msra.mxu0 0
        %7626 = vmatprep.subr.bf16.mxu0 0
        %7627 = vmatpush1.bf16.msra.mxu0 0
        %7628 = vmatprep.subr.bf16.mxu0 0
        %7629 = vmatpush1.bf16.msra.mxu0 0
        %7630 = vmatprep.subr.bf16.mxu0 0
        %7631 = vmatpush1.bf16.msra.mxu0 0
        %7632 = vmatprep.subr.bf16.mxu0 0
        %7633 = vmatpush1.bf16.msra.mxu0 0
        %7634 = vmatprep.subr.bf16.mxu0 0
        %7635 = vmatpush1.bf16.msra.mxu0 0
        %7636 = vmatprep.subr.bf16.mxu0 0
        %7637 = vmatpush1.bf16.msra.mxu0 0
        %7638 = vmatprep.subr.bf16.mxu0 0
        %7639 = vmatpush1.bf16.msra.mxu0 0
        %7640 = vmatprep.subr.bf16.mxu0 0
        %7641 = vmatpush1.bf16.msra.mxu0 0
        %7642 = vmatprep.mubr.bf16.mxu0 0
        %7643 = vmatmul.mubr.bf16.gmra.mrb[0].mxu0 %v7608
        %v7644 = vpop.f32.mrb[0].mxu0
        %v7645 = vadd.f32 0.0, %v7644
        %v7646 = vpop.f32.mrb[0].mxu0
        %v7647 = vpop.f32.mrb[0].mxu0
        %v7648 = vadd.f32 0.0, %v7647
        %v7649 = vpop.f32.mrb[0].mxu0
        %7650 = vdwg.mxu0
        %7651 = vrot.lane.b32.xlu0 %v6905, 40
        %v7652 = vpop.permute.xlu0 %7651
        %v7655 = vsel %vm1160, %v7505, 0
        %7657 = vmatprep.subr.bf16.mxu0 0
        %7658 = vmatpush1.bf16.msra.mxu0 %v7652
        %7659 = vmatprep.subr.bf16.mxu0 0
        %7660 = vmatpush1.bf16.msra.mxu0 0
        %7661 = vmatprep.subr.bf16.mxu0 0
        %7662 = vmatpush1.bf16.msra.mxu0 0
        %7663 = vmatprep.subr.bf16.mxu0 0
        %7664 = vmatpush1.bf16.msra.mxu0 0
        %7665 = vmatprep.subr.bf16.mxu0 0
        %7666 = vmatpush1.bf16.msra.mxu0 0
        %7667 = vmatprep.subr.bf16.mxu0 0
        %7668 = vmatpush1.bf16.msra.mxu0 0
        %7669 = vmatprep.subr.bf16.mxu0 0
        %7670 = vmatpush1.bf16.msra.mxu0 0
        %7671 = vmatprep.subr.bf16.mxu0 0
        %7672 = vmatpush1.bf16.msra.mxu0 0
        %7673 = vmatprep.subr.bf16.mxu0 0
        %7674 = vmatpush1.bf16.msra.mxu0 0
        %7675 = vmatprep.subr.bf16.mxu0 0
        %7676 = vmatpush1.bf16.msra.mxu0 0
        %7677 = vmatprep.subr.bf16.mxu0 0
        %7678 = vmatpush1.bf16.msra.mxu0 0
        %7679 = vmatprep.subr.bf16.mxu0 0
        %7680 = vmatpush1.bf16.msra.mxu0 0
        %7681 = vmatprep.subr.bf16.mxu0 0
        %7682 = vmatpush1.bf16.msra.mxu0 0
        %7683 = vmatprep.subr.bf16.mxu0 0
        %7684 = vmatpush1.bf16.msra.mxu0 0
        %7685 = vmatprep.subr.bf16.mxu0 0
        %7686 = vmatpush1.bf16.msra.mxu0 0
        %7687 = vmatprep.subr.bf16.mxu0 0
        %7688 = vmatpush1.bf16.msra.mxu0 0
        %7689 = vmatprep.mubr.bf16.mxu0 0
        %7690 = vmatmul.mubr.bf16.gmra.mrb[0].mxu0 %v7655
        %v7691 = vpop.f32.mrb[0].mxu0
        %v7692 = vadd.f32 0.0, %v7691
        %v7693 = vpop.f32.mrb[0].mxu0
        %v7694 = vpop.f32.mrb[0].mxu0
        %v7695 = vadd.f32 0.0, %v7694
        %v7696 = vpop.f32.mrb[0].mxu0
        %7697 = vdwg.mxu0
        %7698 = vrot.lane.b32.xlu0 %v6906, 40
        %v7699 = vpop.permute.xlu0 %7698
        %v7702 = vsel %vm1160, %v7506, 0
        %7704 = vmatprep.subr.bf16.mxu0 0
        %7705 = vmatpush1.bf16.msra.mxu0 %v7699
        %7706 = vmatprep.subr.bf16.mxu0 0
        %7707 = vmatpush1.bf16.msra.mxu0 0
        %7708 = vmatprep.subr.bf16.mxu0 0
        %7709 = vmatpush1.bf16.msra.mxu0 0
        %7710 = vmatprep.subr.bf16.mxu0 0
        %7711 = vmatpush1.bf16.msra.mxu0 0
        %7712 = vmatprep.subr.bf16.mxu0 0
        %7713 = vmatpush1.bf16.msra.mxu0 0
        %7714 = vmatprep.subr.bf16.mxu0 0
        %7715 = vmatpush1.bf16.msra.mxu0 0
        %7716 = vmatprep.subr.bf16.mxu0 0
        %7717 = vmatpush1.bf16.msra.mxu0 0
        %7718 = vmatprep.subr.bf16.mxu0 0
        %7719 = vmatpush1.bf16.msra.mxu0 0
        %7720 = vmatprep.subr.bf16.mxu0 0
        %7721 = vmatpush1.bf16.msra.mxu0 0
        %7722 = vmatprep.subr.bf16.mxu0 0
        %7723 = vmatpush1.bf16.msra.mxu0 0
        %7724 = vmatprep.subr.bf16.mxu0 0
        %7725 = vmatpush1.bf16.msra.mxu0 0
        %7726 = vmatprep.subr.bf16.mxu0 0
        %7727 = vmatpush1.bf16.msra.mxu0 0
        %7728 = vmatprep.subr.bf16.mxu0 0
        %7729 = vmatpush1.bf16.msra.mxu0 0
        %7730 = vmatprep.subr.bf16.mxu0 0
        %7731 = vmatpush1.bf16.msra.mxu0 0
        %7732 = vmatprep.subr.bf16.mxu0 0
        %7733 = vmatpush1.bf16.msra.mxu0 0
        %7734 = vmatprep.subr.bf16.mxu0 0
        %7735 = vmatpush1.bf16.msra.mxu0 0
        %7736 = vmatprep.mubr.bf16.mxu0 0
        %7737 = vmatmul.mubr.bf16.gmra.mrb[0].mxu0 %v7702
        %v7738 = vpop.f32.mrb[0].mxu0
        %v7739 = vadd.f32 0.0, %v7738
        %v7740 = vpop.f32.mrb[0].mxu0
        %v7741 = vpop.f32.mrb[0].mxu0
        %v7742 = vadd.f32 0.0, %v7741
        %v7743 = vpop.f32.mrb[0].mxu0
        %7744 = vdwg.mxu0
        %7745 = vrot.lane.b32.xlu0 %v6907, 40
        %v7746 = vpop.permute.xlu0 %7745
        %v7749 = vsel %vm1160, %v7507, 0
        %7751 = vmatprep.subr.bf16.mxu0 0
        %7752 = vmatpush1.bf16.msra.mxu0 %v7746
        %7753 = vmatprep.subr.bf16.mxu0 0
        %7754 = vmatpush1.bf16.msra.mxu0 0
        %7755 = vmatprep.subr.bf16.mxu0 0
        %7756 = vmatpush1.bf16.msra.mxu0 0
        %7757 = vmatprep.subr.bf16.mxu0 0
        %7758 = vmatpush1.bf16.msra.mxu0 0
        %7759 = vmatprep.subr.bf16.mxu0 0
        %7760 = vmatpush1.bf16.msra.mxu0 0
        %7761 = vmatprep.subr.bf16.mxu0 0
        %7762 = vmatpush1.bf16.msra.mxu0 0
        %7763 = vmatprep.subr.bf16.mxu0 0
        %7764 = vmatpush1.bf16.msra.mxu0 0
        %7765 = vmatprep.subr.bf16.mxu0 0
        %7766 = vmatpush1.bf16.msra.mxu0 0
        %7767 = vmatprep.subr.bf16.mxu0 0
        %7768 = vmatpush1.bf16.msra.mxu0 0
        %7769 = vmatprep.subr.bf16.mxu0 0
        %7770 = vmatpush1.bf16.msra.mxu0 0
        %7771 = vmatprep.subr.bf16.mxu0 0
        %7772 = vmatpush1.bf16.msra.mxu0 0
        %7773 = vmatprep.subr.bf16.mxu0 0
        %7774 = vmatpush1.bf16.msra.mxu0 0
        %7775 = vmatprep.subr.bf16.mxu0 0
        %7776 = vmatpush1.bf16.msra.mxu0 0
        %7777 = vmatprep.subr.bf16.mxu0 0
        %7778 = vmatpush1.bf16.msra.mxu0 0
        %7779 = vmatprep.subr.bf16.mxu0 0
        %7780 = vmatpush1.bf16.msra.mxu0 0
        %7781 = vmatprep.subr.bf16.mxu0 0
        %7782 = vmatpush1.bf16.msra.mxu0 0
        %7783 = vmatprep.mubr.bf16.mxu0 0
        %7784 = vmatmul.mubr.bf16.gmra.mrb[0].mxu0 %v7749
        %v7785 = vpop.f32.mrb[0].mxu0
        %v7786 = vadd.f32 0.0, %v7785
        %v7787 = vpop.f32.mrb[0].mxu0
        %v7788 = vpop.f32.mrb[0].mxu0
        %v7789 = vadd.f32 0.0, %v7788
        %v7790 = vpop.f32.mrb[0].mxu0
        %7791 = vdwg.mxu0
        %7792 = vrot.lane.b32.xlu0 %v6908, 40
        %v7793 = vpop.permute.xlu0 %7792
        %v7796 = vsel %vm1160, %v7508, 0
        %7798 = vmatprep.subr.bf16.mxu0 0
        %7799 = vmatpush1.bf16.msra.mxu0 %v7793
        %7800 = vmatprep.subr.bf16.mxu0 0
        %7801 = vmatpush1.bf16.msra.mxu0 0
        %7802 = vmatprep.subr.bf16.mxu0 0
        %7803 = vmatpush1.bf16.msra.mxu0 0
        %7804 = vmatprep.subr.bf16.mxu0 0
        %7805 = vmatpush1.bf16.msra.mxu0 0
        %7806 = vmatprep.subr.bf16.mxu0 0
        %7807 = vmatpush1.bf16.msra.mxu0 0
        %7808 = vmatprep.subr.bf16.mxu0 0
        %7809 = vmatpush1.bf16.msra.mxu0 0
        %7810 = vmatprep.subr.bf16.mxu0 0
        %7811 = vmatpush1.bf16.msra.mxu0 0
        %7812 = vmatprep.subr.bf16.mxu0 0
        %7813 = vmatpush1.bf16.msra.mxu0 0
        %7814 = vmatprep.subr.bf16.mxu0 0
        %7815 = vmatpush1.bf16.msra.mxu0 0
        %7816 = vmatprep.subr.bf16.mxu0 0
        %7817 = vmatpush1.bf16.msra.mxu0 0
        %7818 = vmatprep.subr.bf16.mxu0 0
        %7819 = vmatpush1.bf16.msra.mxu0 0
        %7820 = vmatprep.subr.bf16.mxu0 0
        %7821 = vmatpush1.bf16.msra.mxu0 0
        %7822 = vmatprep.subr.bf16.mxu0 0
        %7823 = vmatpush1.bf16.msra.mxu0 0
        %7824 = vmatprep.subr.bf16.mxu0 0
        %7825 = vmatpush1.bf16.msra.mxu0 0
        %7826 = vmatprep.subr.bf16.mxu0 0
        %7827 = vmatpush1.bf16.msra.mxu0 0
        %7828 = vmatprep.subr.bf16.mxu0 0
        %7829 = vmatpush1.bf16.msra.mxu0 0
        %7830 = vmatprep.mubr.bf16.mxu0 0
        %7831 = vmatmul.mubr.bf16.gmra.mrb[0].mxu0 %v7796
        %v7832 = vpop.f32.mrb[0].mxu0
        %v7833 = vadd.f32 0.0, %v7832
        %v7834 = vpop.f32.mrb[0].mxu0
        %v7835 = vpop.f32.mrb[0].mxu0
        %v7836 = vadd.f32 0.0, %v7835
        %v7837 = vpop.f32.mrb[0].mxu0
        %7838 = vdwg.mxu0
        %7839 = vrot.lane.b32.xlu0 %v6909, 40
        %v7840 = vpop.permute.xlu0 %7839
        %v7843 = vsel %vm1160, %v7509, 0
        %7845 = vmatprep.subr.bf16.mxu0 0
        %7846 = vmatpush1.bf16.msra.mxu0 %v7840
        %7847 = vmatprep.subr.bf16.mxu0 0
        %7848 = vmatpush1.bf16.msra.mxu0 0
        %7849 = vmatprep.subr.bf16.mxu0 0
        %7850 = vmatpush1.bf16.msra.mxu0 0
        %7851 = vmatprep.subr.bf16.mxu0 0
        %7852 = vmatpush1.bf16.msra.mxu0 0
        %7853 = vmatprep.subr.bf16.mxu0 0
        %7854 = vmatpush1.bf16.msra.mxu0 0
        %7855 = vmatprep.subr.bf16.mxu0 0
        %7856 = vmatpush1.bf16.msra.mxu0 0
        %7857 = vmatprep.subr.bf16.mxu0 0
        %7858 = vmatpush1.bf16.msra.mxu0 0
        %7859 = vmatprep.subr.bf16.mxu0 0
        %7860 = vmatpush1.bf16.msra.mxu0 0
        %7861 = vmatprep.subr.bf16.mxu0 0
        %7862 = vmatpush1.bf16.msra.mxu0 0
        %7863 = vmatprep.subr.bf16.mxu0 0
        %7864 = vmatpush1.bf16.msra.mxu0 0
        %7865 = vmatprep.subr.bf16.mxu0 0
        %7866 = vmatpush1.bf16.msra.mxu0 0
        %7867 = vmatprep.subr.bf16.mxu0 0
        %7868 = vmatpush1.bf16.msra.mxu0 0
        %7869 = vmatprep.subr.bf16.mxu0 0
        %7870 = vmatpush1.bf16.msra.mxu0 0
        %7871 = vmatprep.subr.bf16.mxu0 0
        %7872 = vmatpush1.bf16.msra.mxu0 0
        %7873 = vmatprep.subr.bf16.mxu0 0
        %7874 = vmatpush1.bf16.msra.mxu0 0
        %7875 = vmatprep.subr.bf16.mxu0 0
        %7876 = vmatpush1.bf16.msra.mxu0 0
        %7877 = vmatprep.mubr.bf16.mxu0 0
        %7878 = vmatmul.mubr.bf16.gmra.mrb[0].mxu0 %v7843
        %v7879 = vpop.f32.mrb[0].mxu0
        %v7880 = vadd.f32 0.0, %v7879
        %v7881 = vpop.f32.mrb[0].mxu0
        %v7882 = vpop.f32.mrb[0].mxu0
        %v7883 = vadd.f32 0.0, %v7882
        %v7884 = vpop.f32.mrb[0].mxu0
        %7885 = vdwg.mxu0
        %v7886 = vpack.c.bf16 %v7554, %v7551
        %v7887 = vpack.c.bf16 %v7601, %v7598
        %v7888 = vpack.c.bf16 %v7648, %v7645
        %v7889 = vpack.c.bf16 %v7695, %v7692
        %v7890 = vpack.c.bf16 %v7742, %v7739
        %v7891 = vpack.c.bf16 %v7789, %v7786
        %v7892 = vpack.c.bf16 %v7836, %v7833
        %v7893 = vpack.c.bf16 %v7883, %v7880
        %7902 = vrot.lane.b32.xlu0 %v7886, 24
        %v7903 = vpop.permute.xlu0 %7902
        %7904 = vrot.lane.b32.xlu0 %v7887, 24
        %v7905 = vpop.permute.xlu0 %7904
        %7906 = vrot.lane.b32.xlu0 %v7888, 24
        %v7907 = vpop.permute.xlu0 %7906
        %7908 = vrot.lane.b32.xlu0 %v7889, 24
        %v7909 = vpop.permute.xlu0 %7908
        %7910 = vrot.lane.b32.xlu0 %v7890, 24
        %v7911 = vpop.permute.xlu0 %7910
        %7912 = vrot.lane.b32.xlu0 %v7891, 24
        %v7913 = vpop.permute.xlu0 %7912
        %7914 = vrot.lane.b32.xlu0 %v7892, 24
        %v7915 = vpop.permute.xlu0 %7914
        %7916 = vrot.lane.b32.xlu0 %v7893, 24
        %v7917 = vpop.permute.xlu0 %7916
        %vm7926 = vcmask 228544
        %7927 = vst.msk [vmem:[#allocation3] sm:$0xff] %vm7926, %v7903
        %7928 = vst.msk [vmem:[#allocation3 + $0x8] sm:$0xff] %vm7926, %v7905
        %7929 = vst.msk [vmem:[#allocation3 + $0x10] sm:$0xff] %vm7926, %v7907
        %7930 = vst.msk [vmem:[#allocation3 + $0x18] sm:$0xff] %vm7926, %v7909
        %7931 = vst.msk [vmem:[#allocation3 + $0x20] sm:$0xff] %vm7926, %v7911
        %7932 = vst.msk [vmem:[#allocation3 + $0x28] sm:$0xff] %vm7926, %v7913
        %7933 = vst.msk [vmem:[#allocation3 + $0x30] sm:$0xff] %vm7926, %v7915
        %7934 = vst.msk [vmem:[#allocation3 + $0x38] sm:$0xff] %vm7926, %v7917
        %v7935 = vld [vmem:[#allocation2] sm:$0xff]
        %v7936 = vld [vmem:[#allocation2 + $0x8] sm:$0xff]
        %v7937 = vld [vmem:[#allocation2 + $0x10] sm:$0xff]
        %v7938 = vld [vmem:[#allocation2 + $0x18] sm:$0xff]
        %v7939 = vld [vmem:[#allocation2 + $0x20] sm:$0xff]
        %v7940 = vld [vmem:[#allocation2 + $0x28] sm:$0xff]
        %v7941 = vld [vmem:[#allocation2 + $0x30] sm:$0xff]
        %v7942 = vld [vmem:[#allocation2 + $0x38] sm:$0xff]
        %7944 = vrot.lane.b32.xlu0 %v7935, 100
        %v7945 = vpop.permute.xlu0 %7944
        %7946 = vrot.lane.b32.xlu0 %v7935, 68
        %v7947 = vpop.permute.xlu0 %7946
        %v7949 = vsel %vm762, %v7945, 0
        %v7952 = vsel %vm762, %v7947, 0
        %7954 = vmatprep.subr.bf16.mxu0 0
        %7955 = vmatpush1.bf16.xpose.msra.mxu0 %v7952
        %7956 = vmatprep.subr.bf16.mxu0 0
        %7957 = vmatpush1.bf16.xpose.msra.mxu0 0
        %7958 = vmatprep.subr.bf16.mxu0 0
        %7959 = vmatpush1.bf16.xpose.msra.mxu0 0
        %7960 = vmatprep.subr.bf16.mxu0 0
        %7961 = vmatpush1.bf16.xpose.msra.mxu0 0
        %7962 = vmatprep.subr.bf16.mxu0 0
        %7963 = vmatpush1.bf16.xpose.msra.mxu0 0
        %7964 = vmatprep.subr.bf16.mxu0 0
        %7965 = vmatpush1.bf16.xpose.msra.mxu0 0
        %7966 = vmatprep.subr.bf16.mxu0 0
        %7967 = vmatpush1.bf16.xpose.msra.mxu0 0
        %7968 = vmatprep.subr.bf16.mxu0 0
        %7969 = vmatpush1.bf16.xpose.msra.mxu0 0
        %7970 = vmatprep.subr.bf16.mxu0 0
        %7971 = vmatpush1.bf16.xpose.msra.mxu0 0
        %7972 = vmatprep.subr.bf16.mxu0 0
        %7973 = vmatpush1.bf16.xpose.msra.mxu0 0
        %7974 = vmatprep.subr.bf16.mxu0 0
        %7975 = vmatpush1.bf16.xpose.msra.mxu0 0
        %7976 = vmatprep.subr.bf16.mxu0 0
        %7977 = vmatpush1.bf16.xpose.msra.mxu0 0
        %7978 = vmatprep.subr.bf16.mxu0 0
        %7979 = vmatpush1.bf16.xpose.msra.mxu0 0
        %7980 = vmatprep.subr.bf16.mxu0 0
        %7981 = vmatpush1.bf16.xpose.msra.mxu0 0
        %7982 = vmatprep.subr.bf16.mxu0 0
        %7983 = vmatpush1.bf16.xpose.msra.mxu0 0
        %7984 = vmatprep.subr.bf16.mxu0 0
        %7985 = vmatpush1.bf16.xpose.msra.mxu0 0
        %7986 = vmatprep.mubr.bf16.mxu0 0
        %7987 = vmatmul.mubr.bf16.gmra.mrb[0].mxu0 %v7949
        %v7988 = vpop.f32.mrb[0].mxu0
        %v7989 = vadd.f32 0.0, %v7988
        %v7990 = vpop.f32.mrb[0].mxu0
        %v7991 = vpop.f32.mrb[0].mxu0
        %v7992 = vadd.f32 0.0, %v7991
        %v7993 = vpop.f32.mrb[0].mxu0
        %7994 = vdwg.mxu0
        %7996 = vrot.lane.b32.xlu0 %v7936, 100
        %v7997 = vpop.permute.xlu0 %7996
        %7998 = vrot.lane.b32.xlu0 %v7936, 68
        %v7999 = vpop.permute.xlu0 %7998
        %v8001 = vsel %vm762, %v7997, 0
        %v8004 = vsel %vm762, %v7999, 0
        %8006 = vmatprep.subr.bf16.mxu0 0
        %8007 = vmatpush1.bf16.xpose.msra.mxu0 %v8004
        %8008 = vmatprep.subr.bf16.mxu0 0
        %8009 = vmatpush1.bf16.xpose.msra.mxu0 0
        %8010 = vmatprep.subr.bf16.mxu0 0
        %8011 = vmatpush1.bf16.xpose.msra.mxu0 0
        %8012 = vmatprep.subr.bf16.mxu0 0
        %8013 = vmatpush1.bf16.xpose.msra.mxu0 0
        %8014 = vmatprep.subr.bf16.mxu0 0
        %8015 = vmatpush1.bf16.xpose.msra.mxu0 0
        %8016 = vmatprep.subr.bf16.mxu0 0
        %8017 = vmatpush1.bf16.xpose.msra.mxu0 0
        %8018 = vmatprep.subr.bf16.mxu0 0
        %8019 = vmatpush1.bf16.xpose.msra.mxu0 0
        %8020 = vmatprep.subr.bf16.mxu0 0
        %8021 = vmatpush1.bf16.xpose.msra.mxu0 0
        %8022 = vmatprep.subr.bf16.mxu0 0
        %8023 = vmatpush1.bf16.xpose.msra.mxu0 0
        %8024 = vmatprep.subr.bf16.mxu0 0
        %8025 = vmatpush1.bf16.xpose.msra.mxu0 0
        %8026 = vmatprep.subr.bf16.mxu0 0
        %8027 = vmatpush1.bf16.xpose.msra.mxu0 0
        %8028 = vmatprep.subr.bf16.mxu0 0
        %8029 = vmatpush1.bf16.xpose.msra.mxu0 0
        %8030 = vmatprep.subr.bf16.mxu0 0
        %8031 = vmatpush1.bf16.xpose.msra.mxu0 0
        %8032 = vmatprep.subr.bf16.mxu0 0
        %8033 = vmatpush1.bf16.xpose.msra.mxu0 0
        %8034 = vmatprep.subr.bf16.mxu0 0
        %8035 = vmatpush1.bf16.xpose.msra.mxu0 0
        %8036 = vmatprep.subr.bf16.mxu0 0
        %8037 = vmatpush1.bf16.xpose.msra.mxu0 0
        %8038 = vmatprep.mubr.bf16.mxu0 0
        %8039 = vmatmul.mubr.bf16.gmra.mrb[0].mxu0 %v8001
        %v8040 = vpop.f32.mrb[0].mxu0
        %v8041 = vadd.f32 0.0, %v8040
        %v8042 = vpop.f32.mrb[0].mxu0
        %v8043 = vpop.f32.mrb[0].mxu0
        %v8044 = vadd.f32 0.0, %v8043
        %v8045 = vpop.f32.mrb[0].mxu0
        %8046 = vdwg.mxu0
        %8048 = vrot.lane.b32.xlu0 %v7937, 100
        %v8049 = vpop.permute.xlu0 %8048
        %8050 = vrot.lane.b32.xlu0 %v7937, 68
        %v8051 = vpop.permute.xlu0 %8050
        %v8053 = vsel %vm762, %v8049, 0
        %v8056 = vsel %vm762, %v8051, 0
        %8058 = vmatprep.subr.bf16.mxu0 0
        %8059 = vmatpush1.bf16.xpose.msra.mxu0 %v8056
        %8060 = vmatprep.subr.bf16.mxu0 0
        %8061 = vmatpush1.bf16.xpose.msra.mxu0 0
        %8062 = vmatprep.subr.bf16.mxu0 0
        %8063 = vmatpush1.bf16.xpose.msra.mxu0 0
        %8064 = vmatprep.subr.bf16.mxu0 0
        %8065 = vmatpush1.bf16.xpose.msra.mxu0 0
        %8066 = vmatprep.subr.bf16.mxu0 0
        %8067 = vmatpush1.bf16.xpose.msra.mxu0 0
        %8068 = vmatprep.subr.bf16.mxu0 0
        %8069 = vmatpush1.bf16.xpose.msra.mxu0 0
        %8070 = vmatprep.subr.bf16.mxu0 0
        %8071 = vmatpush1.bf16.xpose.msra.mxu0 0
        %8072 = vmatprep.subr.bf16.mxu0 0
        %8073 = vmatpush1.bf16.xpose.msra.mxu0 0
        %8074 = vmatprep.subr.bf16.mxu0 0
        %8075 = vmatpush1.bf16.xpose.msra.mxu0 0
        %8076 = vmatprep.subr.bf16.mxu0 0
        %8077 = vmatpush1.bf16.xpose.msra.mxu0 0
        %8078 = vmatprep.subr.bf16.mxu0 0
        %8079 = vmatpush1.bf16.xpose.msra.mxu0 0
        %8080 = vmatprep.subr.bf16.mxu0 0
        %8081 = vmatpush1.bf16.xpose.msra.mxu0 0
        %8082 = vmatprep.subr.bf16.mxu0 0
        %8083 = vmatpush1.bf16.xpose.msra.mxu0 0
        %8084 = vmatprep.subr.bf16.mxu0 0
        %8085 = vmatpush1.bf16.xpose.msra.mxu0 0
        %8086 = vmatprep.subr.bf16.mxu0 0
        %8087 = vmatpush1.bf16.xpose.msra.mxu0 0
        %8088 = vmatprep.subr.bf16.mxu0 0
        %8089 = vmatpush1.bf16.xpose.msra.mxu0 0
        %8090 = vmatprep.mubr.bf16.mxu0 0
        %8091 = vmatmul.mubr.bf16.gmra.mrb[0].mxu0 %v8053
        %v8092 = vpop.f32.mrb[0].mxu0
        %v8093 = vadd.f32 0.0, %v8092
        %v8094 = vpop.f32.mrb[0].mxu0
        %v8095 = vpop.f32.mrb[0].mxu0
        %v8096 = vadd.f32 0.0, %v8095
        %v8097 = vpop.f32.mrb[0].mxu0
        %8098 = vdwg.mxu0
        %8100 = vrot.lane.b32.xlu0 %v7938, 100
        %v8101 = vpop.permute.xlu0 %8100
        %8102 = vrot.lane.b32.xlu0 %v7938, 68
        %v8103 = vpop.permute.xlu0 %8102
        %v8105 = vsel %vm762, %v8101, 0
        %v8108 = vsel %vm762, %v8103, 0
        %8110 = vmatprep.subr.bf16.mxu0 0
        %8111 = vmatpush1.bf16.xpose.msra.mxu0 %v8108
        %8112 = vmatprep.subr.bf16.mxu0 0
        %8113 = vmatpush1.bf16.xpose.msra.mxu0 0
        %8114 = vmatprep.subr.bf16.mxu0 0
        %8115 = vmatpush1.bf16.xpose.msra.mxu0 0
        %8116 = vmatprep.subr.bf16.mxu0 0
        %8117 = vmatpush1.bf16.xpose.msra.mxu0 0
        %8118 = vmatprep.subr.bf16.mxu0 0
        %8119 = vmatpush1.bf16.xpose.msra.mxu0 0
        %8120 = vmatprep.subr.bf16.mxu0 0
        %8121 = vmatpush1.bf16.xpose.msra.mxu0 0
        %8122 = vmatprep.subr.bf16.mxu0 0
        %8123 = vmatpush1.bf16.xpose.msra.mxu0 0
        %8124 = vmatprep.subr.bf16.mxu0 0
        %8125 = vmatpush1.bf16.xpose.msra.mxu0 0
        %8126 = vmatprep.subr.bf16.mxu0 0
        %8127 = vmatpush1.bf16.xpose.msra.mxu0 0
        %8128 = vmatprep.subr.bf16.mxu0 0
        %8129 = vmatpush1.bf16.xpose.msra.mxu0 0
        %8130 = vmatprep.subr.bf16.mxu0 0
        %8131 = vmatpush1.bf16.xpose.msra.mxu0 0
        %8132 = vmatprep.subr.bf16.mxu0 0
        %8133 = vmatpush1.bf16.xpose.msra.mxu0 0
        %8134 = vmatprep.subr.bf16.mxu0 0
        %8135 = vmatpush1.bf16.xpose.msra.mxu0 0
        %8136 = vmatprep.subr.bf16.mxu0 0
        %8137 = vmatpush1.bf16.xpose.msra.mxu0 0
        %8138 = vmatprep.subr.bf16.mxu0 0
        %8139 = vmatpush1.bf16.xpose.msra.mxu0 0
        %8140 = vmatprep.subr.bf16.mxu0 0
        %8141 = vmatpush1.bf16.xpose.msra.mxu0 0
        %8142 = vmatprep.mubr.bf16.mxu0 0
        %8143 = vmatmul.mubr.bf16.gmra.mrb[0].mxu0 %v8105
        %v8144 = vpop.f32.mrb[0].mxu0
        %v8145 = vadd.f32 0.0, %v8144
        %v8146 = vpop.f32.mrb[0].mxu0
        %v8147 = vpop.f32.mrb[0].mxu0
        %v8148 = vadd.f32 0.0, %v8147
        %v8149 = vpop.f32.mrb[0].mxu0
        %8150 = vdwg.mxu0
        %8152 = vrot.lane.b32.xlu0 %v7939, 100
        %v8153 = vpop.permute.xlu0 %8152
        %8154 = vrot.lane.b32.xlu0 %v7939, 68
        %v8155 = vpop.permute.xlu0 %8154
        %v8157 = vsel %vm762, %v8153, 0
        %v8160 = vsel %vm762, %v8155, 0
        %8162 = vmatprep.subr.bf16.mxu0 0
        %8163 = vmatpush1.bf16.xpose.msra.mxu0 %v8160
        %8164 = vmatprep.subr.bf16.mxu0 0
        %8165 = vmatpush1.bf16.xpose.msra.mxu0 0
        %8166 = vmatprep.subr.bf16.mxu0 0
        %8167 = vmatpush1.bf16.xpose.msra.mxu0 0
        %8168 = vmatprep.subr.bf16.mxu0 0
        %8169 = vmatpush1.bf16.xpose.msra.mxu0 0
        %8170 = vmatprep.subr.bf16.mxu0 0
        %8171 = vmatpush1.bf16.xpose.msra.mxu0 0
        %8172 = vmatprep.subr.bf16.mxu0 0
        %8173 = vmatpush1.bf16.xpose.msra.mxu0 0
        %8174 = vmatprep.subr.bf16.mxu0 0
        %8175 = vmatpush1.bf16.xpose.msra.mxu0 0
        %8176 = vmatprep.subr.bf16.mxu0 0
        %8177 = vmatpush1.bf16.xpose.msra.mxu0 0
        %8178 = vmatprep.subr.bf16.mxu0 0
        %8179 = vmatpush1.bf16.xpose.msra.mxu0 0
        %8180 = vmatprep.subr.bf16.mxu0 0
        %8181 = vmatpush1.bf16.xpose.msra.mxu0 0
        %8182 = vmatprep.subr.bf16.mxu0 0
        %8183 = vmatpush1.bf16.xpose.msra.mxu0 0
        %8184 = vmatprep.subr.bf16.mxu0 0
        %8185 = vmatpush1.bf16.xpose.msra.mxu0 0
        %8186 = vmatprep.subr.bf16.mxu0 0
        %8187 = vmatpush1.bf16.xpose.msra.mxu0 0
        %8188 = vmatprep.subr.bf16.mxu0 0
        %8189 = vmatpush1.bf16.xpose.msra.mxu0 0
        %8190 = vmatprep.subr.bf16.mxu0 0
        %8191 = vmatpush1.bf16.xpose.msra.mxu0 0
        %8192 = vmatprep.subr.bf16.mxu0 0
        %8193 = vmatpush1.bf16.xpose.msra.mxu0 0
        %8194 = vmatprep.mubr.bf16.mxu0 0
        %8195 = vmatmul.mubr.bf16.gmra.mrb[0].mxu0 %v8157
        %v8196 = vpop.f32.mrb[0].mxu0
        %v8197 = vadd.f32 0.0, %v8196
        %v8198 = vpop.f32.mrb[0].mxu0
        %v8199 = vpop.f32.mrb[0].mxu0
        %v8200 = vadd.f32 0.0, %v8199
        %v8201 = vpop.f32.mrb[0].mxu0
        %8202 = vdwg.mxu0
        %8204 = vrot.lane.b32.xlu0 %v7940, 100
        %v8205 = vpop.permute.xlu0 %8204
        %8206 = vrot.lane.b32.xlu0 %v7940, 68
        %v8207 = vpop.permute.xlu0 %8206
        %v8209 = vsel %vm762, %v8205, 0
        %v8212 = vsel %vm762, %v8207, 0
        %8214 = vmatprep.subr.bf16.mxu0 0
        %8215 = vmatpush1.bf16.xpose.msra.mxu0 %v8212
        %8216 = vmatprep.subr.bf16.mxu0 0
        %8217 = vmatpush1.bf16.xpose.msra.mxu0 0
        %8218 = vmatprep.subr.bf16.mxu0 0
        %8219 = vmatpush1.bf16.xpose.msra.mxu0 0
        %8220 = vmatprep.subr.bf16.mxu0 0
        %8221 = vmatpush1.bf16.xpose.msra.mxu0 0
        %8222 = vmatprep.subr.bf16.mxu0 0
        %8223 = vmatpush1.bf16.xpose.msra.mxu0 0
        %8224 = vmatprep.subr.bf16.mxu0 0
        %8225 = vmatpush1.bf16.xpose.msra.mxu0 0
        %8226 = vmatprep.subr.bf16.mxu0 0
        %8227 = vmatpush1.bf16.xpose.msra.mxu0 0
        %8228 = vmatprep.subr.bf16.mxu0 0
        %8229 = vmatpush1.bf16.xpose.msra.mxu0 0
        %8230 = vmatprep.subr.bf16.mxu0 0
        %8231 = vmatpush1.bf16.xpose.msra.mxu0 0
        %8232 = vmatprep.subr.bf16.mxu0 0
        %8233 = vmatpush1.bf16.xpose.msra.mxu0 0
        %8234 = vmatprep.subr.bf16.mxu0 0
        %8235 = vmatpush1.bf16.xpose.msra.mxu0 0
        %8236 = vmatprep.subr.bf16.mxu0 0
        %8237 = vmatpush1.bf16.xpose.msra.mxu0 0
        %8238 = vmatprep.subr.bf16.mxu0 0
        %8239 = vmatpush1.bf16.xpose.msra.mxu0 0
        %8240 = vmatprep.subr.bf16.mxu0 0
        %8241 = vmatpush1.bf16.xpose.msra.mxu0 0
        %8242 = vmatprep.subr.bf16.mxu0 0
        %8243 = vmatpush1.bf16.xpose.msra.mxu0 0
        %8244 = vmatprep.subr.bf16.mxu0 0
        %8245 = vmatpush1.bf16.xpose.msra.mxu0 0
        %8246 = vmatprep.mubr.bf16.mxu0 0
        %8247 = vmatmul.mubr.bf16.gmra.mrb[0].mxu0 %v8209
        %v8248 = vpop.f32.mrb[0].mxu0
        %v8249 = vadd.f32 0.0, %v8248
        %v8250 = vpop.f32.mrb[0].mxu0
        %v8251 = vpop.f32.mrb[0].mxu0
        %v8252 = vadd.f32 0.0, %v8251
        %v8253 = vpop.f32.mrb[0].mxu0
        %8254 = vdwg.mxu0
        %8256 = vrot.lane.b32.xlu0 %v7941, 100
        %v8257 = vpop.permute.xlu0 %8256
        %8258 = vrot.lane.b32.xlu0 %v7941, 68
        %v8259 = vpop.permute.xlu0 %8258
        %v8261 = vsel %vm762, %v8257, 0
        %v8264 = vsel %vm762, %v8259, 0
        %8266 = vmatprep.subr.bf16.mxu0 0
        %8267 = vmatpush1.bf16.xpose.msra.mxu0 %v8264
        %8268 = vmatprep.subr.bf16.mxu0 0
        %8269 = vmatpush1.bf16.xpose.msra.mxu0 0
        %8270 = vmatprep.subr.bf16.mxu0 0
        %8271 = vmatpush1.bf16.xpose.msra.mxu0 0
        %8272 = vmatprep.subr.bf16.mxu0 0
        %8273 = vmatpush1.bf16.xpose.msra.mxu0 0
        %8274 = vmatprep.subr.bf16.mxu0 0
        %8275 = vmatpush1.bf16.xpose.msra.mxu0 0
        %8276 = vmatprep.subr.bf16.mxu0 0
        %8277 = vmatpush1.bf16.xpose.msra.mxu0 0
        %8278 = vmatprep.subr.bf16.mxu0 0
        %8279 = vmatpush1.bf16.xpose.msra.mxu0 0
        %8280 = vmatprep.subr.bf16.mxu0 0
        %8281 = vmatpush1.bf16.xpose.msra.mxu0 0
        %8282 = vmatprep.subr.bf16.mxu0 0
        %8283 = vmatpush1.bf16.xpose.msra.mxu0 0
        %8284 = vmatprep.subr.bf16.mxu0 0
        %8285 = vmatpush1.bf16.xpose.msra.mxu0 0
        %8286 = vmatprep.subr.bf16.mxu0 0
        %8287 = vmatpush1.bf16.xpose.msra.mxu0 0
        %8288 = vmatprep.subr.bf16.mxu0 0
        %8289 = vmatpush1.bf16.xpose.msra.mxu0 0
        %8290 = vmatprep.subr.bf16.mxu0 0
        %8291 = vmatpush1.bf16.xpose.msra.mxu0 0
        %8292 = vmatprep.subr.bf16.mxu0 0
        %8293 = vmatpush1.bf16.xpose.msra.mxu0 0
        %8294 = vmatprep.subr.bf16.mxu0 0
        %8295 = vmatpush1.bf16.xpose.msra.mxu0 0
        %8296 = vmatprep.subr.bf16.mxu0 0
        %8297 = vmatpush1.bf16.xpose.msra.mxu0 0
        %8298 = vmatprep.mubr.bf16.mxu0 0
        %8299 = vmatmul.mubr.bf16.gmra.mrb[0].mxu0 %v8261
        %v8300 = vpop.f32.mrb[0].mxu0
        %v8301 = vadd.f32 0.0, %v8300
        %v8302 = vpop.f32.mrb[0].mxu0
        %v8303 = vpop.f32.mrb[0].mxu0
        %v8304 = vadd.f32 0.0, %v8303
        %v8305 = vpop.f32.mrb[0].mxu0
        %8306 = vdwg.mxu0
        %8308 = vrot.lane.b32.xlu0 %v7942, 100
        %v8309 = vpop.permute.xlu0 %8308
        %8310 = vrot.lane.b32.xlu0 %v7942, 68
        %v8311 = vpop.permute.xlu0 %8310
        %v8313 = vsel %vm762, %v8309, 0
        %v8316 = vsel %vm762, %v8311, 0
        %8318 = vmatprep.subr.bf16.mxu0 0
        %8319 = vmatpush1.bf16.xpose.msra.mxu0 %v8316
        %8320 = vmatprep.subr.bf16.mxu0 0
        %8321 = vmatpush1.bf16.xpose.msra.mxu0 0
        %8322 = vmatprep.subr.bf16.mxu0 0
        %8323 = vmatpush1.bf16.xpose.msra.mxu0 0
        %8324 = vmatprep.subr.bf16.mxu0 0
        %8325 = vmatpush1.bf16.xpose.msra.mxu0 0
        %8326 = vmatprep.subr.bf16.mxu0 0
        %8327 = vmatpush1.bf16.xpose.msra.mxu0 0
        %8328 = vmatprep.subr.bf16.mxu0 0
        %8329 = vmatpush1.bf16.xpose.msra.mxu0 0
        %8330 = vmatprep.subr.bf16.mxu0 0
        %8331 = vmatpush1.bf16.xpose.msra.mxu0 0
        %8332 = vmatprep.subr.bf16.mxu0 0
        %8333 = vmatpush1.bf16.xpose.msra.mxu0 0
        %8334 = vmatprep.subr.bf16.mxu0 0
        %8335 = vmatpush1.bf16.xpose.msra.mxu0 0
        %8336 = vmatprep.subr.bf16.mxu0 0
        %8337 = vmatpush1.bf16.xpose.msra.mxu0 0
        %8338 = vmatprep.subr.bf16.mxu0 0
        %8339 = vmatpush1.bf16.xpose.msra.mxu0 0
        %8340 = vmatprep.subr.bf16.mxu0 0
        %8341 = vmatpush1.bf16.xpose.msra.mxu0 0
        %8342 = vmatprep.subr.bf16.mxu0 0
        %8343 = vmatpush1.bf16.xpose.msra.mxu0 0
        %8344 = vmatprep.subr.bf16.mxu0 0
        %8345 = vmatpush1.bf16.xpose.msra.mxu0 0
        %8346 = vmatprep.subr.bf16.mxu0 0
        %8347 = vmatpush1.bf16.xpose.msra.mxu0 0
        %8348 = vmatprep.subr.bf16.mxu0 0
        %8349 = vmatpush1.bf16.xpose.msra.mxu0 0
        %8350 = vmatprep.mubr.bf16.mxu0 0
        %8351 = vmatmul.mubr.bf16.gmra.mrb[0].mxu0 %v8313
        %v8352 = vpop.f32.mrb[0].mxu0
        %v8353 = vadd.f32 0.0, %v8352
        %v8354 = vpop.f32.mrb[0].mxu0
        %v8355 = vpop.f32.mrb[0].mxu0
        %v8356 = vadd.f32 0.0, %v8355
        %v8357 = vpop.f32.mrb[0].mxu0
        %8358 = vdwg.mxu0
        %v8359 = vsel %vm1160, %v7989, -inf
        %8360 = vmax.xlane.f32.xlu0 %v8359
        %v8361 = vpop.xlane.xlu0 %8360
        %v8362 = vsel %vm1160, %v7992, -inf
        %8363 = vmax.xlane.f32.xlu0 %v8362
        %v8364 = vpop.xlane.xlu0 %8363
        %v8365 = vsel %vm1160, %v8041, -inf
        %8366 = vmax.xlane.f32.xlu0 %v8365
        %v8367 = vpop.xlane.xlu0 %8366
        %v8368 = vsel %vm1160, %v8044, -inf
        %8369 = vmax.xlane.f32.xlu0 %v8368
        %v8370 = vpop.xlane.xlu0 %8369
        %v8371 = vsel %vm1160, %v8093, -inf
        %8372 = vmax.xlane.f32.xlu0 %v8371
        %v8373 = vpop.xlane.xlu0 %8372
        %v8374 = vsel %vm1160, %v8096, -inf
        %8375 = vmax.xlane.f32.xlu0 %v8374
        %v8376 = vpop.xlane.xlu0 %8375
        %v8377 = vsel %vm1160, %v8145, -inf
        %8378 = vmax.xlane.f32.xlu0 %v8377
        %v8379 = vpop.xlane.xlu0 %8378
        %v8380 = vsel %vm1160, %v8148, -inf
        %8381 = vmax.xlane.f32.xlu0 %v8380
        %v8382 = vpop.xlane.xlu0 %8381
        %v8383 = vsel %vm1160, %v8197, -inf
        %8384 = vmax.xlane.f32.xlu0 %v8383
        %v8385 = vpop.xlane.xlu0 %8384
        %v8386 = vsel %vm1160, %v8200, -inf
        %8387 = vmax.xlane.f32.xlu0 %v8386
        %v8388 = vpop.xlane.xlu0 %8387
        %v8389 = vsel %vm1160, %v8249, -inf
        %8390 = vmax.xlane.f32.xlu0 %v8389
        %v8391 = vpop.xlane.xlu0 %8390
        %v8392 = vsel %vm1160, %v8252, -inf
        %8393 = vmax.xlane.f32.xlu0 %v8392
        %v8394 = vpop.xlane.xlu0 %8393
        %v8395 = vsel %vm1160, %v8301, -inf
        %8396 = vmax.xlane.f32.xlu0 %v8395
        %v8397 = vpop.xlane.xlu0 %8396
        %v8398 = vsel %vm1160, %v8304, -inf
        %8399 = vmax.xlane.f32.xlu0 %v8398
        %v8400 = vpop.xlane.xlu0 %8399
        %v8401 = vsel %vm1160, %v8353, -inf
        %8402 = vmax.xlane.f32.xlu0 %v8401
        %v8403 = vpop.xlane.xlu0 %8402
        %v8404 = vsel %vm1160, %v8356, -inf
        %8405 = vmax.xlane.f32.xlu0 %v8404
        %v8406 = vpop.xlane.xlu0 %8405
        %v8407 = vsub.f32 %v7989, %v8361
        %v8408 = vsub.f32 %v7992, %v8364
        %v8409 = vsub.f32 %v8041, %v8367
        %v8410 = vsub.f32 %v8044, %v8370
        %v8411 = vsub.f32 %v8093, %v8373
        %v8412 = vsub.f32 %v8096, %v8376
        %v8413 = vsub.f32 %v8145, %v8379
        %v8414 = vsub.f32 %v8148, %v8382
        %v8415 = vsub.f32 %v8197, %v8385
        %v8416 = vsub.f32 %v8200, %v8388
        %v8417 = vsub.f32 %v8249, %v8391
        %v8418 = vsub.f32 %v8252, %v8394
        %v8419 = vsub.f32 %v8301, %v8397
        %v8420 = vsub.f32 %v8304, %v8400
        %v8421 = vsub.f32 %v8353, %v8403
        %v8422 = vsub.f32 %v8356, %v8406
        %v8423 = vmul.f32 %v8407, 1.442695
        %v8424 = vpow.pop %v8423
        %v8425 = vmul.f32 %v8408, 1.442695
        %v8426 = vpow.pop %v8425
        %v8427 = vmul.f32 %v8409, 1.442695
        %v8428 = vpow.pop %v8427
        %v8429 = vmul.f32 %v8410, 1.442695
        %v8430 = vpow.pop %v8429
        %v8431 = vmul.f32 %v8411, 1.442695
        %v8432 = vpow.pop %v8431
        %v8433 = vmul.f32 %v8412, 1.442695
        %v8434 = vpow.pop %v8433
        %v8435 = vmul.f32 %v8413, 1.442695
        %v8436 = vpow.pop %v8435
        %v8437 = vmul.f32 %v8414, 1.442695
        %v8438 = vpow.pop %v8437
        %v8439 = vmul.f32 %v8415, 1.442695
        %v8440 = vpow.pop %v8439
        %v8441 = vmul.f32 %v8416, 1.442695
        %v8442 = vpow.pop %v8441
        %v8443 = vmul.f32 %v8417, 1.442695
        %v8444 = vpow.pop %v8443
        %v8445 = vmul.f32 %v8418, 1.442695
        %v8446 = vpow.pop %v8445
        %v8447 = vmul.f32 %v8419, 1.442695
        %v8448 = vpow.pop %v8447
        %v8449 = vmul.f32 %v8420, 1.442695
        %v8450 = vpow.pop %v8449
        %v8451 = vmul.f32 %v8421, 1.442695
        %v8452 = vpow.pop %v8451
        %v8453 = vmul.f32 %v8422, 1.442695
        %v8454 = vpow.pop %v8453
        %v8455 = vsel %vm1160, %v8424, 0.0
        %8456 = vadd.xlane.f32.xlu0 %v8455
        %v8457 = vpop.xlane.xlu0 %8456
        %v8458 = vsel %vm1160, %v8426, 0.0
        %8459 = vadd.xlane.f32.xlu0 %v8458
        %v8460 = vpop.xlane.xlu0 %8459
        %v8461 = vsel %vm1160, %v8428, 0.0
        %8462 = vadd.xlane.f32.xlu0 %v8461
        %v8463 = vpop.xlane.xlu0 %8462
        %v8464 = vsel %vm1160, %v8430, 0.0
        %8465 = vadd.xlane.f32.xlu0 %v8464
        %v8466 = vpop.xlane.xlu0 %8465
        %v8467 = vsel %vm1160, %v8432, 0.0
        %8468 = vadd.xlane.f32.xlu0 %v8467
        %v8469 = vpop.xlane.xlu0 %8468
        %v8470 = vsel %vm1160, %v8434, 0.0
        %8471 = vadd.xlane.f32.xlu0 %v8470
        %v8472 = vpop.xlane.xlu0 %8471
        %v8473 = vsel %vm1160, %v8436, 0.0
        %8474 = vadd.xlane.f32.xlu0 %v8473
        %v8475 = vpop.xlane.xlu0 %8474
        %v8476 = vsel %vm1160, %v8438, 0.0
        %8477 = vadd.xlane.f32.xlu0 %v8476
        %v8478 = vpop.xlane.xlu0 %8477
        %v8479 = vsel %vm1160, %v8440, 0.0
        %8480 = vadd.xlane.f32.xlu0 %v8479
        %v8481 = vpop.xlane.xlu0 %8480
        %v8482 = vsel %vm1160, %v8442, 0.0
        %8483 = vadd.xlane.f32.xlu0 %v8482
        %v8484 = vpop.xlane.xlu0 %8483
        %v8485 = vsel %vm1160, %v8444, 0.0
        %8486 = vadd.xlane.f32.xlu0 %v8485
        %v8487 = vpop.xlane.xlu0 %8486
        %v8488 = vsel %vm1160, %v8446, 0.0
        %8489 = vadd.xlane.f32.xlu0 %v8488
        %v8490 = vpop.xlane.xlu0 %8489
        %v8491 = vsel %vm1160, %v8448, 0.0
        %8492 = vadd.xlane.f32.xlu0 %v8491
        %v8493 = vpop.xlane.xlu0 %8492
        %v8494 = vsel %vm1160, %v8450, 0.0
        %8495 = vadd.xlane.f32.xlu0 %v8494
        %v8496 = vpop.xlane.xlu0 %8495
        %v8497 = vsel %vm1160, %v8452, 0.0
        %8498 = vadd.xlane.f32.xlu0 %v8497
        %v8499 = vpop.xlane.xlu0 %8498
        %v8500 = vsel %vm1160, %v8454, 0.0
        %8501 = vadd.xlane.f32.xlu0 %v8500
        %v8502 = vpop.xlane.xlu0 %8501
        %v8503 = vrcp.pop %v8457
        %v8504 = vrcp.pop %v8460
        %v8505 = vrcp.pop %v8463
        %v8506 = vrcp.pop %v8466
        %v8507 = vrcp.pop %v8469
        %v8508 = vrcp.pop %v8472
        %v8509 = vrcp.pop %v8475
        %v8510 = vrcp.pop %v8478
        %v8511 = vrcp.pop %v8481
        %v8512 = vrcp.pop %v8484
        %v8513 = vrcp.pop %v8487
        %v8514 = vrcp.pop %v8490
        %v8515 = vrcp.pop %v8493
        %v8516 = vrcp.pop %v8496
        %v8517 = vrcp.pop %v8499
        %v8518 = vrcp.pop %v8502
        %v8519 = vmul.f32 %v8424, %v8503
        %v8520 = vmul.f32 %v8426, %v8504
        %v8521 = vmul.f32 %v8428, %v8505
        %v8522 = vmul.f32 %v8430, %v8506
        %v8523 = vmul.f32 %v8432, %v8507
        %v8524 = vmul.f32 %v8434, %v8508
        %v8525 = vmul.f32 %v8436, %v8509
        %v8526 = vmul.f32 %v8438, %v8510
        %v8527 = vmul.f32 %v8440, %v8511
        %v8528 = vmul.f32 %v8442, %v8512
        %v8529 = vmul.f32 %v8444, %v8513
        %v8530 = vmul.f32 %v8446, %v8514
        %v8531 = vmul.f32 %v8448, %v8515
        %v8532 = vmul.f32 %v8450, %v8516
        %v8533 = vmul.f32 %v8452, %v8517
        %v8534 = vmul.f32 %v8454, %v8518
        %v8535 = vpack.c.bf16 %v8520, %v8519
        %v8536 = vpack.c.bf16 %v8522, %v8521
        %v8537 = vpack.c.bf16 %v8524, %v8523
        %v8538 = vpack.c.bf16 %v8526, %v8525
        %v8539 = vpack.c.bf16 %v8528, %v8527
        %v8540 = vpack.c.bf16 %v8530, %v8529
        %v8541 = vpack.c.bf16 %v8532, %v8531
        %v8542 = vpack.c.bf16 %v8534, %v8533
        %8543 = vrot.lane.b32.xlu0 %v7935, 36
        %v8544 = vpop.permute.xlu0 %8543
        %v8547 = vsel %vm1160, %v8535, 0
        %8549 = vmatprep.subr.bf16.mxu0 0
        %8550 = vmatpush1.bf16.msra.mxu0 %v8544
        %8551 = vmatprep.subr.bf16.mxu0 0
        %8552 = vmatpush1.bf16.msra.mxu0 0
        %8553 = vmatprep.subr.bf16.mxu0 0
        %8554 = vmatpush1.bf16.msra.mxu0 0
        %8555 = vmatprep.subr.bf16.mxu0 0
        %8556 = vmatpush1.bf16.msra.mxu0 0
        %8557 = vmatprep.subr.bf16.mxu0 0
        %8558 = vmatpush1.bf16.msra.mxu0 0
        %8559 = vmatprep.subr.bf16.mxu0 0
        %8560 = vmatpush1.bf16.msra.mxu0 0
        %8561 = vmatprep.subr.bf16.mxu0 0
        %8562 = vmatpush1.bf16.msra.mxu0 0
        %8563 = vmatprep.subr.bf16.mxu0 0
        %8564 = vmatpush1.bf16.msra.mxu0 0
        %8565 = vmatprep.subr.bf16.mxu0 0
        %8566 = vmatpush1.bf16.msra.mxu0 0
        %8567 = vmatprep.subr.bf16.mxu0 0
        %8568 = vmatpush1.bf16.msra.mxu0 0
        %8569 = vmatprep.subr.bf16.mxu0 0
        %8570 = vmatpush1.bf16.msra.mxu0 0
        %8571 = vmatprep.subr.bf16.mxu0 0
        %8572 = vmatpush1.bf16.msra.mxu0 0
        %8573 = vmatprep.subr.bf16.mxu0 0
        %8574 = vmatpush1.bf16.msra.mxu0 0
        %8575 = vmatprep.subr.bf16.mxu0 0
        %8576 = vmatpush1.bf16.msra.mxu0 0
        %8577 = vmatprep.subr.bf16.mxu0 0
        %8578 = vmatpush1.bf16.msra.mxu0 0
        %8579 = vmatprep.subr.bf16.mxu0 0
        %8580 = vmatpush1.bf16.msra.mxu0 0
        %8581 = vmatprep.mubr.bf16.mxu0 0
        %8582 = vmatmul.mubr.bf16.gmra.mrb[0].mxu0 %v8547
        %v8583 = vpop.f32.mrb[0].mxu0
        %v8584 = vadd.f32 0.0, %v8583
        %v8585 = vpop.f32.mrb[0].mxu0
        %v8586 = vpop.f32.mrb[0].mxu0
        %v8587 = vadd.f32 0.0, %v8586
        %v8588 = vpop.f32.mrb[0].mxu0
        %8589 = vdwg.mxu0
        %8590 = vrot.lane.b32.xlu0 %v7936, 36
        %v8591 = vpop.permute.xlu0 %8590
        %v8594 = vsel %vm1160, %v8536, 0
        %8596 = vmatprep.subr.bf16.mxu0 0
        %8597 = vmatpush1.bf16.msra.mxu0 %v8591
        %8598 = vmatprep.subr.bf16.mxu0 0
        %8599 = vmatpush1.bf16.msra.mxu0 0
        %8600 = vmatprep.subr.bf16.mxu0 0
        %8601 = vmatpush1.bf16.msra.mxu0 0
        %8602 = vmatprep.subr.bf16.mxu0 0
        %8603 = vmatpush1.bf16.msra.mxu0 0
        %8604 = vmatprep.subr.bf16.mxu0 0
        %8605 = vmatpush1.bf16.msra.mxu0 0
        %8606 = vmatprep.subr.bf16.mxu0 0
        %8607 = vmatpush1.bf16.msra.mxu0 0
        %8608 = vmatprep.subr.bf16.mxu0 0
        %8609 = vmatpush1.bf16.msra.mxu0 0
        %8610 = vmatprep.subr.bf16.mxu0 0
        %8611 = vmatpush1.bf16.msra.mxu0 0
        %8612 = vmatprep.subr.bf16.mxu0 0
        %8613 = vmatpush1.bf16.msra.mxu0 0
        %8614 = vmatprep.subr.bf16.mxu0 0
        %8615 = vmatpush1.bf16.msra.mxu0 0
        %8616 = vmatprep.subr.bf16.mxu0 0
        %8617 = vmatpush1.bf16.msra.mxu0 0
        %8618 = vmatprep.subr.bf16.mxu0 0
        %8619 = vmatpush1.bf16.msra.mxu0 0
        %8620 = vmatprep.subr.bf16.mxu0 0
        %8621 = vmatpush1.bf16.msra.mxu0 0
        %8622 = vmatprep.subr.bf16.mxu0 0
        %8623 = vmatpush1.bf16.msra.mxu0 0
        %8624 = vmatprep.subr.bf16.mxu0 0
        %8625 = vmatpush1.bf16.msra.mxu0 0
        %8626 = vmatprep.subr.bf16.mxu0 0
        %8627 = vmatpush1.bf16.msra.mxu0 0
        %8628 = vmatprep.mubr.bf16.mxu0 0
        %8629 = vmatmul.mubr.bf16.gmra.mrb[0].mxu0 %v8594
        %v8630 = vpop.f32.mrb[0].mxu0
        %v8631 = vadd.f32 0.0, %v8630
        %v8632 = vpop.f32.mrb[0].mxu0
        %v8633 = vpop.f32.mrb[0].mxu0
        %v8634 = vadd.f32 0.0, %v8633
        %v8635 = vpop.f32.mrb[0].mxu0
        %8636 = vdwg.mxu0
        %8637 = vrot.lane.b32.xlu0 %v7937, 36
        %v8638 = vpop.permute.xlu0 %8637
        %v8641 = vsel %vm1160, %v8537, 0
        %8643 = vmatprep.subr.bf16.mxu0 0
        %8644 = vmatpush1.bf16.msra.mxu0 %v8638
        %8645 = vmatprep.subr.bf16.mxu0 0
        %8646 = vmatpush1.bf16.msra.mxu0 0
        %8647 = vmatprep.subr.bf16.mxu0 0
        %8648 = vmatpush1.bf16.msra.mxu0 0
        %8649 = vmatprep.subr.bf16.mxu0 0
        %8650 = vmatpush1.bf16.msra.mxu0 0
        %8651 = vmatprep.subr.bf16.mxu0 0
        %8652 = vmatpush1.bf16.msra.mxu0 0
        %8653 = vmatprep.subr.bf16.mxu0 0
        %8654 = vmatpush1.bf16.msra.mxu0 0
        %8655 = vmatprep.subr.bf16.mxu0 0
        %8656 = vmatpush1.bf16.msra.mxu0 0
        %8657 = vmatprep.subr.bf16.mxu0 0
        %8658 = vmatpush1.bf16.msra.mxu0 0
        %8659 = vmatprep.subr.bf16.mxu0 0
        %8660 = vmatpush1.bf16.msra.mxu0 0
        %8661 = vmatprep.subr.bf16.mxu0 0
        %8662 = vmatpush1.bf16.msra.mxu0 0
        %8663 = vmatprep.subr.bf16.mxu0 0
        %8664 = vmatpush1.bf16.msra.mxu0 0
        %8665 = vmatprep.subr.bf16.mxu0 0
        %8666 = vmatpush1.bf16.msra.mxu0 0
        %8667 = vmatprep.subr.bf16.mxu0 0
        %8668 = vmatpush1.bf16.msra.mxu0 0
        %8669 = vmatprep.subr.bf16.mxu0 0
        %8670 = vmatpush1.bf16.msra.mxu0 0
        %8671 = vmatprep.subr.bf16.mxu0 0
        %8672 = vmatpush1.bf16.msra.mxu0 0
        %8673 = vmatprep.subr.bf16.mxu0 0
        %8674 = vmatpush1.bf16.msra.mxu0 0
        %8675 = vmatprep.mubr.bf16.mxu0 0
        %8676 = vmatmul.mubr.bf16.gmra.mrb[0].mxu0 %v8641
        %v8677 = vpop.f32.mrb[0].mxu0
        %v8678 = vadd.f32 0.0, %v8677
        %v8679 = vpop.f32.mrb[0].mxu0
        %v8680 = vpop.f32.mrb[0].mxu0
        %v8681 = vadd.f32 0.0, %v8680
        %v8682 = vpop.f32.mrb[0].mxu0
        %8683 = vdwg.mxu0
        %8684 = vrot.lane.b32.xlu0 %v7938, 36
        %v8685 = vpop.permute.xlu0 %8684
        %v8688 = vsel %vm1160, %v8538, 0
        %8690 = vmatprep.subr.bf16.mxu0 0
        %8691 = vmatpush1.bf16.msra.mxu0 %v8685
        %8692 = vmatprep.subr.bf16.mxu0 0
        %8693 = vmatpush1.bf16.msra.mxu0 0
        %8694 = vmatprep.subr.bf16.mxu0 0
        %8695 = vmatpush1.bf16.msra.mxu0 0
        %8696 = vmatprep.subr.bf16.mxu0 0
        %8697 = vmatpush1.bf16.msra.mxu0 0
        %8698 = vmatprep.subr.bf16.mxu0 0
        %8699 = vmatpush1.bf16.msra.mxu0 0
        %8700 = vmatprep.subr.bf16.mxu0 0
        %8701 = vmatpush1.bf16.msra.mxu0 0
        %8702 = vmatprep.subr.bf16.mxu0 0
        %8703 = vmatpush1.bf16.msra.mxu0 0
        %8704 = vmatprep.subr.bf16.mxu0 0
        %8705 = vmatpush1.bf16.msra.mxu0 0
        %8706 = vmatprep.subr.bf16.mxu0 0
        %8707 = vmatpush1.bf16.msra.mxu0 0
        %8708 = vmatprep.subr.bf16.mxu0 0
        %8709 = vmatpush1.bf16.msra.mxu0 0
        %8710 = vmatprep.subr.bf16.mxu0 0
        %8711 = vmatpush1.bf16.msra.mxu0 0
        %8712 = vmatprep.subr.bf16.mxu0 0
        %8713 = vmatpush1.bf16.msra.mxu0 0
        %8714 = vmatprep.subr.bf16.mxu0 0
        %8715 = vmatpush1.bf16.msra.mxu0 0
        %8716 = vmatprep.subr.bf16.mxu0 0
        %8717 = vmatpush1.bf16.msra.mxu0 0
        %8718 = vmatprep.subr.bf16.mxu0 0
        %8719 = vmatpush1.bf16.msra.mxu0 0
        %8720 = vmatprep.subr.bf16.mxu0 0
        %8721 = vmatpush1.bf16.msra.mxu0 0
        %8722 = vmatprep.mubr.bf16.mxu0 0
        %8723 = vmatmul.mubr.bf16.gmra.mrb[0].mxu0 %v8688
        %v8724 = vpop.f32.mrb[0].mxu0
        %v8725 = vadd.f32 0.0, %v8724
        %v8726 = vpop.f32.mrb[0].mxu0
        %v8727 = vpop.f32.mrb[0].mxu0
        %v8728 = vadd.f32 0.0, %v8727
        %v8729 = vpop.f32.mrb[0].mxu0
        %8730 = vdwg.mxu0
        %8731 = vrot.lane.b32.xlu0 %v7939, 36
        %v8732 = vpop.permute.xlu0 %8731
        %v8735 = vsel %vm1160, %v8539, 0
        %8737 = vmatprep.subr.bf16.mxu0 0
        %8738 = vmatpush1.bf16.msra.mxu0 %v8732
        %8739 = vmatprep.subr.bf16.mxu0 0
        %8740 = vmatpush1.bf16.msra.mxu0 0
        %8741 = vmatprep.subr.bf16.mxu0 0
        %8742 = vmatpush1.bf16.msra.mxu0 0
        %8743 = vmatprep.subr.bf16.mxu0 0
        %8744 = vmatpush1.bf16.msra.mxu0 0
        %8745 = vmatprep.subr.bf16.mxu0 0
        %8746 = vmatpush1.bf16.msra.mxu0 0
        %8747 = vmatprep.subr.bf16.mxu0 0
        %8748 = vmatpush1.bf16.msra.mxu0 0
        %8749 = vmatprep.subr.bf16.mxu0 0
        %8750 = vmatpush1.bf16.msra.mxu0 0
        %8751 = vmatprep.subr.bf16.mxu0 0
        %8752 = vmatpush1.bf16.msra.mxu0 0
        %8753 = vmatprep.subr.bf16.mxu0 0
        %8754 = vmatpush1.bf16.msra.mxu0 0
        %8755 = vmatprep.subr.bf16.mxu0 0
        %8756 = vmatpush1.bf16.msra.mxu0 0
        %8757 = vmatprep.subr.bf16.mxu0 0
        %8758 = vmatpush1.bf16.msra.mxu0 0
        %8759 = vmatprep.subr.bf16.mxu0 0
        %8760 = vmatpush1.bf16.msra.mxu0 0
        %8761 = vmatprep.subr.bf16.mxu0 0
        %8762 = vmatpush1.bf16.msra.mxu0 0
        %8763 = vmatprep.subr.bf16.mxu0 0
        %8764 = vmatpush1.bf16.msra.mxu0 0
        %8765 = vmatprep.subr.bf16.mxu0 0
        %8766 = vmatpush1.bf16.msra.mxu0 0
        %8767 = vmatprep.subr.bf16.mxu0 0
        %8768 = vmatpush1.bf16.msra.mxu0 0
        %8769 = vmatprep.mubr.bf16.mxu0 0
        %8770 = vmatmul.mubr.bf16.gmra.mrb[0].mxu0 %v8735
        %v8771 = vpop.f32.mrb[0].mxu0
        %v8772 = vadd.f32 0.0, %v8771
        %v8773 = vpop.f32.mrb[0].mxu0
        %v8774 = vpop.f32.mrb[0].mxu0
        %v8775 = vadd.f32 0.0, %v8774
        %v8776 = vpop.f32.mrb[0].mxu0
        %8777 = vdwg.mxu0
        %8778 = vrot.lane.b32.xlu0 %v7940, 36
        %v8779 = vpop.permute.xlu0 %8778
        %v8782 = vsel %vm1160, %v8540, 0
        %8784 = vmatprep.subr.bf16.mxu0 0
        %8785 = vmatpush1.bf16.msra.mxu0 %v8779
        %8786 = vmatprep.subr.bf16.mxu0 0
        %8787 = vmatpush1.bf16.msra.mxu0 0
        %8788 = vmatprep.subr.bf16.mxu0 0
        %8789 = vmatpush1.bf16.msra.mxu0 0
        %8790 = vmatprep.subr.bf16.mxu0 0
        %8791 = vmatpush1.bf16.msra.mxu0 0
        %8792 = vmatprep.subr.bf16.mxu0 0
        %8793 = vmatpush1.bf16.msra.mxu0 0
        %8794 = vmatprep.subr.bf16.mxu0 0
        %8795 = vmatpush1.bf16.msra.mxu0 0
        %8796 = vmatprep.subr.bf16.mxu0 0
        %8797 = vmatpush1.bf16.msra.mxu0 0
        %8798 = vmatprep.subr.bf16.mxu0 0
        %8799 = vmatpush1.bf16.msra.mxu0 0
        %8800 = vmatprep.subr.bf16.mxu0 0
        %8801 = vmatpush1.bf16.msra.mxu0 0
        %8802 = vmatprep.subr.bf16.mxu0 0
        %8803 = vmatpush1.bf16.msra.mxu0 0
        %8804 = vmatprep.subr.bf16.mxu0 0
        %8805 = vmatpush1.bf16.msra.mxu0 0
        %8806 = vmatprep.subr.bf16.mxu0 0
        %8807 = vmatpush1.bf16.msra.mxu0 0
        %8808 = vmatprep.subr.bf16.mxu0 0
        %8809 = vmatpush1.bf16.msra.mxu0 0
        %8810 = vmatprep.subr.bf16.mxu0 0
        %8811 = vmatpush1.bf16.msra.mxu0 0
        %8812 = vmatprep.subr.bf16.mxu0 0
        %8813 = vmatpush1.bf16.msra.mxu0 0
        %8814 = vmatprep.subr.bf16.mxu0 0
        %8815 = vmatpush1.bf16.msra.mxu0 0
        %8816 = vmatprep.mubr.bf16.mxu0 0
        %8817 = vmatmul.mubr.bf16.gmra.mrb[0].mxu0 %v8782
        %v8818 = vpop.f32.mrb[0].mxu0
        %v8819 = vadd.f32 0.0, %v8818
        %v8820 = vpop.f32.mrb[0].mxu0
        %v8821 = vpop.f32.mrb[0].mxu0
        %v8822 = vadd.f32 0.0, %v8821
        %v8823 = vpop.f32.mrb[0].mxu0
        %8824 = vdwg.mxu0
        %8825 = vrot.lane.b32.xlu0 %v7941, 36
        %v8826 = vpop.permute.xlu0 %8825
        %v8829 = vsel %vm1160, %v8541, 0
        %8831 = vmatprep.subr.bf16.mxu0 0
        %8832 = vmatpush1.bf16.msra.mxu0 %v8826
        %8833 = vmatprep.subr.bf16.mxu0 0
        %8834 = vmatpush1.bf16.msra.mxu0 0
        %8835 = vmatprep.subr.bf16.mxu0 0
        %8836 = vmatpush1.bf16.msra.mxu0 0
        %8837 = vmatprep.subr.bf16.mxu0 0
        %8838 = vmatpush1.bf16.msra.mxu0 0
        %8839 = vmatprep.subr.bf16.mxu0 0
        %8840 = vmatpush1.bf16.msra.mxu0 0
        %8841 = vmatprep.subr.bf16.mxu0 0
        %8842 = vmatpush1.bf16.msra.mxu0 0
        %8843 = vmatprep.subr.bf16.mxu0 0
        %8844 = vmatpush1.bf16.msra.mxu0 0
        %8845 = vmatprep.subr.bf16.mxu0 0
        %8846 = vmatpush1.bf16.msra.mxu0 0
        %8847 = vmatprep.subr.bf16.mxu0 0
        %8848 = vmatpush1.bf16.msra.mxu0 0
        %8849 = vmatprep.subr.bf16.mxu0 0
        %8850 = vmatpush1.bf16.msra.mxu0 0
        %8851 = vmatprep.subr.bf16.mxu0 0
        %8852 = vmatpush1.bf16.msra.mxu0 0
        %8853 = vmatprep.subr.bf16.mxu0 0
        %8854 = vmatpush1.bf16.msra.mxu0 0
        %8855 = vmatprep.subr.bf16.mxu0 0
        %8856 = vmatpush1.bf16.msra.mxu0 0
        %8857 = vmatprep.subr.bf16.mxu0 0
        %8858 = vmatpush1.bf16.msra.mxu0 0
        %8859 = vmatprep.subr.bf16.mxu0 0
        %8860 = vmatpush1.bf16.msra.mxu0 0
        %8861 = vmatprep.subr.bf16.mxu0 0
        %8862 = vmatpush1.bf16.msra.mxu0 0
        %8863 = vmatprep.mubr.bf16.mxu0 0
        %8864 = vmatmul.mubr.bf16.gmra.mrb[0].mxu0 %v8829
        %v8865 = vpop.f32.mrb[0].mxu0
        %v8866 = vadd.f32 0.0, %v8865
        %v8867 = vpop.f32.mrb[0].mxu0
        %v8868 = vpop.f32.mrb[0].mxu0
        %v8869 = vadd.f32 0.0, %v8868
        %v8870 = vpop.f32.mrb[0].mxu0
        %8871 = vdwg.mxu0
        %8872 = vrot.lane.b32.xlu0 %v7942, 36
        %v8873 = vpop.permute.xlu0 %8872
        %v8876 = vsel %vm1160, %v8542, 0
        %8878 = vmatprep.subr.bf16.mxu0 0
        %8879 = vmatpush1.bf16.msra.mxu0 %v8873
        %8880 = vmatprep.subr.bf16.mxu0 0
        %8881 = vmatpush1.bf16.msra.mxu0 0
        %8882 = vmatprep.subr.bf16.mxu0 0
        %8883 = vmatpush1.bf16.msra.mxu0 0
        %8884 = vmatprep.subr.bf16.mxu0 0
        %8885 = vmatpush1.bf16.msra.mxu0 0
        %8886 = vmatprep.subr.bf16.mxu0 0
        %8887 = vmatpush1.bf16.msra.mxu0 0
        %8888 = vmatprep.subr.bf16.mxu0 0
        %8889 = vmatpush1.bf16.msra.mxu0 0
        %8890 = vmatprep.subr.bf16.mxu0 0
        %8891 = vmatpush1.bf16.msra.mxu0 0
        %8892 = vmatprep.subr.bf16.mxu0 0
        %8893 = vmatpush1.bf16.msra.mxu0 0
        %8894 = vmatprep.subr.bf16.mxu0 0
        %8895 = vmatpush1.bf16.msra.mxu0 0
        %8896 = vmatprep.subr.bf16.mxu0 0
        %8897 = vmatpush1.bf16.msra.mxu0 0
        %8898 = vmatprep.subr.bf16.mxu0 0
        %8899 = vmatpush1.bf16.msra.mxu0 0
        %8900 = vmatprep.subr.bf16.mxu0 0
        %8901 = vmatpush1.bf16.msra.mxu0 0
        %8902 = vmatprep.subr.bf16.mxu0 0
        %8903 = vmatpush1.bf16.msra.mxu0 0
        %8904 = vmatprep.subr.bf16.mxu0 0
        %8905 = vmatpush1.bf16.msra.mxu0 0
        %8906 = vmatprep.subr.bf16.mxu0 0
        %8907 = vmatpush1.bf16.msra.mxu0 0
        %8908 = vmatprep.subr.bf16.mxu0 0
        %8909 = vmatpush1.bf16.msra.mxu0 0
        %8910 = vmatprep.mubr.bf16.mxu0 0
        %8911 = vmatmul.mubr.bf16.gmra.mrb[0].mxu0 %v8876
        %v8912 = vpop.f32.mrb[0].mxu0
        %v8913 = vadd.f32 0.0, %v8912
        %v8914 = vpop.f32.mrb[0].mxu0
        %v8915 = vpop.f32.mrb[0].mxu0
        %v8916 = vadd.f32 0.0, %v8915
        %v8917 = vpop.f32.mrb[0].mxu0
        %8918 = vdwg.mxu0
        %v8919 = vpack.c.bf16 %v8587, %v8584
        %v8920 = vpack.c.bf16 %v8634, %v8631
        %v8921 = vpack.c.bf16 %v8681, %v8678
        %v8922 = vpack.c.bf16 %v8728, %v8725
        %v8923 = vpack.c.bf16 %v8775, %v8772
        %v8924 = vpack.c.bf16 %v8822, %v8819
        %v8925 = vpack.c.bf16 %v8869, %v8866
        %v8926 = vpack.c.bf16 %v8916, %v8913
        %8935 = vrot.lane.b32.xlu0 %v8919, 28
        %v8936 = vpop.permute.xlu0 %8935
        %8937 = vrot.lane.b32.xlu0 %v8920, 28
        %v8938 = vpop.permute.xlu0 %8937
        %8939 = vrot.lane.b32.xlu0 %v8921, 28
        %v8940 = vpop.permute.xlu0 %8939
        %8941 = vrot.lane.b32.xlu0 %v8922, 28
        %v8942 = vpop.permute.xlu0 %8941
        %8943 = vrot.lane.b32.xlu0 %v8923, 28
        %v8944 = vpop.permute.xlu0 %8943
        %8945 = vrot.lane.b32.xlu0 %v8924, 28
        %v8946 = vpop.permute.xlu0 %8945
        %8947 = vrot.lane.b32.xlu0 %v8925, 28
        %v8948 = vpop.permute.xlu0 %8947
        %8949 = vrot.lane.b32.xlu0 %v8926, 28
        %v8950 = vpop.permute.xlu0 %8949
        %vm8959 = vcmask 261344
        %8960 = vst.msk [vmem:[#allocation3] sm:$0xff] %vm8959, %v8936
        %8961 = vst.msk [vmem:[#allocation3 + $0x8] sm:$0xff] %vm8959, %v8938
        %8962 = vst.msk [vmem:[#allocation3 + $0x10] sm:$0xff] %vm8959, %v8940
        %8963 = vst.msk [vmem:[#allocation3 + $0x18] sm:$0xff] %vm8959, %v8942
        %8964 = vst.msk [vmem:[#allocation3 + $0x20] sm:$0xff] %vm8959, %v8944
        %8965 = vst.msk [vmem:[#allocation3 + $0x28] sm:$0xff] %vm8959, %v8946
        %8966 = vst.msk [vmem:[#allocation3 + $0x30] sm:$0xff] %vm8959, %v8948
        %8967 = vst.msk [vmem:[#allocation3 + $0x38] sm:$0xff] %vm8959, %v8950
        %v8968 = vld [vmem:[#allocation3] sm:$0xff]
        %v8969 = vld [vmem:[#allocation3 + $0x8] sm:$0xff]
        %v8970 = vld [vmem:[#allocation3 + $0x10] sm:$0xff]
        %v8971 = vld [vmem:[#allocation3 + $0x18] sm:$0xff]
        %v8972 = vld [vmem:[#allocation3 + $0x20] sm:$0xff]
        %v8973 = vld [vmem:[#allocation3 + $0x28] sm:$0xff]
        %v8974 = vld [vmem:[#allocation3 + $0x30] sm:$0xff]
        %v8975 = vld [vmem:[#allocation3 + $0x38] sm:$0xff]
        %v8976 = vld [vmem:[%s5] sm:$0xf]
        %v8977 = vld [vmem:[%s5 + $0x4] sm:$0xf]
        %v8978 = vld [vmem:[%s5 + $0x8] sm:$0xf]
        %v8979 = vld [vmem:[%s5 + $0xc] sm:$0xf]
        %v8980 = vld [vmem:[%s6] sm:$0x1]
        %v8982 = vlaneseq
        %v8983 = vshrl.u32 %v8982, 7
        %v8984 = vsub.s32 0, %v8983
        %v8985 = vrot.slane %v8980, %v8984
        %v8991 = vunpack.c.l.b16 %v8976
        %v8992 = vunpack.c.l.b16 %v8977
        %v8993 = vunpack.c.l.b16 %v8978
        %v8994 = vunpack.c.l.b16 %v8979
        %v8995 = vpack.c.b16 %v8992, %v8991
        %v8996 = vpack.c.b16 %v8994, %v8993
        %v9000 = vsel %vm440, %v8968, 0
        %v9003 = vsel %vm440, %v8969, 0
        %v9006 = vsel %vm440, %v8970, 0
        %v9009 = vsel %vm440, %v8971, 0
        %v9012 = vsel %vm440, %v8972, 0
        %v9015 = vsel %vm440, %v8973, 0
        %v9018 = vsel %vm440, %v8974, 0
        %v9021 = vsel %vm440, %v8975, 0
        %9023 = vmatprep.subr.bf16.mxu0 0
        %9024 = vmatpush1.bf16.msra.mxu0 %v8995
        %9025 = vmatprep.subr.bf16.mxu0 0
        %9026 = vmatpush1.bf16.msra.mxu0 %v8996
        %9027 = vmatprep.subr.bf16.mxu0 0
        %9028 = vmatpush1.bf16.msra.mxu0 0
        %9029 = vmatprep.subr.bf16.mxu0 0
        %9030 = vmatpush1.bf16.msra.mxu0 0
        %9031 = vmatprep.subr.bf16.mxu0 0
        %9032 = vmatpush1.bf16.msra.mxu0 0
        %9033 = vmatprep.subr.bf16.mxu0 0
        %9034 = vmatpush1.bf16.msra.mxu0 0
        %9035 = vmatprep.subr.bf16.mxu0 0
        %9036 = vmatpush1.bf16.msra.mxu0 0
        %9037 = vmatprep.subr.bf16.mxu0 0
        %9038 = vmatpush1.bf16.msra.mxu0 0
        %9039 = vmatprep.subr.bf16.mxu0 0
        %9040 = vmatpush1.bf16.msra.mxu0 0
        %9041 = vmatprep.subr.bf16.mxu0 0
        %9042 = vmatpush1.bf16.msra.mxu0 0
        %9043 = vmatprep.subr.bf16.mxu0 0
        %9044 = vmatpush1.bf16.msra.mxu0 0
        %9045 = vmatprep.subr.bf16.mxu0 0
        %9046 = vmatpush1.bf16.msra.mxu0 0
        %9047 = vmatprep.subr.bf16.mxu0 0
        %9048 = vmatpush1.bf16.msra.mxu0 0
        %9049 = vmatprep.subr.bf16.mxu0 0
        %9050 = vmatpush1.bf16.msra.mxu0 0
        %9051 = vmatprep.subr.bf16.mxu0 0
        %9052 = vmatpush1.bf16.msra.mxu0 0
        %9053 = vmatprep.subr.bf16.mxu0 0
        %9054 = vmatpush1.bf16.msra.mxu0 0
        %9055 = vmatprep.mubr.bf16.mxu0 0
        %9056 = vmatmul.mubr.bf16.gmra.mrb[0].mxu0 %v9000
        %v9057 = vpop.f32.mrb[0].mxu0
        %v9058 = vadd.f32 %v8985, %v9057
        %v9059 = vpop.f32.mrb[0].mxu0
        %v9060 = vpop.f32.mrb[0].mxu0
        %v9061 = vadd.f32 %v8985, %v9060
        %v9062 = vpop.f32.mrb[0].mxu0
        %9063 = vmatprep.mubr.bf16.mxu0 0
        %9064 = vmatmul.mubr.bf16.gmra.mrb[0].mxu0 %v9003
        %v9065 = vpop.f32.mrb[0].mxu0
        %v9066 = vadd.f32 %v8985, %v9065
        %v9067 = vpop.f32.mrb[0].mxu0
        %v9068 = vpop.f32.mrb[0].mxu0
        %v9069 = vadd.f32 %v8985, %v9068
        %v9070 = vpop.f32.mrb[0].mxu0
        %9071 = vmatprep.mubr.bf16.mxu0 0
        %9072 = vmatmul.mubr.bf16.gmra.mrb[0].mxu0 %v9006
        %v9073 = vpop.f32.mrb[0].mxu0
        %v9074 = vadd.f32 %v8985, %v9073
        %v9075 = vpop.f32.mrb[0].mxu0
        %v9076 = vpop.f32.mrb[0].mxu0
        %v9077 = vadd.f32 %v8985, %v9076
        %v9078 = vpop.f32.mrb[0].mxu0
        %9079 = vmatprep.mubr.bf16.mxu0 0
        %9080 = vmatmul.mubr.bf16.gmra.mrb[0].mxu0 %v9009
        %v9081 = vpop.f32.mrb[0].mxu0
        %v9082 = vadd.f32 %v8985, %v9081
        %v9083 = vpop.f32.mrb[0].mxu0
        %v9084 = vpop.f32.mrb[0].mxu0
        %v9085 = vadd.f32 %v8985, %v9084
        %v9086 = vpop.f32.mrb[0].mxu0
        %9087 = vmatprep.mubr.bf16.mxu0 0
        %9088 = vmatmul.mubr.bf16.gmra.mrb[0].mxu0 %v9012
        %v9089 = vpop.f32.mrb[0].mxu0
        %v9090 = vadd.f32 %v8985, %v9089
        %v9091 = vpop.f32.mrb[0].mxu0
        %v9092 = vpop.f32.mrb[0].mxu0
        %v9093 = vadd.f32 %v8985, %v9092
        %v9094 = vpop.f32.mrb[0].mxu0
        %9095 = vmatprep.mubr.bf16.mxu0 0
        %9096 = vmatmul.mubr.bf16.gmra.mrb[0].mxu0 %v9015
        %v9097 = vpop.f32.mrb[0].mxu0
        %v9098 = vadd.f32 %v8985, %v9097
        %v9099 = vpop.f32.mrb[0].mxu0
        %v9100 = vpop.f32.mrb[0].mxu0
        %v9101 = vadd.f32 %v8985, %v9100
        %v9102 = vpop.f32.mrb[0].mxu0
        %9103 = vmatprep.mubr.bf16.mxu0 0
        %9104 = vmatmul.mubr.bf16.gmra.mrb[0].mxu0 %v9018
        %v9105 = vpop.f32.mrb[0].mxu0
        %v9106 = vadd.f32 %v8985, %v9105
        %v9107 = vpop.f32.mrb[0].mxu0
        %v9108 = vpop.f32.mrb[0].mxu0
        %v9109 = vadd.f32 %v8985, %v9108
        %v9110 = vpop.f32.mrb[0].mxu0
        %9111 = vmatprep.mubr.bf16.mxu0 0
        %9112 = vmatmul.mubr.bf16.gmra.mrb[0].mxu0 %v9021
        %v9113 = vpop.f32.mrb[0].mxu0
        %v9114 = vadd.f32 %v8985, %v9113
        %v9115 = vpop.f32.mrb[0].mxu0
        %v9116 = vpop.f32.mrb[0].mxu0
        %v9117 = vadd.f32 %v8985, %v9116
        %v9118 = vpop.f32.mrb[0].mxu0
        %9119 = vdwg.mxu0
        %v9120 = vmax.f32 %v9058, 0.0
        %v9121 = vmax.f32 %v9061, 0.0
        %v9122 = vmax.f32 %v9066, 0.0
        %v9123 = vmax.f32 %v9069, 0.0
        %v9124 = vmax.f32 %v9074, 0.0
        %v9125 = vmax.f32 %v9077, 0.0
        %v9126 = vmax.f32 %v9082, 0.0
        %v9127 = vmax.f32 %v9085, 0.0
        %v9128 = vmax.f32 %v9090, 0.0
        %v9129 = vmax.f32 %v9093, 0.0
        %v9130 = vmax.f32 %v9098, 0.0
        %v9131 = vmax.f32 %v9101, 0.0
        %v9132 = vmax.f32 %v9106, 0.0
        %v9133 = vmax.f32 %v9109, 0.0
        %v9134 = vmax.f32 %v9114, 0.0
        %v9135 = vmax.f32 %v9117, 0.0
        %9136 = vst.msk [vmem:[%s367] sm:$0xff] %vm440, %v9120
        %9137 = vst.msk [vmem:[%s367 + $0x8] sm:$0xff] %vm440, %v9121
        %9138 = vst.msk [vmem:[%s367 + $0x10] sm:$0xff] %vm440, %v9122
        %9139 = vst.msk [vmem:[%s367 + $0x18] sm:$0xff] %vm440, %v9123
        %9140 = vst.msk [vmem:[%s367 + $0x20] sm:$0xff] %vm440, %v9124
        %9141 = vst.msk [vmem:[%s367 + $0x28] sm:$0xff] %vm440, %v9125
        %9142 = vst.msk [vmem:[%s367 + $0x30] sm:$0xff] %vm440, %v9126
        %9143 = vst.msk [vmem:[%s367 + $0x38] sm:$0xff] %vm440, %v9127
        %9144 = vst.msk [vmem:[%s367 + $0x40] sm:$0xff] %vm440, %v9128
        %9145 = vst.msk [vmem:[%s367 + $0x48] sm:$0xff] %vm440, %v9129
        %9146 = vst.msk [vmem:[%s367 + $0x50] sm:$0xff] %vm440, %v9130
        %9147 = vst.msk [vmem:[%s367 + $0x58] sm:$0xff] %vm440, %v9131
        %9148 = vst.msk [vmem:[%s367 + $0x60] sm:$0xff] %vm440, %v9132
        %9149 = vst.msk [vmem:[%s367 + $0x68] sm:$0xff] %vm440, %v9133
        %9150 = vst.msk [vmem:[%s367 + $0x70] sm:$0xff] %vm440, %v9134
        %9151 = vst.msk [vmem:[%s367 + $0x78] sm:$0xff] %vm440, %v9135
        %s9152 = sand.u32 %s193, 1
        %s9153 = scalar_lea.sflag [#allocation6], %s9152
        %s9154 = sand.u32 %s193, 1
        %s9155 = smul.addr %s9154, 128
        %s9156 = scalar_lea.vmem [#allocation12], %s9155
        // Predicated region
        $region65: #{tpu_custom_call.1} parent=47 // pred_check
          %p9157 = pneg %p203
        $region66: #{tpu_custom_call.1} parent=47 // pred_check_branch
          %9159 = sbr.rel (%p9157) target = $region68
        $region67: #{tpu_custom_call.1} parent=47 // pred_region
          %s9160 = smul.u32 8, %s28
          %s9162 = ssub.s32 2048, 2048
          %9163 = vsyncadd %s9153, %s9162
          %s9164 = smul.addr %s9160, 2
          %s9165 = smul.addr %s9164, 128
          %s9166 = scalar_lea.hbm %s7, %s9165
          %s9167 = sshll.u32 %s9156, 4
          %s9168 = int_to_ptr.vmem [resolvable:$true] %s9167
          %9173 = dma.vmem_to_hbm [thread:$0]  %s9168, 2048, %s9166, %s9153, 128, 128, 8
        $region68: #{tpu_custom_call.1} parent=47 // pred_fallthru
          _
      $region48: #{tpu_custom_call.1} parent=5 // pred_fallthru
        _
      %p9174 = scmp.le.s32.totalorder 2, %s23
      // Predicated region
      $region69: #{tpu_custom_call.1} parent=5 // pred_check
        %p9175 = pneg %p9174
      $region70: #{tpu_custom_call.1} parent=5 // pred_check_branch
        %9177 = sbr.rel (%p9175) target = $region72
      $region71: #{tpu_custom_call.1} parent=5 // pred_region
        %s9178 = ssub.s32 %s23, 2
        // Predicated region
        $region73: #{tpu_custom_call.1} parent=71 // pred_check
          %p9179 = pneg %p209
        $region74: #{tpu_custom_call.1} parent=71 // pred_check_branch
          %9181 = sbr.rel (%p9179) target = $region76
        $region75: #{tpu_custom_call.1} parent=71 // pred_region
          %s9182 = sand.u32 %s194, 1
          %s9183 = scalar_lea.sflag [#allocation6], %s9182
          %s9184 = sand.u32 %s194, 1
          %s9185 = smul.addr %s9184, 128
          %s9186 = scalar_lea.vmem [#allocation12], %s9185
          %9187 = dma.done %s9183, 2048
        $region76: #{tpu_custom_call.1} parent=71 // pred_fallthru
          _
      $region72: #{tpu_custom_call.1} parent=5 // pred_fallthru
        _
    $region6: #{tpu_custom_call.1} parent=1 // loop_footer
      %s27 = sadd.s32 1, %s23
    $region7: #{tpu_custom_call.1} parent=1 // loop_footer_branch
      %22 = sbr.rel target = $region3
    $region8: #{tpu_custom_call.1} parent=1 // loop_exit
      _
    %9188 = vsyncpa [#allocation5], 1
    %s9189 = scalar_lea.sflag [#allocation5], 1
    %9190 = vsyncpa %s9189, 1
    %9191 = vsyncpa [#allocation8], 1
    %s9192 = scalar_lea.sflag [#allocation8], 1
    %9193 = vsyncpa %s9192, 1
    %9194 = vsyncpa [#allocation11], 1
    %9195 = vsyncpa [#allocation6], 1
    %s9196 = scalar_lea.sflag [#allocation6], 1
    %9197 = vsyncpa %s9196, 1

</llo_original>
